<compile_context>
chip_gen: v7x
topology: tpu7x:2x2x1
jax: 0.10.0
libtpu: 0.0.40
codegen_flags: <defaults>
</compile_context>

<pallas_src>
import jax
import jax.numpy as jnp
from jax.experimental import pallas as pl
from jax.experimental.pallas import tpu as pltpu

LANE = 128


def _round_up(n, m):
    return ((n + m - 1) // m) * m


def _pad2(a, rows, cols):
    return jnp.pad(a, ((0, rows - a.shape[0]), (0, cols - a.shape[1])))


def confidnet_kernel(x_ref,
                     wf_ref, wcat_ref, w2_ref, w3_ref, w4_ref, w5_ref, w6_ref,
                     b_ref, out_ref):
    """One batch tile: x [TB, K] (bf16) -> merged [TB, NC_pad] f32 slab.

    Lane layout of the output slab: lanes [0, num_classes) = logits,
    lane num_classes = uncertainty (placed there by the padded w6/b6),
    remaining lanes = 0.
    """
    F = wf_ref.shape[1]
    NC_H1 = wcat_ref.shape[1]
    H1 = w2_ref.shape[0]
    NC = NC_H1 - H1
    H2 = w2_ref.shape[1]
    OUT = w6_ref.shape[1]

    # Static slices into the single packed bias row (views, zero runtime cost).
    o = 0
    bf = b_ref[:, o:o + F];       o += F
    bcat = b_ref[:, o:o + NC_H1]; o += NC_H1
    b2 = b_ref[:, o:o + H2];      o += H2
    b3 = b_ref[:, o:o + H2];      o += H2
    b4 = b_ref[:, o:o + H2];      o += H2
    b5 = b_ref[:, o:o + H2];      o += H2
    b6 = b_ref[:, o:o + OUT];     o += OUT

    x = x_ref[...]                                          # bf16 [TB, K]

    # --- frozen feature extractor (stand-in): Linear+ReLU feature head ------
    feats = jnp.maximum(
        jnp.dot(x, wf_ref[...], preferred_element_type=jnp.float32) + bf,
        0.0).astype(jnp.bfloat16)                           # bf16 [TB, F]

    # --- fused classifier head + first confidnet layer (shared feats input) -
    cat = (jnp.dot(feats, wcat_ref[...], preferred_element_type=jnp.float32)
           + bcat)                                          # f32 [TB, NC+H1]
    logits = cat[:, :NC]                                    # f32 [TB, NC]
    h = jnp.maximum(cat[:, NC:], 0.0).astype(jnp.bfloat16)  # bf16 [TB, H1]

    # --- remaining confidnet MLP: 512 -> 400 -> 400 -> 400 -> 400 (padded) --
    for w_ref, b in ((w2_ref, b2), (w3_ref, b3), (w4_ref, b4), (w5_ref, b5)):
        h = jnp.maximum(
            jnp.dot(h, w_ref[...], preferred_element_type=jnp.float32) + b,
            0.0).astype(jnp.bfloat16)

    # Final layer: padded weight column already sits at lane `num_classes`.
    unc = (jnp.dot(h, w6_ref[...], preferred_element_type=jnp.float32) + b6)

    out_ref[...] = (logits + unc).astype(out_ref.dtype)     # single 128-lane vst


def prepare_params(params, in_dim, num_classes):
    """Pad lane dims to multiples of 128, fuse wl|w1, pack biases into one row."""
    (wf, bf, wl, bl, w1, b1, w2, b2, w3, b3, w4, b4, w5, b5, w6, b6) = params
    K = _round_up(in_dim, LANE)
    F = _round_up(wf.shape[1], LANE)             # features_dim -> 128
    NC = _round_up(num_classes + 1, LANE)        # logits + 1 free lane for unc
    H1 = _round_up(w1.shape[1], LANE)            # 512
    H2 = _round_up(w2.shape[1], LANE)            # 400 -> 512
    OUT = NC                                     # unc merged into logits slab

    def w_(a, r, c):
        return _pad2(a, r, c).astype(jnp.bfloat16)

    wf_p = w_(wf, K, F)
    # Fuse classifier + first confidnet layer over the shared feats operand.
    wcat = jnp.concatenate([_pad2(wl, F, NC), _pad2(w1, F, H1)],
                           axis=1).astype(jnp.bfloat16)      # [F, NC+H1]
    w2_p = w_(w2, H1, H2)
    w3_p = w_(w3, H2, H2)
    w4_p = w_(w4, H2, H2)
    w5_p = w_(w5, H2, H2)
    # Place the single uncertainty column at lane `num_classes` of the padded
    # output so logits and uncertainty merge with one add (no roll, one store).
    w6_p = (jnp.zeros((H2, OUT), jnp.float32)
            .at[:w6.shape[0], num_classes:num_classes + 1].set(w6)
            .astype(jnp.bfloat16))

    b6_p = (jnp.zeros((1, OUT), jnp.float32)
            .at[:, num_classes:num_classes + 1].set(b6))
    bias_row = jnp.concatenate(
        [_pad2(bf, 1, F),
         _pad2(bl, 1, NC), _pad2(b1, 1, H1),
         _pad2(b2, 1, H2), _pad2(b3, 1, H2), _pad2(b4, 1, H2), _pad2(b5, 1, H2),
         b6_p], axis=1).astype(jnp.float32)                  # [1, 2944]

    weights = (wf_p, wcat, w2_p, w3_p, w4_p, w5_p, w6_p)
    return weights, bias_row, (K, F, NC, H1, H2, OUT)


def confidnet_forward(x_nchw, params, *, batch_tile=512):
    """Returns (linear_logits [B, num_classes], uncertainty [B, 1])."""
    B = x_nchw.shape[0]
    x2d = x_nchw.reshape(B, -1).astype(jnp.float32)
    in_dim = x2d.shape[1]
    num_classes = params[2].shape[1]

    weights, bias_row, (K_pad, F, NC, H1, H2, OUT) = prepare_params(
        params, in_dim, num_classes)

    # Batch tiling: big tiles amortize per-grid-step overhead; keep >=2 tiles
    # when possible so ("parallel",) can shard across the two v7x TensorCores.
    TB = min(batch_tile, _round_up(B, 128))
    B_pad = _round_up(B, TB)
    if B_pad // TB == 1 and TB >= 256:
        TB //= 2
    x_pad = _pad2(x2d, B_pad, K_pad).astype(jnp.bfloat16)

    grid = (B_pad // TB,)
    x_spec = pl.BlockSpec((TB, K_pad), lambda i: (i, 0))
    out_spec = pl.BlockSpec((TB, NC), lambda i: (i, 0))

    def resident(p):
        # full-extent block, constant index -> copied to VMEM once, stays put
        return pl.BlockSpec(p.shape, lambda i: (0, 0))

    flops = 2 * B_pad * (K_pad * F + F * (NC + H1) + H1 * H2
                         + 3 * H2 * H2 + H2 * OUT)
    bytes_accessed = (x_pad.size * 2
                      + sum(int(w.size) * 2 for w in weights)
                      + int(bias_row.size) * 4
                      + B_pad * NC * 4)
    cost = pl.CostEstimate(flops=int(flops), transcendentals=0,
                           bytes_accessed=int(bytes_accessed))

    slab = pl.pallas_call(
        confidnet_kernel,
        out_shape=jax.ShapeDtypeStruct((B_pad, NC), jnp.float32),
        grid=grid,
        in_specs=[x_spec] + [resident(w) for w in weights] + [resident(bias_row)],
        out_specs=out_spec,
        compiler_params=pltpu.CompilerParams(
            dimension_semantics=("parallel",),
            vmem_limit_bytes=32 << 20),
        cost_estimate=cost,
    )(x_pad, *weights, bias_row)

    logits = slab[:B, :num_classes]
    uncertainty = slab[:B, num_classes:num_classes + 1]
    return logits, uncertainty


def init_params(key, in_dim, features_dim, num_classes):
    """Deterministic PyTorch-style uniform(-1/sqrt(fan_in), 1/sqrt(fan_in)) init."""
    layer_dims = [
        (in_dim, features_dim),      # feature-extractor feature head
        (features_dim, num_classes), # feature-extractor linear head
        (features_dim, 512),         # confidnet
        (512, 400),
        (400, 400),
        (400, 400),
        (400, 400),
        (400, 1),
    ]
    params = []
    for fan_in, fan_out in layer_dims:
        key, wk, bk = jax.random.split(key, 3)
        bound = 1.0 / float(fan_in) ** 0.5
        w = jax.random.uniform(wk, (fan_in, fan_out), jnp.float32, -bound, bound)
        b = jax.random.uniform(bk, (1, fan_out), jnp.float32, -bound, bound)
        params += [w, b]
    return tuple(params)


def reference_forward(x_nchw, params):
    """Plain-JAX reference with the same bf16-matmul / f32-accumulate numerics."""
    B = x_nchw.shape[0]
    x = x_nchw.reshape(B, -1).astype(jnp.float32)
    (wf, bf, wl, bl,
     w1, b1, w2, b2, w3, b3, w4, b4, w5, b5, w6, b6) = params

    def mm(a, w):
        return jnp.dot(a.astype(jnp.bfloat16), w.astype(jnp.bfloat16),
                       preferred_element_type=jnp.float32)

    feats = jnp.maximum(mm(x, wf) + bf, 0.0)
    logits = mm(feats, wl) + bl
    h = feats
    for w, b in ((w1, b1), (w2, b2), (w3, b3), (w4, b4), (w5, b5)):
        h = jnp.maximum(mm(h, w) + b, 0.0)
    unc = mm(h, w6) + b6
    return logits, unc


if __name__ == "__main__":
    B, C, H, W = 2, 4, 16, 16
    features_dim = 32
    num_classes = 10

    key = jax.random.PRNGKey(0)
    key_x, key_p = jax.random.split(key)
    x = jax.random.normal(key_x, (B, C, H, W), jnp.float32)
    params = init_params(key_p, C * H * W, features_dim, num_classes)

    logits, uncertainty = confidnet_forward(x, params)
    jax.block_until_ready((logits, uncertainty))

    ref_logits, ref_unc = reference_forward(x, params)
    assert logits.shape == (B, num_classes) and uncertainty.shape == (B, 1)
    assert jnp.allclose(logits, ref_logits, atol=1e-2, rtol=1e-2)
    assert jnp.allclose(uncertainty, ref_unc, atol=1e-2, rtol=1e-2)

    print("KERNEL_OK")
</pallas_src>

<mosaic_0001>
module attributes {stable_mosaic.version = 11 : i64} {
  func.func @confidnet_kernel(%arg0: i32, %arg1: memref<128x1024xbf16, #tpu.memory_space<vmem>>, %arg2: memref<1024x128xbf16, #tpu.memory_space<vmem>>, %arg3: memref<128x640xbf16, #tpu.memory_space<vmem>>, %arg4: memref<512x512xbf16, #tpu.memory_space<vmem>>, %arg5: memref<512x512xbf16, #tpu.memory_space<vmem>>, %arg6: memref<512x512xbf16, #tpu.memory_space<vmem>>, %arg7: memref<512x512xbf16, #tpu.memory_space<vmem>>, %arg8: memref<512x128xbf16, #tpu.memory_space<vmem>>, %arg9: memref<1x2944xf32, #tpu.memory_space<vmem>>, %arg10: memref<128x128xf32, #tpu.memory_space<vmem>>) attributes {dimension_semantics = [#tpu.dimension_semantics<parallel>], iteration_bounds = array<i64: 1>, scalar_prefetch = 0 : i64, scratch_operands = 0 : i64, tpu.core_type = #tpu.core_type<tc>, window_params = [{transform_indices = @transform_0, window_bounds = array<i64: 128, 1024>}, {pipeline_mode = #tpu.pipeline_mode<synchronous>, transform_indices = @transform_1, window_bounds = array<i64: 1024, 128>}, {pipeline_mode = #tpu.pipeline_mode<synchronous>, transform_indices = @transform_2, window_bounds = array<i64: 128, 640>}, {pipeline_mode = #tpu.pipeline_mode<synchronous>, transform_indices = @transform_3, window_bounds = array<i64: 512, 512>}, {pipeline_mode = #tpu.pipeline_mode<synchronous>, transform_indices = @transform_4, window_bounds = array<i64: 512, 512>}, {pipeline_mode = #tpu.pipeline_mode<synchronous>, transform_indices = @transform_5, window_bounds = array<i64: 512, 512>}, {pipeline_mode = #tpu.pipeline_mode<synchronous>, transform_indices = @transform_6, window_bounds = array<i64: 512, 512>}, {pipeline_mode = #tpu.pipeline_mode<synchronous>, transform_indices = @transform_7, window_bounds = array<i64: 512, 128>}, {pipeline_mode = #tpu.pipeline_mode<synchronous>, transform_indices = @transform_8, window_bounds = array<i64: 1, 2944>}, {transform_indices = @transform_9, window_bounds = array<i64: 128, 128>}]} {
    %c0 = arith.constant 0 : index
    %c0_0 = arith.constant 0 : index
    %0 = vector.load %arg9[%c0, %c0_0] : memref<1x2944xf32, #tpu.memory_space<vmem>>, vector<1x128xf32>
    %c0_1 = arith.constant 0 : index
    %c128 = arith.constant 128 : index
    %1 = vector.load %arg9[%c0_1, %c128] : memref<1x2944xf32, #tpu.memory_space<vmem>>, vector<1x640xf32>
    %c0_2 = arith.constant 0 : index
    %c768 = arith.constant 768 : index
    %2 = vector.load %arg9[%c0_2, %c768] : memref<1x2944xf32, #tpu.memory_space<vmem>>, vector<1x512xf32>
    %c0_3 = arith.constant 0 : index
    %c1280 = arith.constant 1280 : index
    %3 = vector.load %arg9[%c0_3, %c1280] : memref<1x2944xf32, #tpu.memory_space<vmem>>, vector<1x512xf32>
    %c0_4 = arith.constant 0 : index
    %c1792 = arith.constant 1792 : index
    %4 = vector.load %arg9[%c0_4, %c1792] : memref<1x2944xf32, #tpu.memory_space<vmem>>, vector<1x512xf32>
    %c0_5 = arith.constant 0 : index
    %c2304 = arith.constant 2304 : index
    %5 = vector.load %arg9[%c0_5, %c2304] : memref<1x2944xf32, #tpu.memory_space<vmem>>, vector<1x512xf32>
    %c0_6 = arith.constant 0 : index
    %c2816 = arith.constant 2816 : index
    %6 = vector.load %arg9[%c0_6, %c2816] : memref<1x2944xf32, #tpu.memory_space<vmem>>, vector<1x128xf32>
    %c0_7 = arith.constant 0 : index
    %c0_8 = arith.constant 0 : index
    %7 = vector.load %arg1[%c0_7, %c0_8] : memref<128x1024xbf16, #tpu.memory_space<vmem>>, vector<128x1024xbf16>
    %c0_9 = arith.constant 0 : index
    %c0_10 = arith.constant 0 : index
    %8 = vector.load %arg2[%c0_9, %c0_10] : memref<1024x128xbf16, #tpu.memory_space<vmem>>, vector<1024x128xbf16>
    %cst = arith.constant dense<0.000000e+00> : vector<128x128xf32>
    %9 = tpu.matmul %7, %8, %cst {dimension_numbers = #tpu.dot_dimension_numbers<[1], [0], [0], [1], [0, 0, 1, 1], [], []>} : vector<128x1024xbf16>, vector<1024x128xbf16>, vector<128x128xf32> -> vector<128x128xf32>
    %10 = vector.broadcast %0 : vector<1x128xf32> to vector<128x128xf32>
    %11 = arith.addf %9, %10 : vector<128x128xf32>
    %cst_11 = arith.constant 0.000000e+00 : f32
    %12 = vector.broadcast %cst_11 : f32 to vector<128x128xf32>
    %13 = arith.maximumf %11, %12 : vector<128x128xf32>
    %14 = arith.truncf %13 : vector<128x128xf32> to vector<128x128xbf16>
    %c0_12 = arith.constant 0 : index
    %c0_13 = arith.constant 0 : index
    %15 = vector.load %arg3[%c0_12, %c0_13] : memref<128x640xbf16, #tpu.memory_space<vmem>>, vector<128x640xbf16>
    %cst_14 = arith.constant dense<0.000000e+00> : vector<128x640xf32>
    %16 = tpu.matmul %14, %15, %cst_14 {dimension_numbers = #tpu.dot_dimension_numbers<[1], [0], [0], [1], [0, 0, 1, 1], [], []>} : vector<128x128xbf16>, vector<128x640xbf16>, vector<128x640xf32> -> vector<128x640xf32>
    %17 = vector.broadcast %1 : vector<1x640xf32> to vector<128x640xf32>
    %18 = arith.addf %16, %17 : vector<128x640xf32>
    %19 = vector.extract_strided_slice %18 {offsets = [0, 0], sizes = [128, 128], strides = [1, 1]} : vector<128x640xf32> to vector<128x128xf32>
    %20 = vector.extract_strided_slice %18 {offsets = [0, 128], sizes = [128, 512], strides = [1, 1]} : vector<128x640xf32> to vector<128x512xf32>
    %cst_15 = arith.constant 0.000000e+00 : f32
    %21 = vector.broadcast %cst_15 : f32 to vector<128x512xf32>
    %22 = arith.maximumf %20, %21 : vector<128x512xf32>
    %23 = arith.truncf %22 : vector<128x512xf32> to vector<128x512xbf16>
    %c0_16 = arith.constant 0 : index
    %c0_17 = arith.constant 0 : index
    %24 = vector.load %arg4[%c0_16, %c0_17] : memref<512x512xbf16, #tpu.memory_space<vmem>>, vector<512x512xbf16>
    %cst_18 = arith.constant dense<0.000000e+00> : vector<128x512xf32>
    %25 = tpu.matmul %23, %24, %cst_18 {dimension_numbers = #tpu.dot_dimension_numbers<[1], [0], [0], [1], [0, 0, 1, 1], [], []>} : vector<128x512xbf16>, vector<512x512xbf16>, vector<128x512xf32> -> vector<128x512xf32>
    %26 = vector.broadcast %2 : vector<1x512xf32> to vector<128x512xf32>
    %27 = arith.addf %25, %26 : vector<128x512xf32>
    %cst_19 = arith.constant 0.000000e+00 : f32
    %28 = vector.broadcast %cst_19 : f32 to vector<128x512xf32>
    %29 = arith.maximumf %27, %28 : vector<128x512xf32>
    %30 = arith.truncf %29 : vector<128x512xf32> to vector<128x512xbf16>
    %c0_20 = arith.constant 0 : index
    %c0_21 = arith.constant 0 : index
    %31 = vector.load %arg5[%c0_20, %c0_21] : memref<512x512xbf16, #tpu.memory_space<vmem>>, vector<512x512xbf16>
    %cst_22 = arith.constant dense<0.000000e+00> : vector<128x512xf32>
    %32 = tpu.matmul %30, %31, %cst_22 {dimension_numbers = #tpu.dot_dimension_numbers<[1], [0], [0], [1], [0, 0, 1, 1], [], []>} : vector<128x512xbf16>, vector<512x512xbf16>, vector<128x512xf32> -> vector<128x512xf32>
    %33 = vector.broadcast %3 : vector<1x512xf32> to vector<128x512xf32>
    %34 = arith.addf %32, %33 : vector<128x512xf32>
    %cst_23 = arith.constant 0.000000e+00 : f32
    %35 = vector.broadcast %cst_23 : f32 to vector<128x512xf32>
    %36 = arith.maximumf %34, %35 : vector<128x512xf32>
    %37 = arith.truncf %36 : vector<128x512xf32> to vector<128x512xbf16>
    %c0_24 = arith.constant 0 : index
    %c0_25 = arith.constant 0 : index
    %38 = vector.load %arg6[%c0_24, %c0_25] : memref<512x512xbf16, #tpu.memory_space<vmem>>, vector<512x512xbf16>
    %cst_26 = arith.constant dense<0.000000e+00> : vector<128x512xf32>
    %39 = tpu.matmul %37, %38, %cst_26 {dimension_numbers = #tpu.dot_dimension_numbers<[1], [0], [0], [1], [0, 0, 1, 1], [], []>} : vector<128x512xbf16>, vector<512x512xbf16>, vector<128x512xf32> -> vector<128x512xf32>
    %40 = vector.broadcast %4 : vector<1x512xf32> to vector<128x512xf32>
    %41 = arith.addf %39, %40 : vector<128x512xf32>
    %cst_27 = arith.constant 0.000000e+00 : f32
    %42 = vector.broadcast %cst_27 : f32 to vector<128x512xf32>
    %43 = arith.maximumf %41, %42 : vector<128x512xf32>
    %44 = arith.truncf %43 : vector<128x512xf32> to vector<128x512xbf16>
    %c0_28 = arith.constant 0 : index
    %c0_29 = arith.constant 0 : index
    %45 = vector.load %arg7[%c0_28, %c0_29] : memref<512x512xbf16, #tpu.memory_space<vmem>>, vector<512x512xbf16>
    %cst_30 = arith.constant dense<0.000000e+00> : vector<128x512xf32>
    %46 = tpu.matmul %44, %45, %cst_30 {dimension_numbers = #tpu.dot_dimension_numbers<[1], [0], [0], [1], [0, 0, 1, 1], [], []>} : vector<128x512xbf16>, vector<512x512xbf16>, vector<128x512xf32> -> vector<128x512xf32>
    %47 = vector.broadcast %5 : vector<1x512xf32> to vector<128x512xf32>
    %48 = arith.addf %46, %47 : vector<128x512xf32>
    %cst_31 = arith.constant 0.000000e+00 : f32
    %49 = vector.broadcast %cst_31 : f32 to vector<128x512xf32>
    %50 = arith.maximumf %48, %49 : vector<128x512xf32>
    %51 = arith.truncf %50 : vector<128x512xf32> to vector<128x512xbf16>
    %c0_32 = arith.constant 0 : index
    %c0_33 = arith.constant 0 : index
    %52 = vector.load %arg8[%c0_32, %c0_33] : memref<512x128xbf16, #tpu.memory_space<vmem>>, vector<512x128xbf16>
    %cst_34 = arith.constant dense<0.000000e+00> : vector<128x128xf32>
    %53 = tpu.matmul %51, %52, %cst_34 {dimension_numbers = #tpu.dot_dimension_numbers<[1], [0], [0], [1], [0, 0, 1, 1], [], []>} : vector<128x512xbf16>, vector<512x128xbf16>, vector<128x128xf32> -> vector<128x128xf32>
    %54 = vector.broadcast %6 : vector<1x128xf32> to vector<128x128xf32>
    %55 = arith.addf %53, %54 : vector<128x128xf32>
    %56 = arith.addf %19, %55 : vector<128x128xf32>
    %c0_35 = arith.constant 0 : index
    %c0_36 = arith.constant 0 : index
    %57 = vector.load %arg10[%c0_35, %c0_36] : memref<128x128xf32, #tpu.memory_space<vmem>>, vector<128x128xf32>
    tpu.vector_store %arg10[%c0_35, %c0_36], %56 {strides = array<i32>} : memref<128x128xf32, #tpu.memory_space<vmem>>, vector<128x128xf32>,
    return
  }
  func.func @transform_0(%arg0: i32) -> (i32, i32) {
    %c0_i32 = arith.constant 0 : i32
    %c0_i32_0 = arith.constant 0 : i32
    return %arg0, %c0_i32 : i32, i32
  }
  func.func @transform_1(%arg0: i32) -> (i32, i32) {
    %c0_i32 = arith.constant 0 : i32
    %c0_i32_0 = arith.constant 0 : i32
    %c0_i32_1 = arith.constant 0 : i32
    return %c0_i32, %c0_i32_0 : i32, i32
  }
  func.func @transform_2(%arg0: i32) -> (i32, i32) {
    %c0_i32 = arith.constant 0 : i32
    %c0_i32_0 = arith.constant 0 : i32
    %c0_i32_1 = arith.constant 0 : i32
    return %c0_i32, %c0_i32_0 : i32, i32
  }
  func.func @transform_3(%arg0: i32) -> (i32, i32) {
    %c0_i32 = arith.constant 0 : i32
    %c0_i32_0 = arith.constant 0 : i32
    %c0_i32_1 = arith.constant 0 : i32
    return %c0_i32, %c0_i32_0 : i32, i32
  }
  func.func @transform_4(%arg0: i32) -> (i32, i32) {
    %c0_i32 = arith.constant 0 : i32
    %c0_i32_0 = arith.constant 0 : i32
    %c0_i32_1 = arith.constant 0 : i32
    return %c0_i32, %c0_i32_0 : i32, i32
  }
  func.func @transform_5(%arg0: i32) -> (i32, i32) {
    %c0_i32 = arith.constant 0 : i32
    %c0_i32_0 = arith.constant 0 : i32
    %c0_i32_1 = arith.constant 0 : i32
    return %c0_i32, %c0_i32_0 : i32, i32
  }
  func.func @transform_6(%arg0: i32) -> (i32, i32) {
    %c0_i32 = arith.constant 0 : i32
    %c0_i32_0 = arith.constant 0 : i32
    %c0_i32_1 = arith.constant 0 : i32
    return %c0_i32, %c0_i32_0 : i32, i32
  }
  func.func @transform_7(%arg0: i32) -> (i32, i32) {
    %c0_i32 = arith.constant 0 : i32
    %c0_i32_0 = arith.constant 0 : i32
    %c0_i32_1 = arith.constant 0 : i32
    return %c0_i32, %c0_i32_0 : i32, i32
  }
  func.func @transform_8(%arg0: i32) -> (i32, i32) {
    %c0_i32 = arith.constant 0 : i32
    %c0_i32_0 = arith.constant 0 : i32
    %c0_i32_1 = arith.constant 0 : i32
    return %c0_i32, %c0_i32_0 : i32, i32
  }
  func.func @transform_9(%arg0: i32) -> (i32, i32) {
    %c0_i32 = arith.constant 0 : i32
    %c0_i32_0 = arith.constant 0 : i32
    return %arg0, %c0_i32 : i32, i32
  }
}

</mosaic_0001>

<llo_original>
// kernel: tpu_custom_call.1
$region0: #{tpu_custom_call.1}
  #allocation0 [shape = 'u32[]', space=smem, size = 0x4, offset = 0x4, fixed_abs, tag = 'smem constant byte address 0x4 - core index']
  #allocation1 [shape = 'u32[144,128]{1,0:T(1,128)}', space=vmem, size = 0x12000, scoped, tag = 'internal scratch']
  %s0 = inlined_call_operand.hbm [shape: bf16[128,1024], index: 0, kind: input, shape index: {}]
  %s1 = inlined_call_operand.hbm [shape: bf16[1024,128], index: 1, kind: input, shape index: {}]
  %s2 = inlined_call_operand.hbm [shape: bf16[128,640], index: 2, kind: input, shape index: {}]
  %s3 = inlined_call_operand.hbm [shape: bf16[512,512], index: 3, kind: input, shape index: {}]
  %s4 = inlined_call_operand.hbm [shape: bf16[512,512], index: 4, kind: input, shape index: {}]
  %s5 = inlined_call_operand.hbm [shape: bf16[512,512], index: 5, kind: input, shape index: {}]
  %s6 = inlined_call_operand.hbm [shape: bf16[512,512], index: 6, kind: input, shape index: {}]
  %s7 = inlined_call_operand.hbm [shape: bf16[512,128], index: 7, kind: input, shape index: {}]
  %s8 = inlined_call_operand.vmem [shape: f32[1,2944], index: 8, kind: input, shape index: {}]
  %s9 = inlined_call_operand.hbm [shape: f32[128,128], index: 9, kind: output, shape index: {}]
  %s10 = sld [smem:[#allocation0]]
  $region78: #{tpu_custom_call.1} parent=0
    _
  %s12 = ssub.s32 1, %s10
  %s13 = scalar_select 0, %s12, %s10
  $region1: #{tpu_custom_call.1} parent=0
    #allocation2 [shape = 'u8[262144]{0}', space=vmem, size = 0x40000, scoped, tag = 'input window, operand 0, single buffered']
    #allocation3 [shape = 's32[1]{0}', space=sflag, size = 0x4, scoped, tag = 'scoped memory for tpu_custom_call.1']
    #allocation4 [shape = 's32[1]{0}', space=sflag, size = 0x4, scoped, tag = 'scoped memory for tpu_custom_call.1']
    #allocation5 [shape = 'u8[262144]{0}', space=vmem, size = 0x40000, scoped, tag = 'input window, operand 1, single buffered']
    #allocation6 [shape = 's32[1]{0}', space=sflag, size = 0x4, scoped, tag = 'scoped memory for tpu_custom_call.1']
    #allocation7 [shape = 'u8[163840]{0}', space=vmem, size = 0x28000, scoped, tag = 'input window, operand 2, single buffered']
    #allocation8 [shape = 'u8[524288]{0}', space=vmem, size = 0x80000, scoped, tag = 'input window, operand 3, single buffered']
    #allocation9 [shape = 's32[1]{0}', space=sflag, size = 0x4, scoped, tag = 'scoped memory for tpu_custom_call.1']
    #allocation10 [shape = 'u8[524288]{0}', space=vmem, size = 0x80000, scoped, tag = 'input window, operand 4, single buffered']
    #allocation11 [shape = 'u8[524288]{0}', space=vmem, size = 0x80000, scoped, tag = 'input window, operand 5, single buffered']
    #allocation12 [shape = 's32[1]{0}', space=sflag, size = 0x4, scoped, tag = 'scoped memory for tpu_custom_call.1']
    #allocation13 [shape = 'u8[524288]{0}', space=vmem, size = 0x80000, scoped, tag = 'input window, operand 6, single buffered']
    #allocation14 [shape = 'u8[131072]{0}', space=vmem, size = 0x20000, scoped, tag = 'input window, operand 7, single buffered']
    #allocation15 [shape = 's32[1]{0}', space=sflag, size = 0x4, scoped, tag = 'scoped memory for tpu_custom_call.1']
    #allocation16 [shape = 'u8[65536]{0}', space=vmem, size = 0x10000, scoped, tag = 'output window, operand 0, single buffered']
    %14 = vsyncpa [#allocation3], 0
    %15 = vsyncpa [#allocation6], 0
    %16 = vsyncpa [#allocation9], 0
    %17 = vsyncpa [#allocation12], 0
    %18 = vsyncpa [#allocation15], 0
    %19 = vsyncpa [#allocation4], 0
    // Predicated region
    $region2: #{tpu_custom_call.1} parent=1 // pred_check
      _
    $region3: #{tpu_custom_call.1} parent=1 // pred_check_branch
      %21 = sbr.rel (0) target = $region5
    $region4: #{tpu_custom_call.1} parent=1 // pred_region
      %s23 = ssub.s32 8192, 8192
      %24 = vsyncadd [#allocation3], %s23
      %s25 = sshll.u32 [#allocation2], 4
      %s26 = int_to_ptr.vmem [resolvable:$true] %s25
      %31 = dma.hbm_to_vmem [thread:$0]  %s0, 8192, %s26, [#allocation3], 512, 512, 32
    $region5: #{tpu_custom_call.1} parent=1 // pred_fallthru
      _
    // Predicated region
    $region6: #{tpu_custom_call.1} parent=1 // pred_check
      _
    $region7: #{tpu_custom_call.1} parent=1 // pred_check_branch
      %33 = sbr.rel (0) target = $region9
    $region8: #{tpu_custom_call.1} parent=1 // pred_region
      %s35 = ssub.s32 8192, 8192
      %36 = vsyncadd [#allocation6], %s35
      %s37 = sshll.u32 [#allocation5], 4
      %s38 = int_to_ptr.vmem [resolvable:$true] %s37
      %43 = dma.hbm_to_vmem [thread:$0]  %s1, 8192, %s38, [#allocation6], 64, 64, 4
    $region9: #{tpu_custom_call.1} parent=1 // pred_fallthru
      _
    // Predicated region
    $region10: #{tpu_custom_call.1} parent=1 // pred_check
      _
    $region11: #{tpu_custom_call.1} parent=1 // pred_check_branch
      %45 = sbr.rel (0) target = $region13
    $region12: #{tpu_custom_call.1} parent=1 // pred_region
      %s47 = ssub.s32 5120, 5120
      %48 = vsyncadd [#allocation6], %s47
      %s49 = sshll.u32 [#allocation7], 4
      %s50 = int_to_ptr.vmem [resolvable:$true] %s49
      %55 = dma.hbm_to_vmem [thread:$0]  %s2, 5120, %s50, [#allocation6], 320, 320, 20
    $region13: #{tpu_custom_call.1} parent=1 // pred_fallthru
      _
    // Predicated region
    $region14: #{tpu_custom_call.1} parent=1 // pred_check
      _
    $region15: #{tpu_custom_call.1} parent=1 // pred_check_branch
      %57 = sbr.rel (0) target = $region17
    $region16: #{tpu_custom_call.1} parent=1 // pred_region
      %s59 = ssub.s32 16384, 16384
      %60 = vsyncadd [#allocation9], %s59
      %s61 = sshll.u32 [#allocation8], 4
      %s62 = int_to_ptr.vmem [resolvable:$true] %s61
      %67 = dma.hbm_to_vmem [thread:$0]  %s3, 16384, %s62, [#allocation9], 256, 256, 16
    $region17: #{tpu_custom_call.1} parent=1 // pred_fallthru
      _
    // Predicated region
    $region18: #{tpu_custom_call.1} parent=1 // pred_check
      _
    $region19: #{tpu_custom_call.1} parent=1 // pred_check_branch
      %69 = sbr.rel (0) target = $region21
    $region20: #{tpu_custom_call.1} parent=1 // pred_region
      %s71 = ssub.s32 16384, 16384
      %72 = vsyncadd [#allocation9], %s71
      %s73 = sshll.u32 [#allocation10], 4
      %s74 = int_to_ptr.vmem [resolvable:$true] %s73
      %79 = dma.hbm_to_vmem [thread:$0]  %s4, 16384, %s74, [#allocation9], 256, 256, 16
    $region21: #{tpu_custom_call.1} parent=1 // pred_fallthru
      _
    // Predicated region
    $region22: #{tpu_custom_call.1} parent=1 // pred_check
      _
    $region23: #{tpu_custom_call.1} parent=1 // pred_check_branch
      %81 = sbr.rel (0) target = $region25
    $region24: #{tpu_custom_call.1} parent=1 // pred_region
      %s83 = ssub.s32 16384, 16384
      %84 = vsyncadd [#allocation12], %s83
      %s85 = sshll.u32 [#allocation11], 4
      %s86 = int_to_ptr.vmem [resolvable:$true] %s85
      %91 = dma.hbm_to_vmem [thread:$0]  %s5, 16384, %s86, [#allocation12], 256, 256, 16
    $region25: #{tpu_custom_call.1} parent=1 // pred_fallthru
      _
    // Predicated region
    $region26: #{tpu_custom_call.1} parent=1 // pred_check
      _
    $region27: #{tpu_custom_call.1} parent=1 // pred_check_branch
      %93 = sbr.rel (0) target = $region29
    $region28: #{tpu_custom_call.1} parent=1 // pred_region
      %s95 = ssub.s32 16384, 16384
      %96 = vsyncadd [#allocation12], %s95
      %s97 = sshll.u32 [#allocation13], 4
      %s98 = int_to_ptr.vmem [resolvable:$true] %s97
      %103 = dma.hbm_to_vmem [thread:$0]  %s6, 16384, %s98, [#allocation12], 256, 256, 16
    $region29: #{tpu_custom_call.1} parent=1 // pred_fallthru
      _
    // Predicated region
    $region30: #{tpu_custom_call.1} parent=1 // pred_check
      _
    $region31: #{tpu_custom_call.1} parent=1 // pred_check_branch
      %105 = sbr.rel (0) target = $region33
    $region32: #{tpu_custom_call.1} parent=1 // pred_region
      %s107 = ssub.s32 4096, 4096
      %108 = vsyncadd [#allocation15], %s107
      %s109 = sshll.u32 [#allocation14], 4
      %s110 = int_to_ptr.vmem [resolvable:$true] %s109
      %115 = dma.hbm_to_vmem [thread:$0]  %s7, 4096, %s110, [#allocation15], 64, 64, 4
    $region33: #{tpu_custom_call.1} parent=1 // pred_fallthru
      _
    // Predicated region
    $region34: #{tpu_custom_call.1} parent=1 // pred_check
      _
    $region35: #{tpu_custom_call.1} parent=1 // pred_check_branch
      %117 = sbr.rel (0) target = $region37
    $region36: #{tpu_custom_call.1} parent=1 // pred_region
      _
    $region37: #{tpu_custom_call.1} parent=1 // pred_fallthru
      _
    // Predicated region
    $region38: #{tpu_custom_call.1} parent=1 // pred_check
      _
    $region39: #{tpu_custom_call.1} parent=1 // pred_check_branch
      %119 = sbr.rel (0) target = $region41
    $region40: #{tpu_custom_call.1} parent=1 // pred_region
      %120 = dma.done [#allocation3], 8192
    $region41: #{tpu_custom_call.1} parent=1 // pred_fallthru
      _
    // Predicated region
    $region42: #{tpu_custom_call.1} parent=1 // pred_check
      _
    $region43: #{tpu_custom_call.1} parent=1 // pred_check_branch
      %122 = sbr.rel (0) target = $region45
    $region44: #{tpu_custom_call.1} parent=1 // pred_region
      %123 = dma.done [#allocation6], 8192
    $region45: #{tpu_custom_call.1} parent=1 // pred_fallthru
      _
    // Predicated region
    $region46: #{tpu_custom_call.1} parent=1 // pred_check
      _
    $region47: #{tpu_custom_call.1} parent=1 // pred_check_branch
      %125 = sbr.rel (0) target = $region49
    $region48: #{tpu_custom_call.1} parent=1 // pred_region
      %126 = dma.done [#allocation6], 5120
    $region49: #{tpu_custom_call.1} parent=1 // pred_fallthru
      _
    // Predicated region
    $region50: #{tpu_custom_call.1} parent=1 // pred_check
      _
    $region51: #{tpu_custom_call.1} parent=1 // pred_check_branch
      %128 = sbr.rel (0) target = $region53
    $region52: #{tpu_custom_call.1} parent=1 // pred_region
      %129 = dma.done [#allocation9], 16384
    $region53: #{tpu_custom_call.1} parent=1 // pred_fallthru
      _
    // Predicated region
    $region54: #{tpu_custom_call.1} parent=1 // pred_check
      _
    $region55: #{tpu_custom_call.1} parent=1 // pred_check_branch
      %131 = sbr.rel (0) target = $region57
    $region56: #{tpu_custom_call.1} parent=1 // pred_region
      %132 = dma.done [#allocation9], 16384
    $region57: #{tpu_custom_call.1} parent=1 // pred_fallthru
      _
    // Predicated region
    $region58: #{tpu_custom_call.1} parent=1 // pred_check
      _
    $region59: #{tpu_custom_call.1} parent=1 // pred_check_branch
      %134 = sbr.rel (0) target = $region61
    $region60: #{tpu_custom_call.1} parent=1 // pred_region
      %135 = dma.done [#allocation12], 16384
    $region61: #{tpu_custom_call.1} parent=1 // pred_fallthru
      _
    // Predicated region
    $region62: #{tpu_custom_call.1} parent=1 // pred_check
      _
    $region63: #{tpu_custom_call.1} parent=1 // pred_check_branch
      %137 = sbr.rel (0) target = $region65
    $region64: #{tpu_custom_call.1} parent=1 // pred_region
      %138 = dma.done [#allocation12], 16384
    $region65: #{tpu_custom_call.1} parent=1 // pred_fallthru
      _
    // Predicated region
    $region66: #{tpu_custom_call.1} parent=1 // pred_check
      _
    $region67: #{tpu_custom_call.1} parent=1 // pred_check_branch
      %140 = sbr.rel (0) target = $region69
    $region68: #{tpu_custom_call.1} parent=1 // pred_region
      %141 = dma.done [#allocation15], 4096
    $region69: #{tpu_custom_call.1} parent=1 // pred_fallthru
      _
    %v143 = vld [vmem:[%s8] sm:$0x1]
    %v144 = vld [vmem:[%s8 + $0x1] sm:$0x1f]
    %v145 = vld [vmem:[%s8 + $0x6] sm:$0xf]
    %v146 = vld [vmem:[%s8 + $0xa] sm:$0xf]
    %v147 = vld [vmem:[%s8 + $0xe] sm:$0xf]
    %v148 = vld [vmem:[%s8 + $0x12] sm:$0xf]
    %v149 = vld [vmem:[%s8 + $0x16] sm:$0x1]
    %v150 = vld [vmem:[#allocation2] sm:$0xff]
    %v151 = vld [vmem:[#allocation2 + $0x8] sm:$0xff]
    %v152 = vld [vmem:[#allocation2 + $0x10] sm:$0xff]
    %v153 = vld [vmem:[#allocation2 + $0x18] sm:$0xff]
    %v154 = vld [vmem:[#allocation2 + $0x20] sm:$0xff]
    %v155 = vld [vmem:[#allocation2 + $0x28] sm:$0xff]
    %v156 = vld [vmem:[#allocation2 + $0x30] sm:$0xff]
    %v157 = vld [vmem:[#allocation2 + $0x38] sm:$0xff]
    %v158 = vld [vmem:[#allocation2 + $0x40] sm:$0xff]
    %v159 = vld [vmem:[#allocation2 + $0x48] sm:$0xff]
    %v160 = vld [vmem:[#allocation2 + $0x50] sm:$0xff]
    %v161 = vld [vmem:[#allocation2 + $0x58] sm:$0xff]
    %v162 = vld [vmem:[#allocation2 + $0x60] sm:$0xff]
    %v163 = vld [vmem:[#allocation2 + $0x68] sm:$0xff]
    %v164 = vld [vmem:[#allocation2 + $0x70] sm:$0xff]
    %v165 = vld [vmem:[#allocation2 + $0x78] sm:$0xff]
    %v166 = vld [vmem:[#allocation2 + $0x80] sm:$0xff]
    %v167 = vld [vmem:[#allocation2 + $0x88] sm:$0xff]
    %v168 = vld [vmem:[#allocation2 + $0x90] sm:$0xff]
    %v169 = vld [vmem:[#allocation2 + $0x98] sm:$0xff]
    %v170 = vld [vmem:[#allocation2 + $0xa0] sm:$0xff]
    %v171 = vld [vmem:[#allocation2 + $0xa8] sm:$0xff]
    %v172 = vld [vmem:[#allocation2 + $0xb0] sm:$0xff]
    %v173 = vld [vmem:[#allocation2 + $0xb8] sm:$0xff]
    %v174 = vld [vmem:[#allocation2 + $0xc0] sm:$0xff]
    %v175 = vld [vmem:[#allocation2 + $0xc8] sm:$0xff]
    %v176 = vld [vmem:[#allocation2 + $0xd0] sm:$0xff]
    %v177 = vld [vmem:[#allocation2 + $0xd8] sm:$0xff]
    %v178 = vld [vmem:[#allocation2 + $0xe0] sm:$0xff]
    %v179 = vld [vmem:[#allocation2 + $0xe8] sm:$0xff]
    %v180 = vld [vmem:[#allocation2 + $0xf0] sm:$0xff]
    %v181 = vld [vmem:[#allocation2 + $0xf8] sm:$0xff]
    %v182 = vld [vmem:[#allocation2 + $0x100] sm:$0xff]
    %v183 = vld [vmem:[#allocation2 + $0x108] sm:$0xff]
    %v184 = vld [vmem:[#allocation2 + $0x110] sm:$0xff]
    %v185 = vld [vmem:[#allocation2 + $0x118] sm:$0xff]
    %v186 = vld [vmem:[#allocation2 + $0x120] sm:$0xff]
    %v187 = vld [vmem:[#allocation2 + $0x128] sm:$0xff]
    %v188 = vld [vmem:[#allocation2 + $0x130] sm:$0xff]
    %v189 = vld [vmem:[#allocation2 + $0x138] sm:$0xff]
    %v190 = vld [vmem:[#allocation2 + $0x140] sm:$0xff]
    %v191 = vld [vmem:[#allocation2 + $0x148] sm:$0xff]
    %v192 = vld [vmem:[#allocation2 + $0x150] sm:$0xff]
    %v193 = vld [vmem:[#allocation2 + $0x158] sm:$0xff]
    %v194 = vld [vmem:[#allocation2 + $0x160] sm:$0xff]
    %v195 = vld [vmem:[#allocation2 + $0x168] sm:$0xff]
    %v196 = vld [vmem:[#allocation2 + $0x170] sm:$0xff]
    %v197 = vld [vmem:[#allocation2 + $0x178] sm:$0xff]
    %v198 = vld [vmem:[#allocation2 + $0x180] sm:$0xff]
    %v199 = vld [vmem:[#allocation2 + $0x188] sm:$0xff]
    %v200 = vld [vmem:[#allocation2 + $0x190] sm:$0xff]
    %v201 = vld [vmem:[#allocation2 + $0x198] sm:$0xff]
    %v202 = vld [vmem:[#allocation2 + $0x1a0] sm:$0xff]
    %v203 = vld [vmem:[#allocation2 + $0x1a8] sm:$0xff]
    %v204 = vld [vmem:[#allocation2 + $0x1b0] sm:$0xff]
    %v205 = vld [vmem:[#allocation2 + $0x1b8] sm:$0xff]
    %v206 = vld [vmem:[#allocation2 + $0x1c0] sm:$0xff]
    %v207 = vld [vmem:[#allocation2 + $0x1c8] sm:$0xff]
    %v208 = vld [vmem:[#allocation2 + $0x1d0] sm:$0xff]
    %v209 = vld [vmem:[#allocation2 + $0x1d8] sm:$0xff]
    %v210 = vld [vmem:[#allocation2 + $0x1e0] sm:$0xff]
    %v211 = vld [vmem:[#allocation2 + $0x1e8] sm:$0xff]
    %v212 = vld [vmem:[#allocation2 + $0x1f0] sm:$0xff]
    %v213 = vld [vmem:[#allocation2 + $0x1f8] sm:$0xff]
    %v214 = vld [vmem:[#allocation5] sm:$0xf]
    %v215 = vld [vmem:[#allocation5 + $0x4] sm:$0xf]
    %v216 = vld [vmem:[#allocation5 + $0x8] sm:$0xf]
    %v217 = vld [vmem:[#allocation5 + $0xc] sm:$0xf]
    %v218 = vld [vmem:[#allocation5 + $0x10] sm:$0xf]
    %v219 = vld [vmem:[#allocation5 + $0x14] sm:$0xf]
    %v220 = vld [vmem:[#allocation5 + $0x18] sm:$0xf]
    %v221 = vld [vmem:[#allocation5 + $0x1c] sm:$0xf]
    %v222 = vld [vmem:[#allocation5 + $0x20] sm:$0xf]
    %v223 = vld [vmem:[#allocation5 + $0x24] sm:$0xf]
    %v224 = vld [vmem:[#allocation5 + $0x28] sm:$0xf]
    %v225 = vld [vmem:[#allocation5 + $0x2c] sm:$0xf]
    %v226 = vld [vmem:[#allocation5 + $0x30] sm:$0xf]
    %v227 = vld [vmem:[#allocation5 + $0x34] sm:$0xf]
    %v228 = vld [vmem:[#allocation5 + $0x38] sm:$0xf]
    %v229 = vld [vmem:[#allocation5 + $0x3c] sm:$0xf]
    %v230 = vld [vmem:[#allocation5 + $0x40] sm:$0xf]
    %v231 = vld [vmem:[#allocation5 + $0x44] sm:$0xf]
    %v232 = vld [vmem:[#allocation5 + $0x48] sm:$0xf]
    %v233 = vld [vmem:[#allocation5 + $0x4c] sm:$0xf]
    %v234 = vld [vmem:[#allocation5 + $0x50] sm:$0xf]
    %v235 = vld [vmem:[#allocation5 + $0x54] sm:$0xf]
    %v236 = vld [vmem:[#allocation5 + $0x58] sm:$0xf]
    %v237 = vld [vmem:[#allocation5 + $0x5c] sm:$0xf]
    %v238 = vld [vmem:[#allocation5 + $0x60] sm:$0xf]
    %v239 = vld [vmem:[#allocation5 + $0x64] sm:$0xf]
    %v240 = vld [vmem:[#allocation5 + $0x68] sm:$0xf]
    %v241 = vld [vmem:[#allocation5 + $0x6c] sm:$0xf]
    %v242 = vld [vmem:[#allocation5 + $0x70] sm:$0xf]
    %v243 = vld [vmem:[#allocation5 + $0x74] sm:$0xf]
    %v244 = vld [vmem:[#allocation5 + $0x78] sm:$0xf]
    %v245 = vld [vmem:[#allocation5 + $0x7c] sm:$0xf]
    %v246 = vld [vmem:[#allocation5 + $0x80] sm:$0xf]
    %v247 = vld [vmem:[#allocation5 + $0x84] sm:$0xf]
    %v248 = vld [vmem:[#allocation5 + $0x88] sm:$0xf]
    %v249 = vld [vmem:[#allocation5 + $0x8c] sm:$0xf]
    %v250 = vld [vmem:[#allocation5 + $0x90] sm:$0xf]
    %v251 = vld [vmem:[#allocation5 + $0x94] sm:$0xf]
    %v252 = vld [vmem:[#allocation5 + $0x98] sm:$0xf]
    %v253 = vld [vmem:[#allocation5 + $0x9c] sm:$0xf]
    %v254 = vld [vmem:[#allocation5 + $0xa0] sm:$0xf]
    %v255 = vld [vmem:[#allocation5 + $0xa4] sm:$0xf]
    %v256 = vld [vmem:[#allocation5 + $0xa8] sm:$0xf]
    %v257 = vld [vmem:[#allocation5 + $0xac] sm:$0xf]
    %v258 = vld [vmem:[#allocation5 + $0xb0] sm:$0xf]
    %v259 = vld [vmem:[#allocation5 + $0xb4] sm:$0xf]
    %v260 = vld [vmem:[#allocation5 + $0xb8] sm:$0xf]
    %v261 = vld [vmem:[#allocation5 + $0xbc] sm:$0xf]
    %v262 = vld [vmem:[#allocation5 + $0xc0] sm:$0xf]
    %v263 = vld [vmem:[#allocation5 + $0xc4] sm:$0xf]
    %v264 = vld [vmem:[#allocation5 + $0xc8] sm:$0xf]
    %v265 = vld [vmem:[#allocation5 + $0xcc] sm:$0xf]
    %v266 = vld [vmem:[#allocation5 + $0xd0] sm:$0xf]
    %v267 = vld [vmem:[#allocation5 + $0xd4] sm:$0xf]
    %v268 = vld [vmem:[#allocation5 + $0xd8] sm:$0xf]
    %v269 = vld [vmem:[#allocation5 + $0xdc] sm:$0xf]
    %v270 = vld [vmem:[#allocation5 + $0xe0] sm:$0xf]
    %v271 = vld [vmem:[#allocation5 + $0xe4] sm:$0xf]
    %v272 = vld [vmem:[#allocation5 + $0xe8] sm:$0xf]
    %v273 = vld [vmem:[#allocation5 + $0xec] sm:$0xf]
    %v274 = vld [vmem:[#allocation5 + $0xf0] sm:$0xf]
    %v275 = vld [vmem:[#allocation5 + $0xf4] sm:$0xf]
    %v276 = vld [vmem:[#allocation5 + $0xf8] sm:$0xf]
    %v277 = vld [vmem:[#allocation5 + $0xfc] sm:$0xf]
    %v278 = vld [vmem:[#allocation5 + $0x100] sm:$0xf]
    %v279 = vld [vmem:[#allocation5 + $0x104] sm:$0xf]
    %v280 = vld [vmem:[#allocation5 + $0x108] sm:$0xf]
    %v281 = vld [vmem:[#allocation5 + $0x10c] sm:$0xf]
    %v282 = vld [vmem:[#allocation5 + $0x110] sm:$0xf]
    %v283 = vld [vmem:[#allocation5 + $0x114] sm:$0xf]
    %v284 = vld [vmem:[#allocation5 + $0x118] sm:$0xf]
    %v285 = vld [vmem:[#allocation5 + $0x11c] sm:$0xf]
    %v286 = vld [vmem:[#allocation5 + $0x120] sm:$0xf]
    %v287 = vld [vmem:[#allocation5 + $0x124] sm:$0xf]
    %v288 = vld [vmem:[#allocation5 + $0x128] sm:$0xf]
    %v289 = vld [vmem:[#allocation5 + $0x12c] sm:$0xf]
    %v290 = vld [vmem:[#allocation5 + $0x130] sm:$0xf]
    %v291 = vld [vmem:[#allocation5 + $0x134] sm:$0xf]
    %v292 = vld [vmem:[#allocation5 + $0x138] sm:$0xf]
    %v293 = vld [vmem:[#allocation5 + $0x13c] sm:$0xf]
    %v294 = vld [vmem:[#allocation5 + $0x140] sm:$0xf]
    %v295 = vld [vmem:[#allocation5 + $0x144] sm:$0xf]
    %v296 = vld [vmem:[#allocation5 + $0x148] sm:$0xf]
    %v297 = vld [vmem:[#allocation5 + $0x14c] sm:$0xf]
    %v298 = vld [vmem:[#allocation5 + $0x150] sm:$0xf]
    %v299 = vld [vmem:[#allocation5 + $0x154] sm:$0xf]
    %v300 = vld [vmem:[#allocation5 + $0x158] sm:$0xf]
    %v301 = vld [vmem:[#allocation5 + $0x15c] sm:$0xf]
    %v302 = vld [vmem:[#allocation5 + $0x160] sm:$0xf]
    %v303 = vld [vmem:[#allocation5 + $0x164] sm:$0xf]
    %v304 = vld [vmem:[#allocation5 + $0x168] sm:$0xf]
    %v305 = vld [vmem:[#allocation5 + $0x16c] sm:$0xf]
    %v306 = vld [vmem:[#allocation5 + $0x170] sm:$0xf]
    %v307 = vld [vmem:[#allocation5 + $0x174] sm:$0xf]
    %v308 = vld [vmem:[#allocation5 + $0x178] sm:$0xf]
    %v309 = vld [vmem:[#allocation5 + $0x17c] sm:$0xf]
    %v310 = vld [vmem:[#allocation5 + $0x180] sm:$0xf]
    %v311 = vld [vmem:[#allocation5 + $0x184] sm:$0xf]
    %v312 = vld [vmem:[#allocation5 + $0x188] sm:$0xf]
    %v313 = vld [vmem:[#allocation5 + $0x18c] sm:$0xf]
    %v314 = vld [vmem:[#allocation5 + $0x190] sm:$0xf]
    %v315 = vld [vmem:[#allocation5 + $0x194] sm:$0xf]
    %v316 = vld [vmem:[#allocation5 + $0x198] sm:$0xf]
    %v317 = vld [vmem:[#allocation5 + $0x19c] sm:$0xf]
    %v318 = vld [vmem:[#allocation5 + $0x1a0] sm:$0xf]
    %v319 = vld [vmem:[#allocation5 + $0x1a4] sm:$0xf]
    %v320 = vld [vmem:[#allocation5 + $0x1a8] sm:$0xf]
    %v321 = vld [vmem:[#allocation5 + $0x1ac] sm:$0xf]
    %v322 = vld [vmem:[#allocation5 + $0x1b0] sm:$0xf]
    %v323 = vld [vmem:[#allocation5 + $0x1b4] sm:$0xf]
    %v324 = vld [vmem:[#allocation5 + $0x1b8] sm:$0xf]
    %v325 = vld [vmem:[#allocation5 + $0x1bc] sm:$0xf]
    %v326 = vld [vmem:[#allocation5 + $0x1c0] sm:$0xf]
    %v327 = vld [vmem:[#allocation5 + $0x1c4] sm:$0xf]
    %v328 = vld [vmem:[#allocation5 + $0x1c8] sm:$0xf]
    %v329 = vld [vmem:[#allocation5 + $0x1cc] sm:$0xf]
    %v330 = vld [vmem:[#allocation5 + $0x1d0] sm:$0xf]
    %v331 = vld [vmem:[#allocation5 + $0x1d4] sm:$0xf]
    %v332 = vld [vmem:[#allocation5 + $0x1d8] sm:$0xf]
    %v333 = vld [vmem:[#allocation5 + $0x1dc] sm:$0xf]
    %v334 = vld [vmem:[#allocation5 + $0x1e0] sm:$0xf]
    %v335 = vld [vmem:[#allocation5 + $0x1e4] sm:$0xf]
    %v336 = vld [vmem:[#allocation5 + $0x1e8] sm:$0xf]
    %v337 = vld [vmem:[#allocation5 + $0x1ec] sm:$0xf]
    %v338 = vld [vmem:[#allocation5 + $0x1f0] sm:$0xf]
    %v339 = vld [vmem:[#allocation5 + $0x1f4] sm:$0xf]
    %v340 = vld [vmem:[#allocation5 + $0x1f8] sm:$0xf]
    %v341 = vld [vmem:[#allocation5 + $0x1fc] sm:$0xf]
    %v343 = vlaneseq
    %v344 = vshrl.u32 %v343, 7
    %v345 = vsub.s32 0, %v344
    %v346 = vrot.slane %v143, %v345
    %v412 = vunpack.c.l.b16 %v150
    %v413 = vunpack.c.h.b16 %v150
    %v414 = vunpack.c.l.b16 %v151
    %v415 = vunpack.c.h.b16 %v151
    %v416 = vunpack.c.l.b16 %v152
    %v417 = vunpack.c.h.b16 %v152
    %v418 = vunpack.c.l.b16 %v153
    %v419 = vunpack.c.h.b16 %v153
    %v420 = vunpack.c.l.b16 %v154
    %v421 = vunpack.c.h.b16 %v154
    %v422 = vunpack.c.l.b16 %v155
    %v423 = vunpack.c.h.b16 %v155
    %v424 = vunpack.c.l.b16 %v156
    %v425 = vunpack.c.h.b16 %v156
    %v426 = vunpack.c.l.b16 %v157
    %v427 = vunpack.c.h.b16 %v157
    %v428 = vunpack.c.l.b16 %v158
    %v429 = vunpack.c.h.b16 %v158
    %v430 = vunpack.c.l.b16 %v159
    %v431 = vunpack.c.h.b16 %v159
    %v432 = vunpack.c.l.b16 %v160
    %v433 = vunpack.c.h.b16 %v160
    %v434 = vunpack.c.l.b16 %v161
    %v435 = vunpack.c.h.b16 %v161
    %v436 = vunpack.c.l.b16 %v162
    %v437 = vunpack.c.h.b16 %v162
    %v438 = vunpack.c.l.b16 %v163
    %v439 = vunpack.c.h.b16 %v163
    %v440 = vunpack.c.l.b16 %v164
    %v441 = vunpack.c.h.b16 %v164
    %v442 = vunpack.c.l.b16 %v165
    %v443 = vunpack.c.h.b16 %v165
    %v444 = vunpack.c.l.b16 %v166
    %v445 = vunpack.c.h.b16 %v166
    %v446 = vunpack.c.l.b16 %v167
    %v447 = vunpack.c.h.b16 %v167
    %v448 = vunpack.c.l.b16 %v168
    %v449 = vunpack.c.h.b16 %v168
    %v450 = vunpack.c.l.b16 %v169
    %v451 = vunpack.c.h.b16 %v169
    %v452 = vunpack.c.l.b16 %v170
    %v453 = vunpack.c.h.b16 %v170
    %v454 = vunpack.c.l.b16 %v171
    %v455 = vunpack.c.h.b16 %v171
    %v456 = vunpack.c.l.b16 %v172
    %v457 = vunpack.c.h.b16 %v172
    %v458 = vunpack.c.l.b16 %v173
    %v459 = vunpack.c.h.b16 %v173
    %v460 = vunpack.c.l.b16 %v174
    %v461 = vunpack.c.h.b16 %v174
    %v462 = vunpack.c.l.b16 %v175
    %v463 = vunpack.c.h.b16 %v175
    %v464 = vunpack.c.l.b16 %v176
    %v465 = vunpack.c.h.b16 %v176
    %v466 = vunpack.c.l.b16 %v177
    %v467 = vunpack.c.h.b16 %v177
    %v468 = vunpack.c.l.b16 %v178
    %v469 = vunpack.c.h.b16 %v178
    %v470 = vunpack.c.l.b16 %v179
    %v471 = vunpack.c.h.b16 %v179
    %v472 = vunpack.c.l.b16 %v180
    %v473 = vunpack.c.h.b16 %v180
    %v474 = vunpack.c.l.b16 %v181
    %v475 = vunpack.c.h.b16 %v181
    %v476 = vunpack.c.l.b16 %v182
    %v477 = vunpack.c.h.b16 %v182
    %v478 = vunpack.c.l.b16 %v183
    %v479 = vunpack.c.h.b16 %v183
    %v480 = vunpack.c.l.b16 %v184
    %v481 = vunpack.c.h.b16 %v184
    %v482 = vunpack.c.l.b16 %v185
    %v483 = vunpack.c.h.b16 %v185
    %v484 = vunpack.c.l.b16 %v186
    %v485 = vunpack.c.h.b16 %v186
    %v486 = vunpack.c.l.b16 %v187
    %v487 = vunpack.c.h.b16 %v187
    %v488 = vunpack.c.l.b16 %v188
    %v489 = vunpack.c.h.b16 %v188
    %v490 = vunpack.c.l.b16 %v189
    %v491 = vunpack.c.h.b16 %v189
    %v492 = vunpack.c.l.b16 %v190
    %v493 = vunpack.c.h.b16 %v190
    %v494 = vunpack.c.l.b16 %v191
    %v495 = vunpack.c.h.b16 %v191
    %v496 = vunpack.c.l.b16 %v192
    %v497 = vunpack.c.h.b16 %v192
    %v498 = vunpack.c.l.b16 %v193
    %v499 = vunpack.c.h.b16 %v193
    %v500 = vunpack.c.l.b16 %v194
    %v501 = vunpack.c.h.b16 %v194
    %v502 = vunpack.c.l.b16 %v195
    %v503 = vunpack.c.h.b16 %v195
    %v504 = vunpack.c.l.b16 %v196
    %v505 = vunpack.c.h.b16 %v196
    %v506 = vunpack.c.l.b16 %v197
    %v507 = vunpack.c.h.b16 %v197
    %v508 = vunpack.c.l.b16 %v198
    %v509 = vunpack.c.h.b16 %v198
    %v510 = vunpack.c.l.b16 %v199
    %v511 = vunpack.c.h.b16 %v199
    %v512 = vunpack.c.l.b16 %v200
    %v513 = vunpack.c.h.b16 %v200
    %v514 = vunpack.c.l.b16 %v201
    %v515 = vunpack.c.h.b16 %v201
    %v516 = vunpack.c.l.b16 %v202
    %v517 = vunpack.c.h.b16 %v202
    %v518 = vunpack.c.l.b16 %v203
    %v519 = vunpack.c.h.b16 %v203
    %v520 = vunpack.c.l.b16 %v204
    %v521 = vunpack.c.h.b16 %v204
    %v522 = vunpack.c.l.b16 %v205
    %v523 = vunpack.c.h.b16 %v205
    %v524 = vunpack.c.l.b16 %v206
    %v525 = vunpack.c.h.b16 %v206
    %v526 = vunpack.c.l.b16 %v207
    %v527 = vunpack.c.h.b16 %v207
    %v528 = vunpack.c.l.b16 %v208
    %v529 = vunpack.c.h.b16 %v208
    %v530 = vunpack.c.l.b16 %v209
    %v531 = vunpack.c.h.b16 %v209
    %v532 = vunpack.c.l.b16 %v210
    %v533 = vunpack.c.h.b16 %v210
    %v534 = vunpack.c.l.b16 %v211
    %v535 = vunpack.c.h.b16 %v211
    %v536 = vunpack.c.l.b16 %v212
    %v537 = vunpack.c.h.b16 %v212
    %v538 = vunpack.c.l.b16 %v213
    %v539 = vunpack.c.h.b16 %v213
    %v540 = vpack.c.b16 %v420, %v412
    %v541 = vpack.c.b16 %v421, %v413
    %v542 = vpack.c.b16 %v422, %v414
    %v543 = vpack.c.b16 %v423, %v415
    %v544 = vpack.c.b16 %v424, %v416
    %v545 = vpack.c.b16 %v425, %v417
    %v546 = vpack.c.b16 %v426, %v418
    %v547 = vpack.c.b16 %v427, %v419
    %v548 = vpack.c.b16 %v436, %v428
    %v549 = vpack.c.b16 %v437, %v429
    %v550 = vpack.c.b16 %v438, %v430
    %v551 = vpack.c.b16 %v439, %v431
    %v552 = vpack.c.b16 %v440, %v432
    %v553 = vpack.c.b16 %v441, %v433
    %v554 = vpack.c.b16 %v442, %v434
    %v555 = vpack.c.b16 %v443, %v435
    %v556 = vpack.c.b16 %v452, %v444
    %v557 = vpack.c.b16 %v453, %v445
    %v558 = vpack.c.b16 %v454, %v446
    %v559 = vpack.c.b16 %v455, %v447
    %v560 = vpack.c.b16 %v456, %v448
    %v561 = vpack.c.b16 %v457, %v449
    %v562 = vpack.c.b16 %v458, %v450
    %v563 = vpack.c.b16 %v459, %v451
    %v564 = vpack.c.b16 %v468, %v460
    %v565 = vpack.c.b16 %v469, %v461
    %v566 = vpack.c.b16 %v470, %v462
    %v567 = vpack.c.b16 %v471, %v463
    %v568 = vpack.c.b16 %v472, %v464
    %v569 = vpack.c.b16 %v473, %v465
    %v570 = vpack.c.b16 %v474, %v466
    %v571 = vpack.c.b16 %v475, %v467
    %v572 = vpack.c.b16 %v484, %v476
    %v573 = vpack.c.b16 %v485, %v477
    %v574 = vpack.c.b16 %v486, %v478
    %v575 = vpack.c.b16 %v487, %v479
    %v576 = vpack.c.b16 %v488, %v480
    %v577 = vpack.c.b16 %v489, %v481
    %v578 = vpack.c.b16 %v490, %v482
    %v579 = vpack.c.b16 %v491, %v483
    %v580 = vpack.c.b16 %v500, %v492
    %v581 = vpack.c.b16 %v501, %v493
    %v582 = vpack.c.b16 %v502, %v494
    %v583 = vpack.c.b16 %v503, %v495
    %v584 = vpack.c.b16 %v504, %v496
    %v585 = vpack.c.b16 %v505, %v497
    %v586 = vpack.c.b16 %v506, %v498
    %v587 = vpack.c.b16 %v507, %v499
    %v588 = vpack.c.b16 %v516, %v508
    %v589 = vpack.c.b16 %v517, %v509
    %v590 = vpack.c.b16 %v518, %v510
    %v591 = vpack.c.b16 %v519, %v511
    %v592 = vpack.c.b16 %v520, %v512
    %v593 = vpack.c.b16 %v521, %v513
    %v594 = vpack.c.b16 %v522, %v514
    %v595 = vpack.c.b16 %v523, %v515
    %v596 = vpack.c.b16 %v532, %v524
    %v597 = vpack.c.b16 %v533, %v525
    %v598 = vpack.c.b16 %v534, %v526
    %v599 = vpack.c.b16 %v535, %v527
    %v600 = vpack.c.b16 %v536, %v528
    %v601 = vpack.c.b16 %v537, %v529
    %v602 = vpack.c.b16 %v538, %v530
    %v603 = vpack.c.b16 %v539, %v531
    %v796 = vunpack.c.l.b16 %v214
    %v797 = vunpack.c.l.b16 %v215
    %v798 = vunpack.c.l.b16 %v216
    %v799 = vunpack.c.l.b16 %v217
    %v800 = vunpack.c.l.b16 %v218
    %v801 = vunpack.c.l.b16 %v219
    %v802 = vunpack.c.l.b16 %v220
    %v803 = vunpack.c.l.b16 %v221
    %v804 = vunpack.c.l.b16 %v222
    %v805 = vunpack.c.l.b16 %v223
    %v806 = vunpack.c.l.b16 %v224
    %v807 = vunpack.c.l.b16 %v225
    %v808 = vunpack.c.l.b16 %v226
    %v809 = vunpack.c.l.b16 %v227
    %v810 = vunpack.c.l.b16 %v228
    %v811 = vunpack.c.l.b16 %v229
    %v812 = vunpack.c.l.b16 %v230
    %v813 = vunpack.c.l.b16 %v231
    %v814 = vunpack.c.l.b16 %v232
    %v815 = vunpack.c.l.b16 %v233
    %v816 = vunpack.c.l.b16 %v234
    %v817 = vunpack.c.l.b16 %v235
    %v818 = vunpack.c.l.b16 %v236
    %v819 = vunpack.c.l.b16 %v237
    %v820 = vunpack.c.l.b16 %v238
    %v821 = vunpack.c.l.b16 %v239
    %v822 = vunpack.c.l.b16 %v240
    %v823 = vunpack.c.l.b16 %v241
    %v824 = vunpack.c.l.b16 %v242
    %v825 = vunpack.c.l.b16 %v243
    %v826 = vunpack.c.l.b16 %v244
    %v827 = vunpack.c.l.b16 %v245
    %v828 = vunpack.c.l.b16 %v246
    %v829 = vunpack.c.l.b16 %v247
    %v830 = vunpack.c.l.b16 %v248
    %v831 = vunpack.c.l.b16 %v249
    %v832 = vunpack.c.l.b16 %v250
    %v833 = vunpack.c.l.b16 %v251
    %v834 = vunpack.c.l.b16 %v252
    %v835 = vunpack.c.l.b16 %v253
    %v836 = vunpack.c.l.b16 %v254
    %v837 = vunpack.c.l.b16 %v255
    %v838 = vunpack.c.l.b16 %v256
    %v839 = vunpack.c.l.b16 %v257
    %v840 = vunpack.c.l.b16 %v258
    %v841 = vunpack.c.l.b16 %v259
    %v842 = vunpack.c.l.b16 %v260
    %v843 = vunpack.c.l.b16 %v261
    %v844 = vunpack.c.l.b16 %v262
    %v845 = vunpack.c.l.b16 %v263
    %v846 = vunpack.c.l.b16 %v264
    %v847 = vunpack.c.l.b16 %v265
    %v848 = vunpack.c.l.b16 %v266
    %v849 = vunpack.c.l.b16 %v267
    %v850 = vunpack.c.l.b16 %v268
    %v851 = vunpack.c.l.b16 %v269
    %v852 = vunpack.c.l.b16 %v270
    %v853 = vunpack.c.l.b16 %v271
    %v854 = vunpack.c.l.b16 %v272
    %v855 = vunpack.c.l.b16 %v273
    %v856 = vunpack.c.l.b16 %v274
    %v857 = vunpack.c.l.b16 %v275
    %v858 = vunpack.c.l.b16 %v276
    %v859 = vunpack.c.l.b16 %v277
    %v860 = vunpack.c.l.b16 %v278
    %v861 = vunpack.c.l.b16 %v279
    %v862 = vunpack.c.l.b16 %v280
    %v863 = vunpack.c.l.b16 %v281
    %v864 = vunpack.c.l.b16 %v282
    %v865 = vunpack.c.l.b16 %v283
    %v866 = vunpack.c.l.b16 %v284
    %v867 = vunpack.c.l.b16 %v285
    %v868 = vunpack.c.l.b16 %v286
    %v869 = vunpack.c.l.b16 %v287
    %v870 = vunpack.c.l.b16 %v288
    %v871 = vunpack.c.l.b16 %v289
    %v872 = vunpack.c.l.b16 %v290
    %v873 = vunpack.c.l.b16 %v291
    %v874 = vunpack.c.l.b16 %v292
    %v875 = vunpack.c.l.b16 %v293
    %v876 = vunpack.c.l.b16 %v294
    %v877 = vunpack.c.l.b16 %v295
    %v878 = vunpack.c.l.b16 %v296
    %v879 = vunpack.c.l.b16 %v297
    %v880 = vunpack.c.l.b16 %v298
    %v881 = vunpack.c.l.b16 %v299
    %v882 = vunpack.c.l.b16 %v300
    %v883 = vunpack.c.l.b16 %v301
    %v884 = vunpack.c.l.b16 %v302
    %v885 = vunpack.c.l.b16 %v303
    %v886 = vunpack.c.l.b16 %v304
    %v887 = vunpack.c.l.b16 %v305
    %v888 = vunpack.c.l.b16 %v306
    %v889 = vunpack.c.l.b16 %v307
    %v890 = vunpack.c.l.b16 %v308
    %v891 = vunpack.c.l.b16 %v309
    %v892 = vunpack.c.l.b16 %v310
    %v893 = vunpack.c.l.b16 %v311
    %v894 = vunpack.c.l.b16 %v312
    %v895 = vunpack.c.l.b16 %v313
    %v896 = vunpack.c.l.b16 %v314
    %v897 = vunpack.c.l.b16 %v315
    %v898 = vunpack.c.l.b16 %v316
    %v899 = vunpack.c.l.b16 %v317
    %v900 = vunpack.c.l.b16 %v318
    %v901 = vunpack.c.l.b16 %v319
    %v902 = vunpack.c.l.b16 %v320
    %v903 = vunpack.c.l.b16 %v321
    %v904 = vunpack.c.l.b16 %v322
    %v905 = vunpack.c.l.b16 %v323
    %v906 = vunpack.c.l.b16 %v324
    %v907 = vunpack.c.l.b16 %v325
    %v908 = vunpack.c.l.b16 %v326
    %v909 = vunpack.c.l.b16 %v327
    %v910 = vunpack.c.l.b16 %v328
    %v911 = vunpack.c.l.b16 %v329
    %v912 = vunpack.c.l.b16 %v330
    %v913 = vunpack.c.l.b16 %v331
    %v914 = vunpack.c.l.b16 %v332
    %v915 = vunpack.c.l.b16 %v333
    %v916 = vunpack.c.l.b16 %v334
    %v917 = vunpack.c.l.b16 %v335
    %v918 = vunpack.c.l.b16 %v336
    %v919 = vunpack.c.l.b16 %v337
    %v920 = vunpack.c.l.b16 %v338
    %v921 = vunpack.c.l.b16 %v339
    %v922 = vunpack.c.l.b16 %v340
    %v923 = vunpack.c.l.b16 %v341
    %v924 = vpack.c.b16 %v797, %v796
    %v925 = vpack.c.b16 %v799, %v798
    %v926 = vpack.c.b16 %v801, %v800
    %v927 = vpack.c.b16 %v803, %v802
    %v928 = vpack.c.b16 %v805, %v804
    %v929 = vpack.c.b16 %v807, %v806
    %v930 = vpack.c.b16 %v809, %v808
    %v931 = vpack.c.b16 %v811, %v810
    %v932 = vpack.c.b16 %v813, %v812
    %v933 = vpack.c.b16 %v815, %v814
    %v934 = vpack.c.b16 %v817, %v816
    %v935 = vpack.c.b16 %v819, %v818
    %v936 = vpack.c.b16 %v821, %v820
    %v937 = vpack.c.b16 %v823, %v822
    %v938 = vpack.c.b16 %v825, %v824
    %v939 = vpack.c.b16 %v827, %v826
    %v940 = vpack.c.b16 %v829, %v828
    %v941 = vpack.c.b16 %v831, %v830
    %v942 = vpack.c.b16 %v833, %v832
    %v943 = vpack.c.b16 %v835, %v834
    %v944 = vpack.c.b16 %v837, %v836
    %v945 = vpack.c.b16 %v839, %v838
    %v946 = vpack.c.b16 %v841, %v840
    %v947 = vpack.c.b16 %v843, %v842
    %v948 = vpack.c.b16 %v845, %v844
    %v949 = vpack.c.b16 %v847, %v846
    %v950 = vpack.c.b16 %v849, %v848
    %v951 = vpack.c.b16 %v851, %v850
    %v952 = vpack.c.b16 %v853, %v852
    %v953 = vpack.c.b16 %v855, %v854
    %v954 = vpack.c.b16 %v857, %v856
    %v955 = vpack.c.b16 %v859, %v858
    %v956 = vpack.c.b16 %v861, %v860
    %v957 = vpack.c.b16 %v863, %v862
    %v958 = vpack.c.b16 %v865, %v864
    %v959 = vpack.c.b16 %v867, %v866
    %v960 = vpack.c.b16 %v869, %v868
    %v961 = vpack.c.b16 %v871, %v870
    %v962 = vpack.c.b16 %v873, %v872
    %v963 = vpack.c.b16 %v875, %v874
    %v964 = vpack.c.b16 %v877, %v876
    %v965 = vpack.c.b16 %v879, %v878
    %v966 = vpack.c.b16 %v881, %v880
    %v967 = vpack.c.b16 %v883, %v882
    %v968 = vpack.c.b16 %v885, %v884
    %v969 = vpack.c.b16 %v887, %v886
    %v970 = vpack.c.b16 %v889, %v888
    %v971 = vpack.c.b16 %v891, %v890
    %v972 = vpack.c.b16 %v893, %v892
    %v973 = vpack.c.b16 %v895, %v894
    %v974 = vpack.c.b16 %v897, %v896
    %v975 = vpack.c.b16 %v899, %v898
    %v976 = vpack.c.b16 %v901, %v900
    %v977 = vpack.c.b16 %v903, %v902
    %v978 = vpack.c.b16 %v905, %v904
    %v979 = vpack.c.b16 %v907, %v906
    %v980 = vpack.c.b16 %v909, %v908
    %v981 = vpack.c.b16 %v911, %v910
    %v982 = vpack.c.b16 %v913, %v912
    %v983 = vpack.c.b16 %v915, %v914
    %v984 = vpack.c.b16 %v917, %v916
    %v985 = vpack.c.b16 %v919, %v918
    %v986 = vpack.c.b16 %v921, %v920
    %v987 = vpack.c.b16 %v923, %v922
    %1052 = vmatprep.subr.bf16.mxu0 0
    %1053 = vmatpush1.bf16.msra.mxu0 %v924
    %1054 = vmatprep.subr.bf16.mxu0 0
    %1055 = vmatpush1.bf16.msra.mxu0 %v925
    %1056 = vmatprep.subr.bf16.mxu0 0
    %1057 = vmatpush1.bf16.msra.mxu0 %v926
    %1058 = vmatprep.subr.bf16.mxu0 0
    %1059 = vmatpush1.bf16.msra.mxu0 %v927
    %1060 = vmatprep.subr.bf16.mxu0 0
    %1061 = vmatpush1.bf16.msra.mxu0 %v928
    %1062 = vmatprep.subr.bf16.mxu0 0
    %1063 = vmatpush1.bf16.msra.mxu0 %v929
    %1064 = vmatprep.subr.bf16.mxu0 0
    %1065 = vmatpush1.bf16.msra.mxu0 %v930
    %1066 = vmatprep.subr.bf16.mxu0 0
    %1067 = vmatpush1.bf16.msra.mxu0 %v931
    %1068 = vmatprep.subr.bf16.mxu0 0
    %1069 = vmatpush1.bf16.msra.mxu0 %v932
    %1070 = vmatprep.subr.bf16.mxu0 0
    %1071 = vmatpush1.bf16.msra.mxu0 %v933
    %1072 = vmatprep.subr.bf16.mxu0 0
    %1073 = vmatpush1.bf16.msra.mxu0 %v934
    %1074 = vmatprep.subr.bf16.mxu0 0
    %1075 = vmatpush1.bf16.msra.mxu0 %v935
    %1076 = vmatprep.subr.bf16.mxu0 0
    %1077 = vmatpush1.bf16.msra.mxu0 %v936
    %1078 = vmatprep.subr.bf16.mxu0 0
    %1079 = vmatpush1.bf16.msra.mxu0 %v937
    %1080 = vmatprep.subr.bf16.mxu0 0
    %1081 = vmatpush1.bf16.msra.mxu0 %v938
    %1082 = vmatprep.subr.bf16.mxu0 0
    %1083 = vmatpush1.bf16.msra.mxu0 %v939
    %1084 = vmatprep.mubr.bf16.mxu0 %v541
    %1085 = vmatmul.mubr.bf16.gmra.mrb[0].mxu0 %v540
    %v1086 = vpop.f32.mrb[0].mxu0
    %v1087 = vadd.f32 %v346, %v1086
    %v1088 = vpop.f32.mrb[0].mxu0
    %v1089 = vpop.f32.mrb[0].mxu0
    %v1090 = vadd.f32 %v346, %v1089
    %v1091 = vpop.f32.mrb[0].mxu0
    %1092 = vmatprep.mubr.bf16.mxu0 %v549
    %1093 = vmatmul.mubr.bf16.gmra.mrb[0].mxu0 %v548
    %v1094 = vpop.f32.mrb[0].mxu0
    %v1095 = vadd.f32 %v346, %v1094
    %v1096 = vpop.f32.mrb[0].mxu0
    %v1097 = vpop.f32.mrb[0].mxu0
    %v1098 = vadd.f32 %v346, %v1097
    %v1099 = vpop.f32.mrb[0].mxu0
    %1100 = vmatprep.mubr.bf16.mxu0 %v557
    %1101 = vmatmul.mubr.bf16.gmra.mrb[0].mxu0 %v556
    %v1102 = vpop.f32.mrb[0].mxu0
    %v1103 = vadd.f32 %v346, %v1102
    %v1104 = vpop.f32.mrb[0].mxu0
    %v1105 = vpop.f32.mrb[0].mxu0
    %v1106 = vadd.f32 %v346, %v1105
    %v1107 = vpop.f32.mrb[0].mxu0
    %1108 = vmatprep.mubr.bf16.mxu0 %v565
    %1109 = vmatmul.mubr.bf16.gmra.mrb[0].mxu0 %v564
    %v1110 = vpop.f32.mrb[0].mxu0
    %v1111 = vadd.f32 %v346, %v1110
    %v1112 = vpop.f32.mrb[0].mxu0
    %v1113 = vpop.f32.mrb[0].mxu0
    %v1114 = vadd.f32 %v346, %v1113
    %v1115 = vpop.f32.mrb[0].mxu0
    %1116 = vmatprep.mubr.bf16.mxu0 %v573
    %1117 = vmatmul.mubr.bf16.gmra.mrb[0].mxu0 %v572
    %v1118 = vpop.f32.mrb[0].mxu0
    %v1119 = vadd.f32 %v346, %v1118
    %v1120 = vpop.f32.mrb[0].mxu0
    %v1121 = vpop.f32.mrb[0].mxu0
    %v1122 = vadd.f32 %v346, %v1121
    %v1123 = vpop.f32.mrb[0].mxu0
    %1124 = vmatprep.mubr.bf16.mxu0 %v581
    %1125 = vmatmul.mubr.bf16.gmra.mrb[0].mxu0 %v580
    %v1126 = vpop.f32.mrb[0].mxu0
    %v1127 = vadd.f32 %v346, %v1126
    %v1128 = vpop.f32.mrb[0].mxu0
    %v1129 = vpop.f32.mrb[0].mxu0
    %v1130 = vadd.f32 %v346, %v1129
    %v1131 = vpop.f32.mrb[0].mxu0
    %1132 = vmatprep.mubr.bf16.mxu0 %v589
    %1133 = vmatmul.mubr.bf16.gmra.mrb[0].mxu0 %v588
    %v1134 = vpop.f32.mrb[0].mxu0
    %v1135 = vadd.f32 %v346, %v1134
    %v1136 = vpop.f32.mrb[0].mxu0
    %v1137 = vpop.f32.mrb[0].mxu0
    %v1138 = vadd.f32 %v346, %v1137
    %v1139 = vpop.f32.mrb[0].mxu0
    %1140 = vmatprep.mubr.bf16.mxu0 %v597
    %1141 = vmatmul.mubr.bf16.gmra.mrb[0].mxu0 %v596
    %v1142 = vpop.f32.mrb[0].mxu0
    %v1143 = vadd.f32 %v346, %v1142
    %v1144 = vpop.f32.mrb[0].mxu0
    %v1145 = vpop.f32.mrb[0].mxu0
    %v1146 = vadd.f32 %v346, %v1145
    %v1147 = vpop.f32.mrb[0].mxu0
    %1148 = vdwg.mxu0
    %1149 = vmatprep.subr.bf16.mxu0 0
    %1150 = vmatpush1.bf16.msra.mxu0 %v940
    %1151 = vmatprep.subr.bf16.mxu0 0
    %1152 = vmatpush1.bf16.msra.mxu0 %v941
    %1153 = vmatprep.subr.bf16.mxu0 0
    %1154 = vmatpush1.bf16.msra.mxu0 %v942
    %1155 = vmatprep.subr.bf16.mxu0 0
    %1156 = vmatpush1.bf16.msra.mxu0 %v943
    %1157 = vmatprep.subr.bf16.mxu0 0
    %1158 = vmatpush1.bf16.msra.mxu0 %v944
    %1159 = vmatprep.subr.bf16.mxu0 0
    %1160 = vmatpush1.bf16.msra.mxu0 %v945
    %1161 = vmatprep.subr.bf16.mxu0 0
    %1162 = vmatpush1.bf16.msra.mxu0 %v946
    %1163 = vmatprep.subr.bf16.mxu0 0
    %1164 = vmatpush1.bf16.msra.mxu0 %v947
    %1165 = vmatprep.subr.bf16.mxu0 0
    %1166 = vmatpush1.bf16.msra.mxu0 %v948
    %1167 = vmatprep.subr.bf16.mxu0 0
    %1168 = vmatpush1.bf16.msra.mxu0 %v949
    %1169 = vmatprep.subr.bf16.mxu0 0
    %1170 = vmatpush1.bf16.msra.mxu0 %v950
    %1171 = vmatprep.subr.bf16.mxu0 0
    %1172 = vmatpush1.bf16.msra.mxu0 %v951
    %1173 = vmatprep.subr.bf16.mxu0 0
    %1174 = vmatpush1.bf16.msra.mxu0 %v952
    %1175 = vmatprep.subr.bf16.mxu0 0
    %1176 = vmatpush1.bf16.msra.mxu0 %v953
    %1177 = vmatprep.subr.bf16.mxu0 0
    %1178 = vmatpush1.bf16.msra.mxu0 %v954
    %1179 = vmatprep.subr.bf16.mxu0 0
    %1180 = vmatpush1.bf16.msra.mxu0 %v955
    %1181 = vmatprep.mubr.bf16.mxu0 %v543
    %1182 = vmatmul.mubr.bf16.gmra.mrb[0].mxu0 %v542
    %v1183 = vpop.f32.mrb[0].mxu0
    %v1184 = vadd.f32 %v1087, %v1183
    %v1185 = vpop.f32.mrb[0].mxu0
    %v1186 = vpop.f32.mrb[0].mxu0
    %v1187 = vadd.f32 %v1090, %v1186
    %v1188 = vpop.f32.mrb[0].mxu0
    %1189 = vmatprep.mubr.bf16.mxu0 %v551
    %1190 = vmatmul.mubr.bf16.gmra.mrb[0].mxu0 %v550
    %v1191 = vpop.f32.mrb[0].mxu0
    %v1192 = vadd.f32 %v1095, %v1191
    %v1193 = vpop.f32.mrb[0].mxu0
    %v1194 = vpop.f32.mrb[0].mxu0
    %v1195 = vadd.f32 %v1098, %v1194
    %v1196 = vpop.f32.mrb[0].mxu0
    %1197 = vmatprep.mubr.bf16.mxu0 %v559
    %1198 = vmatmul.mubr.bf16.gmra.mrb[0].mxu0 %v558
    %v1199 = vpop.f32.mrb[0].mxu0
    %v1200 = vadd.f32 %v1103, %v1199
    %v1201 = vpop.f32.mrb[0].mxu0
    %v1202 = vpop.f32.mrb[0].mxu0
    %v1203 = vadd.f32 %v1106, %v1202
    %v1204 = vpop.f32.mrb[0].mxu0
    %1205 = vmatprep.mubr.bf16.mxu0 %v567
    %1206 = vmatmul.mubr.bf16.gmra.mrb[0].mxu0 %v566
    %v1207 = vpop.f32.mrb[0].mxu0
    %v1208 = vadd.f32 %v1111, %v1207
    %v1209 = vpop.f32.mrb[0].mxu0
    %v1210 = vpop.f32.mrb[0].mxu0
    %v1211 = vadd.f32 %v1114, %v1210
    %v1212 = vpop.f32.mrb[0].mxu0
    %1213 = vmatprep.mubr.bf16.mxu0 %v575
    %1214 = vmatmul.mubr.bf16.gmra.mrb[0].mxu0 %v574
    %v1215 = vpop.f32.mrb[0].mxu0
    %v1216 = vadd.f32 %v1119, %v1215
    %v1217 = vpop.f32.mrb[0].mxu0
    %v1218 = vpop.f32.mrb[0].mxu0
    %v1219 = vadd.f32 %v1122, %v1218
    %v1220 = vpop.f32.mrb[0].mxu0
    %1221 = vmatprep.mubr.bf16.mxu0 %v583
    %1222 = vmatmul.mubr.bf16.gmra.mrb[0].mxu0 %v582
    %v1223 = vpop.f32.mrb[0].mxu0
    %v1224 = vadd.f32 %v1127, %v1223
    %v1225 = vpop.f32.mrb[0].mxu0
    %v1226 = vpop.f32.mrb[0].mxu0
    %v1227 = vadd.f32 %v1130, %v1226
    %v1228 = vpop.f32.mrb[0].mxu0
    %1229 = vmatprep.mubr.bf16.mxu0 %v591
    %1230 = vmatmul.mubr.bf16.gmra.mrb[0].mxu0 %v590
    %v1231 = vpop.f32.mrb[0].mxu0
    %v1232 = vadd.f32 %v1135, %v1231
    %v1233 = vpop.f32.mrb[0].mxu0
    %v1234 = vpop.f32.mrb[0].mxu0
    %v1235 = vadd.f32 %v1138, %v1234
    %v1236 = vpop.f32.mrb[0].mxu0
    %1237 = vmatprep.mubr.bf16.mxu0 %v599
    %1238 = vmatmul.mubr.bf16.gmra.mrb[0].mxu0 %v598
    %v1239 = vpop.f32.mrb[0].mxu0
    %v1240 = vadd.f32 %v1143, %v1239
    %v1241 = vpop.f32.mrb[0].mxu0
    %v1242 = vpop.f32.mrb[0].mxu0
    %v1243 = vadd.f32 %v1146, %v1242
    %v1244 = vpop.f32.mrb[0].mxu0
    %1245 = vdwg.mxu0
    %1246 = vmatprep.subr.bf16.mxu0 0
    %1247 = vmatpush1.bf16.msra.mxu0 %v956
    %1248 = vmatprep.subr.bf16.mxu0 0
    %1249 = vmatpush1.bf16.msra.mxu0 %v957
    %1250 = vmatprep.subr.bf16.mxu0 0
    %1251 = vmatpush1.bf16.msra.mxu0 %v958
    %1252 = vmatprep.subr.bf16.mxu0 0
    %1253 = vmatpush1.bf16.msra.mxu0 %v959
    %1254 = vmatprep.subr.bf16.mxu0 0
    %1255 = vmatpush1.bf16.msra.mxu0 %v960
    %1256 = vmatprep.subr.bf16.mxu0 0
    %1257 = vmatpush1.bf16.msra.mxu0 %v961
    %1258 = vmatprep.subr.bf16.mxu0 0
    %1259 = vmatpush1.bf16.msra.mxu0 %v962
    %1260 = vmatprep.subr.bf16.mxu0 0
    %1261 = vmatpush1.bf16.msra.mxu0 %v963
    %1262 = vmatprep.subr.bf16.mxu0 0
    %1263 = vmatpush1.bf16.msra.mxu0 %v964
    %1264 = vmatprep.subr.bf16.mxu0 0
    %1265 = vmatpush1.bf16.msra.mxu0 %v965
    %1266 = vmatprep.subr.bf16.mxu0 0
    %1267 = vmatpush1.bf16.msra.mxu0 %v966
    %1268 = vmatprep.subr.bf16.mxu0 0
    %1269 = vmatpush1.bf16.msra.mxu0 %v967
    %1270 = vmatprep.subr.bf16.mxu0 0
    %1271 = vmatpush1.bf16.msra.mxu0 %v968
    %1272 = vmatprep.subr.bf16.mxu0 0
    %1273 = vmatpush1.bf16.msra.mxu0 %v969
    %1274 = vmatprep.subr.bf16.mxu0 0
    %1275 = vmatpush1.bf16.msra.mxu0 %v970
    %1276 = vmatprep.subr.bf16.mxu0 0
    %1277 = vmatpush1.bf16.msra.mxu0 %v971
    %1278 = vmatprep.mubr.bf16.mxu0 %v545
    %1279 = vmatmul.mubr.bf16.gmra.mrb[0].mxu0 %v544
    %v1280 = vpop.f32.mrb[0].mxu0
    %v1281 = vadd.f32 %v1184, %v1280
    %v1282 = vpop.f32.mrb[0].mxu0
    %v1283 = vpop.f32.mrb[0].mxu0
    %v1284 = vadd.f32 %v1187, %v1283
    %v1285 = vpop.f32.mrb[0].mxu0
    %1286 = vmatprep.mubr.bf16.mxu0 %v553
    %1287 = vmatmul.mubr.bf16.gmra.mrb[0].mxu0 %v552
    %v1288 = vpop.f32.mrb[0].mxu0
    %v1289 = vadd.f32 %v1192, %v1288
    %v1290 = vpop.f32.mrb[0].mxu0
    %v1291 = vpop.f32.mrb[0].mxu0
    %v1292 = vadd.f32 %v1195, %v1291
    %v1293 = vpop.f32.mrb[0].mxu0
    %1294 = vmatprep.mubr.bf16.mxu0 %v561
    %1295 = vmatmul.mubr.bf16.gmra.mrb[0].mxu0 %v560
    %v1296 = vpop.f32.mrb[0].mxu0
    %v1297 = vadd.f32 %v1200, %v1296
    %v1298 = vpop.f32.mrb[0].mxu0
    %v1299 = vpop.f32.mrb[0].mxu0
    %v1300 = vadd.f32 %v1203, %v1299
    %v1301 = vpop.f32.mrb[0].mxu0
    %1302 = vmatprep.mubr.bf16.mxu0 %v569
    %1303 = vmatmul.mubr.bf16.gmra.mrb[0].mxu0 %v568
    %v1304 = vpop.f32.mrb[0].mxu0
    %v1305 = vadd.f32 %v1208, %v1304
    %v1306 = vpop.f32.mrb[0].mxu0
    %v1307 = vpop.f32.mrb[0].mxu0
    %v1308 = vadd.f32 %v1211, %v1307
    %v1309 = vpop.f32.mrb[0].mxu0
    %1310 = vmatprep.mubr.bf16.mxu0 %v577
    %1311 = vmatmul.mubr.bf16.gmra.mrb[0].mxu0 %v576
    %v1312 = vpop.f32.mrb[0].mxu0
    %v1313 = vadd.f32 %v1216, %v1312
    %v1314 = vpop.f32.mrb[0].mxu0
    %v1315 = vpop.f32.mrb[0].mxu0
    %v1316 = vadd.f32 %v1219, %v1315
    %v1317 = vpop.f32.mrb[0].mxu0
    %1318 = vmatprep.mubr.bf16.mxu0 %v585
    %1319 = vmatmul.mubr.bf16.gmra.mrb[0].mxu0 %v584
    %v1320 = vpop.f32.mrb[0].mxu0
    %v1321 = vadd.f32 %v1224, %v1320
    %v1322 = vpop.f32.mrb[0].mxu0
    %v1323 = vpop.f32.mrb[0].mxu0
    %v1324 = vadd.f32 %v1227, %v1323
    %v1325 = vpop.f32.mrb[0].mxu0
    %1326 = vmatprep.mubr.bf16.mxu0 %v593
    %1327 = vmatmul.mubr.bf16.gmra.mrb[0].mxu0 %v592
    %v1328 = vpop.f32.mrb[0].mxu0
    %v1329 = vadd.f32 %v1232, %v1328
    %v1330 = vpop.f32.mrb[0].mxu0
    %v1331 = vpop.f32.mrb[0].mxu0
    %v1332 = vadd.f32 %v1235, %v1331
    %v1333 = vpop.f32.mrb[0].mxu0
    %1334 = vmatprep.mubr.bf16.mxu0 %v601
    %1335 = vmatmul.mubr.bf16.gmra.mrb[0].mxu0 %v600
    %v1336 = vpop.f32.mrb[0].mxu0
    %v1337 = vadd.f32 %v1240, %v1336
    %v1338 = vpop.f32.mrb[0].mxu0
    %v1339 = vpop.f32.mrb[0].mxu0
    %v1340 = vadd.f32 %v1243, %v1339
    %v1341 = vpop.f32.mrb[0].mxu0
    %1342 = vdwg.mxu0
    %1343 = vmatprep.subr.bf16.mxu0 0
    %1344 = vmatpush1.bf16.msra.mxu0 %v972
    %1345 = vmatprep.subr.bf16.mxu0 0
    %1346 = vmatpush1.bf16.msra.mxu0 %v973
    %1347 = vmatprep.subr.bf16.mxu0 0
    %1348 = vmatpush1.bf16.msra.mxu0 %v974
    %1349 = vmatprep.subr.bf16.mxu0 0
    %1350 = vmatpush1.bf16.msra.mxu0 %v975
    %1351 = vmatprep.subr.bf16.mxu0 0
    %1352 = vmatpush1.bf16.msra.mxu0 %v976
    %1353 = vmatprep.subr.bf16.mxu0 0
    %1354 = vmatpush1.bf16.msra.mxu0 %v977
    %1355 = vmatprep.subr.bf16.mxu0 0
    %1356 = vmatpush1.bf16.msra.mxu0 %v978
    %1357 = vmatprep.subr.bf16.mxu0 0
    %1358 = vmatpush1.bf16.msra.mxu0 %v979
    %1359 = vmatprep.subr.bf16.mxu0 0
    %1360 = vmatpush1.bf16.msra.mxu0 %v980
    %1361 = vmatprep.subr.bf16.mxu0 0
    %1362 = vmatpush1.bf16.msra.mxu0 %v981
    %1363 = vmatprep.subr.bf16.mxu0 0
    %1364 = vmatpush1.bf16.msra.mxu0 %v982
    %1365 = vmatprep.subr.bf16.mxu0 0
    %1366 = vmatpush1.bf16.msra.mxu0 %v983
    %1367 = vmatprep.subr.bf16.mxu0 0
    %1368 = vmatpush1.bf16.msra.mxu0 %v984
    %1369 = vmatprep.subr.bf16.mxu0 0
    %1370 = vmatpush1.bf16.msra.mxu0 %v985
    %1371 = vmatprep.subr.bf16.mxu0 0
    %1372 = vmatpush1.bf16.msra.mxu0 %v986
    %1373 = vmatprep.subr.bf16.mxu0 0
    %1374 = vmatpush1.bf16.msra.mxu0 %v987
    %1375 = vmatprep.mubr.bf16.mxu0 %v547
    %1376 = vmatmul.mubr.bf16.gmra.mrb[0].mxu0 %v546
    %v1377 = vpop.f32.mrb[0].mxu0
    %v1378 = vadd.f32 %v1281, %v1377
    %v1379 = vpop.f32.mrb[0].mxu0
    %v1380 = vpop.f32.mrb[0].mxu0
    %v1381 = vadd.f32 %v1284, %v1380
    %v1382 = vpop.f32.mrb[0].mxu0
    %1383 = vmatprep.mubr.bf16.mxu0 %v555
    %1384 = vmatmul.mubr.bf16.gmra.mrb[0].mxu0 %v554
    %v1385 = vpop.f32.mrb[0].mxu0
    %v1386 = vadd.f32 %v1289, %v1385
    %v1387 = vpop.f32.mrb[0].mxu0
    %v1388 = vpop.f32.mrb[0].mxu0
    %v1389 = vadd.f32 %v1292, %v1388
    %v1390 = vpop.f32.mrb[0].mxu0
    %1391 = vmatprep.mubr.bf16.mxu0 %v563
    %1392 = vmatmul.mubr.bf16.gmra.mrb[0].mxu0 %v562
    %v1393 = vpop.f32.mrb[0].mxu0
    %v1394 = vadd.f32 %v1297, %v1393
    %v1395 = vpop.f32.mrb[0].mxu0
    %v1396 = vpop.f32.mrb[0].mxu0
    %v1397 = vadd.f32 %v1300, %v1396
    %v1398 = vpop.f32.mrb[0].mxu0
    %1399 = vmatprep.mubr.bf16.mxu0 %v571
    %1400 = vmatmul.mubr.bf16.gmra.mrb[0].mxu0 %v570
    %v1401 = vpop.f32.mrb[0].mxu0
    %v1402 = vadd.f32 %v1305, %v1401
    %v1403 = vpop.f32.mrb[0].mxu0
    %v1404 = vpop.f32.mrb[0].mxu0
    %v1405 = vadd.f32 %v1308, %v1404
    %v1406 = vpop.f32.mrb[0].mxu0
    %1407 = vmatprep.mubr.bf16.mxu0 %v579
    %1408 = vmatmul.mubr.bf16.gmra.mrb[0].mxu0 %v578
    %v1409 = vpop.f32.mrb[0].mxu0
    %v1410 = vadd.f32 %v1313, %v1409
    %v1411 = vpop.f32.mrb[0].mxu0
    %v1412 = vpop.f32.mrb[0].mxu0
    %v1413 = vadd.f32 %v1316, %v1412
    %v1414 = vpop.f32.mrb[0].mxu0
    %1415 = vmatprep.mubr.bf16.mxu0 %v587
    %1416 = vmatmul.mubr.bf16.gmra.mrb[0].mxu0 %v586
    %v1417 = vpop.f32.mrb[0].mxu0
    %v1418 = vadd.f32 %v1321, %v1417
    %v1419 = vpop.f32.mrb[0].mxu0
    %v1420 = vpop.f32.mrb[0].mxu0
    %v1421 = vadd.f32 %v1324, %v1420
    %v1422 = vpop.f32.mrb[0].mxu0
    %1423 = vmatprep.mubr.bf16.mxu0 %v595
    %1424 = vmatmul.mubr.bf16.gmra.mrb[0].mxu0 %v594
    %v1425 = vpop.f32.mrb[0].mxu0
    %v1426 = vadd.f32 %v1329, %v1425
    %v1427 = vpop.f32.mrb[0].mxu0
    %v1428 = vpop.f32.mrb[0].mxu0
    %v1429 = vadd.f32 %v1332, %v1428
    %v1430 = vpop.f32.mrb[0].mxu0
    %1431 = vmatprep.mubr.bf16.mxu0 %v603
    %1432 = vmatmul.mubr.bf16.gmra.mrb[0].mxu0 %v602
    %v1433 = vpop.f32.mrb[0].mxu0
    %v1434 = vadd.f32 %v1337, %v1433
    %v1435 = vpop.f32.mrb[0].mxu0
    %v1436 = vpop.f32.mrb[0].mxu0
    %v1437 = vadd.f32 %v1340, %v1436
    %v1438 = vpop.f32.mrb[0].mxu0
    %1439 = vdwg.mxu0
    %v1440 = vmax.f32 %v1378, 0.0
    %v1441 = vmax.f32 %v1381, 0.0
    %v1442 = vmax.f32 %v1386, 0.0
    %v1443 = vmax.f32 %v1389, 0.0
    %v1444 = vmax.f32 %v1394, 0.0
    %v1445 = vmax.f32 %v1397, 0.0
    %v1446 = vmax.f32 %v1402, 0.0
    %v1447 = vmax.f32 %v1405, 0.0
    %v1448 = vmax.f32 %v1410, 0.0
    %v1449 = vmax.f32 %v1413, 0.0
    %v1450 = vmax.f32 %v1418, 0.0
    %v1451 = vmax.f32 %v1421, 0.0
    %v1452 = vmax.f32 %v1426, 0.0
    %v1453 = vmax.f32 %v1429, 0.0
    %v1454 = vmax.f32 %v1434, 0.0
    %v1455 = vmax.f32 %v1437, 0.0
    %v1456 = vpack.c.bf16 %v1441, %v1440
    %v1457 = vpack.c.bf16 %v1443, %v1442
    %v1458 = vpack.c.bf16 %v1445, %v1444
    %v1459 = vpack.c.bf16 %v1447, %v1446
    %v1460 = vpack.c.bf16 %v1449, %v1448
    %v1461 = vpack.c.bf16 %v1451, %v1450
    %v1462 = vpack.c.bf16 %v1453, %v1452
    %v1463 = vpack.c.bf16 %v1455, %v1454
    %v1464 = vld [vmem:[#allocation7] sm:$0xff]
    %v1465 = vld [vmem:[#allocation7 + $0x8] sm:$0xff]
    %v1466 = vld [vmem:[#allocation7 + $0x10] sm:$0xf]
    %v1467 = vld [vmem:[#allocation7 + $0x14] sm:$0xff]
    %v1468 = vld [vmem:[#allocation7 + $0x1c] sm:$0xff]
    %v1469 = vld [vmem:[#allocation7 + $0x24] sm:$0xf]
    %v1470 = vld [vmem:[#allocation7 + $0x28] sm:$0xff]
    %v1471 = vld [vmem:[#allocation7 + $0x30] sm:$0xff]
    %v1472 = vld [vmem:[#allocation7 + $0x38] sm:$0xf]
    %v1473 = vld [vmem:[#allocation7 + $0x3c] sm:$0xff]
    %v1474 = vld [vmem:[#allocation7 + $0x44] sm:$0xff]
    %v1475 = vld [vmem:[#allocation7 + $0x4c] sm:$0xf]
    %v1476 = vld [vmem:[#allocation7 + $0x50] sm:$0xff]
    %v1477 = vld [vmem:[#allocation7 + $0x58] sm:$0xff]
    %v1478 = vld [vmem:[#allocation7 + $0x60] sm:$0xf]
    %v1479 = vld [vmem:[#allocation7 + $0x64] sm:$0xff]
    %v1480 = vld [vmem:[#allocation7 + $0x6c] sm:$0xff]
    %v1481 = vld [vmem:[#allocation7 + $0x74] sm:$0xf]
    %v1482 = vld [vmem:[#allocation7 + $0x78] sm:$0xff]
    %v1483 = vld [vmem:[#allocation7 + $0x80] sm:$0xff]
    %v1484 = vld [vmem:[#allocation7 + $0x88] sm:$0xf]
    %v1485 = vld [vmem:[#allocation7 + $0x8c] sm:$0xff]
    %v1486 = vld [vmem:[#allocation7 + $0x94] sm:$0xff]
    %v1487 = vld [vmem:[#allocation7 + $0x9c] sm:$0xf]
    %v1488 = vld [vmem:[#allocation7 + $0xa0] sm:$0xff]
    %v1489 = vld [vmem:[#allocation7 + $0xa8] sm:$0xff]
    %v1490 = vld [vmem:[#allocation7 + $0xb0] sm:$0xf]
    %v1491 = vld [vmem:[#allocation7 + $0xb4] sm:$0xff]
    %v1492 = vld [vmem:[#allocation7 + $0xbc] sm:$0xff]
    %v1493 = vld [vmem:[#allocation7 + $0xc4] sm:$0xf]
    %v1494 = vld [vmem:[#allocation7 + $0xc8] sm:$0xff]
    %v1495 = vld [vmem:[#allocation7 + $0xd0] sm:$0xff]
    %v1496 = vld [vmem:[#allocation7 + $0xd8] sm:$0xf]
    %v1497 = vld [vmem:[#allocation7 + $0xdc] sm:$0xff]
    %v1498 = vld [vmem:[#allocation7 + $0xe4] sm:$0xff]
    %v1499 = vld [vmem:[#allocation7 + $0xec] sm:$0xf]
    %v1500 = vld [vmem:[#allocation7 + $0xf0] sm:$0xff]
    %v1501 = vld [vmem:[#allocation7 + $0xf8] sm:$0xff]
    %v1502 = vld [vmem:[#allocation7 + $0x100] sm:$0xf]
    %v1503 = vld [vmem:[#allocation7 + $0x104] sm:$0xff]
    %v1504 = vld [vmem:[#allocation7 + $0x10c] sm:$0xff]
    %v1505 = vld [vmem:[#allocation7 + $0x114] sm:$0xf]
    %v1506 = vld [vmem:[#allocation7 + $0x118] sm:$0xff]
    %v1507 = vld [vmem:[#allocation7 + $0x120] sm:$0xff]
    %v1508 = vld [vmem:[#allocation7 + $0x128] sm:$0xf]
    %v1509 = vld [vmem:[#allocation7 + $0x12c] sm:$0xff]
    %v1510 = vld [vmem:[#allocation7 + $0x134] sm:$0xff]
    %v1511 = vld [vmem:[#allocation7 + $0x13c] sm:$0xf]
    %v1513 = vlaneseq
    %v1514 = vshrl.u32 %v1513, 7
    %v1515 = vsub.s32 0, %v1514
    %v1516 = vrot.slane %v144, %v1515
    %v1517 = vlaneseq
    %v1518 = vshrl.u32 %v1517, 7
    %v1519 = vsub.s32 1, %v1518
    %v1520 = vrot.slane %v144, %v1519
    %v1521 = vlaneseq
    %v1522 = vshrl.u32 %v1521, 7
    %v1523 = vsub.s32 2, %v1522
    %v1524 = vrot.slane %v144, %v1523
    %v1525 = vlaneseq
    %v1526 = vshrl.u32 %v1525, 7
    %v1527 = vsub.s32 3, %v1526
    %v1528 = vrot.slane %v144, %v1527
    %v1529 = vlaneseq
    %v1530 = vshrl.u32 %v1529, 7
    %v1531 = vsub.s32 4, %v1530
    %v1532 = vrot.slane %v144, %v1531
    %v1586 = vunpack.c.l.b16 %v1464
    %v1587 = vunpack.c.h.b16 %v1464
    %v1588 = vunpack.c.l.b16 %v1465
    %v1589 = vunpack.c.h.b16 %v1465
    %v1590 = vunpack.c.l.b16 %v1466
    %v1591 = vunpack.c.l.b16 %v1467
    %v1592 = vunpack.c.h.b16 %v1467
    %v1593 = vunpack.c.l.b16 %v1468
    %v1594 = vunpack.c.h.b16 %v1468
    %v1595 = vunpack.c.l.b16 %v1469
    %v1596 = vunpack.c.l.b16 %v1470
    %v1597 = vunpack.c.h.b16 %v1470
    %v1598 = vunpack.c.l.b16 %v1471
    %v1599 = vunpack.c.h.b16 %v1471
    %v1600 = vunpack.c.l.b16 %v1472
    %v1601 = vunpack.c.l.b16 %v1473
    %v1602 = vunpack.c.h.b16 %v1473
    %v1603 = vunpack.c.l.b16 %v1474
    %v1604 = vunpack.c.h.b16 %v1474
    %v1605 = vunpack.c.l.b16 %v1475
    %v1606 = vunpack.c.l.b16 %v1476
    %v1607 = vunpack.c.h.b16 %v1476
    %v1608 = vunpack.c.l.b16 %v1477
    %v1609 = vunpack.c.h.b16 %v1477
    %v1610 = vunpack.c.l.b16 %v1478
    %v1611 = vunpack.c.l.b16 %v1479
    %v1612 = vunpack.c.h.b16 %v1479
    %v1613 = vunpack.c.l.b16 %v1480
    %v1614 = vunpack.c.h.b16 %v1480
    %v1615 = vunpack.c.l.b16 %v1481
    %v1616 = vunpack.c.l.b16 %v1482
    %v1617 = vunpack.c.h.b16 %v1482
    %v1618 = vunpack.c.l.b16 %v1483
    %v1619 = vunpack.c.h.b16 %v1483
    %v1620 = vunpack.c.l.b16 %v1484
    %v1621 = vunpack.c.l.b16 %v1485
    %v1622 = vunpack.c.h.b16 %v1485
    %v1623 = vunpack.c.l.b16 %v1486
    %v1624 = vunpack.c.h.b16 %v1486
    %v1625 = vunpack.c.l.b16 %v1487
    %v1626 = vunpack.c.l.b16 %v1488
    %v1627 = vunpack.c.h.b16 %v1488
    %v1628 = vunpack.c.l.b16 %v1489
    %v1629 = vunpack.c.h.b16 %v1489
    %v1630 = vunpack.c.l.b16 %v1490
    %v1631 = vunpack.c.l.b16 %v1491
    %v1632 = vunpack.c.h.b16 %v1491
    %v1633 = vunpack.c.l.b16 %v1492
    %v1634 = vunpack.c.h.b16 %v1492
    %v1635 = vunpack.c.l.b16 %v1493
    %v1636 = vunpack.c.l.b16 %v1494
    %v1637 = vunpack.c.h.b16 %v1494
    %v1638 = vunpack.c.l.b16 %v1495
    %v1639 = vunpack.c.h.b16 %v1495
    %v1640 = vunpack.c.l.b16 %v1496
    %v1641 = vunpack.c.l.b16 %v1497
    %v1642 = vunpack.c.h.b16 %v1497
    %v1643 = vunpack.c.l.b16 %v1498
    %v1644 = vunpack.c.h.b16 %v1498
    %v1645 = vunpack.c.l.b16 %v1499
    %v1646 = vunpack.c.l.b16 %v1500
    %v1647 = vunpack.c.h.b16 %v1500
    %v1648 = vunpack.c.l.b16 %v1501
    %v1649 = vunpack.c.h.b16 %v1501
    %v1650 = vunpack.c.l.b16 %v1502
    %v1651 = vunpack.c.l.b16 %v1503
    %v1652 = vunpack.c.h.b16 %v1503
    %v1653 = vunpack.c.l.b16 %v1504
    %v1654 = vunpack.c.h.b16 %v1504
    %v1655 = vunpack.c.l.b16 %v1505
    %v1656 = vunpack.c.l.b16 %v1506
    %v1657 = vunpack.c.h.b16 %v1506
    %v1658 = vunpack.c.l.b16 %v1507
    %v1659 = vunpack.c.h.b16 %v1507
    %v1660 = vunpack.c.l.b16 %v1508
    %v1661 = vunpack.c.l.b16 %v1509
    %v1662 = vunpack.c.h.b16 %v1509
    %v1663 = vunpack.c.l.b16 %v1510
    %v1664 = vunpack.c.h.b16 %v1510
    %v1665 = vunpack.c.l.b16 %v1511
    %v1666 = vpack.c.b16 %v1591, %v1586
    %v1667 = vpack.c.b16 %v1592, %v1587
    %v1668 = vpack.c.b16 %v1593, %v1588
    %v1669 = vpack.c.b16 %v1594, %v1589
    %v1670 = vpack.c.b16 %v1595, %v1590
    %v1671 = vpack.c.b16 %v1601, %v1596
    %v1672 = vpack.c.b16 %v1602, %v1597
    %v1673 = vpack.c.b16 %v1603, %v1598
    %v1674 = vpack.c.b16 %v1604, %v1599
    %v1675 = vpack.c.b16 %v1605, %v1600
    %v1676 = vpack.c.b16 %v1611, %v1606
    %v1677 = vpack.c.b16 %v1612, %v1607
    %v1678 = vpack.c.b16 %v1613, %v1608
    %v1679 = vpack.c.b16 %v1614, %v1609
    %v1680 = vpack.c.b16 %v1615, %v1610
    %v1681 = vpack.c.b16 %v1621, %v1616
    %v1682 = vpack.c.b16 %v1622, %v1617
    %v1683 = vpack.c.b16 %v1623, %v1618
    %v1684 = vpack.c.b16 %v1624, %v1619
    %v1685 = vpack.c.b16 %v1625, %v1620
    %v1686 = vpack.c.b16 %v1631, %v1626
    %v1687 = vpack.c.b16 %v1632, %v1627
    %v1688 = vpack.c.b16 %v1633, %v1628
    %v1689 = vpack.c.b16 %v1634, %v1629
    %v1690 = vpack.c.b16 %v1635, %v1630
    %v1691 = vpack.c.b16 %v1641, %v1636
    %v1692 = vpack.c.b16 %v1642, %v1637
    %v1693 = vpack.c.b16 %v1643, %v1638
    %v1694 = vpack.c.b16 %v1644, %v1639
    %v1695 = vpack.c.b16 %v1645, %v1640
    %v1696 = vpack.c.b16 %v1651, %v1646
    %v1697 = vpack.c.b16 %v1652, %v1647
    %v1698 = vpack.c.b16 %v1653, %v1648
    %v1699 = vpack.c.b16 %v1654, %v1649
    %v1700 = vpack.c.b16 %v1655, %v1650
    %v1701 = vpack.c.b16 %v1661, %v1656
    %v1702 = vpack.c.b16 %v1662, %v1657
    %v1703 = vpack.c.b16 %v1663, %v1658
    %v1704 = vpack.c.b16 %v1664, %v1659
    %v1705 = vpack.c.b16 %v1665, %v1660
    %1746 = vmatprep.subr.bf16.mxu0 %v1667
    %1747 = vmatpush1.bf16.msra.mxu0 %v1666
    %1748 = vmatprep.subr.bf16.mxu0 %v1672
    %1749 = vmatpush1.bf16.msra.mxu0 %v1671
    %1750 = vmatprep.subr.bf16.mxu0 %v1677
    %1751 = vmatpush1.bf16.msra.mxu0 %v1676
    %1752 = vmatprep.subr.bf16.mxu0 %v1682
    %1753 = vmatpush1.bf16.msra.mxu0 %v1681
    %1754 = vmatprep.subr.bf16.mxu0 %v1687
    %1755 = vmatpush1.bf16.msra.mxu0 %v1686
    %1756 = vmatprep.subr.bf16.mxu0 %v1692
    %1757 = vmatpush1.bf16.msra.mxu0 %v1691
    %1758 = vmatprep.subr.bf16.mxu0 %v1697
    %1759 = vmatpush1.bf16.msra.mxu0 %v1696
    %1760 = vmatprep.subr.bf16.mxu0 %v1702
    %1761 = vmatpush1.bf16.msra.mxu0 %v1701
    %1762 = vmatprep.subr.bf16.mxu0 0
    %1763 = vmatpush1.bf16.msra.mxu0 0
    %1764 = vmatprep.subr.bf16.mxu0 0
    %1765 = vmatpush1.bf16.msra.mxu0 0
    %1766 = vmatprep.subr.bf16.mxu0 0
    %1767 = vmatpush1.bf16.msra.mxu0 0
    %1768 = vmatprep.subr.bf16.mxu0 0
    %1769 = vmatpush1.bf16.msra.mxu0 0
    %1770 = vmatprep.subr.bf16.mxu0 0
    %1771 = vmatpush1.bf16.msra.mxu0 0
    %1772 = vmatprep.subr.bf16.mxu0 0
    %1773 = vmatpush1.bf16.msra.mxu0 0
    %1774 = vmatprep.subr.bf16.mxu0 0
    %1775 = vmatpush1.bf16.msra.mxu0 0
    %1776 = vmatprep.subr.bf16.mxu0 0
    %1777 = vmatpush1.bf16.msra.mxu0 0
    %1778 = vmatprep.mubr.bf16.mxu0 0
    %1779 = vmatmul.mubr.bf16.gmra.mrb[0].mxu0 %v1456
    %v1780 = vpop.f32.mrb[0].mxu0
    %v1781 = vadd.f32 %v1516, %v1780
    %v1782 = vpop.f32.mrb[0].mxu0
    %v1783 = vadd.f32 %v1520, %v1782
    %v1784 = vpop.f32.mrb[0].mxu0
    %v1785 = vadd.f32 %v1516, %v1784
    %v1786 = vpop.f32.mrb[0].mxu0
    %v1787 = vadd.f32 %v1520, %v1786
    %1788 = vmatprep.mubr.bf16.mxu0 0
    %1789 = vmatmul.mubr.bf16.gmra.mrb[0].mxu0 %v1457
    %v1790 = vpop.f32.mrb[0].mxu0
    %v1791 = vadd.f32 %v1516, %v1790
    %v1792 = vpop.f32.mrb[0].mxu0
    %v1793 = vadd.f32 %v1520, %v1792
    %v1794 = vpop.f32.mrb[0].mxu0
    %v1795 = vadd.f32 %v1516, %v1794
    %v1796 = vpop.f32.mrb[0].mxu0
    %v1797 = vadd.f32 %v1520, %v1796
    %1798 = vmatprep.mubr.bf16.mxu0 0
    %1799 = vmatmul.mubr.bf16.gmra.mrb[0].mxu0 %v1458
    %v1800 = vpop.f32.mrb[0].mxu0
    %v1801 = vadd.f32 %v1516, %v1800
    %v1802 = vpop.f32.mrb[0].mxu0
    %v1803 = vadd.f32 %v1520, %v1802
    %v1804 = vpop.f32.mrb[0].mxu0
    %v1805 = vadd.f32 %v1516, %v1804
    %v1806 = vpop.f32.mrb[0].mxu0
    %v1807 = vadd.f32 %v1520, %v1806
    %1808 = vmatprep.mubr.bf16.mxu0 0
    %1809 = vmatmul.mubr.bf16.gmra.mrb[0].mxu0 %v1459
    %v1810 = vpop.f32.mrb[0].mxu0
    %v1811 = vadd.f32 %v1516, %v1810
    %v1812 = vpop.f32.mrb[0].mxu0
    %v1813 = vadd.f32 %v1520, %v1812
    %v1814 = vpop.f32.mrb[0].mxu0
    %v1815 = vadd.f32 %v1516, %v1814
    %v1816 = vpop.f32.mrb[0].mxu0
    %v1817 = vadd.f32 %v1520, %v1816
    %1818 = vmatprep.mubr.bf16.mxu0 0
    %1819 = vmatmul.mubr.bf16.gmra.mrb[0].mxu0 %v1460
    %v1820 = vpop.f32.mrb[0].mxu0
    %v1821 = vadd.f32 %v1516, %v1820
    %v1822 = vpop.f32.mrb[0].mxu0
    %v1823 = vadd.f32 %v1520, %v1822
    %v1824 = vpop.f32.mrb[0].mxu0
    %v1825 = vadd.f32 %v1516, %v1824
    %v1826 = vpop.f32.mrb[0].mxu0
    %v1827 = vadd.f32 %v1520, %v1826
    %1828 = vmatprep.mubr.bf16.mxu0 0
    %1829 = vmatmul.mubr.bf16.gmra.mrb[0].mxu0 %v1461
    %v1830 = vpop.f32.mrb[0].mxu0
    %v1831 = vadd.f32 %v1516, %v1830
    %v1832 = vpop.f32.mrb[0].mxu0
    %v1833 = vadd.f32 %v1520, %v1832
    %v1834 = vpop.f32.mrb[0].mxu0
    %v1835 = vadd.f32 %v1516, %v1834
    %v1836 = vpop.f32.mrb[0].mxu0
    %v1837 = vadd.f32 %v1520, %v1836
    %1838 = vmatprep.mubr.bf16.mxu0 0
    %1839 = vmatmul.mubr.bf16.gmra.mrb[0].mxu0 %v1462
    %v1840 = vpop.f32.mrb[0].mxu0
    %v1841 = vadd.f32 %v1516, %v1840
    %v1842 = vpop.f32.mrb[0].mxu0
    %v1843 = vadd.f32 %v1520, %v1842
    %v1844 = vpop.f32.mrb[0].mxu0
    %v1845 = vadd.f32 %v1516, %v1844
    %v1846 = vpop.f32.mrb[0].mxu0
    %v1847 = vadd.f32 %v1520, %v1846
    %1848 = vmatprep.mubr.bf16.mxu0 0
    %1849 = vmatmul.mubr.bf16.gmra.mrb[0].mxu0 %v1463
    %v1850 = vpop.f32.mrb[0].mxu0
    %v1851 = vadd.f32 %v1516, %v1850
    %v1852 = vpop.f32.mrb[0].mxu0
    %v1853 = vadd.f32 %v1520, %v1852
    %v1854 = vpop.f32.mrb[0].mxu0
    %v1855 = vadd.f32 %v1516, %v1854
    %v1856 = vpop.f32.mrb[0].mxu0
    %v1857 = vadd.f32 %v1520, %v1856
    %1858 = vdwg.mxu0
    %1859 = vmatprep.subr.bf16.mxu0 %v1669
    %1860 = vmatpush1.bf16.msra.mxu0 %v1668
    %1861 = vmatprep.subr.bf16.mxu0 %v1674
    %1862 = vmatpush1.bf16.msra.mxu0 %v1673
    %1863 = vmatprep.subr.bf16.mxu0 %v1679
    %1864 = vmatpush1.bf16.msra.mxu0 %v1678
    %1865 = vmatprep.subr.bf16.mxu0 %v1684
    %1866 = vmatpush1.bf16.msra.mxu0 %v1683
    %1867 = vmatprep.subr.bf16.mxu0 %v1689
    %1868 = vmatpush1.bf16.msra.mxu0 %v1688
    %1869 = vmatprep.subr.bf16.mxu0 %v1694
    %1870 = vmatpush1.bf16.msra.mxu0 %v1693
    %1871 = vmatprep.subr.bf16.mxu0 %v1699
    %1872 = vmatpush1.bf16.msra.mxu0 %v1698
    %1873 = vmatprep.subr.bf16.mxu0 %v1704
    %1874 = vmatpush1.bf16.msra.mxu0 %v1703
    %1875 = vmatprep.subr.bf16.mxu0 0
    %1876 = vmatpush1.bf16.msra.mxu0 0
    %1877 = vmatprep.subr.bf16.mxu0 0
    %1878 = vmatpush1.bf16.msra.mxu0 0
    %1879 = vmatprep.subr.bf16.mxu0 0
    %1880 = vmatpush1.bf16.msra.mxu0 0
    %1881 = vmatprep.subr.bf16.mxu0 0
    %1882 = vmatpush1.bf16.msra.mxu0 0
    %1883 = vmatprep.subr.bf16.mxu0 0
    %1884 = vmatpush1.bf16.msra.mxu0 0
    %1885 = vmatprep.subr.bf16.mxu0 0
    %1886 = vmatpush1.bf16.msra.mxu0 0
    %1887 = vmatprep.subr.bf16.mxu0 0
    %1888 = vmatpush1.bf16.msra.mxu0 0
    %1889 = vmatprep.subr.bf16.mxu0 0
    %1890 = vmatpush1.bf16.msra.mxu0 0
    %1891 = vmatprep.mubr.bf16.mxu0 0
    %1892 = vmatmul.mubr.bf16.gmra.mrb[0].mxu0 %v1456
    %v1893 = vpop.f32.mrb[0].mxu0
    %v1894 = vadd.f32 %v1524, %v1893
    %v1895 = vpop.f32.mrb[0].mxu0
    %v1896 = vadd.f32 %v1528, %v1895
    %v1897 = vpop.f32.mrb[0].mxu0
    %v1898 = vadd.f32 %v1524, %v1897
    %v1899 = vpop.f32.mrb[0].mxu0
    %v1900 = vadd.f32 %v1528, %v1899
    %1901 = vmatprep.mubr.bf16.mxu0 0
    %1902 = vmatmul.mubr.bf16.gmra.mrb[0].mxu0 %v1457
    %v1903 = vpop.f32.mrb[0].mxu0
    %v1904 = vadd.f32 %v1524, %v1903
    %v1905 = vpop.f32.mrb[0].mxu0
    %v1906 = vadd.f32 %v1528, %v1905
    %v1907 = vpop.f32.mrb[0].mxu0
    %v1908 = vadd.f32 %v1524, %v1907
    %v1909 = vpop.f32.mrb[0].mxu0
    %v1910 = vadd.f32 %v1528, %v1909
    %1911 = vmatprep.mubr.bf16.mxu0 0
    %1912 = vmatmul.mubr.bf16.gmra.mrb[0].mxu0 %v1458
    %v1913 = vpop.f32.mrb[0].mxu0
    %v1914 = vadd.f32 %v1524, %v1913
    %v1915 = vpop.f32.mrb[0].mxu0
    %v1916 = vadd.f32 %v1528, %v1915
    %v1917 = vpop.f32.mrb[0].mxu0
    %v1918 = vadd.f32 %v1524, %v1917
    %v1919 = vpop.f32.mrb[0].mxu0
    %v1920 = vadd.f32 %v1528, %v1919
    %1921 = vmatprep.mubr.bf16.mxu0 0
    %1922 = vmatmul.mubr.bf16.gmra.mrb[0].mxu0 %v1459
    %v1923 = vpop.f32.mrb[0].mxu0
    %v1924 = vadd.f32 %v1524, %v1923
    %v1925 = vpop.f32.mrb[0].mxu0
    %v1926 = vadd.f32 %v1528, %v1925
    %v1927 = vpop.f32.mrb[0].mxu0
    %v1928 = vadd.f32 %v1524, %v1927
    %v1929 = vpop.f32.mrb[0].mxu0
    %v1930 = vadd.f32 %v1528, %v1929
    %1931 = vmatprep.mubr.bf16.mxu0 0
    %1932 = vmatmul.mubr.bf16.gmra.mrb[0].mxu0 %v1460
    %v1933 = vpop.f32.mrb[0].mxu0
    %v1934 = vadd.f32 %v1524, %v1933
    %v1935 = vpop.f32.mrb[0].mxu0
    %v1936 = vadd.f32 %v1528, %v1935
    %v1937 = vpop.f32.mrb[0].mxu0
    %v1938 = vadd.f32 %v1524, %v1937
    %v1939 = vpop.f32.mrb[0].mxu0
    %v1940 = vadd.f32 %v1528, %v1939
    %1941 = vmatprep.mubr.bf16.mxu0 0
    %1942 = vmatmul.mubr.bf16.gmra.mrb[0].mxu0 %v1461
    %v1943 = vpop.f32.mrb[0].mxu0
    %v1944 = vadd.f32 %v1524, %v1943
    %v1945 = vpop.f32.mrb[0].mxu0
    %v1946 = vadd.f32 %v1528, %v1945
    %v1947 = vpop.f32.mrb[0].mxu0
    %v1948 = vadd.f32 %v1524, %v1947
    %v1949 = vpop.f32.mrb[0].mxu0
    %v1950 = vadd.f32 %v1528, %v1949
    %1951 = vmatprep.mubr.bf16.mxu0 0
    %1952 = vmatmul.mubr.bf16.gmra.mrb[0].mxu0 %v1462
    %v1953 = vpop.f32.mrb[0].mxu0
    %v1954 = vadd.f32 %v1524, %v1953
    %v1955 = vpop.f32.mrb[0].mxu0
    %v1956 = vadd.f32 %v1528, %v1955
    %v1957 = vpop.f32.mrb[0].mxu0
    %v1958 = vadd.f32 %v1524, %v1957
    %v1959 = vpop.f32.mrb[0].mxu0
    %v1960 = vadd.f32 %v1528, %v1959
    %1961 = vmatprep.mubr.bf16.mxu0 0
    %1962 = vmatmul.mubr.bf16.gmra.mrb[0].mxu0 %v1463
    %v1963 = vpop.f32.mrb[0].mxu0
    %v1964 = vadd.f32 %v1524, %v1963
    %v1965 = vpop.f32.mrb[0].mxu0
    %v1966 = vadd.f32 %v1528, %v1965
    %v1967 = vpop.f32.mrb[0].mxu0
    %v1968 = vadd.f32 %v1524, %v1967
    %v1969 = vpop.f32.mrb[0].mxu0
    %v1970 = vadd.f32 %v1528, %v1969
    %1971 = vdwg.mxu0
    %1972 = vmatprep.subr.bf16.mxu0 0
    %1973 = vmatpush1.bf16.msra.mxu0 %v1670
    %1974 = vmatprep.subr.bf16.mxu0 0
    %1975 = vmatpush1.bf16.msra.mxu0 %v1675
    %1976 = vmatprep.subr.bf16.mxu0 0
    %1977 = vmatpush1.bf16.msra.mxu0 %v1680
    %1978 = vmatprep.subr.bf16.mxu0 0
    %1979 = vmatpush1.bf16.msra.mxu0 %v1685
    %1980 = vmatprep.subr.bf16.mxu0 0
    %1981 = vmatpush1.bf16.msra.mxu0 %v1690
    %1982 = vmatprep.subr.bf16.mxu0 0
    %1983 = vmatpush1.bf16.msra.mxu0 %v1695
    %1984 = vmatprep.subr.bf16.mxu0 0
    %1985 = vmatpush1.bf16.msra.mxu0 %v1700
    %1986 = vmatprep.subr.bf16.mxu0 0
    %1987 = vmatpush1.bf16.msra.mxu0 %v1705
    %1988 = vmatprep.subr.bf16.mxu0 0
    %1989 = vmatpush1.bf16.msra.mxu0 0
    %1990 = vmatprep.subr.bf16.mxu0 0
    %1991 = vmatpush1.bf16.msra.mxu0 0
    %1992 = vmatprep.subr.bf16.mxu0 0
    %1993 = vmatpush1.bf16.msra.mxu0 0
    %1994 = vmatprep.subr.bf16.mxu0 0
    %1995 = vmatpush1.bf16.msra.mxu0 0
    %1996 = vmatprep.subr.bf16.mxu0 0
    %1997 = vmatpush1.bf16.msra.mxu0 0
    %1998 = vmatprep.subr.bf16.mxu0 0
    %1999 = vmatpush1.bf16.msra.mxu0 0
    %2000 = vmatprep.subr.bf16.mxu0 0
    %2001 = vmatpush1.bf16.msra.mxu0 0
    %2002 = vmatprep.subr.bf16.mxu0 0
    %2003 = vmatpush1.bf16.msra.mxu0 0
    %2004 = vmatprep.mubr.bf16.mxu0 0
    %2005 = vmatmul.mubr.bf16.gmra.mrb[0].mxu0 %v1456
    %v2006 = vpop.f32.mrb[0].mxu0
    %v2007 = vadd.f32 %v1532, %v2006
    %v2008 = vpop.f32.mrb[0].mxu0
    %v2009 = vpop.f32.mrb[0].mxu0
    %v2010 = vadd.f32 %v1532, %v2009
    %v2011 = vpop.f32.mrb[0].mxu0
    %2012 = vmatprep.mubr.bf16.mxu0 0
    %2013 = vmatmul.mubr.bf16.gmra.mrb[0].mxu0 %v1457
    %v2014 = vpop.f32.mrb[0].mxu0
    %v2015 = vadd.f32 %v1532, %v2014
    %v2016 = vpop.f32.mrb[0].mxu0
    %v2017 = vpop.f32.mrb[0].mxu0
    %v2018 = vadd.f32 %v1532, %v2017
    %v2019 = vpop.f32.mrb[0].mxu0
    %2020 = vmatprep.mubr.bf16.mxu0 0
    %2021 = vmatmul.mubr.bf16.gmra.mrb[0].mxu0 %v1458
    %v2022 = vpop.f32.mrb[0].mxu0
    %v2023 = vadd.f32 %v1532, %v2022
    %v2024 = vpop.f32.mrb[0].mxu0
    %v2025 = vpop.f32.mrb[0].mxu0
    %v2026 = vadd.f32 %v1532, %v2025
    %v2027 = vpop.f32.mrb[0].mxu0
    %2028 = vmatprep.mubr.bf16.mxu0 0
    %2029 = vmatmul.mubr.bf16.gmra.mrb[0].mxu0 %v1459
    %v2030 = vpop.f32.mrb[0].mxu0
    %v2031 = vadd.f32 %v1532, %v2030
    %v2032 = vpop.f32.mrb[0].mxu0
    %v2033 = vpop.f32.mrb[0].mxu0
    %v2034 = vadd.f32 %v1532, %v2033
    %v2035 = vpop.f32.mrb[0].mxu0
    %2036 = vmatprep.mubr.bf16.mxu0 0
    %2037 = vmatmul.mubr.bf16.gmra.mrb[0].mxu0 %v1460
    %v2038 = vpop.f32.mrb[0].mxu0
    %v2039 = vadd.f32 %v1532, %v2038
    %v2040 = vpop.f32.mrb[0].mxu0
    %v2041 = vpop.f32.mrb[0].mxu0
    %v2042 = vadd.f32 %v1532, %v2041
    %v2043 = vpop.f32.mrb[0].mxu0
    %2044 = vmatprep.mubr.bf16.mxu0 0
    %2045 = vmatmul.mubr.bf16.gmra.mrb[0].mxu0 %v1461
    %v2046 = vpop.f32.mrb[0].mxu0
    %v2047 = vadd.f32 %v1532, %v2046
    %v2048 = vpop.f32.mrb[0].mxu0
    %v2049 = vpop.f32.mrb[0].mxu0
    %v2050 = vadd.f32 %v1532, %v2049
    %v2051 = vpop.f32.mrb[0].mxu0
    %2052 = vmatprep.mubr.bf16.mxu0 0
    %2053 = vmatmul.mubr.bf16.gmra.mrb[0].mxu0 %v1462
    %v2054 = vpop.f32.mrb[0].mxu0
    %v2055 = vadd.f32 %v1532, %v2054
    %v2056 = vpop.f32.mrb[0].mxu0
    %v2057 = vpop.f32.mrb[0].mxu0
    %v2058 = vadd.f32 %v1532, %v2057
    %v2059 = vpop.f32.mrb[0].mxu0
    %2060 = vmatprep.mubr.bf16.mxu0 0
    %2061 = vmatmul.mubr.bf16.gmra.mrb[0].mxu0 %v1463
    %v2062 = vpop.f32.mrb[0].mxu0
    %v2063 = vadd.f32 %v1532, %v2062
    %v2064 = vpop.f32.mrb[0].mxu0
    %v2065 = vpop.f32.mrb[0].mxu0
    %v2066 = vadd.f32 %v1532, %v2065
    %v2067 = vpop.f32.mrb[0].mxu0
    %2068 = vdwg.mxu0
    %v2069 = vmax.f32 %v1783, 0.0
    %v2070 = vmax.f32 %v1894, 0.0
    %v2071 = vmax.f32 %v1896, 0.0
    %v2072 = vmax.f32 %v2007, 0.0
    %v2073 = vmax.f32 %v1787, 0.0
    %v2074 = vmax.f32 %v1898, 0.0
    %v2075 = vmax.f32 %v1900, 0.0
    %v2076 = vmax.f32 %v2010, 0.0
    %v2077 = vmax.f32 %v1793, 0.0
    %v2078 = vmax.f32 %v1904, 0.0
    %v2079 = vmax.f32 %v1906, 0.0
    %v2080 = vmax.f32 %v2015, 0.0
    %v2081 = vmax.f32 %v1797, 0.0
    %v2082 = vmax.f32 %v1908, 0.0
    %v2083 = vmax.f32 %v1910, 0.0
    %v2084 = vmax.f32 %v2018, 0.0
    %v2085 = vmax.f32 %v1803, 0.0
    %v2086 = vmax.f32 %v1914, 0.0
    %v2087 = vmax.f32 %v1916, 0.0
    %v2088 = vmax.f32 %v2023, 0.0
    %v2089 = vmax.f32 %v1807, 0.0
    %v2090 = vmax.f32 %v1918, 0.0
    %v2091 = vmax.f32 %v1920, 0.0
    %v2092 = vmax.f32 %v2026, 0.0
    %v2093 = vmax.f32 %v1813, 0.0
    %v2094 = vmax.f32 %v1924, 0.0
    %v2095 = vmax.f32 %v1926, 0.0
    %v2096 = vmax.f32 %v2031, 0.0
    %v2097 = vmax.f32 %v1817, 0.0
    %v2098 = vmax.f32 %v1928, 0.0
    %v2099 = vmax.f32 %v1930, 0.0
    %v2100 = vmax.f32 %v2034, 0.0
    %v2101 = vmax.f32 %v1823, 0.0
    %v2102 = vmax.f32 %v1934, 0.0
    %v2103 = vmax.f32 %v1936, 0.0
    %v2104 = vmax.f32 %v2039, 0.0
    %v2105 = vmax.f32 %v1827, 0.0
    %v2106 = vmax.f32 %v1938, 0.0
    %v2107 = vmax.f32 %v1940, 0.0
    %v2108 = vmax.f32 %v2042, 0.0
    %v2109 = vmax.f32 %v1833, 0.0
    %v2110 = vmax.f32 %v1944, 0.0
    %v2111 = vmax.f32 %v1946, 0.0
    %v2112 = vmax.f32 %v2047, 0.0
    %v2113 = vmax.f32 %v1837, 0.0
    %v2114 = vmax.f32 %v1948, 0.0
    %v2115 = vmax.f32 %v1950, 0.0
    %v2116 = vmax.f32 %v2050, 0.0
    %v2117 = vmax.f32 %v1843, 0.0
    %v2118 = vmax.f32 %v1954, 0.0
    %v2119 = vmax.f32 %v1956, 0.0
    %v2120 = vmax.f32 %v2055, 0.0
    %v2121 = vmax.f32 %v1847, 0.0
    %v2122 = vmax.f32 %v1958, 0.0
    %v2123 = vmax.f32 %v1960, 0.0
    %v2124 = vmax.f32 %v2058, 0.0
    %v2125 = vmax.f32 %v1853, 0.0
    %v2126 = vmax.f32 %v1964, 0.0
    %v2127 = vmax.f32 %v1966, 0.0
    %v2128 = vmax.f32 %v2063, 0.0
    %v2129 = vmax.f32 %v1857, 0.0
    %v2130 = vmax.f32 %v1968, 0.0
    %v2131 = vmax.f32 %v1970, 0.0
    %v2132 = vmax.f32 %v2066, 0.0
    %v2133 = vpack.c.bf16 %v2073, %v2069
    %v2134 = vpack.c.bf16 %v2074, %v2070
    %v2135 = vpack.c.bf16 %v2075, %v2071
    %v2136 = vpack.c.bf16 %v2076, %v2072
    %v2137 = vpack.c.bf16 %v2081, %v2077
    %v2138 = vpack.c.bf16 %v2082, %v2078
    %v2139 = vpack.c.bf16 %v2083, %v2079
    %v2140 = vpack.c.bf16 %v2084, %v2080
    %v2141 = vpack.c.bf16 %v2089, %v2085
    %v2142 = vpack.c.bf16 %v2090, %v2086
    %v2143 = vpack.c.bf16 %v2091, %v2087
    %v2144 = vpack.c.bf16 %v2092, %v2088
    %v2145 = vpack.c.bf16 %v2097, %v2093
    %v2146 = vpack.c.bf16 %v2098, %v2094
    %v2147 = vpack.c.bf16 %v2099, %v2095
    %v2148 = vpack.c.bf16 %v2100, %v2096
    %v2149 = vpack.c.bf16 %v2105, %v2101
    %v2150 = vpack.c.bf16 %v2106, %v2102
    %v2151 = vpack.c.bf16 %v2107, %v2103
    %v2152 = vpack.c.bf16 %v2108, %v2104
    %v2153 = vpack.c.bf16 %v2113, %v2109
    %v2154 = vpack.c.bf16 %v2114, %v2110
    %v2155 = vpack.c.bf16 %v2115, %v2111
    %v2156 = vpack.c.bf16 %v2116, %v2112
    %v2157 = vpack.c.bf16 %v2121, %v2117
    %v2158 = vpack.c.bf16 %v2122, %v2118
    %v2159 = vpack.c.bf16 %v2123, %v2119
    %v2160 = vpack.c.bf16 %v2124, %v2120
    %v2161 = vpack.c.bf16 %v2129, %v2125
    %v2162 = vpack.c.bf16 %v2130, %v2126
    %v2163 = vpack.c.bf16 %v2131, %v2127
    %v2164 = vpack.c.bf16 %v2132, %v2128
    %v2165 = vld [vmem:[#allocation8] sm:$0xff]
    %v2166 = vld [vmem:[#allocation8 + $0x8] sm:$0xff]
    %v2167 = vld [vmem:[#allocation8 + $0x10] sm:$0xff]
    %v2168 = vld [vmem:[#allocation8 + $0x18] sm:$0xff]
    %v2169 = vld [vmem:[#allocation8 + $0x20] sm:$0xff]
    %v2170 = vld [vmem:[#allocation8 + $0x28] sm:$0xff]
    %v2171 = vld [vmem:[#allocation8 + $0x30] sm:$0xff]
    %v2172 = vld [vmem:[#allocation8 + $0x38] sm:$0xff]
    %v2173 = vld [vmem:[#allocation8 + $0x40] sm:$0xff]
    %v2174 = vld [vmem:[#allocation8 + $0x48] sm:$0xff]
    %v2175 = vld [vmem:[#allocation8 + $0x50] sm:$0xff]
    %v2176 = vld [vmem:[#allocation8 + $0x58] sm:$0xff]
    %v2177 = vld [vmem:[#allocation8 + $0x60] sm:$0xff]
    %v2178 = vld [vmem:[#allocation8 + $0x68] sm:$0xff]
    %v2179 = vld [vmem:[#allocation8 + $0x70] sm:$0xff]
    %v2180 = vld [vmem:[#allocation8 + $0x78] sm:$0xff]
    %v2181 = vld [vmem:[#allocation8 + $0x80] sm:$0xff]
    %v2182 = vld [vmem:[#allocation8 + $0x88] sm:$0xff]
    %v2183 = vld [vmem:[#allocation8 + $0x90] sm:$0xff]
    %v2184 = vld [vmem:[#allocation8 + $0x98] sm:$0xff]
    %v2185 = vld [vmem:[#allocation8 + $0xa0] sm:$0xff]
    %v2186 = vld [vmem:[#allocation8 + $0xa8] sm:$0xff]
    %v2187 = vld [vmem:[#allocation8 + $0xb0] sm:$0xff]
    %v2188 = vld [vmem:[#allocation8 + $0xb8] sm:$0xff]
    %v2189 = vld [vmem:[#allocation8 + $0xc0] sm:$0xff]
    %v2190 = vld [vmem:[#allocation8 + $0xc8] sm:$0xff]
    %v2191 = vld [vmem:[#allocation8 + $0xd0] sm:$0xff]
    %v2192 = vld [vmem:[#allocation8 + $0xd8] sm:$0xff]
    %v2193 = vld [vmem:[#allocation8 + $0xe0] sm:$0xff]
    %v2194 = vld [vmem:[#allocation8 + $0xe8] sm:$0xff]
    %v2195 = vld [vmem:[#allocation8 + $0xf0] sm:$0xff]
    %v2196 = vld [vmem:[#allocation8 + $0xf8] sm:$0xff]
    %v2197 = vld [vmem:[#allocation8 + $0x100] sm:$0xff]
    %v2198 = vld [vmem:[#allocation8 + $0x108] sm:$0xff]
    %v2199 = vld [vmem:[#allocation8 + $0x110] sm:$0xff]
    %v2200 = vld [vmem:[#allocation8 + $0x118] sm:$0xff]
    %v2201 = vld [vmem:[#allocation8 + $0x120] sm:$0xff]
    %v2202 = vld [vmem:[#allocation8 + $0x128] sm:$0xff]
    %v2203 = vld [vmem:[#allocation8 + $0x130] sm:$0xff]
    %v2204 = vld [vmem:[#allocation8 + $0x138] sm:$0xff]
    %v2205 = vld [vmem:[#allocation8 + $0x140] sm:$0xff]
    %v2206 = vld [vmem:[#allocation8 + $0x148] sm:$0xff]
    %v2207 = vld [vmem:[#allocation8 + $0x150] sm:$0xff]
    %v2208 = vld [vmem:[#allocation8 + $0x158] sm:$0xff]
    %v2209 = vld [vmem:[#allocation8 + $0x160] sm:$0xff]
    %v2210 = vld [vmem:[#allocation8 + $0x168] sm:$0xff]
    %v2211 = vld [vmem:[#allocation8 + $0x170] sm:$0xff]
    %v2212 = vld [vmem:[#allocation8 + $0x178] sm:$0xff]
    %v2213 = vld [vmem:[#allocation8 + $0x180] sm:$0xff]
    %v2214 = vld [vmem:[#allocation8 + $0x188] sm:$0xff]
    %v2215 = vld [vmem:[#allocation8 + $0x190] sm:$0xff]
    %v2216 = vld [vmem:[#allocation8 + $0x198] sm:$0xff]
    %v2217 = vld [vmem:[#allocation8 + $0x1a0] sm:$0xff]
    %v2218 = vld [vmem:[#allocation8 + $0x1a8] sm:$0xff]
    %v2219 = vld [vmem:[#allocation8 + $0x1b0] sm:$0xff]
    %v2220 = vld [vmem:[#allocation8 + $0x1b8] sm:$0xff]
    %v2221 = vld [vmem:[#allocation8 + $0x1c0] sm:$0xff]
    %v2222 = vld [vmem:[#allocation8 + $0x1c8] sm:$0xff]
    %v2223 = vld [vmem:[#allocation8 + $0x1d0] sm:$0xff]
    %v2224 = vld [vmem:[#allocation8 + $0x1d8] sm:$0xff]
    %v2225 = vld [vmem:[#allocation8 + $0x1e0] sm:$0xff]
    %v2226 = vld [vmem:[#allocation8 + $0x1e8] sm:$0xff]
    %v2227 = vld [vmem:[#allocation8 + $0x1f0] sm:$0xff]
    %v2228 = vld [vmem:[#allocation8 + $0x1f8] sm:$0xff]
    %v2229 = vld [vmem:[#allocation8 + $0x200] sm:$0xff]
    %v2230 = vld [vmem:[#allocation8 + $0x208] sm:$0xff]
    %v2231 = vld [vmem:[#allocation8 + $0x210] sm:$0xff]
    %v2232 = vld [vmem:[#allocation8 + $0x218] sm:$0xff]
    %v2233 = vld [vmem:[#allocation8 + $0x220] sm:$0xff]
    %v2234 = vld [vmem:[#allocation8 + $0x228] sm:$0xff]
    %v2235 = vld [vmem:[#allocation8 + $0x230] sm:$0xff]
    %v2236 = vld [vmem:[#allocation8 + $0x238] sm:$0xff]
    %v2237 = vld [vmem:[#allocation8 + $0x240] sm:$0xff]
    %v2238 = vld [vmem:[#allocation8 + $0x248] sm:$0xff]
    %v2239 = vld [vmem:[#allocation8 + $0x250] sm:$0xff]
    %v2240 = vld [vmem:[#allocation8 + $0x258] sm:$0xff]
    %v2241 = vld [vmem:[#allocation8 + $0x260] sm:$0xff]
    %v2242 = vld [vmem:[#allocation8 + $0x268] sm:$0xff]
    %v2243 = vld [vmem:[#allocation8 + $0x270] sm:$0xff]
    %v2244 = vld [vmem:[#allocation8 + $0x278] sm:$0xff]
    %v2245 = vld [vmem:[#allocation8 + $0x280] sm:$0xff]
    %v2246 = vld [vmem:[#allocation8 + $0x288] sm:$0xff]
    %v2247 = vld [vmem:[#allocation8 + $0x290] sm:$0xff]
    %v2248 = vld [vmem:[#allocation8 + $0x298] sm:$0xff]
    %v2249 = vld [vmem:[#allocation8 + $0x2a0] sm:$0xff]
    %v2250 = vld [vmem:[#allocation8 + $0x2a8] sm:$0xff]
    %v2251 = vld [vmem:[#allocation8 + $0x2b0] sm:$0xff]
    %v2252 = vld [vmem:[#allocation8 + $0x2b8] sm:$0xff]
    %v2253 = vld [vmem:[#allocation8 + $0x2c0] sm:$0xff]
    %v2254 = vld [vmem:[#allocation8 + $0x2c8] sm:$0xff]
    %v2255 = vld [vmem:[#allocation8 + $0x2d0] sm:$0xff]
    %v2256 = vld [vmem:[#allocation8 + $0x2d8] sm:$0xff]
    %v2257 = vld [vmem:[#allocation8 + $0x2e0] sm:$0xff]
    %v2258 = vld [vmem:[#allocation8 + $0x2e8] sm:$0xff]
    %v2259 = vld [vmem:[#allocation8 + $0x2f0] sm:$0xff]
    %v2260 = vld [vmem:[#allocation8 + $0x2f8] sm:$0xff]
    %v2261 = vld [vmem:[#allocation8 + $0x300] sm:$0xff]
    %v2262 = vld [vmem:[#allocation8 + $0x308] sm:$0xff]
    %v2263 = vld [vmem:[#allocation8 + $0x310] sm:$0xff]
    %v2264 = vld [vmem:[#allocation8 + $0x318] sm:$0xff]
    %v2265 = vld [vmem:[#allocation8 + $0x320] sm:$0xff]
    %v2266 = vld [vmem:[#allocation8 + $0x328] sm:$0xff]
    %v2267 = vld [vmem:[#allocation8 + $0x330] sm:$0xff]
    %v2268 = vld [vmem:[#allocation8 + $0x338] sm:$0xff]
    %v2269 = vld [vmem:[#allocation8 + $0x340] sm:$0xff]
    %v2270 = vld [vmem:[#allocation8 + $0x348] sm:$0xff]
    %v2271 = vld [vmem:[#allocation8 + $0x350] sm:$0xff]
    %v2272 = vld [vmem:[#allocation8 + $0x358] sm:$0xff]
    %v2273 = vld [vmem:[#allocation8 + $0x360] sm:$0xff]
    %v2274 = vld [vmem:[#allocation8 + $0x368] sm:$0xff]
    %v2275 = vld [vmem:[#allocation8 + $0x370] sm:$0xff]
    %v2276 = vld [vmem:[#allocation8 + $0x378] sm:$0xff]
    %v2277 = vld [vmem:[#allocation8 + $0x380] sm:$0xff]
    %v2278 = vld [vmem:[#allocation8 + $0x388] sm:$0xff]
    %v2279 = vld [vmem:[#allocation8 + $0x390] sm:$0xff]
    %v2280 = vld [vmem:[#allocation8 + $0x398] sm:$0xff]
    %v2281 = vld [vmem:[#allocation8 + $0x3a0] sm:$0xff]
    %v2282 = vld [vmem:[#allocation8 + $0x3a8] sm:$0xff]
    %v2283 = vld [vmem:[#allocation8 + $0x3b0] sm:$0xff]
    %v2284 = vld [vmem:[#allocation8 + $0x3b8] sm:$0xff]
    %v2285 = vld [vmem:[#allocation8 + $0x3c0] sm:$0xff]
    %v2286 = vld [vmem:[#allocation8 + $0x3c8] sm:$0xff]
    %v2287 = vld [vmem:[#allocation8 + $0x3d0] sm:$0xff]
    %v2288 = vld [vmem:[#allocation8 + $0x3d8] sm:$0xff]
    %v2289 = vld [vmem:[#allocation8 + $0x3e0] sm:$0xff]
    %v2290 = vld [vmem:[#allocation8 + $0x3e8] sm:$0xff]
    %v2291 = vld [vmem:[#allocation8 + $0x3f0] sm:$0xff]
    %v2292 = vld [vmem:[#allocation8 + $0x3f8] sm:$0xff]
    %v2294 = vlaneseq
    %v2295 = vshrl.u32 %v2294, 7
    %v2296 = vsub.s32 0, %v2295
    %v2297 = vrot.slane %v145, %v2296
    %v2298 = vlaneseq
    %v2299 = vshrl.u32 %v2298, 7
    %v2300 = vsub.s32 1, %v2299
    %v2301 = vrot.slane %v145, %v2300
    %v2302 = vlaneseq
    %v2303 = vshrl.u32 %v2302, 7
    %v2304 = vsub.s32 2, %v2303
    %v2305 = vrot.slane %v145, %v2304
    %v2306 = vlaneseq
    %v2307 = vshrl.u32 %v2306, 7
    %v2308 = vsub.s32 3, %v2307
    %v2309 = vrot.slane %v145, %v2308
    %v2442 = vunpack.c.l.b16 %v2165
    %v2443 = vunpack.c.h.b16 %v2165
    %v2444 = vunpack.c.l.b16 %v2166
    %v2445 = vunpack.c.h.b16 %v2166
    %v2446 = vunpack.c.l.b16 %v2167
    %v2447 = vunpack.c.h.b16 %v2167
    %v2448 = vunpack.c.l.b16 %v2168
    %v2449 = vunpack.c.h.b16 %v2168
    %v2450 = vunpack.c.l.b16 %v2169
    %v2451 = vunpack.c.h.b16 %v2169
    %v2452 = vunpack.c.l.b16 %v2170
    %v2453 = vunpack.c.h.b16 %v2170
    %v2454 = vunpack.c.l.b16 %v2171
    %v2455 = vunpack.c.h.b16 %v2171
    %v2456 = vunpack.c.l.b16 %v2172
    %v2457 = vunpack.c.h.b16 %v2172
    %v2458 = vunpack.c.l.b16 %v2173
    %v2459 = vunpack.c.h.b16 %v2173
    %v2460 = vunpack.c.l.b16 %v2174
    %v2461 = vunpack.c.h.b16 %v2174
    %v2462 = vunpack.c.l.b16 %v2175
    %v2463 = vunpack.c.h.b16 %v2175
    %v2464 = vunpack.c.l.b16 %v2176
    %v2465 = vunpack.c.h.b16 %v2176
    %v2466 = vunpack.c.l.b16 %v2177
    %v2467 = vunpack.c.h.b16 %v2177
    %v2468 = vunpack.c.l.b16 %v2178
    %v2469 = vunpack.c.h.b16 %v2178
    %v2470 = vunpack.c.l.b16 %v2179
    %v2471 = vunpack.c.h.b16 %v2179
    %v2472 = vunpack.c.l.b16 %v2180
    %v2473 = vunpack.c.h.b16 %v2180
    %v2474 = vunpack.c.l.b16 %v2181
    %v2475 = vunpack.c.h.b16 %v2181
    %v2476 = vunpack.c.l.b16 %v2182
    %v2477 = vunpack.c.h.b16 %v2182
    %v2478 = vunpack.c.l.b16 %v2183
    %v2479 = vunpack.c.h.b16 %v2183
    %v2480 = vunpack.c.l.b16 %v2184
    %v2481 = vunpack.c.h.b16 %v2184
    %v2482 = vunpack.c.l.b16 %v2185
    %v2483 = vunpack.c.h.b16 %v2185
    %v2484 = vunpack.c.l.b16 %v2186
    %v2485 = vunpack.c.h.b16 %v2186
    %v2486 = vunpack.c.l.b16 %v2187
    %v2487 = vunpack.c.h.b16 %v2187
    %v2488 = vunpack.c.l.b16 %v2188
    %v2489 = vunpack.c.h.b16 %v2188
    %v2490 = vunpack.c.l.b16 %v2189
    %v2491 = vunpack.c.h.b16 %v2189
    %v2492 = vunpack.c.l.b16 %v2190
    %v2493 = vunpack.c.h.b16 %v2190
    %v2494 = vunpack.c.l.b16 %v2191
    %v2495 = vunpack.c.h.b16 %v2191
    %v2496 = vunpack.c.l.b16 %v2192
    %v2497 = vunpack.c.h.b16 %v2192
    %v2498 = vunpack.c.l.b16 %v2193
    %v2499 = vunpack.c.h.b16 %v2193
    %v2500 = vunpack.c.l.b16 %v2194
    %v2501 = vunpack.c.h.b16 %v2194
    %v2502 = vunpack.c.l.b16 %v2195
    %v2503 = vunpack.c.h.b16 %v2195
    %v2504 = vunpack.c.l.b16 %v2196
    %v2505 = vunpack.c.h.b16 %v2196
    %v2506 = vunpack.c.l.b16 %v2197
    %v2507 = vunpack.c.h.b16 %v2197
    %v2508 = vunpack.c.l.b16 %v2198
    %v2509 = vunpack.c.h.b16 %v2198
    %v2510 = vunpack.c.l.b16 %v2199
    %v2511 = vunpack.c.h.b16 %v2199
    %v2512 = vunpack.c.l.b16 %v2200
    %v2513 = vunpack.c.h.b16 %v2200
    %v2514 = vunpack.c.l.b16 %v2201
    %v2515 = vunpack.c.h.b16 %v2201
    %v2516 = vunpack.c.l.b16 %v2202
    %v2517 = vunpack.c.h.b16 %v2202
    %v2518 = vunpack.c.l.b16 %v2203
    %v2519 = vunpack.c.h.b16 %v2203
    %v2520 = vunpack.c.l.b16 %v2204
    %v2521 = vunpack.c.h.b16 %v2204
    %v2522 = vunpack.c.l.b16 %v2205
    %v2523 = vunpack.c.h.b16 %v2205
    %v2524 = vunpack.c.l.b16 %v2206
    %v2525 = vunpack.c.h.b16 %v2206
    %v2526 = vunpack.c.l.b16 %v2207
    %v2527 = vunpack.c.h.b16 %v2207
    %v2528 = vunpack.c.l.b16 %v2208
    %v2529 = vunpack.c.h.b16 %v2208
    %v2530 = vunpack.c.l.b16 %v2209
    %v2531 = vunpack.c.h.b16 %v2209
    %v2532 = vunpack.c.l.b16 %v2210
    %v2533 = vunpack.c.h.b16 %v2210
    %v2534 = vunpack.c.l.b16 %v2211
    %v2535 = vunpack.c.h.b16 %v2211
    %v2536 = vunpack.c.l.b16 %v2212
    %v2537 = vunpack.c.h.b16 %v2212
    %v2538 = vunpack.c.l.b16 %v2213
    %v2539 = vunpack.c.h.b16 %v2213
    %v2540 = vunpack.c.l.b16 %v2214
    %v2541 = vunpack.c.h.b16 %v2214
    %v2542 = vunpack.c.l.b16 %v2215
    %v2543 = vunpack.c.h.b16 %v2215
    %v2544 = vunpack.c.l.b16 %v2216
    %v2545 = vunpack.c.h.b16 %v2216
    %v2546 = vunpack.c.l.b16 %v2217
    %v2547 = vunpack.c.h.b16 %v2217
    %v2548 = vunpack.c.l.b16 %v2218
    %v2549 = vunpack.c.h.b16 %v2218
    %v2550 = vunpack.c.l.b16 %v2219
    %v2551 = vunpack.c.h.b16 %v2219
    %v2552 = vunpack.c.l.b16 %v2220
    %v2553 = vunpack.c.h.b16 %v2220
    %v2554 = vunpack.c.l.b16 %v2221
    %v2555 = vunpack.c.h.b16 %v2221
    %v2556 = vunpack.c.l.b16 %v2222
    %v2557 = vunpack.c.h.b16 %v2222
    %v2558 = vunpack.c.l.b16 %v2223
    %v2559 = vunpack.c.h.b16 %v2223
    %v2560 = vunpack.c.l.b16 %v2224
    %v2561 = vunpack.c.h.b16 %v2224
    %v2562 = vunpack.c.l.b16 %v2225
    %v2563 = vunpack.c.h.b16 %v2225
    %v2564 = vunpack.c.l.b16 %v2226
    %v2565 = vunpack.c.h.b16 %v2226
    %v2566 = vunpack.c.l.b16 %v2227
    %v2567 = vunpack.c.h.b16 %v2227
    %v2568 = vunpack.c.l.b16 %v2228
    %v2569 = vunpack.c.h.b16 %v2228
    %v2570 = vunpack.c.l.b16 %v2229
    %v2571 = vunpack.c.h.b16 %v2229
    %v2572 = vunpack.c.l.b16 %v2230
    %v2573 = vunpack.c.h.b16 %v2230
    %v2574 = vunpack.c.l.b16 %v2231
    %v2575 = vunpack.c.h.b16 %v2231
    %v2576 = vunpack.c.l.b16 %v2232
    %v2577 = vunpack.c.h.b16 %v2232
    %v2578 = vunpack.c.l.b16 %v2233
    %v2579 = vunpack.c.h.b16 %v2233
    %v2580 = vunpack.c.l.b16 %v2234
    %v2581 = vunpack.c.h.b16 %v2234
    %v2582 = vunpack.c.l.b16 %v2235
    %v2583 = vunpack.c.h.b16 %v2235
    %v2584 = vunpack.c.l.b16 %v2236
    %v2585 = vunpack.c.h.b16 %v2236
    %v2586 = vunpack.c.l.b16 %v2237
    %v2587 = vunpack.c.h.b16 %v2237
    %v2588 = vunpack.c.l.b16 %v2238
    %v2589 = vunpack.c.h.b16 %v2238
    %v2590 = vunpack.c.l.b16 %v2239
    %v2591 = vunpack.c.h.b16 %v2239
    %v2592 = vunpack.c.l.b16 %v2240
    %v2593 = vunpack.c.h.b16 %v2240
    %v2594 = vunpack.c.l.b16 %v2241
    %v2595 = vunpack.c.h.b16 %v2241
    %v2596 = vunpack.c.l.b16 %v2242
    %v2597 = vunpack.c.h.b16 %v2242
    %v2598 = vunpack.c.l.b16 %v2243
    %v2599 = vunpack.c.h.b16 %v2243
    %v2600 = vunpack.c.l.b16 %v2244
    %v2601 = vunpack.c.h.b16 %v2244
    %v2602 = vunpack.c.l.b16 %v2245
    %v2603 = vunpack.c.h.b16 %v2245
    %v2604 = vunpack.c.l.b16 %v2246
    %v2605 = vunpack.c.h.b16 %v2246
    %v2606 = vunpack.c.l.b16 %v2247
    %v2607 = vunpack.c.h.b16 %v2247
    %v2608 = vunpack.c.l.b16 %v2248
    %v2609 = vunpack.c.h.b16 %v2248
    %v2610 = vunpack.c.l.b16 %v2249
    %v2611 = vunpack.c.h.b16 %v2249
    %v2612 = vunpack.c.l.b16 %v2250
    %v2613 = vunpack.c.h.b16 %v2250
    %v2614 = vunpack.c.l.b16 %v2251
    %v2615 = vunpack.c.h.b16 %v2251
    %v2616 = vunpack.c.l.b16 %v2252
    %v2617 = vunpack.c.h.b16 %v2252
    %v2618 = vunpack.c.l.b16 %v2253
    %v2619 = vunpack.c.h.b16 %v2253
    %v2620 = vunpack.c.l.b16 %v2254
    %v2621 = vunpack.c.h.b16 %v2254
    %v2622 = vunpack.c.l.b16 %v2255
    %v2623 = vunpack.c.h.b16 %v2255
    %v2624 = vunpack.c.l.b16 %v2256
    %v2625 = vunpack.c.h.b16 %v2256
    %v2626 = vunpack.c.l.b16 %v2257
    %v2627 = vunpack.c.h.b16 %v2257
    %v2628 = vunpack.c.l.b16 %v2258
    %v2629 = vunpack.c.h.b16 %v2258
    %v2630 = vunpack.c.l.b16 %v2259
    %v2631 = vunpack.c.h.b16 %v2259
    %v2632 = vunpack.c.l.b16 %v2260
    %v2633 = vunpack.c.h.b16 %v2260
    %v2634 = vunpack.c.l.b16 %v2261
    %v2635 = vunpack.c.h.b16 %v2261
    %v2636 = vunpack.c.l.b16 %v2262
    %v2637 = vunpack.c.h.b16 %v2262
    %v2638 = vunpack.c.l.b16 %v2263
    %v2639 = vunpack.c.h.b16 %v2263
    %v2640 = vunpack.c.l.b16 %v2264
    %v2641 = vunpack.c.h.b16 %v2264
    %v2642 = vunpack.c.l.b16 %v2265
    %v2643 = vunpack.c.h.b16 %v2265
    %v2644 = vunpack.c.l.b16 %v2266
    %v2645 = vunpack.c.h.b16 %v2266
    %v2646 = vunpack.c.l.b16 %v2267
    %v2647 = vunpack.c.h.b16 %v2267
    %v2648 = vunpack.c.l.b16 %v2268
    %v2649 = vunpack.c.h.b16 %v2268
    %v2650 = vunpack.c.l.b16 %v2269
    %v2651 = vunpack.c.h.b16 %v2269
    %v2652 = vunpack.c.l.b16 %v2270
    %v2653 = vunpack.c.h.b16 %v2270
    %v2654 = vunpack.c.l.b16 %v2271
    %v2655 = vunpack.c.h.b16 %v2271
    %v2656 = vunpack.c.l.b16 %v2272
    %v2657 = vunpack.c.h.b16 %v2272
    %v2658 = vunpack.c.l.b16 %v2273
    %v2659 = vunpack.c.h.b16 %v2273
    %v2660 = vunpack.c.l.b16 %v2274
    %v2661 = vunpack.c.h.b16 %v2274
    %v2662 = vunpack.c.l.b16 %v2275
    %v2663 = vunpack.c.h.b16 %v2275
    %v2664 = vunpack.c.l.b16 %v2276
    %v2665 = vunpack.c.h.b16 %v2276
    %v2666 = vunpack.c.l.b16 %v2277
    %v2667 = vunpack.c.h.b16 %v2277
    %v2668 = vunpack.c.l.b16 %v2278
    %v2669 = vunpack.c.h.b16 %v2278
    %v2670 = vunpack.c.l.b16 %v2279
    %v2671 = vunpack.c.h.b16 %v2279
    %v2672 = vunpack.c.l.b16 %v2280
    %v2673 = vunpack.c.h.b16 %v2280
    %v2674 = vunpack.c.l.b16 %v2281
    %v2675 = vunpack.c.h.b16 %v2281
    %v2676 = vunpack.c.l.b16 %v2282
    %v2677 = vunpack.c.h.b16 %v2282
    %v2678 = vunpack.c.l.b16 %v2283
    %v2679 = vunpack.c.h.b16 %v2283
    %v2680 = vunpack.c.l.b16 %v2284
    %v2681 = vunpack.c.h.b16 %v2284
    %v2682 = vunpack.c.l.b16 %v2285
    %v2683 = vunpack.c.h.b16 %v2285
    %v2684 = vunpack.c.l.b16 %v2286
    %v2685 = vunpack.c.h.b16 %v2286
    %v2686 = vunpack.c.l.b16 %v2287
    %v2687 = vunpack.c.h.b16 %v2287
    %v2688 = vunpack.c.l.b16 %v2288
    %v2689 = vunpack.c.h.b16 %v2288
    %v2690 = vunpack.c.l.b16 %v2289
    %v2691 = vunpack.c.h.b16 %v2289
    %v2692 = vunpack.c.l.b16 %v2290
    %v2693 = vunpack.c.h.b16 %v2290
    %v2694 = vunpack.c.l.b16 %v2291
    %v2695 = vunpack.c.h.b16 %v2291
    %v2696 = vunpack.c.l.b16 %v2292
    %v2697 = vunpack.c.h.b16 %v2292
    %v2698 = vpack.c.b16 %v2446, %v2442
    %v2699 = vpack.c.b16 %v2447, %v2443
    %v2700 = vpack.c.b16 %v2448, %v2444
    %v2701 = vpack.c.b16 %v2449, %v2445
    %v2702 = vpack.c.b16 %v2454, %v2450
    %v2703 = vpack.c.b16 %v2455, %v2451
    %v2704 = vpack.c.b16 %v2456, %v2452
    %v2705 = vpack.c.b16 %v2457, %v2453
    %v2706 = vpack.c.b16 %v2462, %v2458
    %v2707 = vpack.c.b16 %v2463, %v2459
    %v2708 = vpack.c.b16 %v2464, %v2460
    %v2709 = vpack.c.b16 %v2465, %v2461
    %v2710 = vpack.c.b16 %v2470, %v2466
    %v2711 = vpack.c.b16 %v2471, %v2467
    %v2712 = vpack.c.b16 %v2472, %v2468
    %v2713 = vpack.c.b16 %v2473, %v2469
    %v2714 = vpack.c.b16 %v2478, %v2474
    %v2715 = vpack.c.b16 %v2479, %v2475
    %v2716 = vpack.c.b16 %v2480, %v2476
    %v2717 = vpack.c.b16 %v2481, %v2477
    %v2718 = vpack.c.b16 %v2486, %v2482
    %v2719 = vpack.c.b16 %v2487, %v2483
    %v2720 = vpack.c.b16 %v2488, %v2484
    %v2721 = vpack.c.b16 %v2489, %v2485
    %v2722 = vpack.c.b16 %v2494, %v2490
    %v2723 = vpack.c.b16 %v2495, %v2491
    %v2724 = vpack.c.b16 %v2496, %v2492
    %v2725 = vpack.c.b16 %v2497, %v2493
    %v2726 = vpack.c.b16 %v2502, %v2498
    %v2727 = vpack.c.b16 %v2503, %v2499
    %v2728 = vpack.c.b16 %v2504, %v2500
    %v2729 = vpack.c.b16 %v2505, %v2501
    %v2730 = vpack.c.b16 %v2510, %v2506
    %v2731 = vpack.c.b16 %v2511, %v2507
    %v2732 = vpack.c.b16 %v2512, %v2508
    %v2733 = vpack.c.b16 %v2513, %v2509
    %v2734 = vpack.c.b16 %v2518, %v2514
    %v2735 = vpack.c.b16 %v2519, %v2515
    %v2736 = vpack.c.b16 %v2520, %v2516
    %v2737 = vpack.c.b16 %v2521, %v2517
    %v2738 = vpack.c.b16 %v2526, %v2522
    %v2739 = vpack.c.b16 %v2527, %v2523
    %v2740 = vpack.c.b16 %v2528, %v2524
    %v2741 = vpack.c.b16 %v2529, %v2525
    %v2742 = vpack.c.b16 %v2534, %v2530
    %v2743 = vpack.c.b16 %v2535, %v2531
    %v2744 = vpack.c.b16 %v2536, %v2532
    %v2745 = vpack.c.b16 %v2537, %v2533
    %v2746 = vpack.c.b16 %v2542, %v2538
    %v2747 = vpack.c.b16 %v2543, %v2539
    %v2748 = vpack.c.b16 %v2544, %v2540
    %v2749 = vpack.c.b16 %v2545, %v2541
    %v2750 = vpack.c.b16 %v2550, %v2546
    %v2751 = vpack.c.b16 %v2551, %v2547
    %v2752 = vpack.c.b16 %v2552, %v2548
    %v2753 = vpack.c.b16 %v2553, %v2549
    %v2754 = vpack.c.b16 %v2558, %v2554
    %v2755 = vpack.c.b16 %v2559, %v2555
    %v2756 = vpack.c.b16 %v2560, %v2556
    %v2757 = vpack.c.b16 %v2561, %v2557
    %v2758 = vpack.c.b16 %v2566, %v2562
    %v2759 = vpack.c.b16 %v2567, %v2563
    %v2760 = vpack.c.b16 %v2568, %v2564
    %v2761 = vpack.c.b16 %v2569, %v2565
    %v2762 = vpack.c.b16 %v2574, %v2570
    %v2763 = vpack.c.b16 %v2575, %v2571
    %v2764 = vpack.c.b16 %v2576, %v2572
    %v2765 = vpack.c.b16 %v2577, %v2573
    %v2766 = vpack.c.b16 %v2582, %v2578
    %v2767 = vpack.c.b16 %v2583, %v2579
    %v2768 = vpack.c.b16 %v2584, %v2580
    %v2769 = vpack.c.b16 %v2585, %v2581
    %v2770 = vpack.c.b16 %v2590, %v2586
    %v2771 = vpack.c.b16 %v2591, %v2587
    %v2772 = vpack.c.b16 %v2592, %v2588
    %v2773 = vpack.c.b16 %v2593, %v2589
    %v2774 = vpack.c.b16 %v2598, %v2594
    %v2775 = vpack.c.b16 %v2599, %v2595
    %v2776 = vpack.c.b16 %v2600, %v2596
    %v2777 = vpack.c.b16 %v2601, %v2597
    %v2778 = vpack.c.b16 %v2606, %v2602
    %v2779 = vpack.c.b16 %v2607, %v2603
    %v2780 = vpack.c.b16 %v2608, %v2604
    %v2781 = vpack.c.b16 %v2609, %v2605
    %v2782 = vpack.c.b16 %v2614, %v2610
    %v2783 = vpack.c.b16 %v2615, %v2611
    %v2784 = vpack.c.b16 %v2616, %v2612
    %v2785 = vpack.c.b16 %v2617, %v2613
    %v2786 = vpack.c.b16 %v2622, %v2618
    %v2787 = vpack.c.b16 %v2623, %v2619
    %v2788 = vpack.c.b16 %v2624, %v2620
    %v2789 = vpack.c.b16 %v2625, %v2621
    %v2790 = vpack.c.b16 %v2630, %v2626
    %v2791 = vpack.c.b16 %v2631, %v2627
    %v2792 = vpack.c.b16 %v2632, %v2628
    %v2793 = vpack.c.b16 %v2633, %v2629
    %v2794 = vpack.c.b16 %v2638, %v2634
    %v2795 = vpack.c.b16 %v2639, %v2635
    %v2796 = vpack.c.b16 %v2640, %v2636
    %v2797 = vpack.c.b16 %v2641, %v2637
    %v2798 = vpack.c.b16 %v2646, %v2642
    %v2799 = vpack.c.b16 %v2647, %v2643
    %v2800 = vpack.c.b16 %v2648, %v2644
    %v2801 = vpack.c.b16 %v2649, %v2645
    %v2802 = vpack.c.b16 %v2654, %v2650
    %v2803 = vpack.c.b16 %v2655, %v2651
    %v2804 = vpack.c.b16 %v2656, %v2652
    %v2805 = vpack.c.b16 %v2657, %v2653
    %v2806 = vpack.c.b16 %v2662, %v2658
    %v2807 = vpack.c.b16 %v2663, %v2659
    %v2808 = vpack.c.b16 %v2664, %v2660
    %v2809 = vpack.c.b16 %v2665, %v2661
    %v2810 = vpack.c.b16 %v2670, %v2666
    %v2811 = vpack.c.b16 %v2671, %v2667
    %v2812 = vpack.c.b16 %v2672, %v2668
    %v2813 = vpack.c.b16 %v2673, %v2669
    %v2814 = vpack.c.b16 %v2678, %v2674
    %v2815 = vpack.c.b16 %v2679, %v2675
    %v2816 = vpack.c.b16 %v2680, %v2676
    %v2817 = vpack.c.b16 %v2681, %v2677
    %v2818 = vpack.c.b16 %v2686, %v2682
    %v2819 = vpack.c.b16 %v2687, %v2683
    %v2820 = vpack.c.b16 %v2688, %v2684
    %v2821 = vpack.c.b16 %v2689, %v2685
    %v2822 = vpack.c.b16 %v2694, %v2690
    %v2823 = vpack.c.b16 %v2695, %v2691
    %v2824 = vpack.c.b16 %v2696, %v2692
    %v2825 = vpack.c.b16 %v2697, %v2693
    %2954 = vmatprep.subr.bf16.mxu0 %v2699
    %2955 = vmatpush1.bf16.msra.mxu0 %v2698
    %2956 = vmatprep.subr.bf16.mxu0 %v2703
    %2957 = vmatpush1.bf16.msra.mxu0 %v2702
    %2958 = vmatprep.subr.bf16.mxu0 %v2707
    %2959 = vmatpush1.bf16.msra.mxu0 %v2706
    %2960 = vmatprep.subr.bf16.mxu0 %v2711
    %2961 = vmatpush1.bf16.msra.mxu0 %v2710
    %2962 = vmatprep.subr.bf16.mxu0 %v2715
    %2963 = vmatpush1.bf16.msra.mxu0 %v2714
    %2964 = vmatprep.subr.bf16.mxu0 %v2719
    %2965 = vmatpush1.bf16.msra.mxu0 %v2718
    %2966 = vmatprep.subr.bf16.mxu0 %v2723
    %2967 = vmatpush1.bf16.msra.mxu0 %v2722
    %2968 = vmatprep.subr.bf16.mxu0 %v2727
    %2969 = vmatpush1.bf16.msra.mxu0 %v2726
    %2970 = vmatprep.subr.bf16.mxu0 %v2731
    %2971 = vmatpush1.bf16.msra.mxu0 %v2730
    %2972 = vmatprep.subr.bf16.mxu0 %v2735
    %2973 = vmatpush1.bf16.msra.mxu0 %v2734
    %2974 = vmatprep.subr.bf16.mxu0 %v2739
    %2975 = vmatpush1.bf16.msra.mxu0 %v2738
    %2976 = vmatprep.subr.bf16.mxu0 %v2743
    %2977 = vmatpush1.bf16.msra.mxu0 %v2742
    %2978 = vmatprep.subr.bf16.mxu0 %v2747
    %2979 = vmatpush1.bf16.msra.mxu0 %v2746
    %2980 = vmatprep.subr.bf16.mxu0 %v2751
    %2981 = vmatpush1.bf16.msra.mxu0 %v2750
    %2982 = vmatprep.subr.bf16.mxu0 %v2755
    %2983 = vmatpush1.bf16.msra.mxu0 %v2754
    %2984 = vmatprep.subr.bf16.mxu0 %v2759
    %2985 = vmatpush1.bf16.msra.mxu0 %v2758
    %2986 = vmatprep.mubr.bf16.mxu0 %v2134
    %2987 = vmatmul.mubr.bf16.gmra.mrb[0].mxu0 %v2133
    %v2988 = vpop.f32.mrb[0].mxu0
    %v2989 = vadd.f32 %v2297, %v2988
    %v2990 = vpop.f32.mrb[0].mxu0
    %v2991 = vadd.f32 %v2301, %v2990
    %v2992 = vpop.f32.mrb[0].mxu0
    %v2993 = vadd.f32 %v2297, %v2992
    %v2994 = vpop.f32.mrb[0].mxu0
    %v2995 = vadd.f32 %v2301, %v2994
    %2996 = vmatprep.mubr.bf16.mxu0 %v2138
    %2997 = vmatmul.mubr.bf16.gmra.mrb[0].mxu0 %v2137
    %v2998 = vpop.f32.mrb[0].mxu0
    %v2999 = vadd.f32 %v2297, %v2998
    %v3000 = vpop.f32.mrb[0].mxu0
    %v3001 = vadd.f32 %v2301, %v3000
    %v3002 = vpop.f32.mrb[0].mxu0
    %v3003 = vadd.f32 %v2297, %v3002
    %v3004 = vpop.f32.mrb[0].mxu0
    %v3005 = vadd.f32 %v2301, %v3004
    %3006 = vmatprep.mubr.bf16.mxu0 %v2142
    %3007 = vmatmul.mubr.bf16.gmra.mrb[0].mxu0 %v2141
    %v3008 = vpop.f32.mrb[0].mxu0
    %v3009 = vadd.f32 %v2297, %v3008
    %v3010 = vpop.f32.mrb[0].mxu0
    %v3011 = vadd.f32 %v2301, %v3010
    %v3012 = vpop.f32.mrb[0].mxu0
    %v3013 = vadd.f32 %v2297, %v3012
    %v3014 = vpop.f32.mrb[0].mxu0
    %v3015 = vadd.f32 %v2301, %v3014
    %3016 = vmatprep.mubr.bf16.mxu0 %v2146
    %3017 = vmatmul.mubr.bf16.gmra.mrb[0].mxu0 %v2145
    %v3018 = vpop.f32.mrb[0].mxu0
    %v3019 = vadd.f32 %v2297, %v3018
    %v3020 = vpop.f32.mrb[0].mxu0
    %v3021 = vadd.f32 %v2301, %v3020
    %v3022 = vpop.f32.mrb[0].mxu0
    %v3023 = vadd.f32 %v2297, %v3022
    %v3024 = vpop.f32.mrb[0].mxu0
    %v3025 = vadd.f32 %v2301, %v3024
    %3026 = vmatprep.mubr.bf16.mxu0 %v2150
    %3027 = vmatmul.mubr.bf16.gmra.mrb[0].mxu0 %v2149
    %v3028 = vpop.f32.mrb[0].mxu0
    %v3029 = vadd.f32 %v2297, %v3028
    %v3030 = vpop.f32.mrb[0].mxu0
    %v3031 = vadd.f32 %v2301, %v3030
    %v3032 = vpop.f32.mrb[0].mxu0
    %v3033 = vadd.f32 %v2297, %v3032
    %v3034 = vpop.f32.mrb[0].mxu0
    %v3035 = vadd.f32 %v2301, %v3034
    %3036 = vmatprep.mubr.bf16.mxu0 %v2154
    %3037 = vmatmul.mubr.bf16.gmra.mrb[0].mxu0 %v2153
    %v3038 = vpop.f32.mrb[0].mxu0
    %v3039 = vadd.f32 %v2297, %v3038
    %v3040 = vpop.f32.mrb[0].mxu0
    %v3041 = vadd.f32 %v2301, %v3040
    %v3042 = vpop.f32.mrb[0].mxu0
    %v3043 = vadd.f32 %v2297, %v3042
    %v3044 = vpop.f32.mrb[0].mxu0
    %v3045 = vadd.f32 %v2301, %v3044
    %3046 = vmatprep.mubr.bf16.mxu0 %v2158
    %3047 = vmatmul.mubr.bf16.gmra.mrb[0].mxu0 %v2157
    %v3048 = vpop.f32.mrb[0].mxu0
    %v3049 = vadd.f32 %v2297, %v3048
    %v3050 = vpop.f32.mrb[0].mxu0
    %v3051 = vadd.f32 %v2301, %v3050
    %v3052 = vpop.f32.mrb[0].mxu0
    %v3053 = vadd.f32 %v2297, %v3052
    %v3054 = vpop.f32.mrb[0].mxu0
    %v3055 = vadd.f32 %v2301, %v3054
    %3056 = vmatprep.mubr.bf16.mxu0 %v2162
    %3057 = vmatmul.mubr.bf16.gmra.mrb[0].mxu0 %v2161
    %v3058 = vpop.f32.mrb[0].mxu0
    %v3059 = vadd.f32 %v2297, %v3058
    %v3060 = vpop.f32.mrb[0].mxu0
    %v3061 = vadd.f32 %v2301, %v3060
    %v3062 = vpop.f32.mrb[0].mxu0
    %v3063 = vadd.f32 %v2297, %v3062
    %v3064 = vpop.f32.mrb[0].mxu0
    %v3065 = vadd.f32 %v2301, %v3064
    %3066 = vdwg.mxu0
    %3067 = vmatprep.subr.bf16.mxu0 %v2763
    %3068 = vmatpush1.bf16.msra.mxu0 %v2762
    %3069 = vmatprep.subr.bf16.mxu0 %v2767
    %3070 = vmatpush1.bf16.msra.mxu0 %v2766
    %3071 = vmatprep.subr.bf16.mxu0 %v2771
    %3072 = vmatpush1.bf16.msra.mxu0 %v2770
    %3073 = vmatprep.subr.bf16.mxu0 %v2775
    %3074 = vmatpush1.bf16.msra.mxu0 %v2774
    %3075 = vmatprep.subr.bf16.mxu0 %v2779
    %3076 = vmatpush1.bf16.msra.mxu0 %v2778
    %3077 = vmatprep.subr.bf16.mxu0 %v2783
    %3078 = vmatpush1.bf16.msra.mxu0 %v2782
    %3079 = vmatprep.subr.bf16.mxu0 %v2787
    %3080 = vmatpush1.bf16.msra.mxu0 %v2786
    %3081 = vmatprep.subr.bf16.mxu0 %v2791
    %3082 = vmatpush1.bf16.msra.mxu0 %v2790
    %3083 = vmatprep.subr.bf16.mxu0 %v2795
    %3084 = vmatpush1.bf16.msra.mxu0 %v2794
    %3085 = vmatprep.subr.bf16.mxu0 %v2799
    %3086 = vmatpush1.bf16.msra.mxu0 %v2798
    %3087 = vmatprep.subr.bf16.mxu0 %v2803
    %3088 = vmatpush1.bf16.msra.mxu0 %v2802
    %3089 = vmatprep.subr.bf16.mxu0 %v2807
    %3090 = vmatpush1.bf16.msra.mxu0 %v2806
    %3091 = vmatprep.subr.bf16.mxu0 %v2811
    %3092 = vmatpush1.bf16.msra.mxu0 %v2810
    %3093 = vmatprep.subr.bf16.mxu0 %v2815
    %3094 = vmatpush1.bf16.msra.mxu0 %v2814
    %3095 = vmatprep.subr.bf16.mxu0 %v2819
    %3096 = vmatpush1.bf16.msra.mxu0 %v2818
    %3097 = vmatprep.subr.bf16.mxu0 %v2823
    %3098 = vmatpush1.bf16.msra.mxu0 %v2822
    %3099 = vmatprep.mubr.bf16.mxu0 %v2136
    %3100 = vmatmul.mubr.bf16.gmra.mrb[0].mxu0 %v2135
    %v3101 = vpop.f32.mrb[0].mxu0
    %v3102 = vadd.f32 %v2989, %v3101
    %v3103 = vpop.f32.mrb[0].mxu0
    %v3104 = vadd.f32 %v2991, %v3103
    %v3105 = vpop.f32.mrb[0].mxu0
    %v3106 = vadd.f32 %v2993, %v3105
    %v3107 = vpop.f32.mrb[0].mxu0
    %v3108 = vadd.f32 %v2995, %v3107
    %3109 = vmatprep.mubr.bf16.mxu0 %v2140
    %3110 = vmatmul.mubr.bf16.gmra.mrb[0].mxu0 %v2139
    %v3111 = vpop.f32.mrb[0].mxu0
    %v3112 = vadd.f32 %v2999, %v3111
    %v3113 = vpop.f32.mrb[0].mxu0
    %v3114 = vadd.f32 %v3001, %v3113
    %v3115 = vpop.f32.mrb[0].mxu0
    %v3116 = vadd.f32 %v3003, %v3115
    %v3117 = vpop.f32.mrb[0].mxu0
    %v3118 = vadd.f32 %v3005, %v3117
    %3119 = vmatprep.mubr.bf16.mxu0 %v2144
    %3120 = vmatmul.mubr.bf16.gmra.mrb[0].mxu0 %v2143
    %v3121 = vpop.f32.mrb[0].mxu0
    %v3122 = vadd.f32 %v3009, %v3121
    %v3123 = vpop.f32.mrb[0].mxu0
    %v3124 = vadd.f32 %v3011, %v3123
    %v3125 = vpop.f32.mrb[0].mxu0
    %v3126 = vadd.f32 %v3013, %v3125
    %v3127 = vpop.f32.mrb[0].mxu0
    %v3128 = vadd.f32 %v3015, %v3127
    %3129 = vmatprep.mubr.bf16.mxu0 %v2148
    %3130 = vmatmul.mubr.bf16.gmra.mrb[0].mxu0 %v2147
    %v3131 = vpop.f32.mrb[0].mxu0
    %v3132 = vadd.f32 %v3019, %v3131
    %v3133 = vpop.f32.mrb[0].mxu0
    %v3134 = vadd.f32 %v3021, %v3133
    %v3135 = vpop.f32.mrb[0].mxu0
    %v3136 = vadd.f32 %v3023, %v3135
    %v3137 = vpop.f32.mrb[0].mxu0
    %v3138 = vadd.f32 %v3025, %v3137
    %3139 = vmatprep.mubr.bf16.mxu0 %v2152
    %3140 = vmatmul.mubr.bf16.gmra.mrb[0].mxu0 %v2151
    %v3141 = vpop.f32.mrb[0].mxu0
    %v3142 = vadd.f32 %v3029, %v3141
    %v3143 = vpop.f32.mrb[0].mxu0
    %v3144 = vadd.f32 %v3031, %v3143
    %v3145 = vpop.f32.mrb[0].mxu0
    %v3146 = vadd.f32 %v3033, %v3145
    %v3147 = vpop.f32.mrb[0].mxu0
    %v3148 = vadd.f32 %v3035, %v3147
    %3149 = vmatprep.mubr.bf16.mxu0 %v2156
    %3150 = vmatmul.mubr.bf16.gmra.mrb[0].mxu0 %v2155
    %v3151 = vpop.f32.mrb[0].mxu0
    %v3152 = vadd.f32 %v3039, %v3151
    %v3153 = vpop.f32.mrb[0].mxu0
    %v3154 = vadd.f32 %v3041, %v3153
    %v3155 = vpop.f32.mrb[0].mxu0
    %v3156 = vadd.f32 %v3043, %v3155
    %v3157 = vpop.f32.mrb[0].mxu0
    %v3158 = vadd.f32 %v3045, %v3157
    %3159 = vmatprep.mubr.bf16.mxu0 %v2160
    %3160 = vmatmul.mubr.bf16.gmra.mrb[0].mxu0 %v2159
    %v3161 = vpop.f32.mrb[0].mxu0
    %v3162 = vadd.f32 %v3049, %v3161
    %v3163 = vpop.f32.mrb[0].mxu0
    %v3164 = vadd.f32 %v3051, %v3163
    %v3165 = vpop.f32.mrb[0].mxu0
    %v3166 = vadd.f32 %v3053, %v3165
    %v3167 = vpop.f32.mrb[0].mxu0
    %v3168 = vadd.f32 %v3055, %v3167
    %3169 = vmatprep.mubr.bf16.mxu0 %v2164
    %3170 = vmatmul.mubr.bf16.gmra.mrb[0].mxu0 %v2163
    %v3171 = vpop.f32.mrb[0].mxu0
    %v3172 = vadd.f32 %v3059, %v3171
    %v3173 = vpop.f32.mrb[0].mxu0
    %v3174 = vadd.f32 %v3061, %v3173
    %v3175 = vpop.f32.mrb[0].mxu0
    %v3176 = vadd.f32 %v3063, %v3175
    %v3177 = vpop.f32.mrb[0].mxu0
    %v3178 = vadd.f32 %v3065, %v3177
    %3179 = vdwg.mxu0
    %3180 = vmatprep.subr.bf16.mxu0 %v2701
    %3181 = vmatpush1.bf16.msra.mxu0 %v2700
    %3182 = vmatprep.subr.bf16.mxu0 %v2705
    %3183 = vmatpush1.bf16.msra.mxu0 %v2704
    %3184 = vmatprep.subr.bf16.mxu0 %v2709
    %3185 = vmatpush1.bf16.msra.mxu0 %v2708
    %3186 = vmatprep.subr.bf16.mxu0 %v2713
    %3187 = vmatpush1.bf16.msra.mxu0 %v2712
    %3188 = vmatprep.subr.bf16.mxu0 %v2717
    %3189 = vmatpush1.bf16.msra.mxu0 %v2716
    %3190 = vmatprep.subr.bf16.mxu0 %v2721
    %3191 = vmatpush1.bf16.msra.mxu0 %v2720
    %3192 = vmatprep.subr.bf16.mxu0 %v2725
    %3193 = vmatpush1.bf16.msra.mxu0 %v2724
    %3194 = vmatprep.subr.bf16.mxu0 %v2729
    %3195 = vmatpush1.bf16.msra.mxu0 %v2728
    %3196 = vmatprep.subr.bf16.mxu0 %v2733
    %3197 = vmatpush1.bf16.msra.mxu0 %v2732
    %3198 = vmatprep.subr.bf16.mxu0 %v2737
    %3199 = vmatpush1.bf16.msra.mxu0 %v2736
    %3200 = vmatprep.subr.bf16.mxu0 %v2741
    %3201 = vmatpush1.bf16.msra.mxu0 %v2740
    %3202 = vmatprep.subr.bf16.mxu0 %v2745
    %3203 = vmatpush1.bf16.msra.mxu0 %v2744
    %3204 = vmatprep.subr.bf16.mxu0 %v2749
    %3205 = vmatpush1.bf16.msra.mxu0 %v2748
    %3206 = vmatprep.subr.bf16.mxu0 %v2753
    %3207 = vmatpush1.bf16.msra.mxu0 %v2752
    %3208 = vmatprep.subr.bf16.mxu0 %v2757
    %3209 = vmatpush1.bf16.msra.mxu0 %v2756
    %3210 = vmatprep.subr.bf16.mxu0 %v2761
    %3211 = vmatpush1.bf16.msra.mxu0 %v2760
    %3212 = vmatprep.mubr.bf16.mxu0 %v2134
    %3213 = vmatmul.mubr.bf16.gmra.mrb[0].mxu0 %v2133
    %v3214 = vpop.f32.mrb[0].mxu0
    %v3215 = vadd.f32 %v2305, %v3214
    %v3216 = vpop.f32.mrb[0].mxu0
    %v3217 = vadd.f32 %v2309, %v3216
    %v3218 = vpop.f32.mrb[0].mxu0
    %v3219 = vadd.f32 %v2305, %v3218
    %v3220 = vpop.f32.mrb[0].mxu0
    %v3221 = vadd.f32 %v2309, %v3220
    %3222 = vmatprep.mubr.bf16.mxu0 %v2138
    %3223 = vmatmul.mubr.bf16.gmra.mrb[0].mxu0 %v2137
    %v3224 = vpop.f32.mrb[0].mxu0
    %v3225 = vadd.f32 %v2305, %v3224
    %v3226 = vpop.f32.mrb[0].mxu0
    %v3227 = vadd.f32 %v2309, %v3226
    %v3228 = vpop.f32.mrb[0].mxu0
    %v3229 = vadd.f32 %v2305, %v3228
    %v3230 = vpop.f32.mrb[0].mxu0
    %v3231 = vadd.f32 %v2309, %v3230
    %3232 = vmatprep.mubr.bf16.mxu0 %v2142
    %3233 = vmatmul.mubr.bf16.gmra.mrb[0].mxu0 %v2141
    %v3234 = vpop.f32.mrb[0].mxu0
    %v3235 = vadd.f32 %v2305, %v3234
    %v3236 = vpop.f32.mrb[0].mxu0
    %v3237 = vadd.f32 %v2309, %v3236
    %v3238 = vpop.f32.mrb[0].mxu0
    %v3239 = vadd.f32 %v2305, %v3238
    %v3240 = vpop.f32.mrb[0].mxu0
    %v3241 = vadd.f32 %v2309, %v3240
    %3242 = vmatprep.mubr.bf16.mxu0 %v2146
    %3243 = vmatmul.mubr.bf16.gmra.mrb[0].mxu0 %v2145
    %v3244 = vpop.f32.mrb[0].mxu0
    %v3245 = vadd.f32 %v2305, %v3244
    %v3246 = vpop.f32.mrb[0].mxu0
    %v3247 = vadd.f32 %v2309, %v3246
    %v3248 = vpop.f32.mrb[0].mxu0
    %v3249 = vadd.f32 %v2305, %v3248
    %v3250 = vpop.f32.mrb[0].mxu0
    %v3251 = vadd.f32 %v2309, %v3250
    %3252 = vmatprep.mubr.bf16.mxu0 %v2150
    %3253 = vmatmul.mubr.bf16.gmra.mrb[0].mxu0 %v2149
    %v3254 = vpop.f32.mrb[0].mxu0
    %v3255 = vadd.f32 %v2305, %v3254
    %v3256 = vpop.f32.mrb[0].mxu0
    %v3257 = vadd.f32 %v2309, %v3256
    %v3258 = vpop.f32.mrb[0].mxu0
    %v3259 = vadd.f32 %v2305, %v3258
    %v3260 = vpop.f32.mrb[0].mxu0
    %v3261 = vadd.f32 %v2309, %v3260
    %3262 = vmatprep.mubr.bf16.mxu0 %v2154
    %3263 = vmatmul.mubr.bf16.gmra.mrb[0].mxu0 %v2153
    %v3264 = vpop.f32.mrb[0].mxu0
    %v3265 = vadd.f32 %v2305, %v3264
    %v3266 = vpop.f32.mrb[0].mxu0
    %v3267 = vadd.f32 %v2309, %v3266
    %v3268 = vpop.f32.mrb[0].mxu0
    %v3269 = vadd.f32 %v2305, %v3268
    %v3270 = vpop.f32.mrb[0].mxu0
    %v3271 = vadd.f32 %v2309, %v3270
    %3272 = vmatprep.mubr.bf16.mxu0 %v2158
    %3273 = vmatmul.mubr.bf16.gmra.mrb[0].mxu0 %v2157
    %v3274 = vpop.f32.mrb[0].mxu0
    %v3275 = vadd.f32 %v2305, %v3274
    %v3276 = vpop.f32.mrb[0].mxu0
    %v3277 = vadd.f32 %v2309, %v3276
    %v3278 = vpop.f32.mrb[0].mxu0
    %v3279 = vadd.f32 %v2305, %v3278
    %v3280 = vpop.f32.mrb[0].mxu0
    %v3281 = vadd.f32 %v2309, %v3280
    %3282 = vmatprep.mubr.bf16.mxu0 %v2162
    %3283 = vmatmul.mubr.bf16.gmra.mrb[0].mxu0 %v2161
    %v3284 = vpop.f32.mrb[0].mxu0
    %v3285 = vadd.f32 %v2305, %v3284
    %v3286 = vpop.f32.mrb[0].mxu0
    %v3287 = vadd.f32 %v2309, %v3286
    %v3288 = vpop.f32.mrb[0].mxu0
    %v3289 = vadd.f32 %v2305, %v3288
    %v3290 = vpop.f32.mrb[0].mxu0
    %v3291 = vadd.f32 %v2309, %v3290
    %3292 = vdwg.mxu0
    %3293 = vmatprep.subr.bf16.mxu0 %v2765
    %3294 = vmatpush1.bf16.msra.mxu0 %v2764
    %3295 = vmatprep.subr.bf16.mxu0 %v2769
    %3296 = vmatpush1.bf16.msra.mxu0 %v2768
    %3297 = vmatprep.subr.bf16.mxu0 %v2773
    %3298 = vmatpush1.bf16.msra.mxu0 %v2772
    %3299 = vmatprep.subr.bf16.mxu0 %v2777
    %3300 = vmatpush1.bf16.msra.mxu0 %v2776
    %3301 = vmatprep.subr.bf16.mxu0 %v2781
    %3302 = vmatpush1.bf16.msra.mxu0 %v2780
    %3303 = vmatprep.subr.bf16.mxu0 %v2785
    %3304 = vmatpush1.bf16.msra.mxu0 %v2784
    %3305 = vmatprep.subr.bf16.mxu0 %v2789
    %3306 = vmatpush1.bf16.msra.mxu0 %v2788
    %3307 = vmatprep.subr.bf16.mxu0 %v2793
    %3308 = vmatpush1.bf16.msra.mxu0 %v2792
    %3309 = vmatprep.subr.bf16.mxu0 %v2797
    %3310 = vmatpush1.bf16.msra.mxu0 %v2796
    %3311 = vmatprep.subr.bf16.mxu0 %v2801
    %3312 = vmatpush1.bf16.msra.mxu0 %v2800
    %3313 = vmatprep.subr.bf16.mxu0 %v2805
    %3314 = vmatpush1.bf16.msra.mxu0 %v2804
    %3315 = vmatprep.subr.bf16.mxu0 %v2809
    %3316 = vmatpush1.bf16.msra.mxu0 %v2808
    %3317 = vmatprep.subr.bf16.mxu0 %v2813
    %3318 = vmatpush1.bf16.msra.mxu0 %v2812
    %3319 = vmatprep.subr.bf16.mxu0 %v2817
    %3320 = vmatpush1.bf16.msra.mxu0 %v2816
    %3321 = vmatprep.subr.bf16.mxu0 %v2821
    %3322 = vmatpush1.bf16.msra.mxu0 %v2820
    %3323 = vmatprep.subr.bf16.mxu0 %v2825
    %3324 = vmatpush1.bf16.msra.mxu0 %v2824
    %3325 = vmatprep.mubr.bf16.mxu0 %v2136
    %3326 = vmatmul.mubr.bf16.gmra.mrb[0].mxu0 %v2135
    %v3327 = vpop.f32.mrb[0].mxu0
    %v3328 = vadd.f32 %v3215, %v3327
    %v3329 = vpop.f32.mrb[0].mxu0
    %v3330 = vadd.f32 %v3217, %v3329
    %v3331 = vpop.f32.mrb[0].mxu0
    %v3332 = vadd.f32 %v3219, %v3331
    %v3333 = vpop.f32.mrb[0].mxu0
    %v3334 = vadd.f32 %v3221, %v3333
    %3335 = vmatprep.mubr.bf16.mxu0 %v2140
    %3336 = vmatmul.mubr.bf16.gmra.mrb[0].mxu0 %v2139
    %v3337 = vpop.f32.mrb[0].mxu0
    %v3338 = vadd.f32 %v3225, %v3337
    %v3339 = vpop.f32.mrb[0].mxu0
    %v3340 = vadd.f32 %v3227, %v3339
    %v3341 = vpop.f32.mrb[0].mxu0
    %v3342 = vadd.f32 %v3229, %v3341
    %v3343 = vpop.f32.mrb[0].mxu0
    %v3344 = vadd.f32 %v3231, %v3343
    %3345 = vmatprep.mubr.bf16.mxu0 %v2144
    %3346 = vmatmul.mubr.bf16.gmra.mrb[0].mxu0 %v2143
    %v3347 = vpop.f32.mrb[0].mxu0
    %v3348 = vadd.f32 %v3235, %v3347
    %v3349 = vpop.f32.mrb[0].mxu0
    %v3350 = vadd.f32 %v3237, %v3349
    %v3351 = vpop.f32.mrb[0].mxu0
    %v3352 = vadd.f32 %v3239, %v3351
    %v3353 = vpop.f32.mrb[0].mxu0
    %v3354 = vadd.f32 %v3241, %v3353
    %3355 = vmatprep.mubr.bf16.mxu0 %v2148
    %3356 = vmatmul.mubr.bf16.gmra.mrb[0].mxu0 %v2147
    %v3357 = vpop.f32.mrb[0].mxu0
    %v3358 = vadd.f32 %v3245, %v3357
    %v3359 = vpop.f32.mrb[0].mxu0
    %v3360 = vadd.f32 %v3247, %v3359
    %v3361 = vpop.f32.mrb[0].mxu0
    %v3362 = vadd.f32 %v3249, %v3361
    %v3363 = vpop.f32.mrb[0].mxu0
    %v3364 = vadd.f32 %v3251, %v3363
    %3365 = vmatprep.mubr.bf16.mxu0 %v2152
    %3366 = vmatmul.mubr.bf16.gmra.mrb[0].mxu0 %v2151
    %v3367 = vpop.f32.mrb[0].mxu0
    %v3368 = vadd.f32 %v3255, %v3367
    %v3369 = vpop.f32.mrb[0].mxu0
    %v3370 = vadd.f32 %v3257, %v3369
    %v3371 = vpop.f32.mrb[0].mxu0
    %v3372 = vadd.f32 %v3259, %v3371
    %v3373 = vpop.f32.mrb[0].mxu0
    %v3374 = vadd.f32 %v3261, %v3373
    %3375 = vmatprep.mubr.bf16.mxu0 %v2156
    %3376 = vmatmul.mubr.bf16.gmra.mrb[0].mxu0 %v2155
    %v3377 = vpop.f32.mrb[0].mxu0
    %v3378 = vadd.f32 %v3265, %v3377
    %v3379 = vpop.f32.mrb[0].mxu0
    %v3380 = vadd.f32 %v3267, %v3379
    %v3381 = vpop.f32.mrb[0].mxu0
    %v3382 = vadd.f32 %v3269, %v3381
    %v3383 = vpop.f32.mrb[0].mxu0
    %v3384 = vadd.f32 %v3271, %v3383
    %3385 = vmatprep.mubr.bf16.mxu0 %v2160
    %3386 = vmatmul.mubr.bf16.gmra.mrb[0].mxu0 %v2159
    %v3387 = vpop.f32.mrb[0].mxu0
    %v3388 = vadd.f32 %v3275, %v3387
    %v3389 = vpop.f32.mrb[0].mxu0
    %v3390 = vadd.f32 %v3277, %v3389
    %v3391 = vpop.f32.mrb[0].mxu0
    %v3392 = vadd.f32 %v3279, %v3391
    %v3393 = vpop.f32.mrb[0].mxu0
    %v3394 = vadd.f32 %v3281, %v3393
    %3395 = vmatprep.mubr.bf16.mxu0 %v2164
    %3396 = vmatmul.mubr.bf16.gmra.mrb[0].mxu0 %v2163
    %v3397 = vpop.f32.mrb[0].mxu0
    %v3398 = vadd.f32 %v3285, %v3397
    %v3399 = vpop.f32.mrb[0].mxu0
    %v3400 = vadd.f32 %v3287, %v3399
    %v3401 = vpop.f32.mrb[0].mxu0
    %v3402 = vadd.f32 %v3289, %v3401
    %v3403 = vpop.f32.mrb[0].mxu0
    %v3404 = vadd.f32 %v3291, %v3403
    %3405 = vdwg.mxu0
    %v3406 = vmax.f32 %v3102, 0.0
    %v3407 = vmax.f32 %v3104, 0.0
    %v3408 = vmax.f32 %v3328, 0.0
    %v3409 = vmax.f32 %v3330, 0.0
    %v3410 = vmax.f32 %v3106, 0.0
    %v3411 = vmax.f32 %v3108, 0.0
    %v3412 = vmax.f32 %v3332, 0.0
    %v3413 = vmax.f32 %v3334, 0.0
    %v3414 = vmax.f32 %v3112, 0.0
    %v3415 = vmax.f32 %v3114, 0.0
    %v3416 = vmax.f32 %v3338, 0.0
    %v3417 = vmax.f32 %v3340, 0.0
    %v3418 = vmax.f32 %v3116, 0.0
    %v3419 = vmax.f32 %v3118, 0.0
    %v3420 = vmax.f32 %v3342, 0.0
    %v3421 = vmax.f32 %v3344, 0.0
    %v3422 = vmax.f32 %v3122, 0.0
    %v3423 = vmax.f32 %v3124, 0.0
    %v3424 = vmax.f32 %v3348, 0.0
    %v3425 = vmax.f32 %v3350, 0.0
    %v3426 = vmax.f32 %v3126, 0.0
    %v3427 = vmax.f32 %v3128, 0.0
    %v3428 = vmax.f32 %v3352, 0.0
    %v3429 = vmax.f32 %v3354, 0.0
    %v3430 = vmax.f32 %v3132, 0.0
    %v3431 = vmax.f32 %v3134, 0.0
    %v3432 = vmax.f32 %v3358, 0.0
    %v3433 = vmax.f32 %v3360, 0.0
    %v3434 = vmax.f32 %v3136, 0.0
    %v3435 = vmax.f32 %v3138, 0.0
    %v3436 = vmax.f32 %v3362, 0.0
    %v3437 = vmax.f32 %v3364, 0.0
    %v3438 = vmax.f32 %v3142, 0.0
    %v3439 = vmax.f32 %v3144, 0.0
    %v3440 = vmax.f32 %v3368, 0.0
    %v3441 = vmax.f32 %v3370, 0.0
    %v3442 = vmax.f32 %v3146, 0.0
    %v3443 = vmax.f32 %v3148, 0.0
    %v3444 = vmax.f32 %v3372, 0.0
    %v3445 = vmax.f32 %v3374, 0.0
    %v3446 = vmax.f32 %v3152, 0.0
    %v3447 = vmax.f32 %v3154, 0.0
    %v3448 = vmax.f32 %v3378, 0.0
    %v3449 = vmax.f32 %v3380, 0.0
    %v3450 = vmax.f32 %v3156, 0.0
    %v3451 = vmax.f32 %v3158, 0.0
    %v3452 = vmax.f32 %v3382, 0.0
    %v3453 = vmax.f32 %v3384, 0.0
    %v3454 = vmax.f32 %v3162, 0.0
    %v3455 = vmax.f32 %v3164, 0.0
    %v3456 = vmax.f32 %v3388, 0.0
    %v3457 = vmax.f32 %v3390, 0.0
    %v3458 = vmax.f32 %v3166, 0.0
    %v3459 = vmax.f32 %v3168, 0.0
    %v3460 = vmax.f32 %v3392, 0.0
    %v3461 = vmax.f32 %v3394, 0.0
    %v3462 = vmax.f32 %v3172, 0.0
    %v3463 = vmax.f32 %v3174, 0.0
    %v3464 = vmax.f32 %v3398, 0.0
    %v3465 = vmax.f32 %v3400, 0.0
    %v3466 = vmax.f32 %v3176, 0.0
    %v3467 = vmax.f32 %v3178, 0.0
    %v3468 = vmax.f32 %v3402, 0.0
    %v3469 = vmax.f32 %v3404, 0.0
    %v3470 = vpack.c.bf16 %v3410, %v3406
    %v3471 = vpack.c.bf16 %v3411, %v3407
    %v3472 = vpack.c.bf16 %v3412, %v3408
    %v3473 = vpack.c.bf16 %v3413, %v3409
    %v3474 = vpack.c.bf16 %v3418, %v3414
    %v3475 = vpack.c.bf16 %v3419, %v3415
    %v3476 = vpack.c.bf16 %v3420, %v3416
    %v3477 = vpack.c.bf16 %v3421, %v3417
    %v3478 = vpack.c.bf16 %v3426, %v3422
    %v3479 = vpack.c.bf16 %v3427, %v3423
    %v3480 = vpack.c.bf16 %v3428, %v3424
    %v3481 = vpack.c.bf16 %v3429, %v3425
    %v3482 = vpack.c.bf16 %v3434, %v3430
    %v3483 = vpack.c.bf16 %v3435, %v3431
    %v3484 = vpack.c.bf16 %v3436, %v3432
    %v3485 = vpack.c.bf16 %v3437, %v3433
    %v3486 = vpack.c.bf16 %v3442, %v3438
    %v3487 = vpack.c.bf16 %v3443, %v3439
    %v3488 = vpack.c.bf16 %v3444, %v3440
    %v3489 = vpack.c.bf16 %v3445, %v3441
    %v3490 = vpack.c.bf16 %v3450, %v3446
    %v3491 = vpack.c.bf16 %v3451, %v3447
    %v3492 = vpack.c.bf16 %v3452, %v3448
    %v3493 = vpack.c.bf16 %v3453, %v3449
    %v3494 = vpack.c.bf16 %v3458, %v3454
    %v3495 = vpack.c.bf16 %v3459, %v3455
    %v3496 = vpack.c.bf16 %v3460, %v3456
    %v3497 = vpack.c.bf16 %v3461, %v3457
    %v3498 = vpack.c.bf16 %v3466, %v3462
    %v3499 = vpack.c.bf16 %v3467, %v3463
    %v3500 = vpack.c.bf16 %v3468, %v3464
    %v3501 = vpack.c.bf16 %v3469, %v3465
    %v3502 = vld [vmem:[#allocation10] sm:$0xff]
    %v3503 = vld [vmem:[#allocation10 + $0x8] sm:$0xff]
    %v3504 = vld [vmem:[#allocation10 + $0x10] sm:$0xff]
    %v3505 = vld [vmem:[#allocation10 + $0x18] sm:$0xff]
    %v3506 = vld [vmem:[#allocation10 + $0x20] sm:$0xff]
    %v3507 = vld [vmem:[#allocation10 + $0x28] sm:$0xff]
    %v3508 = vld [vmem:[#allocation10 + $0x30] sm:$0xff]
    %v3509 = vld [vmem:[#allocation10 + $0x38] sm:$0xff]
    %v3510 = vld [vmem:[#allocation10 + $0x40] sm:$0xff]
    %v3511 = vld [vmem:[#allocation10 + $0x48] sm:$0xff]
    %v3512 = vld [vmem:[#allocation10 + $0x50] sm:$0xff]
    %v3513 = vld [vmem:[#allocation10 + $0x58] sm:$0xff]
    %v3514 = vld [vmem:[#allocation10 + $0x60] sm:$0xff]
    %v3515 = vld [vmem:[#allocation10 + $0x68] sm:$0xff]
    %v3516 = vld [vmem:[#allocation10 + $0x70] sm:$0xff]
    %v3517 = vld [vmem:[#allocation10 + $0x78] sm:$0xff]
    %v3518 = vld [vmem:[#allocation10 + $0x80] sm:$0xff]
    %v3519 = vld [vmem:[#allocation10 + $0x88] sm:$0xff]
    %v3520 = vld [vmem:[#allocation10 + $0x90] sm:$0xff]
    %v3521 = vld [vmem:[#allocation10 + $0x98] sm:$0xff]
    %v3522 = vld [vmem:[#allocation10 + $0xa0] sm:$0xff]
    %v3523 = vld [vmem:[#allocation10 + $0xa8] sm:$0xff]
    %v3524 = vld [vmem:[#allocation10 + $0xb0] sm:$0xff]
    %v3525 = vld [vmem:[#allocation10 + $0xb8] sm:$0xff]
    %v3526 = vld [vmem:[#allocation10 + $0xc0] sm:$0xff]
    %v3527 = vld [vmem:[#allocation10 + $0xc8] sm:$0xff]
    %v3528 = vld [vmem:[#allocation10 + $0xd0] sm:$0xff]
    %v3529 = vld [vmem:[#allocation10 + $0xd8] sm:$0xff]
    %v3530 = vld [vmem:[#allocation10 + $0xe0] sm:$0xff]
    %v3531 = vld [vmem:[#allocation10 + $0xe8] sm:$0xff]
    %v3532 = vld [vmem:[#allocation10 + $0xf0] sm:$0xff]
    %v3533 = vld [vmem:[#allocation10 + $0xf8] sm:$0xff]
    %v3534 = vld [vmem:[#allocation10 + $0x100] sm:$0xff]
    %v3535 = vld [vmem:[#allocation10 + $0x108] sm:$0xff]
    %v3536 = vld [vmem:[#allocation10 + $0x110] sm:$0xff]
    %v3537 = vld [vmem:[#allocation10 + $0x118] sm:$0xff]
    %v3538 = vld [vmem:[#allocation10 + $0x120] sm:$0xff]
    %v3539 = vld [vmem:[#allocation10 + $0x128] sm:$0xff]
    %v3540 = vld [vmem:[#allocation10 + $0x130] sm:$0xff]
    %v3541 = vld [vmem:[#allocation10 + $0x138] sm:$0xff]
    %v3542 = vld [vmem:[#allocation10 + $0x140] sm:$0xff]
    %v3543 = vld [vmem:[#allocation10 + $0x148] sm:$0xff]
    %v3544 = vld [vmem:[#allocation10 + $0x150] sm:$0xff]
    %v3545 = vld [vmem:[#allocation10 + $0x158] sm:$0xff]
    %v3546 = vld [vmem:[#allocation10 + $0x160] sm:$0xff]
    %v3547 = vld [vmem:[#allocation10 + $0x168] sm:$0xff]
    %v3548 = vld [vmem:[#allocation10 + $0x170] sm:$0xff]
    %v3549 = vld [vmem:[#allocation10 + $0x178] sm:$0xff]
    %v3550 = vld [vmem:[#allocation10 + $0x180] sm:$0xff]
    %v3551 = vld [vmem:[#allocation10 + $0x188] sm:$0xff]
    %v3552 = vld [vmem:[#allocation10 + $0x190] sm:$0xff]
    %v3553 = vld [vmem:[#allocation10 + $0x198] sm:$0xff]
    %v3554 = vld [vmem:[#allocation10 + $0x1a0] sm:$0xff]
    %v3555 = vld [vmem:[#allocation10 + $0x1a8] sm:$0xff]
    %v3556 = vld [vmem:[#allocation10 + $0x1b0] sm:$0xff]
    %v3557 = vld [vmem:[#allocation10 + $0x1b8] sm:$0xff]
    %v3558 = vld [vmem:[#allocation10 + $0x1c0] sm:$0xff]
    %v3559 = vld [vmem:[#allocation10 + $0x1c8] sm:$0xff]
    %v3560 = vld [vmem:[#allocation10 + $0x1d0] sm:$0xff]
    %v3561 = vld [vmem:[#allocation10 + $0x1d8] sm:$0xff]
    %v3562 = vld [vmem:[#allocation10 + $0x1e0] sm:$0xff]
    %v3563 = vld [vmem:[#allocation10 + $0x1e8] sm:$0xff]
    %v3564 = vld [vmem:[#allocation10 + $0x1f0] sm:$0xff]
    %v3565 = vld [vmem:[#allocation10 + $0x1f8] sm:$0xff]
    %v3566 = vld [vmem:[#allocation10 + $0x200] sm:$0xff]
    %v3567 = vld [vmem:[#allocation10 + $0x208] sm:$0xff]
    %v3568 = vld [vmem:[#allocation10 + $0x210] sm:$0xff]
    %v3569 = vld [vmem:[#allocation10 + $0x218] sm:$0xff]
    %v3570 = vld [vmem:[#allocation10 + $0x220] sm:$0xff]
    %v3571 = vld [vmem:[#allocation10 + $0x228] sm:$0xff]
    %v3572 = vld [vmem:[#allocation10 + $0x230] sm:$0xff]
    %v3573 = vld [vmem:[#allocation10 + $0x238] sm:$0xff]
    %v3574 = vld [vmem:[#allocation10 + $0x240] sm:$0xff]
    %v3575 = vld [vmem:[#allocation10 + $0x248] sm:$0xff]
    %v3576 = vld [vmem:[#allocation10 + $0x250] sm:$0xff]
    %v3577 = vld [vmem:[#allocation10 + $0x258] sm:$0xff]
    %v3578 = vld [vmem:[#allocation10 + $0x260] sm:$0xff]
    %v3579 = vld [vmem:[#allocation10 + $0x268] sm:$0xff]
    %v3580 = vld [vmem:[#allocation10 + $0x270] sm:$0xff]
    %v3581 = vld [vmem:[#allocation10 + $0x278] sm:$0xff]
    %v3582 = vld [vmem:[#allocation10 + $0x280] sm:$0xff]
    %v3583 = vld [vmem:[#allocation10 + $0x288] sm:$0xff]
    %v3584 = vld [vmem:[#allocation10 + $0x290] sm:$0xff]
    %v3585 = vld [vmem:[#allocation10 + $0x298] sm:$0xff]
    %v3586 = vld [vmem:[#allocation10 + $0x2a0] sm:$0xff]
    %v3587 = vld [vmem:[#allocation10 + $0x2a8] sm:$0xff]
    %v3588 = vld [vmem:[#allocation10 + $0x2b0] sm:$0xff]
    %v3589 = vld [vmem:[#allocation10 + $0x2b8] sm:$0xff]
    %v3590 = vld [vmem:[#allocation10 + $0x2c0] sm:$0xff]
    %v3591 = vld [vmem:[#allocation10 + $0x2c8] sm:$0xff]
    %v3592 = vld [vmem:[#allocation10 + $0x2d0] sm:$0xff]
    %v3593 = vld [vmem:[#allocation10 + $0x2d8] sm:$0xff]
    %v3594 = vld [vmem:[#allocation10 + $0x2e0] sm:$0xff]
    %v3595 = vld [vmem:[#allocation10 + $0x2e8] sm:$0xff]
    %v3596 = vld [vmem:[#allocation10 + $0x2f0] sm:$0xff]
    %v3597 = vld [vmem:[#allocation10 + $0x2f8] sm:$0xff]
    %v3598 = vld [vmem:[#allocation10 + $0x300] sm:$0xff]
    %v3599 = vld [vmem:[#allocation10 + $0x308] sm:$0xff]
    %v3600 = vld [vmem:[#allocation10 + $0x310] sm:$0xff]
    %v3601 = vld [vmem:[#allocation10 + $0x318] sm:$0xff]
    %v3602 = vld [vmem:[#allocation10 + $0x320] sm:$0xff]
    %v3603 = vld [vmem:[#allocation10 + $0x328] sm:$0xff]
    %v3604 = vld [vmem:[#allocation10 + $0x330] sm:$0xff]
    %v3605 = vld [vmem:[#allocation10 + $0x338] sm:$0xff]
    %v3606 = vld [vmem:[#allocation10 + $0x340] sm:$0xff]
    %v3607 = vld [vmem:[#allocation10 + $0x348] sm:$0xff]
    %v3608 = vld [vmem:[#allocation10 + $0x350] sm:$0xff]
    %v3609 = vld [vmem:[#allocation10 + $0x358] sm:$0xff]
    %v3610 = vld [vmem:[#allocation10 + $0x360] sm:$0xff]
    %v3611 = vld [vmem:[#allocation10 + $0x368] sm:$0xff]
    %v3612 = vld [vmem:[#allocation10 + $0x370] sm:$0xff]
    %v3613 = vld [vmem:[#allocation10 + $0x378] sm:$0xff]
    %v3614 = vld [vmem:[#allocation10 + $0x380] sm:$0xff]
    %v3615 = vld [vmem:[#allocation10 + $0x388] sm:$0xff]
    %v3616 = vld [vmem:[#allocation10 + $0x390] sm:$0xff]
    %v3617 = vld [vmem:[#allocation10 + $0x398] sm:$0xff]
    %v3618 = vld [vmem:[#allocation10 + $0x3a0] sm:$0xff]
    %v3619 = vld [vmem:[#allocation10 + $0x3a8] sm:$0xff]
    %v3620 = vld [vmem:[#allocation10 + $0x3b0] sm:$0xff]
    %v3621 = vld [vmem:[#allocation10 + $0x3b8] sm:$0xff]
    %v3622 = vld [vmem:[#allocation10 + $0x3c0] sm:$0xff]
    %v3623 = vld [vmem:[#allocation10 + $0x3c8] sm:$0xff]
    %v3624 = vld [vmem:[#allocation10 + $0x3d0] sm:$0xff]
    %v3625 = vld [vmem:[#allocation10 + $0x3d8] sm:$0xff]
    %v3626 = vld [vmem:[#allocation10 + $0x3e0] sm:$0xff]
    %v3627 = vld [vmem:[#allocation10 + $0x3e8] sm:$0xff]
    %v3628 = vld [vmem:[#allocation10 + $0x3f0] sm:$0xff]
    %v3629 = vld [vmem:[#allocation10 + $0x3f8] sm:$0xff]
    %v3631 = vlaneseq
    %v3632 = vshrl.u32 %v3631, 7
    %v3633 = vsub.s32 0, %v3632
    %v3634 = vrot.slane %v146, %v3633
    %v3635 = vlaneseq
    %v3636 = vshrl.u32 %v3635, 7
    %v3637 = vsub.s32 1, %v3636
    %v3638 = vrot.slane %v146, %v3637
    %v3639 = vlaneseq
    %v3640 = vshrl.u32 %v3639, 7
    %v3641 = vsub.s32 2, %v3640
    %v3642 = vrot.slane %v146, %v3641
    %v3643 = vlaneseq
    %v3644 = vshrl.u32 %v3643, 7
    %v3645 = vsub.s32 3, %v3644
    %v3646 = vrot.slane %v146, %v3645
    %v3779 = vunpack.c.l.b16 %v3502
    %v3780 = vunpack.c.h.b16 %v3502
    %v3781 = vunpack.c.l.b16 %v3503
    %v3782 = vunpack.c.h.b16 %v3503
    %v3783 = vunpack.c.l.b16 %v3504
    %v3784 = vunpack.c.h.b16 %v3504
    %v3785 = vunpack.c.l.b16 %v3505
    %v3786 = vunpack.c.h.b16 %v3505
    %v3787 = vunpack.c.l.b16 %v3506
    %v3788 = vunpack.c.h.b16 %v3506
    %v3789 = vunpack.c.l.b16 %v3507
    %v3790 = vunpack.c.h.b16 %v3507
    %v3791 = vunpack.c.l.b16 %v3508
    %v3792 = vunpack.c.h.b16 %v3508
    %v3793 = vunpack.c.l.b16 %v3509
    %v3794 = vunpack.c.h.b16 %v3509
    %v3795 = vunpack.c.l.b16 %v3510
    %v3796 = vunpack.c.h.b16 %v3510
    %v3797 = vunpack.c.l.b16 %v3511
    %v3798 = vunpack.c.h.b16 %v3511
    %v3799 = vunpack.c.l.b16 %v3512
    %v3800 = vunpack.c.h.b16 %v3512
    %v3801 = vunpack.c.l.b16 %v3513
    %v3802 = vunpack.c.h.b16 %v3513
    %v3803 = vunpack.c.l.b16 %v3514
    %v3804 = vunpack.c.h.b16 %v3514
    %v3805 = vunpack.c.l.b16 %v3515
    %v3806 = vunpack.c.h.b16 %v3515
    %v3807 = vunpack.c.l.b16 %v3516
    %v3808 = vunpack.c.h.b16 %v3516
    %v3809 = vunpack.c.l.b16 %v3517
    %v3810 = vunpack.c.h.b16 %v3517
    %v3811 = vunpack.c.l.b16 %v3518
    %v3812 = vunpack.c.h.b16 %v3518
    %v3813 = vunpack.c.l.b16 %v3519
    %v3814 = vunpack.c.h.b16 %v3519
    %v3815 = vunpack.c.l.b16 %v3520
    %v3816 = vunpack.c.h.b16 %v3520
    %v3817 = vunpack.c.l.b16 %v3521
    %v3818 = vunpack.c.h.b16 %v3521
    %v3819 = vunpack.c.l.b16 %v3522
    %v3820 = vunpack.c.h.b16 %v3522
    %v3821 = vunpack.c.l.b16 %v3523
    %v3822 = vunpack.c.h.b16 %v3523
    %v3823 = vunpack.c.l.b16 %v3524
    %v3824 = vunpack.c.h.b16 %v3524
    %v3825 = vunpack.c.l.b16 %v3525
    %v3826 = vunpack.c.h.b16 %v3525
    %v3827 = vunpack.c.l.b16 %v3526
    %v3828 = vunpack.c.h.b16 %v3526
    %v3829 = vunpack.c.l.b16 %v3527
    %v3830 = vunpack.c.h.b16 %v3527
    %v3831 = vunpack.c.l.b16 %v3528
    %v3832 = vunpack.c.h.b16 %v3528
    %v3833 = vunpack.c.l.b16 %v3529
    %v3834 = vunpack.c.h.b16 %v3529
    %v3835 = vunpack.c.l.b16 %v3530
    %v3836 = vunpack.c.h.b16 %v3530
    %v3837 = vunpack.c.l.b16 %v3531
    %v3838 = vunpack.c.h.b16 %v3531
    %v3839 = vunpack.c.l.b16 %v3532
    %v3840 = vunpack.c.h.b16 %v3532
    %v3841 = vunpack.c.l.b16 %v3533
    %v3842 = vunpack.c.h.b16 %v3533
    %v3843 = vunpack.c.l.b16 %v3534
    %v3844 = vunpack.c.h.b16 %v3534
    %v3845 = vunpack.c.l.b16 %v3535
    %v3846 = vunpack.c.h.b16 %v3535
    %v3847 = vunpack.c.l.b16 %v3536
    %v3848 = vunpack.c.h.b16 %v3536
    %v3849 = vunpack.c.l.b16 %v3537
    %v3850 = vunpack.c.h.b16 %v3537
    %v3851 = vunpack.c.l.b16 %v3538
    %v3852 = vunpack.c.h.b16 %v3538
    %v3853 = vunpack.c.l.b16 %v3539
    %v3854 = vunpack.c.h.b16 %v3539
    %v3855 = vunpack.c.l.b16 %v3540
    %v3856 = vunpack.c.h.b16 %v3540
    %v3857 = vunpack.c.l.b16 %v3541
    %v3858 = vunpack.c.h.b16 %v3541
    %v3859 = vunpack.c.l.b16 %v3542
    %v3860 = vunpack.c.h.b16 %v3542
    %v3861 = vunpack.c.l.b16 %v3543
    %v3862 = vunpack.c.h.b16 %v3543
    %v3863 = vunpack.c.l.b16 %v3544
    %v3864 = vunpack.c.h.b16 %v3544
    %v3865 = vunpack.c.l.b16 %v3545
    %v3866 = vunpack.c.h.b16 %v3545
    %v3867 = vunpack.c.l.b16 %v3546
    %v3868 = vunpack.c.h.b16 %v3546
    %v3869 = vunpack.c.l.b16 %v3547
    %v3870 = vunpack.c.h.b16 %v3547
    %v3871 = vunpack.c.l.b16 %v3548
    %v3872 = vunpack.c.h.b16 %v3548
    %v3873 = vunpack.c.l.b16 %v3549
    %v3874 = vunpack.c.h.b16 %v3549
    %v3875 = vunpack.c.l.b16 %v3550
    %v3876 = vunpack.c.h.b16 %v3550
    %v3877 = vunpack.c.l.b16 %v3551
    %v3878 = vunpack.c.h.b16 %v3551
    %v3879 = vunpack.c.l.b16 %v3552
    %v3880 = vunpack.c.h.b16 %v3552
    %v3881 = vunpack.c.l.b16 %v3553
    %v3882 = vunpack.c.h.b16 %v3553
    %v3883 = vunpack.c.l.b16 %v3554
    %v3884 = vunpack.c.h.b16 %v3554
    %v3885 = vunpack.c.l.b16 %v3555
    %v3886 = vunpack.c.h.b16 %v3555
    %v3887 = vunpack.c.l.b16 %v3556
    %v3888 = vunpack.c.h.b16 %v3556
    %v3889 = vunpack.c.l.b16 %v3557
    %v3890 = vunpack.c.h.b16 %v3557
    %v3891 = vunpack.c.l.b16 %v3558
    %v3892 = vunpack.c.h.b16 %v3558
    %v3893 = vunpack.c.l.b16 %v3559
    %v3894 = vunpack.c.h.b16 %v3559
    %v3895 = vunpack.c.l.b16 %v3560
    %v3896 = vunpack.c.h.b16 %v3560
    %v3897 = vunpack.c.l.b16 %v3561
    %v3898 = vunpack.c.h.b16 %v3561
    %v3899 = vunpack.c.l.b16 %v3562
    %v3900 = vunpack.c.h.b16 %v3562
    %v3901 = vunpack.c.l.b16 %v3563
    %v3902 = vunpack.c.h.b16 %v3563
    %v3903 = vunpack.c.l.b16 %v3564
    %v3904 = vunpack.c.h.b16 %v3564
    %v3905 = vunpack.c.l.b16 %v3565
    %v3906 = vunpack.c.h.b16 %v3565
    %v3907 = vunpack.c.l.b16 %v3566
    %v3908 = vunpack.c.h.b16 %v3566
    %v3909 = vunpack.c.l.b16 %v3567
    %v3910 = vunpack.c.h.b16 %v3567
    %v3911 = vunpack.c.l.b16 %v3568
    %v3912 = vunpack.c.h.b16 %v3568
    %v3913 = vunpack.c.l.b16 %v3569
    %v3914 = vunpack.c.h.b16 %v3569
    %v3915 = vunpack.c.l.b16 %v3570
    %v3916 = vunpack.c.h.b16 %v3570
    %v3917 = vunpack.c.l.b16 %v3571
    %v3918 = vunpack.c.h.b16 %v3571
    %v3919 = vunpack.c.l.b16 %v3572
    %v3920 = vunpack.c.h.b16 %v3572
    %v3921 = vunpack.c.l.b16 %v3573
    %v3922 = vunpack.c.h.b16 %v3573
    %v3923 = vunpack.c.l.b16 %v3574
    %v3924 = vunpack.c.h.b16 %v3574
    %v3925 = vunpack.c.l.b16 %v3575
    %v3926 = vunpack.c.h.b16 %v3575
    %v3927 = vunpack.c.l.b16 %v3576
    %v3928 = vunpack.c.h.b16 %v3576
    %v3929 = vunpack.c.l.b16 %v3577
    %v3930 = vunpack.c.h.b16 %v3577
    %v3931 = vunpack.c.l.b16 %v3578
    %v3932 = vunpack.c.h.b16 %v3578
    %v3933 = vunpack.c.l.b16 %v3579
    %v3934 = vunpack.c.h.b16 %v3579
    %v3935 = vunpack.c.l.b16 %v3580
    %v3936 = vunpack.c.h.b16 %v3580
    %v3937 = vunpack.c.l.b16 %v3581
    %v3938 = vunpack.c.h.b16 %v3581
    %v3939 = vunpack.c.l.b16 %v3582
    %v3940 = vunpack.c.h.b16 %v3582
    %v3941 = vunpack.c.l.b16 %v3583
    %v3942 = vunpack.c.h.b16 %v3583
    %v3943 = vunpack.c.l.b16 %v3584
    %v3944 = vunpack.c.h.b16 %v3584
    %v3945 = vunpack.c.l.b16 %v3585
    %v3946 = vunpack.c.h.b16 %v3585
    %v3947 = vunpack.c.l.b16 %v3586
    %v3948 = vunpack.c.h.b16 %v3586
    %v3949 = vunpack.c.l.b16 %v3587
    %v3950 = vunpack.c.h.b16 %v3587
    %v3951 = vunpack.c.l.b16 %v3588
    %v3952 = vunpack.c.h.b16 %v3588
    %v3953 = vunpack.c.l.b16 %v3589
    %v3954 = vunpack.c.h.b16 %v3589
    %v3955 = vunpack.c.l.b16 %v3590
    %v3956 = vunpack.c.h.b16 %v3590
    %v3957 = vunpack.c.l.b16 %v3591
    %v3958 = vunpack.c.h.b16 %v3591
    %v3959 = vunpack.c.l.b16 %v3592
    %v3960 = vunpack.c.h.b16 %v3592
    %v3961 = vunpack.c.l.b16 %v3593
    %v3962 = vunpack.c.h.b16 %v3593
    %v3963 = vunpack.c.l.b16 %v3594
    %v3964 = vunpack.c.h.b16 %v3594
    %v3965 = vunpack.c.l.b16 %v3595
    %v3966 = vunpack.c.h.b16 %v3595
    %v3967 = vunpack.c.l.b16 %v3596
    %v3968 = vunpack.c.h.b16 %v3596
    %v3969 = vunpack.c.l.b16 %v3597
    %v3970 = vunpack.c.h.b16 %v3597
    %v3971 = vunpack.c.l.b16 %v3598
    %v3972 = vunpack.c.h.b16 %v3598
    %v3973 = vunpack.c.l.b16 %v3599
    %v3974 = vunpack.c.h.b16 %v3599
    %v3975 = vunpack.c.l.b16 %v3600
    %v3976 = vunpack.c.h.b16 %v3600
    %v3977 = vunpack.c.l.b16 %v3601
    %v3978 = vunpack.c.h.b16 %v3601
    %v3979 = vunpack.c.l.b16 %v3602
    %v3980 = vunpack.c.h.b16 %v3602
    %v3981 = vunpack.c.l.b16 %v3603
    %v3982 = vunpack.c.h.b16 %v3603
    %v3983 = vunpack.c.l.b16 %v3604
    %v3984 = vunpack.c.h.b16 %v3604
    %v3985 = vunpack.c.l.b16 %v3605
    %v3986 = vunpack.c.h.b16 %v3605
    %v3987 = vunpack.c.l.b16 %v3606
    %v3988 = vunpack.c.h.b16 %v3606
    %v3989 = vunpack.c.l.b16 %v3607
    %v3990 = vunpack.c.h.b16 %v3607
    %v3991 = vunpack.c.l.b16 %v3608
    %v3992 = vunpack.c.h.b16 %v3608
    %v3993 = vunpack.c.l.b16 %v3609
    %v3994 = vunpack.c.h.b16 %v3609
    %v3995 = vunpack.c.l.b16 %v3610
    %v3996 = vunpack.c.h.b16 %v3610
    %v3997 = vunpack.c.l.b16 %v3611
    %v3998 = vunpack.c.h.b16 %v3611
    %v3999 = vunpack.c.l.b16 %v3612
    %v4000 = vunpack.c.h.b16 %v3612
    %v4001 = vunpack.c.l.b16 %v3613
    %v4002 = vunpack.c.h.b16 %v3613
    %v4003 = vunpack.c.l.b16 %v3614
    %v4004 = vunpack.c.h.b16 %v3614
    %v4005 = vunpack.c.l.b16 %v3615
    %v4006 = vunpack.c.h.b16 %v3615
    %v4007 = vunpack.c.l.b16 %v3616
    %v4008 = vunpack.c.h.b16 %v3616
    %v4009 = vunpack.c.l.b16 %v3617
    %v4010 = vunpack.c.h.b16 %v3617
    %v4011 = vunpack.c.l.b16 %v3618
    %v4012 = vunpack.c.h.b16 %v3618
    %v4013 = vunpack.c.l.b16 %v3619
    %v4014 = vunpack.c.h.b16 %v3619
    %v4015 = vunpack.c.l.b16 %v3620
    %v4016 = vunpack.c.h.b16 %v3620
    %v4017 = vunpack.c.l.b16 %v3621
    %v4018 = vunpack.c.h.b16 %v3621
    %v4019 = vunpack.c.l.b16 %v3622
    %v4020 = vunpack.c.h.b16 %v3622
    %v4021 = vunpack.c.l.b16 %v3623
    %v4022 = vunpack.c.h.b16 %v3623
    %v4023 = vunpack.c.l.b16 %v3624
    %v4024 = vunpack.c.h.b16 %v3624
    %v4025 = vunpack.c.l.b16 %v3625
    %v4026 = vunpack.c.h.b16 %v3625
    %v4027 = vunpack.c.l.b16 %v3626
    %v4028 = vunpack.c.h.b16 %v3626
    %v4029 = vunpack.c.l.b16 %v3627
    %v4030 = vunpack.c.h.b16 %v3627
    %v4031 = vunpack.c.l.b16 %v3628
    %v4032 = vunpack.c.h.b16 %v3628
    %v4033 = vunpack.c.l.b16 %v3629
    %v4034 = vunpack.c.h.b16 %v3629
    %v4035 = vpack.c.b16 %v3783, %v3779
    %v4036 = vpack.c.b16 %v3784, %v3780
    %v4037 = vpack.c.b16 %v3785, %v3781
    %v4038 = vpack.c.b16 %v3786, %v3782
    %v4039 = vpack.c.b16 %v3791, %v3787
    %v4040 = vpack.c.b16 %v3792, %v3788
    %v4041 = vpack.c.b16 %v3793, %v3789
    %v4042 = vpack.c.b16 %v3794, %v3790
    %v4043 = vpack.c.b16 %v3799, %v3795
    %v4044 = vpack.c.b16 %v3800, %v3796
    %v4045 = vpack.c.b16 %v3801, %v3797
    %v4046 = vpack.c.b16 %v3802, %v3798
    %v4047 = vpack.c.b16 %v3807, %v3803
    %v4048 = vpack.c.b16 %v3808, %v3804
    %v4049 = vpack.c.b16 %v3809, %v3805
    %v4050 = vpack.c.b16 %v3810, %v3806
    %v4051 = vpack.c.b16 %v3815, %v3811
    %v4052 = vpack.c.b16 %v3816, %v3812
    %v4053 = vpack.c.b16 %v3817, %v3813
    %v4054 = vpack.c.b16 %v3818, %v3814
    %v4055 = vpack.c.b16 %v3823, %v3819
    %v4056 = vpack.c.b16 %v3824, %v3820
    %v4057 = vpack.c.b16 %v3825, %v3821
    %v4058 = vpack.c.b16 %v3826, %v3822
    %v4059 = vpack.c.b16 %v3831, %v3827
    %v4060 = vpack.c.b16 %v3832, %v3828
    %v4061 = vpack.c.b16 %v3833, %v3829
    %v4062 = vpack.c.b16 %v3834, %v3830
    %v4063 = vpack.c.b16 %v3839, %v3835
    %v4064 = vpack.c.b16 %v3840, %v3836
    %v4065 = vpack.c.b16 %v3841, %v3837
    %v4066 = vpack.c.b16 %v3842, %v3838
    %v4067 = vpack.c.b16 %v3847, %v3843
    %v4068 = vpack.c.b16 %v3848, %v3844
    %v4069 = vpack.c.b16 %v3849, %v3845
    %v4070 = vpack.c.b16 %v3850, %v3846
    %v4071 = vpack.c.b16 %v3855, %v3851
    %v4072 = vpack.c.b16 %v3856, %v3852
    %v4073 = vpack.c.b16 %v3857, %v3853
    %v4074 = vpack.c.b16 %v3858, %v3854
    %v4075 = vpack.c.b16 %v3863, %v3859
    %v4076 = vpack.c.b16 %v3864, %v3860
    %v4077 = vpack.c.b16 %v3865, %v3861
    %v4078 = vpack.c.b16 %v3866, %v3862
    %v4079 = vpack.c.b16 %v3871, %v3867
    %v4080 = vpack.c.b16 %v3872, %v3868
    %v4081 = vpack.c.b16 %v3873, %v3869
    %v4082 = vpack.c.b16 %v3874, %v3870
    %v4083 = vpack.c.b16 %v3879, %v3875
    %v4084 = vpack.c.b16 %v3880, %v3876
    %v4085 = vpack.c.b16 %v3881, %v3877
    %v4086 = vpack.c.b16 %v3882, %v3878
    %v4087 = vpack.c.b16 %v3887, %v3883
    %v4088 = vpack.c.b16 %v3888, %v3884
    %v4089 = vpack.c.b16 %v3889, %v3885
    %v4090 = vpack.c.b16 %v3890, %v3886
    %v4091 = vpack.c.b16 %v3895, %v3891
    %v4092 = vpack.c.b16 %v3896, %v3892
    %v4093 = vpack.c.b16 %v3897, %v3893
    %v4094 = vpack.c.b16 %v3898, %v3894
    %v4095 = vpack.c.b16 %v3903, %v3899
    %v4096 = vpack.c.b16 %v3904, %v3900
    %v4097 = vpack.c.b16 %v3905, %v3901
    %v4098 = vpack.c.b16 %v3906, %v3902
    %v4099 = vpack.c.b16 %v3911, %v3907
    %v4100 = vpack.c.b16 %v3912, %v3908
    %v4101 = vpack.c.b16 %v3913, %v3909
    %v4102 = vpack.c.b16 %v3914, %v3910
    %v4103 = vpack.c.b16 %v3919, %v3915
    %v4104 = vpack.c.b16 %v3920, %v3916
    %v4105 = vpack.c.b16 %v3921, %v3917
    %v4106 = vpack.c.b16 %v3922, %v3918
    %v4107 = vpack.c.b16 %v3927, %v3923
    %v4108 = vpack.c.b16 %v3928, %v3924
    %v4109 = vpack.c.b16 %v3929, %v3925
    %v4110 = vpack.c.b16 %v3930, %v3926
    %v4111 = vpack.c.b16 %v3935, %v3931
    %v4112 = vpack.c.b16 %v3936, %v3932
    %v4113 = vpack.c.b16 %v3937, %v3933
    %v4114 = vpack.c.b16 %v3938, %v3934
    %v4115 = vpack.c.b16 %v3943, %v3939
    %v4116 = vpack.c.b16 %v3944, %v3940
    %v4117 = vpack.c.b16 %v3945, %v3941
    %v4118 = vpack.c.b16 %v3946, %v3942
    %v4119 = vpack.c.b16 %v3951, %v3947
    %v4120 = vpack.c.b16 %v3952, %v3948
    %v4121 = vpack.c.b16 %v3953, %v3949
    %v4122 = vpack.c.b16 %v3954, %v3950
    %v4123 = vpack.c.b16 %v3959, %v3955
    %v4124 = vpack.c.b16 %v3960, %v3956
    %v4125 = vpack.c.b16 %v3961, %v3957
    %v4126 = vpack.c.b16 %v3962, %v3958
    %v4127 = vpack.c.b16 %v3967, %v3963
    %v4128 = vpack.c.b16 %v3968, %v3964
    %v4129 = vpack.c.b16 %v3969, %v3965
    %v4130 = vpack.c.b16 %v3970, %v3966
    %v4131 = vpack.c.b16 %v3975, %v3971
    %v4132 = vpack.c.b16 %v3976, %v3972
    %v4133 = vpack.c.b16 %v3977, %v3973
    %v4134 = vpack.c.b16 %v3978, %v3974
    %v4135 = vpack.c.b16 %v3983, %v3979
    %v4136 = vpack.c.b16 %v3984, %v3980
    %v4137 = vpack.c.b16 %v3985, %v3981
    %v4138 = vpack.c.b16 %v3986, %v3982
    %v4139 = vpack.c.b16 %v3991, %v3987
    %v4140 = vpack.c.b16 %v3992, %v3988
    %v4141 = vpack.c.b16 %v3993, %v3989
    %v4142 = vpack.c.b16 %v3994, %v3990
    %v4143 = vpack.c.b16 %v3999, %v3995
    %v4144 = vpack.c.b16 %v4000, %v3996
    %v4145 = vpack.c.b16 %v4001, %v3997
    %v4146 = vpack.c.b16 %v4002, %v3998
    %v4147 = vpack.c.b16 %v4007, %v4003
    %v4148 = vpack.c.b16 %v4008, %v4004
    %v4149 = vpack.c.b16 %v4009, %v4005
    %v4150 = vpack.c.b16 %v4010, %v4006
    %v4151 = vpack.c.b16 %v4015, %v4011
    %v4152 = vpack.c.b16 %v4016, %v4012
    %v4153 = vpack.c.b16 %v4017, %v4013
    %v4154 = vpack.c.b16 %v4018, %v4014
    %v4155 = vpack.c.b16 %v4023, %v4019
    %v4156 = vpack.c.b16 %v4024, %v4020
    %v4157 = vpack.c.b16 %v4025, %v4021
    %v4158 = vpack.c.b16 %v4026, %v4022
    %v4159 = vpack.c.b16 %v4031, %v4027
    %v4160 = vpack.c.b16 %v4032, %v4028
    %v4161 = vpack.c.b16 %v4033, %v4029
    %v4162 = vpack.c.b16 %v4034, %v4030
    %4291 = vmatprep.subr.bf16.mxu0 %v4036
    %4292 = vmatpush1.bf16.msra.mxu0 %v4035
    %4293 = vmatprep.subr.bf16.mxu0 %v4040
    %4294 = vmatpush1.bf16.msra.mxu0 %v4039
    %4295 = vmatprep.subr.bf16.mxu0 %v4044
    %4296 = vmatpush1.bf16.msra.mxu0 %v4043
    %4297 = vmatprep.subr.bf16.mxu0 %v4048
    %4298 = vmatpush1.bf16.msra.mxu0 %v4047
    %4299 = vmatprep.subr.bf16.mxu0 %v4052
    %4300 = vmatpush1.bf16.msra.mxu0 %v4051
    %4301 = vmatprep.subr.bf16.mxu0 %v4056
    %4302 = vmatpush1.bf16.msra.mxu0 %v4055
    %4303 = vmatprep.subr.bf16.mxu0 %v4060
    %4304 = vmatpush1.bf16.msra.mxu0 %v4059
    %4305 = vmatprep.subr.bf16.mxu0 %v4064
    %4306 = vmatpush1.bf16.msra.mxu0 %v4063
    %4307 = vmatprep.subr.bf16.mxu0 %v4068
    %4308 = vmatpush1.bf16.msra.mxu0 %v4067
    %4309 = vmatprep.subr.bf16.mxu0 %v4072
    %4310 = vmatpush1.bf16.msra.mxu0 %v4071
    %4311 = vmatprep.subr.bf16.mxu0 %v4076
    %4312 = vmatpush1.bf16.msra.mxu0 %v4075
    %4313 = vmatprep.subr.bf16.mxu0 %v4080
    %4314 = vmatpush1.bf16.msra.mxu0 %v4079
    %4315 = vmatprep.subr.bf16.mxu0 %v4084
    %4316 = vmatpush1.bf16.msra.mxu0 %v4083
    %4317 = vmatprep.subr.bf16.mxu0 %v4088
    %4318 = vmatpush1.bf16.msra.mxu0 %v4087
    %4319 = vmatprep.subr.bf16.mxu0 %v4092
    %4320 = vmatpush1.bf16.msra.mxu0 %v4091
    %4321 = vmatprep.subr.bf16.mxu0 %v4096
    %4322 = vmatpush1.bf16.msra.mxu0 %v4095
    %4323 = vmatprep.mubr.bf16.mxu0 %v3471
    %4324 = vmatmul.mubr.bf16.gmra.mrb[0].mxu0 %v3470
    %v4325 = vpop.f32.mrb[0].mxu0
    %v4326 = vadd.f32 %v3634, %v4325
    %v4327 = vpop.f32.mrb[0].mxu0
    %v4328 = vadd.f32 %v3638, %v4327
    %v4329 = vpop.f32.mrb[0].mxu0
    %v4330 = vadd.f32 %v3634, %v4329
    %v4331 = vpop.f32.mrb[0].mxu0
    %v4332 = vadd.f32 %v3638, %v4331
    %4333 = vmatprep.mubr.bf16.mxu0 %v3475
    %4334 = vmatmul.mubr.bf16.gmra.mrb[0].mxu0 %v3474
    %v4335 = vpop.f32.mrb[0].mxu0
    %v4336 = vadd.f32 %v3634, %v4335
    %v4337 = vpop.f32.mrb[0].mxu0
    %v4338 = vadd.f32 %v3638, %v4337
    %v4339 = vpop.f32.mrb[0].mxu0
    %v4340 = vadd.f32 %v3634, %v4339
    %v4341 = vpop.f32.mrb[0].mxu0
    %v4342 = vadd.f32 %v3638, %v4341
    %4343 = vmatprep.mubr.bf16.mxu0 %v3479
    %4344 = vmatmul.mubr.bf16.gmra.mrb[0].mxu0 %v3478
    %v4345 = vpop.f32.mrb[0].mxu0
    %v4346 = vadd.f32 %v3634, %v4345
    %v4347 = vpop.f32.mrb[0].mxu0
    %v4348 = vadd.f32 %v3638, %v4347
    %v4349 = vpop.f32.mrb[0].mxu0
    %v4350 = vadd.f32 %v3634, %v4349
    %v4351 = vpop.f32.mrb[0].mxu0
    %v4352 = vadd.f32 %v3638, %v4351
    %4353 = vmatprep.mubr.bf16.mxu0 %v3483
    %4354 = vmatmul.mubr.bf16.gmra.mrb[0].mxu0 %v3482
    %v4355 = vpop.f32.mrb[0].mxu0
    %v4356 = vadd.f32 %v3634, %v4355
    %v4357 = vpop.f32.mrb[0].mxu0
    %v4358 = vadd.f32 %v3638, %v4357
    %v4359 = vpop.f32.mrb[0].mxu0
    %v4360 = vadd.f32 %v3634, %v4359
    %v4361 = vpop.f32.mrb[0].mxu0
    %v4362 = vadd.f32 %v3638, %v4361
    %4363 = vmatprep.mubr.bf16.mxu0 %v3487
    %4364 = vmatmul.mubr.bf16.gmra.mrb[0].mxu0 %v3486
    %v4365 = vpop.f32.mrb[0].mxu0
    %v4366 = vadd.f32 %v3634, %v4365
    %v4367 = vpop.f32.mrb[0].mxu0
    %v4368 = vadd.f32 %v3638, %v4367
    %v4369 = vpop.f32.mrb[0].mxu0
    %v4370 = vadd.f32 %v3634, %v4369
    %v4371 = vpop.f32.mrb[0].mxu0
    %v4372 = vadd.f32 %v3638, %v4371
    %4373 = vmatprep.mubr.bf16.mxu0 %v3491
    %4374 = vmatmul.mubr.bf16.gmra.mrb[0].mxu0 %v3490
    %v4375 = vpop.f32.mrb[0].mxu0
    %v4376 = vadd.f32 %v3634, %v4375
    %v4377 = vpop.f32.mrb[0].mxu0
    %v4378 = vadd.f32 %v3638, %v4377
    %v4379 = vpop.f32.mrb[0].mxu0
    %v4380 = vadd.f32 %v3634, %v4379
    %v4381 = vpop.f32.mrb[0].mxu0
    %v4382 = vadd.f32 %v3638, %v4381
    %4383 = vmatprep.mubr.bf16.mxu0 %v3495
    %4384 = vmatmul.mubr.bf16.gmra.mrb[0].mxu0 %v3494
    %v4385 = vpop.f32.mrb[0].mxu0
    %v4386 = vadd.f32 %v3634, %v4385
    %v4387 = vpop.f32.mrb[0].mxu0
    %v4388 = vadd.f32 %v3638, %v4387
    %v4389 = vpop.f32.mrb[0].mxu0
    %v4390 = vadd.f32 %v3634, %v4389
    %v4391 = vpop.f32.mrb[0].mxu0
    %v4392 = vadd.f32 %v3638, %v4391
    %4393 = vmatprep.mubr.bf16.mxu0 %v3499
    %4394 = vmatmul.mubr.bf16.gmra.mrb[0].mxu0 %v3498
    %v4395 = vpop.f32.mrb[0].mxu0
    %v4396 = vadd.f32 %v3634, %v4395
    %v4397 = vpop.f32.mrb[0].mxu0
    %v4398 = vadd.f32 %v3638, %v4397
    %v4399 = vpop.f32.mrb[0].mxu0
    %v4400 = vadd.f32 %v3634, %v4399
    %v4401 = vpop.f32.mrb[0].mxu0
    %v4402 = vadd.f32 %v3638, %v4401
    %4403 = vdwg.mxu0
    %4404 = vmatprep.subr.bf16.mxu0 %v4100
    %4405 = vmatpush1.bf16.msra.mxu0 %v4099
    %4406 = vmatprep.subr.bf16.mxu0 %v4104
    %4407 = vmatpush1.bf16.msra.mxu0 %v4103
    %4408 = vmatprep.subr.bf16.mxu0 %v4108
    %4409 = vmatpush1.bf16.msra.mxu0 %v4107
    %4410 = vmatprep.subr.bf16.mxu0 %v4112
    %4411 = vmatpush1.bf16.msra.mxu0 %v4111
    %4412 = vmatprep.subr.bf16.mxu0 %v4116
    %4413 = vmatpush1.bf16.msra.mxu0 %v4115
    %4414 = vmatprep.subr.bf16.mxu0 %v4120
    %4415 = vmatpush1.bf16.msra.mxu0 %v4119
    %4416 = vmatprep.subr.bf16.mxu0 %v4124
    %4417 = vmatpush1.bf16.msra.mxu0 %v4123
    %4418 = vmatprep.subr.bf16.mxu0 %v4128
    %4419 = vmatpush1.bf16.msra.mxu0 %v4127
    %4420 = vmatprep.subr.bf16.mxu0 %v4132
    %4421 = vmatpush1.bf16.msra.mxu0 %v4131
    %4422 = vmatprep.subr.bf16.mxu0 %v4136
    %4423 = vmatpush1.bf16.msra.mxu0 %v4135
    %4424 = vmatprep.subr.bf16.mxu0 %v4140
    %4425 = vmatpush1.bf16.msra.mxu0 %v4139
    %4426 = vmatprep.subr.bf16.mxu0 %v4144
    %4427 = vmatpush1.bf16.msra.mxu0 %v4143
    %4428 = vmatprep.subr.bf16.mxu0 %v4148
    %4429 = vmatpush1.bf16.msra.mxu0 %v4147
    %4430 = vmatprep.subr.bf16.mxu0 %v4152
    %4431 = vmatpush1.bf16.msra.mxu0 %v4151
    %4432 = vmatprep.subr.bf16.mxu0 %v4156
    %4433 = vmatpush1.bf16.msra.mxu0 %v4155
    %4434 = vmatprep.subr.bf16.mxu0 %v4160
    %4435 = vmatpush1.bf16.msra.mxu0 %v4159
    %4436 = vmatprep.mubr.bf16.mxu0 %v3473
    %4437 = vmatmul.mubr.bf16.gmra.mrb[0].mxu0 %v3472
    %v4438 = vpop.f32.mrb[0].mxu0
    %v4439 = vadd.f32 %v4326, %v4438
    %v4440 = vpop.f32.mrb[0].mxu0
    %v4441 = vadd.f32 %v4328, %v4440
    %v4442 = vpop.f32.mrb[0].mxu0
    %v4443 = vadd.f32 %v4330, %v4442
    %v4444 = vpop.f32.mrb[0].mxu0
    %v4445 = vadd.f32 %v4332, %v4444
    %4446 = vmatprep.mubr.bf16.mxu0 %v3477
    %4447 = vmatmul.mubr.bf16.gmra.mrb[0].mxu0 %v3476
    %v4448 = vpop.f32.mrb[0].mxu0
    %v4449 = vadd.f32 %v4336, %v4448
    %v4450 = vpop.f32.mrb[0].mxu0
    %v4451 = vadd.f32 %v4338, %v4450
    %v4452 = vpop.f32.mrb[0].mxu0
    %v4453 = vadd.f32 %v4340, %v4452
    %v4454 = vpop.f32.mrb[0].mxu0
    %v4455 = vadd.f32 %v4342, %v4454
    %4456 = vmatprep.mubr.bf16.mxu0 %v3481
    %4457 = vmatmul.mubr.bf16.gmra.mrb[0].mxu0 %v3480
    %v4458 = vpop.f32.mrb[0].mxu0
    %v4459 = vadd.f32 %v4346, %v4458
    %v4460 = vpop.f32.mrb[0].mxu0
    %v4461 = vadd.f32 %v4348, %v4460
    %v4462 = vpop.f32.mrb[0].mxu0
    %v4463 = vadd.f32 %v4350, %v4462
    %v4464 = vpop.f32.mrb[0].mxu0
    %v4465 = vadd.f32 %v4352, %v4464
    %4466 = vmatprep.mubr.bf16.mxu0 %v3485
    %4467 = vmatmul.mubr.bf16.gmra.mrb[0].mxu0 %v3484
    %v4468 = vpop.f32.mrb[0].mxu0
    %v4469 = vadd.f32 %v4356, %v4468
    %v4470 = vpop.f32.mrb[0].mxu0
    %v4471 = vadd.f32 %v4358, %v4470
    %v4472 = vpop.f32.mrb[0].mxu0
    %v4473 = vadd.f32 %v4360, %v4472
    %v4474 = vpop.f32.mrb[0].mxu0
    %v4475 = vadd.f32 %v4362, %v4474
    %4476 = vmatprep.mubr.bf16.mxu0 %v3489
    %4477 = vmatmul.mubr.bf16.gmra.mrb[0].mxu0 %v3488
    %v4478 = vpop.f32.mrb[0].mxu0
    %v4479 = vadd.f32 %v4366, %v4478
    %v4480 = vpop.f32.mrb[0].mxu0
    %v4481 = vadd.f32 %v4368, %v4480
    %v4482 = vpop.f32.mrb[0].mxu0
    %v4483 = vadd.f32 %v4370, %v4482
    %v4484 = vpop.f32.mrb[0].mxu0
    %v4485 = vadd.f32 %v4372, %v4484
    %4486 = vmatprep.mubr.bf16.mxu0 %v3493
    %4487 = vmatmul.mubr.bf16.gmra.mrb[0].mxu0 %v3492
    %v4488 = vpop.f32.mrb[0].mxu0
    %v4489 = vadd.f32 %v4376, %v4488
    %v4490 = vpop.f32.mrb[0].mxu0
    %v4491 = vadd.f32 %v4378, %v4490
    %v4492 = vpop.f32.mrb[0].mxu0
    %v4493 = vadd.f32 %v4380, %v4492
    %v4494 = vpop.f32.mrb[0].mxu0
    %v4495 = vadd.f32 %v4382, %v4494
    %4496 = vmatprep.mubr.bf16.mxu0 %v3497
    %4497 = vmatmul.mubr.bf16.gmra.mrb[0].mxu0 %v3496
    %v4498 = vpop.f32.mrb[0].mxu0
    %v4499 = vadd.f32 %v4386, %v4498
    %v4500 = vpop.f32.mrb[0].mxu0
    %v4501 = vadd.f32 %v4388, %v4500
    %v4502 = vpop.f32.mrb[0].mxu0
    %v4503 = vadd.f32 %v4390, %v4502
    %v4504 = vpop.f32.mrb[0].mxu0
    %v4505 = vadd.f32 %v4392, %v4504
    %4506 = vmatprep.mubr.bf16.mxu0 %v3501
    %4507 = vmatmul.mubr.bf16.gmra.mrb[0].mxu0 %v3500
    %v4508 = vpop.f32.mrb[0].mxu0
    %v4509 = vadd.f32 %v4396, %v4508
    %v4510 = vpop.f32.mrb[0].mxu0
    %v4511 = vadd.f32 %v4398, %v4510
    %v4512 = vpop.f32.mrb[0].mxu0
    %v4513 = vadd.f32 %v4400, %v4512
    %v4514 = vpop.f32.mrb[0].mxu0
    %v4515 = vadd.f32 %v4402, %v4514
    %4516 = vdwg.mxu0
    %4517 = vmatprep.subr.bf16.mxu0 %v4038
    %4518 = vmatpush1.bf16.msra.mxu0 %v4037
    %4519 = vmatprep.subr.bf16.mxu0 %v4042
    %4520 = vmatpush1.bf16.msra.mxu0 %v4041
    %4521 = vmatprep.subr.bf16.mxu0 %v4046
    %4522 = vmatpush1.bf16.msra.mxu0 %v4045
    %4523 = vmatprep.subr.bf16.mxu0 %v4050
    %4524 = vmatpush1.bf16.msra.mxu0 %v4049
    %4525 = vmatprep.subr.bf16.mxu0 %v4054
    %4526 = vmatpush1.bf16.msra.mxu0 %v4053
    %4527 = vmatprep.subr.bf16.mxu0 %v4058
    %4528 = vmatpush1.bf16.msra.mxu0 %v4057
    %4529 = vmatprep.subr.bf16.mxu0 %v4062
    %4530 = vmatpush1.bf16.msra.mxu0 %v4061
    %4531 = vmatprep.subr.bf16.mxu0 %v4066
    %4532 = vmatpush1.bf16.msra.mxu0 %v4065
    %4533 = vmatprep.subr.bf16.mxu0 %v4070
    %4534 = vmatpush1.bf16.msra.mxu0 %v4069
    %4535 = vmatprep.subr.bf16.mxu0 %v4074
    %4536 = vmatpush1.bf16.msra.mxu0 %v4073
    %4537 = vmatprep.subr.bf16.mxu0 %v4078
    %4538 = vmatpush1.bf16.msra.mxu0 %v4077
    %4539 = vmatprep.subr.bf16.mxu0 %v4082
    %4540 = vmatpush1.bf16.msra.mxu0 %v4081
    %4541 = vmatprep.subr.bf16.mxu0 %v4086
    %4542 = vmatpush1.bf16.msra.mxu0 %v4085
    %4543 = vmatprep.subr.bf16.mxu0 %v4090
    %4544 = vmatpush1.bf16.msra.mxu0 %v4089
    %4545 = vmatprep.subr.bf16.mxu0 %v4094
    %4546 = vmatpush1.bf16.msra.mxu0 %v4093
    %4547 = vmatprep.subr.bf16.mxu0 %v4098
    %4548 = vmatpush1.bf16.msra.mxu0 %v4097
    %4549 = vmatprep.mubr.bf16.mxu0 %v3471
    %4550 = vmatmul.mubr.bf16.gmra.mrb[0].mxu0 %v3470
    %v4551 = vpop.f32.mrb[0].mxu0
    %v4552 = vadd.f32 %v3642, %v4551
    %v4553 = vpop.f32.mrb[0].mxu0
    %v4554 = vadd.f32 %v3646, %v4553
    %v4555 = vpop.f32.mrb[0].mxu0
    %v4556 = vadd.f32 %v3642, %v4555
    %v4557 = vpop.f32.mrb[0].mxu0
    %v4558 = vadd.f32 %v3646, %v4557
    %4559 = vmatprep.mubr.bf16.mxu0 %v3475
    %4560 = vmatmul.mubr.bf16.gmra.mrb[0].mxu0 %v3474
    %v4561 = vpop.f32.mrb[0].mxu0
    %v4562 = vadd.f32 %v3642, %v4561
    %v4563 = vpop.f32.mrb[0].mxu0
    %v4564 = vadd.f32 %v3646, %v4563
    %v4565 = vpop.f32.mrb[0].mxu0
    %v4566 = vadd.f32 %v3642, %v4565
    %v4567 = vpop.f32.mrb[0].mxu0
    %v4568 = vadd.f32 %v3646, %v4567
    %4569 = vmatprep.mubr.bf16.mxu0 %v3479
    %4570 = vmatmul.mubr.bf16.gmra.mrb[0].mxu0 %v3478
    %v4571 = vpop.f32.mrb[0].mxu0
    %v4572 = vadd.f32 %v3642, %v4571
    %v4573 = vpop.f32.mrb[0].mxu0
    %v4574 = vadd.f32 %v3646, %v4573
    %v4575 = vpop.f32.mrb[0].mxu0
    %v4576 = vadd.f32 %v3642, %v4575
    %v4577 = vpop.f32.mrb[0].mxu0
    %v4578 = vadd.f32 %v3646, %v4577
    %4579 = vmatprep.mubr.bf16.mxu0 %v3483
    %4580 = vmatmul.mubr.bf16.gmra.mrb[0].mxu0 %v3482
    %v4581 = vpop.f32.mrb[0].mxu0
    %v4582 = vadd.f32 %v3642, %v4581
    %v4583 = vpop.f32.mrb[0].mxu0
    %v4584 = vadd.f32 %v3646, %v4583
    %v4585 = vpop.f32.mrb[0].mxu0
    %v4586 = vadd.f32 %v3642, %v4585
    %v4587 = vpop.f32.mrb[0].mxu0
    %v4588 = vadd.f32 %v3646, %v4587
    %4589 = vmatprep.mubr.bf16.mxu0 %v3487
    %4590 = vmatmul.mubr.bf16.gmra.mrb[0].mxu0 %v3486
    %v4591 = vpop.f32.mrb[0].mxu0
    %v4592 = vadd.f32 %v3642, %v4591
    %v4593 = vpop.f32.mrb[0].mxu0
    %v4594 = vadd.f32 %v3646, %v4593
    %v4595 = vpop.f32.mrb[0].mxu0
    %v4596 = vadd.f32 %v3642, %v4595
    %v4597 = vpop.f32.mrb[0].mxu0
    %v4598 = vadd.f32 %v3646, %v4597
    %4599 = vmatprep.mubr.bf16.mxu0 %v3491
    %4600 = vmatmul.mubr.bf16.gmra.mrb[0].mxu0 %v3490
    %v4601 = vpop.f32.mrb[0].mxu0
    %v4602 = vadd.f32 %v3642, %v4601
    %v4603 = vpop.f32.mrb[0].mxu0
    %v4604 = vadd.f32 %v3646, %v4603
    %v4605 = vpop.f32.mrb[0].mxu0
    %v4606 = vadd.f32 %v3642, %v4605
    %v4607 = vpop.f32.mrb[0].mxu0
    %v4608 = vadd.f32 %v3646, %v4607
    %4609 = vmatprep.mubr.bf16.mxu0 %v3495
    %4610 = vmatmul.mubr.bf16.gmra.mrb[0].mxu0 %v3494
    %v4611 = vpop.f32.mrb[0].mxu0
    %v4612 = vadd.f32 %v3642, %v4611
    %v4613 = vpop.f32.mrb[0].mxu0
    %v4614 = vadd.f32 %v3646, %v4613
    %v4615 = vpop.f32.mrb[0].mxu0
    %v4616 = vadd.f32 %v3642, %v4615
    %v4617 = vpop.f32.mrb[0].mxu0
    %v4618 = vadd.f32 %v3646, %v4617
    %4619 = vmatprep.mubr.bf16.mxu0 %v3499
    %4620 = vmatmul.mubr.bf16.gmra.mrb[0].mxu0 %v3498
    %v4621 = vpop.f32.mrb[0].mxu0
    %v4622 = vadd.f32 %v3642, %v4621
    %v4623 = vpop.f32.mrb[0].mxu0
    %v4624 = vadd.f32 %v3646, %v4623
    %v4625 = vpop.f32.mrb[0].mxu0
    %v4626 = vadd.f32 %v3642, %v4625
    %v4627 = vpop.f32.mrb[0].mxu0
    %v4628 = vadd.f32 %v3646, %v4627
    %4629 = vdwg.mxu0
    %4630 = vmatprep.subr.bf16.mxu0 %v4102
    %4631 = vmatpush1.bf16.msra.mxu0 %v4101
    %4632 = vmatprep.subr.bf16.mxu0 %v4106
    %4633 = vmatpush1.bf16.msra.mxu0 %v4105
    %4634 = vmatprep.subr.bf16.mxu0 %v4110
    %4635 = vmatpush1.bf16.msra.mxu0 %v4109
    %4636 = vmatprep.subr.bf16.mxu0 %v4114
    %4637 = vmatpush1.bf16.msra.mxu0 %v4113
    %4638 = vmatprep.subr.bf16.mxu0 %v4118
    %4639 = vmatpush1.bf16.msra.mxu0 %v4117
    %4640 = vmatprep.subr.bf16.mxu0 %v4122
    %4641 = vmatpush1.bf16.msra.mxu0 %v4121
    %4642 = vmatprep.subr.bf16.mxu0 %v4126
    %4643 = vmatpush1.bf16.msra.mxu0 %v4125
    %4644 = vmatprep.subr.bf16.mxu0 %v4130
    %4645 = vmatpush1.bf16.msra.mxu0 %v4129
    %4646 = vmatprep.subr.bf16.mxu0 %v4134
    %4647 = vmatpush1.bf16.msra.mxu0 %v4133
    %4648 = vmatprep.subr.bf16.mxu0 %v4138
    %4649 = vmatpush1.bf16.msra.mxu0 %v4137
    %4650 = vmatprep.subr.bf16.mxu0 %v4142
    %4651 = vmatpush1.bf16.msra.mxu0 %v4141
    %4652 = vmatprep.subr.bf16.mxu0 %v4146
    %4653 = vmatpush1.bf16.msra.mxu0 %v4145
    %4654 = vmatprep.subr.bf16.mxu0 %v4150
    %4655 = vmatpush1.bf16.msra.mxu0 %v4149
    %4656 = vmatprep.subr.bf16.mxu0 %v4154
    %4657 = vmatpush1.bf16.msra.mxu0 %v4153
    %4658 = vmatprep.subr.bf16.mxu0 %v4158
    %4659 = vmatpush1.bf16.msra.mxu0 %v4157
    %4660 = vmatprep.subr.bf16.mxu0 %v4162
    %4661 = vmatpush1.bf16.msra.mxu0 %v4161
    %4662 = vmatprep.mubr.bf16.mxu0 %v3473
    %4663 = vmatmul.mubr.bf16.gmra.mrb[0].mxu0 %v3472
    %v4664 = vpop.f32.mrb[0].mxu0
    %v4665 = vadd.f32 %v4552, %v4664
    %v4666 = vpop.f32.mrb[0].mxu0
    %v4667 = vadd.f32 %v4554, %v4666
    %v4668 = vpop.f32.mrb[0].mxu0
    %v4669 = vadd.f32 %v4556, %v4668
    %v4670 = vpop.f32.mrb[0].mxu0
    %v4671 = vadd.f32 %v4558, %v4670
    %4672 = vmatprep.mubr.bf16.mxu0 %v3477
    %4673 = vmatmul.mubr.bf16.gmra.mrb[0].mxu0 %v3476
    %v4674 = vpop.f32.mrb[0].mxu0
    %v4675 = vadd.f32 %v4562, %v4674
    %v4676 = vpop.f32.mrb[0].mxu0
    %v4677 = vadd.f32 %v4564, %v4676
    %v4678 = vpop.f32.mrb[0].mxu0
    %v4679 = vadd.f32 %v4566, %v4678
    %v4680 = vpop.f32.mrb[0].mxu0
    %v4681 = vadd.f32 %v4568, %v4680
    %4682 = vmatprep.mubr.bf16.mxu0 %v3481
    %4683 = vmatmul.mubr.bf16.gmra.mrb[0].mxu0 %v3480
    %v4684 = vpop.f32.mrb[0].mxu0
    %v4685 = vadd.f32 %v4572, %v4684
    %v4686 = vpop.f32.mrb[0].mxu0
    %v4687 = vadd.f32 %v4574, %v4686
    %v4688 = vpop.f32.mrb[0].mxu0
    %v4689 = vadd.f32 %v4576, %v4688
    %v4690 = vpop.f32.mrb[0].mxu0
    %v4691 = vadd.f32 %v4578, %v4690
    %4692 = vmatprep.mubr.bf16.mxu0 %v3485
    %4693 = vmatmul.mubr.bf16.gmra.mrb[0].mxu0 %v3484
    %v4694 = vpop.f32.mrb[0].mxu0
    %v4695 = vadd.f32 %v4582, %v4694
    %v4696 = vpop.f32.mrb[0].mxu0
    %v4697 = vadd.f32 %v4584, %v4696
    %v4698 = vpop.f32.mrb[0].mxu0
    %v4699 = vadd.f32 %v4586, %v4698
    %v4700 = vpop.f32.mrb[0].mxu0
    %v4701 = vadd.f32 %v4588, %v4700
    %4702 = vmatprep.mubr.bf16.mxu0 %v3489
    %4703 = vmatmul.mubr.bf16.gmra.mrb[0].mxu0 %v3488
    %v4704 = vpop.f32.mrb[0].mxu0
    %v4705 = vadd.f32 %v4592, %v4704
    %v4706 = vpop.f32.mrb[0].mxu0
    %v4707 = vadd.f32 %v4594, %v4706
    %v4708 = vpop.f32.mrb[0].mxu0
    %v4709 = vadd.f32 %v4596, %v4708
    %v4710 = vpop.f32.mrb[0].mxu0
    %v4711 = vadd.f32 %v4598, %v4710
    %4712 = vmatprep.mubr.bf16.mxu0 %v3493
    %4713 = vmatmul.mubr.bf16.gmra.mrb[0].mxu0 %v3492
    %v4714 = vpop.f32.mrb[0].mxu0
    %v4715 = vadd.f32 %v4602, %v4714
    %v4716 = vpop.f32.mrb[0].mxu0
    %v4717 = vadd.f32 %v4604, %v4716
    %v4718 = vpop.f32.mrb[0].mxu0
    %v4719 = vadd.f32 %v4606, %v4718
    %v4720 = vpop.f32.mrb[0].mxu0
    %v4721 = vadd.f32 %v4608, %v4720
    %4722 = vmatprep.mubr.bf16.mxu0 %v3497
    %4723 = vmatmul.mubr.bf16.gmra.mrb[0].mxu0 %v3496
    %v4724 = vpop.f32.mrb[0].mxu0
    %v4725 = vadd.f32 %v4612, %v4724
    %v4726 = vpop.f32.mrb[0].mxu0
    %v4727 = vadd.f32 %v4614, %v4726
    %v4728 = vpop.f32.mrb[0].mxu0
    %v4729 = vadd.f32 %v4616, %v4728
    %v4730 = vpop.f32.mrb[0].mxu0
    %v4731 = vadd.f32 %v4618, %v4730
    %4732 = vmatprep.mubr.bf16.mxu0 %v3501
    %4733 = vmatmul.mubr.bf16.gmra.mrb[0].mxu0 %v3500
    %v4734 = vpop.f32.mrb[0].mxu0
    %v4735 = vadd.f32 %v4622, %v4734
    %v4736 = vpop.f32.mrb[0].mxu0
    %v4737 = vadd.f32 %v4624, %v4736
    %v4738 = vpop.f32.mrb[0].mxu0
    %v4739 = vadd.f32 %v4626, %v4738
    %v4740 = vpop.f32.mrb[0].mxu0
    %v4741 = vadd.f32 %v4628, %v4740
    %4742 = vdwg.mxu0
    %v4743 = vmax.f32 %v4439, 0.0
    %v4744 = vmax.f32 %v4441, 0.0
    %v4745 = vmax.f32 %v4665, 0.0
    %v4746 = vmax.f32 %v4667, 0.0
    %v4747 = vmax.f32 %v4443, 0.0
    %v4748 = vmax.f32 %v4445, 0.0
    %v4749 = vmax.f32 %v4669, 0.0
    %v4750 = vmax.f32 %v4671, 0.0
    %v4751 = vmax.f32 %v4449, 0.0
    %v4752 = vmax.f32 %v4451, 0.0
    %v4753 = vmax.f32 %v4675, 0.0
    %v4754 = vmax.f32 %v4677, 0.0
    %v4755 = vmax.f32 %v4453, 0.0
    %v4756 = vmax.f32 %v4455, 0.0
    %v4757 = vmax.f32 %v4679, 0.0
    %v4758 = vmax.f32 %v4681, 0.0
    %v4759 = vmax.f32 %v4459, 0.0
    %v4760 = vmax.f32 %v4461, 0.0
    %v4761 = vmax.f32 %v4685, 0.0
    %v4762 = vmax.f32 %v4687, 0.0
    %v4763 = vmax.f32 %v4463, 0.0
    %v4764 = vmax.f32 %v4465, 0.0
    %v4765 = vmax.f32 %v4689, 0.0
    %v4766 = vmax.f32 %v4691, 0.0
    %v4767 = vmax.f32 %v4469, 0.0
    %v4768 = vmax.f32 %v4471, 0.0
    %v4769 = vmax.f32 %v4695, 0.0
    %v4770 = vmax.f32 %v4697, 0.0
    %v4771 = vmax.f32 %v4473, 0.0
    %v4772 = vmax.f32 %v4475, 0.0
    %v4773 = vmax.f32 %v4699, 0.0
    %v4774 = vmax.f32 %v4701, 0.0
    %v4775 = vmax.f32 %v4479, 0.0
    %v4776 = vmax.f32 %v4481, 0.0
    %v4777 = vmax.f32 %v4705, 0.0
    %v4778 = vmax.f32 %v4707, 0.0
    %v4779 = vmax.f32 %v4483, 0.0
    %v4780 = vmax.f32 %v4485, 0.0
    %v4781 = vmax.f32 %v4709, 0.0
    %v4782 = vmax.f32 %v4711, 0.0
    %v4783 = vmax.f32 %v4489, 0.0
    %v4784 = vmax.f32 %v4491, 0.0
    %v4785 = vmax.f32 %v4715, 0.0
    %v4786 = vmax.f32 %v4717, 0.0
    %v4787 = vmax.f32 %v4493, 0.0
    %v4788 = vmax.f32 %v4495, 0.0
    %v4789 = vmax.f32 %v4719, 0.0
    %v4790 = vmax.f32 %v4721, 0.0
    %v4791 = vmax.f32 %v4499, 0.0
    %v4792 = vmax.f32 %v4501, 0.0
    %v4793 = vmax.f32 %v4725, 0.0
    %v4794 = vmax.f32 %v4727, 0.0
    %v4795 = vmax.f32 %v4503, 0.0
    %v4796 = vmax.f32 %v4505, 0.0
    %v4797 = vmax.f32 %v4729, 0.0
    %v4798 = vmax.f32 %v4731, 0.0
    %v4799 = vmax.f32 %v4509, 0.0
    %v4800 = vmax.f32 %v4511, 0.0
    %v4801 = vmax.f32 %v4735, 0.0
    %v4802 = vmax.f32 %v4737, 0.0
    %v4803 = vmax.f32 %v4513, 0.0
    %v4804 = vmax.f32 %v4515, 0.0
    %v4805 = vmax.f32 %v4739, 0.0
    %v4806 = vmax.f32 %v4741, 0.0
    %v4807 = vpack.c.bf16 %v4747, %v4743
    %v4808 = vpack.c.bf16 %v4748, %v4744
    %v4809 = vpack.c.bf16 %v4749, %v4745
    %v4810 = vpack.c.bf16 %v4750, %v4746
    %v4811 = vpack.c.bf16 %v4755, %v4751
    %v4812 = vpack.c.bf16 %v4756, %v4752
    %v4813 = vpack.c.bf16 %v4757, %v4753
    %v4814 = vpack.c.bf16 %v4758, %v4754
    %v4815 = vpack.c.bf16 %v4763, %v4759
    %v4816 = vpack.c.bf16 %v4764, %v4760
    %v4817 = vpack.c.bf16 %v4765, %v4761
    %v4818 = vpack.c.bf16 %v4766, %v4762
    %v4819 = vpack.c.bf16 %v4771, %v4767
    %v4820 = vpack.c.bf16 %v4772, %v4768
    %v4821 = vpack.c.bf16 %v4773, %v4769
    %v4822 = vpack.c.bf16 %v4774, %v4770
    %v4823 = vpack.c.bf16 %v4779, %v4775
    %v4824 = vpack.c.bf16 %v4780, %v4776
    %v4825 = vpack.c.bf16 %v4781, %v4777
    %v4826 = vpack.c.bf16 %v4782, %v4778
    %v4827 = vpack.c.bf16 %v4787, %v4783
    %v4828 = vpack.c.bf16 %v4788, %v4784
    %v4829 = vpack.c.bf16 %v4789, %v4785
    %v4830 = vpack.c.bf16 %v4790, %v4786
    %v4831 = vpack.c.bf16 %v4795, %v4791
    %v4832 = vpack.c.bf16 %v4796, %v4792
    %v4833 = vpack.c.bf16 %v4797, %v4793
    %v4834 = vpack.c.bf16 %v4798, %v4794
    %v4835 = vpack.c.bf16 %v4803, %v4799
    %v4836 = vpack.c.bf16 %v4804, %v4800
    %v4837 = vpack.c.bf16 %v4805, %v4801
    %v4838 = vpack.c.bf16 %v4806, %v4802
    %v4839 = vld [vmem:[#allocation11] sm:$0xff]
    %v4840 = vld [vmem:[#allocation11 + $0x8] sm:$0xff]
    %v4841 = vld [vmem:[#allocation11 + $0x10] sm:$0xff]
    %v4842 = vld [vmem:[#allocation11 + $0x18] sm:$0xff]
    %v4843 = vld [vmem:[#allocation11 + $0x20] sm:$0xff]
    %v4844 = vld [vmem:[#allocation11 + $0x28] sm:$0xff]
    %v4845 = vld [vmem:[#allocation11 + $0x30] sm:$0xff]
    %v4846 = vld [vmem:[#allocation11 + $0x38] sm:$0xff]
    %v4847 = vld [vmem:[#allocation11 + $0x40] sm:$0xff]
    %v4848 = vld [vmem:[#allocation11 + $0x48] sm:$0xff]
    %v4849 = vld [vmem:[#allocation11 + $0x50] sm:$0xff]
    %v4850 = vld [vmem:[#allocation11 + $0x58] sm:$0xff]
    %v4851 = vld [vmem:[#allocation11 + $0x60] sm:$0xff]
    %v4852 = vld [vmem:[#allocation11 + $0x68] sm:$0xff]
    %v4853 = vld [vmem:[#allocation11 + $0x70] sm:$0xff]
    %v4854 = vld [vmem:[#allocation11 + $0x78] sm:$0xff]
    %v4855 = vld [vmem:[#allocation11 + $0x80] sm:$0xff]
    %v4856 = vld [vmem:[#allocation11 + $0x88] sm:$0xff]
    %v4857 = vld [vmem:[#allocation11 + $0x90] sm:$0xff]
    %v4858 = vld [vmem:[#allocation11 + $0x98] sm:$0xff]
    %v4859 = vld [vmem:[#allocation11 + $0xa0] sm:$0xff]
    %v4860 = vld [vmem:[#allocation11 + $0xa8] sm:$0xff]
    %v4861 = vld [vmem:[#allocation11 + $0xb0] sm:$0xff]
    %v4862 = vld [vmem:[#allocation11 + $0xb8] sm:$0xff]
    %v4863 = vld [vmem:[#allocation11 + $0xc0] sm:$0xff]
    %v4864 = vld [vmem:[#allocation11 + $0xc8] sm:$0xff]
    %v4865 = vld [vmem:[#allocation11 + $0xd0] sm:$0xff]
    %v4866 = vld [vmem:[#allocation11 + $0xd8] sm:$0xff]
    %v4867 = vld [vmem:[#allocation11 + $0xe0] sm:$0xff]
    %v4868 = vld [vmem:[#allocation11 + $0xe8] sm:$0xff]
    %v4869 = vld [vmem:[#allocation11 + $0xf0] sm:$0xff]
    %v4870 = vld [vmem:[#allocation11 + $0xf8] sm:$0xff]
    %v4871 = vld [vmem:[#allocation11 + $0x100] sm:$0xff]
    %v4872 = vld [vmem:[#allocation11 + $0x108] sm:$0xff]
    %v4873 = vld [vmem:[#allocation11 + $0x110] sm:$0xff]
    %v4874 = vld [vmem:[#allocation11 + $0x118] sm:$0xff]
    %v4875 = vld [vmem:[#allocation11 + $0x120] sm:$0xff]
    %v4876 = vld [vmem:[#allocation11 + $0x128] sm:$0xff]
    %v4877 = vld [vmem:[#allocation11 + $0x130] sm:$0xff]
    %v4878 = vld [vmem:[#allocation11 + $0x138] sm:$0xff]
    %v4879 = vld [vmem:[#allocation11 + $0x140] sm:$0xff]
    %v4880 = vld [vmem:[#allocation11 + $0x148] sm:$0xff]
    %v4881 = vld [vmem:[#allocation11 + $0x150] sm:$0xff]
    %v4882 = vld [vmem:[#allocation11 + $0x158] sm:$0xff]
    %v4883 = vld [vmem:[#allocation11 + $0x160] sm:$0xff]
    %v4884 = vld [vmem:[#allocation11 + $0x168] sm:$0xff]
    %v4885 = vld [vmem:[#allocation11 + $0x170] sm:$0xff]
    %v4886 = vld [vmem:[#allocation11 + $0x178] sm:$0xff]
    %v4887 = vld [vmem:[#allocation11 + $0x180] sm:$0xff]
    %v4888 = vld [vmem:[#allocation11 + $0x188] sm:$0xff]
    %v4889 = vld [vmem:[#allocation11 + $0x190] sm:$0xff]
    %v4890 = vld [vmem:[#allocation11 + $0x198] sm:$0xff]
    %v4891 = vld [vmem:[#allocation11 + $0x1a0] sm:$0xff]
    %v4892 = vld [vmem:[#allocation11 + $0x1a8] sm:$0xff]
    %v4893 = vld [vmem:[#allocation11 + $0x1b0] sm:$0xff]
    %v4894 = vld [vmem:[#allocation11 + $0x1b8] sm:$0xff]
    %v4895 = vld [vmem:[#allocation11 + $0x1c0] sm:$0xff]
    %v4896 = vld [vmem:[#allocation11 + $0x1c8] sm:$0xff]
    %v4897 = vld [vmem:[#allocation11 + $0x1d0] sm:$0xff]
    %v4898 = vld [vmem:[#allocation11 + $0x1d8] sm:$0xff]
    %v4899 = vld [vmem:[#allocation11 + $0x1e0] sm:$0xff]
    %v4900 = vld [vmem:[#allocation11 + $0x1e8] sm:$0xff]
    %v4901 = vld [vmem:[#allocation11 + $0x1f0] sm:$0xff]
    %v4902 = vld [vmem:[#allocation11 + $0x1f8] sm:$0xff]
    %v4903 = vld [vmem:[#allocation11 + $0x200] sm:$0xff]
    %v4904 = vld [vmem:[#allocation11 + $0x208] sm:$0xff]
    %v4905 = vld [vmem:[#allocation11 + $0x210] sm:$0xff]
    %v4906 = vld [vmem:[#allocation11 + $0x218] sm:$0xff]
    %v4907 = vld [vmem:[#allocation11 + $0x220] sm:$0xff]
    %v4908 = vld [vmem:[#allocation11 + $0x228] sm:$0xff]
    %v4909 = vld [vmem:[#allocation11 + $0x230] sm:$0xff]
    %v4910 = vld [vmem:[#allocation11 + $0x238] sm:$0xff]
    %v4911 = vld [vmem:[#allocation11 + $0x240] sm:$0xff]
    %v4912 = vld [vmem:[#allocation11 + $0x248] sm:$0xff]
    %v4913 = vld [vmem:[#allocation11 + $0x250] sm:$0xff]
    %v4914 = vld [vmem:[#allocation11 + $0x258] sm:$0xff]
    %v4915 = vld [vmem:[#allocation11 + $0x260] sm:$0xff]
    %v4916 = vld [vmem:[#allocation11 + $0x268] sm:$0xff]
    %v4917 = vld [vmem:[#allocation11 + $0x270] sm:$0xff]
    %v4918 = vld [vmem:[#allocation11 + $0x278] sm:$0xff]
    %v4919 = vld [vmem:[#allocation11 + $0x280] sm:$0xff]
    %v4920 = vld [vmem:[#allocation11 + $0x288] sm:$0xff]
    %v4921 = vld [vmem:[#allocation11 + $0x290] sm:$0xff]
    %v4922 = vld [vmem:[#allocation11 + $0x298] sm:$0xff]
    %v4923 = vld [vmem:[#allocation11 + $0x2a0] sm:$0xff]
    %v4924 = vld [vmem:[#allocation11 + $0x2a8] sm:$0xff]
    %v4925 = vld [vmem:[#allocation11 + $0x2b0] sm:$0xff]
    %v4926 = vld [vmem:[#allocation11 + $0x2b8] sm:$0xff]
    %v4927 = vld [vmem:[#allocation11 + $0x2c0] sm:$0xff]
    %v4928 = vld [vmem:[#allocation11 + $0x2c8] sm:$0xff]
    %v4929 = vld [vmem:[#allocation11 + $0x2d0] sm:$0xff]
    %v4930 = vld [vmem:[#allocation11 + $0x2d8] sm:$0xff]
    %v4931 = vld [vmem:[#allocation11 + $0x2e0] sm:$0xff]
    %v4932 = vld [vmem:[#allocation11 + $0x2e8] sm:$0xff]
    %v4933 = vld [vmem:[#allocation11 + $0x2f0] sm:$0xff]
    %v4934 = vld [vmem:[#allocation11 + $0x2f8] sm:$0xff]
    %v4935 = vld [vmem:[#allocation11 + $0x300] sm:$0xff]
    %v4936 = vld [vmem:[#allocation11 + $0x308] sm:$0xff]
    %v4937 = vld [vmem:[#allocation11 + $0x310] sm:$0xff]
    %v4938 = vld [vmem:[#allocation11 + $0x318] sm:$0xff]
    %v4939 = vld [vmem:[#allocation11 + $0x320] sm:$0xff]
    %v4940 = vld [vmem:[#allocation11 + $0x328] sm:$0xff]
    %v4941 = vld [vmem:[#allocation11 + $0x330] sm:$0xff]
    %v4942 = vld [vmem:[#allocation11 + $0x338] sm:$0xff]
    %v4943 = vld [vmem:[#allocation11 + $0x340] sm:$0xff]
    %v4944 = vld [vmem:[#allocation11 + $0x348] sm:$0xff]
    %v4945 = vld [vmem:[#allocation11 + $0x350] sm:$0xff]
    %v4946 = vld [vmem:[#allocation11 + $0x358] sm:$0xff]
    %v4947 = vld [vmem:[#allocation11 + $0x360] sm:$0xff]
    %v4948 = vld [vmem:[#allocation11 + $0x368] sm:$0xff]
    %v4949 = vld [vmem:[#allocation11 + $0x370] sm:$0xff]
    %v4950 = vld [vmem:[#allocation11 + $0x378] sm:$0xff]
    %v4951 = vld [vmem:[#allocation11 + $0x380] sm:$0xff]
    %v4952 = vld [vmem:[#allocation11 + $0x388] sm:$0xff]
    %v4953 = vld [vmem:[#allocation11 + $0x390] sm:$0xff]
    %v4954 = vld [vmem:[#allocation11 + $0x398] sm:$0xff]
    %v4955 = vld [vmem:[#allocation11 + $0x3a0] sm:$0xff]
    %v4956 = vld [vmem:[#allocation11 + $0x3a8] sm:$0xff]
    %v4957 = vld [vmem:[#allocation11 + $0x3b0] sm:$0xff]
    %v4958 = vld [vmem:[#allocation11 + $0x3b8] sm:$0xff]
    %v4959 = vld [vmem:[#allocation11 + $0x3c0] sm:$0xff]
    %v4960 = vld [vmem:[#allocation11 + $0x3c8] sm:$0xff]
    %v4961 = vld [vmem:[#allocation11 + $0x3d0] sm:$0xff]
    %v4962 = vld [vmem:[#allocation11 + $0x3d8] sm:$0xff]
    %v4963 = vld [vmem:[#allocation11 + $0x3e0] sm:$0xff]
    %v4964 = vld [vmem:[#allocation11 + $0x3e8] sm:$0xff]
    %v4965 = vld [vmem:[#allocation11 + $0x3f0] sm:$0xff]
    %v4966 = vld [vmem:[#allocation11 + $0x3f8] sm:$0xff]
    %v4968 = vlaneseq
    %v4969 = vshrl.u32 %v4968, 7
    %v4970 = vsub.s32 0, %v4969
    %v4971 = vrot.slane %v147, %v4970
    %v4972 = vlaneseq
    %v4973 = vshrl.u32 %v4972, 7
    %v4974 = vsub.s32 1, %v4973
    %v4975 = vrot.slane %v147, %v4974
    %v4976 = vlaneseq
    %v4977 = vshrl.u32 %v4976, 7
    %v4978 = vsub.s32 2, %v4977
    %v4979 = vrot.slane %v147, %v4978
    %v4980 = vlaneseq
    %v4981 = vshrl.u32 %v4980, 7
    %v4982 = vsub.s32 3, %v4981
    %v4983 = vrot.slane %v147, %v4982
    %v5116 = vunpack.c.l.b16 %v4839
    %v5117 = vunpack.c.h.b16 %v4839
    %v5118 = vunpack.c.l.b16 %v4840
    %v5119 = vunpack.c.h.b16 %v4840
    %v5120 = vunpack.c.l.b16 %v4841
    %v5121 = vunpack.c.h.b16 %v4841
    %v5122 = vunpack.c.l.b16 %v4842
    %v5123 = vunpack.c.h.b16 %v4842
    %v5124 = vunpack.c.l.b16 %v4843
    %v5125 = vunpack.c.h.b16 %v4843
    %v5126 = vunpack.c.l.b16 %v4844
    %v5127 = vunpack.c.h.b16 %v4844
    %v5128 = vunpack.c.l.b16 %v4845
    %v5129 = vunpack.c.h.b16 %v4845
    %v5130 = vunpack.c.l.b16 %v4846
    %v5131 = vunpack.c.h.b16 %v4846
    %v5132 = vunpack.c.l.b16 %v4847
    %v5133 = vunpack.c.h.b16 %v4847
    %v5134 = vunpack.c.l.b16 %v4848
    %v5135 = vunpack.c.h.b16 %v4848
    %v5136 = vunpack.c.l.b16 %v4849
    %v5137 = vunpack.c.h.b16 %v4849
    %v5138 = vunpack.c.l.b16 %v4850
    %v5139 = vunpack.c.h.b16 %v4850
    %v5140 = vunpack.c.l.b16 %v4851
    %v5141 = vunpack.c.h.b16 %v4851
    %v5142 = vunpack.c.l.b16 %v4852
    %v5143 = vunpack.c.h.b16 %v4852
    %v5144 = vunpack.c.l.b16 %v4853
    %v5145 = vunpack.c.h.b16 %v4853
    %v5146 = vunpack.c.l.b16 %v4854
    %v5147 = vunpack.c.h.b16 %v4854
    %v5148 = vunpack.c.l.b16 %v4855
    %v5149 = vunpack.c.h.b16 %v4855
    %v5150 = vunpack.c.l.b16 %v4856
    %v5151 = vunpack.c.h.b16 %v4856
    %v5152 = vunpack.c.l.b16 %v4857
    %v5153 = vunpack.c.h.b16 %v4857
    %v5154 = vunpack.c.l.b16 %v4858
    %v5155 = vunpack.c.h.b16 %v4858
    %v5156 = vunpack.c.l.b16 %v4859
    %v5157 = vunpack.c.h.b16 %v4859
    %v5158 = vunpack.c.l.b16 %v4860
    %v5159 = vunpack.c.h.b16 %v4860
    %v5160 = vunpack.c.l.b16 %v4861
    %v5161 = vunpack.c.h.b16 %v4861
    %v5162 = vunpack.c.l.b16 %v4862
    %v5163 = vunpack.c.h.b16 %v4862
    %v5164 = vunpack.c.l.b16 %v4863
    %v5165 = vunpack.c.h.b16 %v4863
    %v5166 = vunpack.c.l.b16 %v4864
    %v5167 = vunpack.c.h.b16 %v4864
    %v5168 = vunpack.c.l.b16 %v4865
    %v5169 = vunpack.c.h.b16 %v4865
    %v5170 = vunpack.c.l.b16 %v4866
    %v5171 = vunpack.c.h.b16 %v4866
    %v5172 = vunpack.c.l.b16 %v4867
    %v5173 = vunpack.c.h.b16 %v4867
    %v5174 = vunpack.c.l.b16 %v4868
    %v5175 = vunpack.c.h.b16 %v4868
    %v5176 = vunpack.c.l.b16 %v4869
    %v5177 = vunpack.c.h.b16 %v4869
    %v5178 = vunpack.c.l.b16 %v4870
    %v5179 = vunpack.c.h.b16 %v4870
    %v5180 = vunpack.c.l.b16 %v4871
    %v5181 = vunpack.c.h.b16 %v4871
    %v5182 = vunpack.c.l.b16 %v4872
    %v5183 = vunpack.c.h.b16 %v4872
    %v5184 = vunpack.c.l.b16 %v4873
    %v5185 = vunpack.c.h.b16 %v4873
    %v5186 = vunpack.c.l.b16 %v4874
    %v5187 = vunpack.c.h.b16 %v4874
    %v5188 = vunpack.c.l.b16 %v4875
    %v5189 = vunpack.c.h.b16 %v4875
    %v5190 = vunpack.c.l.b16 %v4876
    %v5191 = vunpack.c.h.b16 %v4876
    %v5192 = vunpack.c.l.b16 %v4877
    %v5193 = vunpack.c.h.b16 %v4877
    %v5194 = vunpack.c.l.b16 %v4878
    %v5195 = vunpack.c.h.b16 %v4878
    %v5196 = vunpack.c.l.b16 %v4879
    %v5197 = vunpack.c.h.b16 %v4879
    %v5198 = vunpack.c.l.b16 %v4880
    %v5199 = vunpack.c.h.b16 %v4880
    %v5200 = vunpack.c.l.b16 %v4881
    %v5201 = vunpack.c.h.b16 %v4881
    %v5202 = vunpack.c.l.b16 %v4882
    %v5203 = vunpack.c.h.b16 %v4882
    %v5204 = vunpack.c.l.b16 %v4883
    %v5205 = vunpack.c.h.b16 %v4883
    %v5206 = vunpack.c.l.b16 %v4884
    %v5207 = vunpack.c.h.b16 %v4884
    %v5208 = vunpack.c.l.b16 %v4885
    %v5209 = vunpack.c.h.b16 %v4885
    %v5210 = vunpack.c.l.b16 %v4886
    %v5211 = vunpack.c.h.b16 %v4886
    %v5212 = vunpack.c.l.b16 %v4887
    %v5213 = vunpack.c.h.b16 %v4887
    %v5214 = vunpack.c.l.b16 %v4888
    %v5215 = vunpack.c.h.b16 %v4888
    %v5216 = vunpack.c.l.b16 %v4889
    %v5217 = vunpack.c.h.b16 %v4889
    %v5218 = vunpack.c.l.b16 %v4890
    %v5219 = vunpack.c.h.b16 %v4890
    %v5220 = vunpack.c.l.b16 %v4891
    %v5221 = vunpack.c.h.b16 %v4891
    %v5222 = vunpack.c.l.b16 %v4892
    %v5223 = vunpack.c.h.b16 %v4892
    %v5224 = vunpack.c.l.b16 %v4893
    %v5225 = vunpack.c.h.b16 %v4893
    %v5226 = vunpack.c.l.b16 %v4894
    %v5227 = vunpack.c.h.b16 %v4894
    %v5228 = vunpack.c.l.b16 %v4895
    %v5229 = vunpack.c.h.b16 %v4895
    %v5230 = vunpack.c.l.b16 %v4896
    %v5231 = vunpack.c.h.b16 %v4896
    %v5232 = vunpack.c.l.b16 %v4897
    %v5233 = vunpack.c.h.b16 %v4897
    %v5234 = vunpack.c.l.b16 %v4898
    %v5235 = vunpack.c.h.b16 %v4898
    %v5236 = vunpack.c.l.b16 %v4899
    %v5237 = vunpack.c.h.b16 %v4899
    %v5238 = vunpack.c.l.b16 %v4900
    %v5239 = vunpack.c.h.b16 %v4900
    %v5240 = vunpack.c.l.b16 %v4901
    %v5241 = vunpack.c.h.b16 %v4901
    %v5242 = vunpack.c.l.b16 %v4902
    %v5243 = vunpack.c.h.b16 %v4902
    %v5244 = vunpack.c.l.b16 %v4903
    %v5245 = vunpack.c.h.b16 %v4903
    %v5246 = vunpack.c.l.b16 %v4904
    %v5247 = vunpack.c.h.b16 %v4904
    %v5248 = vunpack.c.l.b16 %v4905
    %v5249 = vunpack.c.h.b16 %v4905
    %v5250 = vunpack.c.l.b16 %v4906
    %v5251 = vunpack.c.h.b16 %v4906
    %v5252 = vunpack.c.l.b16 %v4907
    %v5253 = vunpack.c.h.b16 %v4907
    %v5254 = vunpack.c.l.b16 %v4908
    %v5255 = vunpack.c.h.b16 %v4908
    %v5256 = vunpack.c.l.b16 %v4909
    %v5257 = vunpack.c.h.b16 %v4909
    %v5258 = vunpack.c.l.b16 %v4910
    %v5259 = vunpack.c.h.b16 %v4910
    %v5260 = vunpack.c.l.b16 %v4911
    %v5261 = vunpack.c.h.b16 %v4911
    %v5262 = vunpack.c.l.b16 %v4912
    %v5263 = vunpack.c.h.b16 %v4912
    %v5264 = vunpack.c.l.b16 %v4913
    %v5265 = vunpack.c.h.b16 %v4913
    %v5266 = vunpack.c.l.b16 %v4914
    %v5267 = vunpack.c.h.b16 %v4914
    %v5268 = vunpack.c.l.b16 %v4915
    %v5269 = vunpack.c.h.b16 %v4915
    %v5270 = vunpack.c.l.b16 %v4916
    %v5271 = vunpack.c.h.b16 %v4916
    %v5272 = vunpack.c.l.b16 %v4917
    %v5273 = vunpack.c.h.b16 %v4917
    %v5274 = vunpack.c.l.b16 %v4918
    %v5275 = vunpack.c.h.b16 %v4918
    %v5276 = vunpack.c.l.b16 %v4919
    %v5277 = vunpack.c.h.b16 %v4919
    %v5278 = vunpack.c.l.b16 %v4920
    %v5279 = vunpack.c.h.b16 %v4920
    %v5280 = vunpack.c.l.b16 %v4921
    %v5281 = vunpack.c.h.b16 %v4921
    %v5282 = vunpack.c.l.b16 %v4922
    %v5283 = vunpack.c.h.b16 %v4922
    %v5284 = vunpack.c.l.b16 %v4923
    %v5285 = vunpack.c.h.b16 %v4923
    %v5286 = vunpack.c.l.b16 %v4924
    %v5287 = vunpack.c.h.b16 %v4924
    %v5288 = vunpack.c.l.b16 %v4925
    %v5289 = vunpack.c.h.b16 %v4925
    %v5290 = vunpack.c.l.b16 %v4926
    %v5291 = vunpack.c.h.b16 %v4926
    %v5292 = vunpack.c.l.b16 %v4927
    %v5293 = vunpack.c.h.b16 %v4927
    %v5294 = vunpack.c.l.b16 %v4928
    %v5295 = vunpack.c.h.b16 %v4928
    %v5296 = vunpack.c.l.b16 %v4929
    %v5297 = vunpack.c.h.b16 %v4929
    %v5298 = vunpack.c.l.b16 %v4930
    %v5299 = vunpack.c.h.b16 %v4930
    %v5300 = vunpack.c.l.b16 %v4931
    %v5301 = vunpack.c.h.b16 %v4931
    %v5302 = vunpack.c.l.b16 %v4932
    %v5303 = vunpack.c.h.b16 %v4932
    %v5304 = vunpack.c.l.b16 %v4933
    %v5305 = vunpack.c.h.b16 %v4933
    %v5306 = vunpack.c.l.b16 %v4934
    %v5307 = vunpack.c.h.b16 %v4934
    %v5308 = vunpack.c.l.b16 %v4935
    %v5309 = vunpack.c.h.b16 %v4935
    %v5310 = vunpack.c.l.b16 %v4936
    %v5311 = vunpack.c.h.b16 %v4936
    %v5312 = vunpack.c.l.b16 %v4937
    %v5313 = vunpack.c.h.b16 %v4937
    %v5314 = vunpack.c.l.b16 %v4938
    %v5315 = vunpack.c.h.b16 %v4938
    %v5316 = vunpack.c.l.b16 %v4939
    %v5317 = vunpack.c.h.b16 %v4939
    %v5318 = vunpack.c.l.b16 %v4940
    %v5319 = vunpack.c.h.b16 %v4940
    %v5320 = vunpack.c.l.b16 %v4941
    %v5321 = vunpack.c.h.b16 %v4941
    %v5322 = vunpack.c.l.b16 %v4942
    %v5323 = vunpack.c.h.b16 %v4942
    %v5324 = vunpack.c.l.b16 %v4943
    %v5325 = vunpack.c.h.b16 %v4943
    %v5326 = vunpack.c.l.b16 %v4944
    %v5327 = vunpack.c.h.b16 %v4944
    %v5328 = vunpack.c.l.b16 %v4945
    %v5329 = vunpack.c.h.b16 %v4945
    %v5330 = vunpack.c.l.b16 %v4946
    %v5331 = vunpack.c.h.b16 %v4946
    %v5332 = vunpack.c.l.b16 %v4947
    %v5333 = vunpack.c.h.b16 %v4947
    %v5334 = vunpack.c.l.b16 %v4948
    %v5335 = vunpack.c.h.b16 %v4948
    %v5336 = vunpack.c.l.b16 %v4949
    %v5337 = vunpack.c.h.b16 %v4949
    %v5338 = vunpack.c.l.b16 %v4950
    %v5339 = vunpack.c.h.b16 %v4950
    %v5340 = vunpack.c.l.b16 %v4951
    %v5341 = vunpack.c.h.b16 %v4951
    %v5342 = vunpack.c.l.b16 %v4952
    %v5343 = vunpack.c.h.b16 %v4952
    %v5344 = vunpack.c.l.b16 %v4953
    %v5345 = vunpack.c.h.b16 %v4953
    %v5346 = vunpack.c.l.b16 %v4954
    %v5347 = vunpack.c.h.b16 %v4954
    %v5348 = vunpack.c.l.b16 %v4955
    %v5349 = vunpack.c.h.b16 %v4955
    %v5350 = vunpack.c.l.b16 %v4956
    %v5351 = vunpack.c.h.b16 %v4956
    %v5352 = vunpack.c.l.b16 %v4957
    %v5353 = vunpack.c.h.b16 %v4957
    %v5354 = vunpack.c.l.b16 %v4958
    %v5355 = vunpack.c.h.b16 %v4958
    %v5356 = vunpack.c.l.b16 %v4959
    %v5357 = vunpack.c.h.b16 %v4959
    %v5358 = vunpack.c.l.b16 %v4960
    %v5359 = vunpack.c.h.b16 %v4960
    %v5360 = vunpack.c.l.b16 %v4961
    %v5361 = vunpack.c.h.b16 %v4961
    %v5362 = vunpack.c.l.b16 %v4962
    %v5363 = vunpack.c.h.b16 %v4962
    %v5364 = vunpack.c.l.b16 %v4963
    %v5365 = vunpack.c.h.b16 %v4963
    %v5366 = vunpack.c.l.b16 %v4964
    %v5367 = vunpack.c.h.b16 %v4964
    %v5368 = vunpack.c.l.b16 %v4965
    %v5369 = vunpack.c.h.b16 %v4965
    %v5370 = vunpack.c.l.b16 %v4966
    %v5371 = vunpack.c.h.b16 %v4966
    %v5372 = vpack.c.b16 %v5120, %v5116
    %v5373 = vpack.c.b16 %v5121, %v5117
    %v5374 = vpack.c.b16 %v5122, %v5118
    %v5375 = vpack.c.b16 %v5123, %v5119
    %v5376 = vpack.c.b16 %v5128, %v5124
    %v5377 = vpack.c.b16 %v5129, %v5125
    %v5378 = vpack.c.b16 %v5130, %v5126
    %v5379 = vpack.c.b16 %v5131, %v5127
    %v5380 = vpack.c.b16 %v5136, %v5132
    %v5381 = vpack.c.b16 %v5137, %v5133
    %v5382 = vpack.c.b16 %v5138, %v5134
    %v5383 = vpack.c.b16 %v5139, %v5135
    %v5384 = vpack.c.b16 %v5144, %v5140
    %v5385 = vpack.c.b16 %v5145, %v5141
    %v5386 = vpack.c.b16 %v5146, %v5142
    %v5387 = vpack.c.b16 %v5147, %v5143
    %v5388 = vpack.c.b16 %v5152, %v5148
    %v5389 = vpack.c.b16 %v5153, %v5149
    %v5390 = vpack.c.b16 %v5154, %v5150
    %v5391 = vpack.c.b16 %v5155, %v5151
    %v5392 = vpack.c.b16 %v5160, %v5156
    %v5393 = vpack.c.b16 %v5161, %v5157
    %v5394 = vpack.c.b16 %v5162, %v5158
    %v5395 = vpack.c.b16 %v5163, %v5159
    %v5396 = vpack.c.b16 %v5168, %v5164
    %v5397 = vpack.c.b16 %v5169, %v5165
    %v5398 = vpack.c.b16 %v5170, %v5166
    %v5399 = vpack.c.b16 %v5171, %v5167
    %v5400 = vpack.c.b16 %v5176, %v5172
    %v5401 = vpack.c.b16 %v5177, %v5173
    %v5402 = vpack.c.b16 %v5178, %v5174
    %v5403 = vpack.c.b16 %v5179, %v5175
    %v5404 = vpack.c.b16 %v5184, %v5180
    %v5405 = vpack.c.b16 %v5185, %v5181
    %v5406 = vpack.c.b16 %v5186, %v5182
    %v5407 = vpack.c.b16 %v5187, %v5183
    %v5408 = vpack.c.b16 %v5192, %v5188
    %v5409 = vpack.c.b16 %v5193, %v5189
    %v5410 = vpack.c.b16 %v5194, %v5190
    %v5411 = vpack.c.b16 %v5195, %v5191
    %v5412 = vpack.c.b16 %v5200, %v5196
    %v5413 = vpack.c.b16 %v5201, %v5197
    %v5414 = vpack.c.b16 %v5202, %v5198
    %v5415 = vpack.c.b16 %v5203, %v5199
    %v5416 = vpack.c.b16 %v5208, %v5204
    %v5417 = vpack.c.b16 %v5209, %v5205
    %v5418 = vpack.c.b16 %v5210, %v5206
    %v5419 = vpack.c.b16 %v5211, %v5207
    %v5420 = vpack.c.b16 %v5216, %v5212
    %v5421 = vpack.c.b16 %v5217, %v5213
    %v5422 = vpack.c.b16 %v5218, %v5214
    %v5423 = vpack.c.b16 %v5219, %v5215
    %v5424 = vpack.c.b16 %v5224, %v5220
    %v5425 = vpack.c.b16 %v5225, %v5221
    %v5426 = vpack.c.b16 %v5226, %v5222
    %v5427 = vpack.c.b16 %v5227, %v5223
    %v5428 = vpack.c.b16 %v5232, %v5228
    %v5429 = vpack.c.b16 %v5233, %v5229
    %v5430 = vpack.c.b16 %v5234, %v5230
    %v5431 = vpack.c.b16 %v5235, %v5231
    %v5432 = vpack.c.b16 %v5240, %v5236
    %v5433 = vpack.c.b16 %v5241, %v5237
    %v5434 = vpack.c.b16 %v5242, %v5238
    %v5435 = vpack.c.b16 %v5243, %v5239
    %v5436 = vpack.c.b16 %v5248, %v5244
    %v5437 = vpack.c.b16 %v5249, %v5245
    %v5438 = vpack.c.b16 %v5250, %v5246
    %v5439 = vpack.c.b16 %v5251, %v5247
    %v5440 = vpack.c.b16 %v5256, %v5252
    %v5441 = vpack.c.b16 %v5257, %v5253
    %v5442 = vpack.c.b16 %v5258, %v5254
    %v5443 = vpack.c.b16 %v5259, %v5255
    %v5444 = vpack.c.b16 %v5264, %v5260
    %v5445 = vpack.c.b16 %v5265, %v5261
    %v5446 = vpack.c.b16 %v5266, %v5262
    %v5447 = vpack.c.b16 %v5267, %v5263
    %v5448 = vpack.c.b16 %v5272, %v5268
    %v5449 = vpack.c.b16 %v5273, %v5269
    %v5450 = vpack.c.b16 %v5274, %v5270
    %v5451 = vpack.c.b16 %v5275, %v5271
    %v5452 = vpack.c.b16 %v5280, %v5276
    %v5453 = vpack.c.b16 %v5281, %v5277
    %v5454 = vpack.c.b16 %v5282, %v5278
    %v5455 = vpack.c.b16 %v5283, %v5279
    %v5456 = vpack.c.b16 %v5288, %v5284
    %v5457 = vpack.c.b16 %v5289, %v5285
    %v5458 = vpack.c.b16 %v5290, %v5286
    %v5459 = vpack.c.b16 %v5291, %v5287
    %v5460 = vpack.c.b16 %v5296, %v5292
    %v5461 = vpack.c.b16 %v5297, %v5293
    %v5462 = vpack.c.b16 %v5298, %v5294
    %v5463 = vpack.c.b16 %v5299, %v5295
    %v5464 = vpack.c.b16 %v5304, %v5300
    %v5465 = vpack.c.b16 %v5305, %v5301
    %v5466 = vpack.c.b16 %v5306, %v5302
    %v5467 = vpack.c.b16 %v5307, %v5303
    %v5468 = vpack.c.b16 %v5312, %v5308
    %v5469 = vpack.c.b16 %v5313, %v5309
    %v5470 = vpack.c.b16 %v5314, %v5310
    %v5471 = vpack.c.b16 %v5315, %v5311
    %v5472 = vpack.c.b16 %v5320, %v5316
    %v5473 = vpack.c.b16 %v5321, %v5317
    %v5474 = vpack.c.b16 %v5322, %v5318
    %v5475 = vpack.c.b16 %v5323, %v5319
    %v5476 = vpack.c.b16 %v5328, %v5324
    %v5477 = vpack.c.b16 %v5329, %v5325
    %v5478 = vpack.c.b16 %v5330, %v5326
    %v5479 = vpack.c.b16 %v5331, %v5327
    %v5480 = vpack.c.b16 %v5336, %v5332
    %v5481 = vpack.c.b16 %v5337, %v5333
    %v5482 = vpack.c.b16 %v5338, %v5334
    %v5483 = vpack.c.b16 %v5339, %v5335
    %v5484 = vpack.c.b16 %v5344, %v5340
    %v5485 = vpack.c.b16 %v5345, %v5341
    %v5486 = vpack.c.b16 %v5346, %v5342
    %v5487 = vpack.c.b16 %v5347, %v5343
    %v5488 = vpack.c.b16 %v5352, %v5348
    %v5489 = vpack.c.b16 %v5353, %v5349
    %v5490 = vpack.c.b16 %v5354, %v5350
    %v5491 = vpack.c.b16 %v5355, %v5351
    %v5492 = vpack.c.b16 %v5360, %v5356
    %v5493 = vpack.c.b16 %v5361, %v5357
    %v5494 = vpack.c.b16 %v5362, %v5358
    %v5495 = vpack.c.b16 %v5363, %v5359
    %v5496 = vpack.c.b16 %v5368, %v5364
    %v5497 = vpack.c.b16 %v5369, %v5365
    %v5498 = vpack.c.b16 %v5370, %v5366
    %v5499 = vpack.c.b16 %v5371, %v5367
    %5628 = vmatprep.subr.bf16.mxu0 %v5373
    %5629 = vmatpush1.bf16.msra.mxu0 %v5372
    %5630 = vmatprep.subr.bf16.mxu0 %v5377
    %5631 = vmatpush1.bf16.msra.mxu0 %v5376
    %5632 = vmatprep.subr.bf16.mxu0 %v5381
    %5633 = vmatpush1.bf16.msra.mxu0 %v5380
    %5634 = vmatprep.subr.bf16.mxu0 %v5385
    %5635 = vmatpush1.bf16.msra.mxu0 %v5384
    %5636 = vmatprep.subr.bf16.mxu0 %v5389
    %5637 = vmatpush1.bf16.msra.mxu0 %v5388
    %5638 = vmatprep.subr.bf16.mxu0 %v5393
    %5639 = vmatpush1.bf16.msra.mxu0 %v5392
    %5640 = vmatprep.subr.bf16.mxu0 %v5397
    %5641 = vmatpush1.bf16.msra.mxu0 %v5396
    %5642 = vmatprep.subr.bf16.mxu0 %v5401
    %5643 = vmatpush1.bf16.msra.mxu0 %v5400
    %5644 = vmatprep.subr.bf16.mxu0 %v5405
    %5645 = vmatpush1.bf16.msra.mxu0 %v5404
    %5646 = vmatprep.subr.bf16.mxu0 %v5409
    %5647 = vmatpush1.bf16.msra.mxu0 %v5408
    %5648 = vmatprep.subr.bf16.mxu0 %v5413
    %5649 = vmatpush1.bf16.msra.mxu0 %v5412
    %5650 = vmatprep.subr.bf16.mxu0 %v5417
    %5651 = vmatpush1.bf16.msra.mxu0 %v5416
    %5652 = vmatprep.subr.bf16.mxu0 %v5421
    %5653 = vmatpush1.bf16.msra.mxu0 %v5420
    %5654 = vmatprep.subr.bf16.mxu0 %v5425
    %5655 = vmatpush1.bf16.msra.mxu0 %v5424
    %5656 = vmatprep.subr.bf16.mxu0 %v5429
    %5657 = vmatpush1.bf16.msra.mxu0 %v5428
    %5658 = vmatprep.subr.bf16.mxu0 %v5433
    %5659 = vmatpush1.bf16.msra.mxu0 %v5432
    %5660 = vmatprep.mubr.bf16.mxu0 %v4808
    %5661 = vmatmul.mubr.bf16.gmra.mrb[0].mxu0 %v4807
    %v5662 = vpop.f32.mrb[0].mxu0
    %v5663 = vadd.f32 %v4971, %v5662
    %v5664 = vpop.f32.mrb[0].mxu0
    %v5665 = vadd.f32 %v4975, %v5664
    %v5666 = vpop.f32.mrb[0].mxu0
    %v5667 = vadd.f32 %v4971, %v5666
    %v5668 = vpop.f32.mrb[0].mxu0
    %v5669 = vadd.f32 %v4975, %v5668
    %5670 = vmatprep.mubr.bf16.mxu0 %v4812
    %5671 = vmatmul.mubr.bf16.gmra.mrb[0].mxu0 %v4811
    %v5672 = vpop.f32.mrb[0].mxu0
    %v5673 = vadd.f32 %v4971, %v5672
    %v5674 = vpop.f32.mrb[0].mxu0
    %v5675 = vadd.f32 %v4975, %v5674
    %v5676 = vpop.f32.mrb[0].mxu0
    %v5677 = vadd.f32 %v4971, %v5676
    %v5678 = vpop.f32.mrb[0].mxu0
    %v5679 = vadd.f32 %v4975, %v5678
    %5680 = vmatprep.mubr.bf16.mxu0 %v4816
    %5681 = vmatmul.mubr.bf16.gmra.mrb[0].mxu0 %v4815
    %v5682 = vpop.f32.mrb[0].mxu0
    %v5683 = vadd.f32 %v4971, %v5682
    %v5684 = vpop.f32.mrb[0].mxu0
    %v5685 = vadd.f32 %v4975, %v5684
    %v5686 = vpop.f32.mrb[0].mxu0
    %v5687 = vadd.f32 %v4971, %v5686
    %v5688 = vpop.f32.mrb[0].mxu0
    %v5689 = vadd.f32 %v4975, %v5688
    %5690 = vmatprep.mubr.bf16.mxu0 %v4820
    %5691 = vmatmul.mubr.bf16.gmra.mrb[0].mxu0 %v4819
    %v5692 = vpop.f32.mrb[0].mxu0
    %v5693 = vadd.f32 %v4971, %v5692
    %v5694 = vpop.f32.mrb[0].mxu0
    %v5695 = vadd.f32 %v4975, %v5694
    %v5696 = vpop.f32.mrb[0].mxu0
    %v5697 = vadd.f32 %v4971, %v5696
    %v5698 = vpop.f32.mrb[0].mxu0
    %v5699 = vadd.f32 %v4975, %v5698
    %5700 = vmatprep.mubr.bf16.mxu0 %v4824
    %5701 = vmatmul.mubr.bf16.gmra.mrb[0].mxu0 %v4823
    %v5702 = vpop.f32.mrb[0].mxu0
    %v5703 = vadd.f32 %v4971, %v5702
    %v5704 = vpop.f32.mrb[0].mxu0
    %v5705 = vadd.f32 %v4975, %v5704
    %v5706 = vpop.f32.mrb[0].mxu0
    %v5707 = vadd.f32 %v4971, %v5706
    %v5708 = vpop.f32.mrb[0].mxu0
    %v5709 = vadd.f32 %v4975, %v5708
    %5710 = vmatprep.mubr.bf16.mxu0 %v4828
    %5711 = vmatmul.mubr.bf16.gmra.mrb[0].mxu0 %v4827
    %v5712 = vpop.f32.mrb[0].mxu0
    %v5713 = vadd.f32 %v4971, %v5712
    %v5714 = vpop.f32.mrb[0].mxu0
    %v5715 = vadd.f32 %v4975, %v5714
    %v5716 = vpop.f32.mrb[0].mxu0
    %v5717 = vadd.f32 %v4971, %v5716
    %v5718 = vpop.f32.mrb[0].mxu0
    %v5719 = vadd.f32 %v4975, %v5718
    %5720 = vmatprep.mubr.bf16.mxu0 %v4832
    %5721 = vmatmul.mubr.bf16.gmra.mrb[0].mxu0 %v4831
    %v5722 = vpop.f32.mrb[0].mxu0
    %v5723 = vadd.f32 %v4971, %v5722
    %v5724 = vpop.f32.mrb[0].mxu0
    %v5725 = vadd.f32 %v4975, %v5724
    %v5726 = vpop.f32.mrb[0].mxu0
    %v5727 = vadd.f32 %v4971, %v5726
    %v5728 = vpop.f32.mrb[0].mxu0
    %v5729 = vadd.f32 %v4975, %v5728
    %5730 = vmatprep.mubr.bf16.mxu0 %v4836
    %5731 = vmatmul.mubr.bf16.gmra.mrb[0].mxu0 %v4835
    %v5732 = vpop.f32.mrb[0].mxu0
    %v5733 = vadd.f32 %v4971, %v5732
    %v5734 = vpop.f32.mrb[0].mxu0
    %v5735 = vadd.f32 %v4975, %v5734
    %v5736 = vpop.f32.mrb[0].mxu0
    %v5737 = vadd.f32 %v4971, %v5736
    %v5738 = vpop.f32.mrb[0].mxu0
    %v5739 = vadd.f32 %v4975, %v5738
    %5740 = vdwg.mxu0
    %5741 = vmatprep.subr.bf16.mxu0 %v5437
    %5742 = vmatpush1.bf16.msra.mxu0 %v5436
    %5743 = vmatprep.subr.bf16.mxu0 %v5441
    %5744 = vmatpush1.bf16.msra.mxu0 %v5440
    %5745 = vmatprep.subr.bf16.mxu0 %v5445
    %5746 = vmatpush1.bf16.msra.mxu0 %v5444
    %5747 = vmatprep.subr.bf16.mxu0 %v5449
    %5748 = vmatpush1.bf16.msra.mxu0 %v5448
    %5749 = vmatprep.subr.bf16.mxu0 %v5453
    %5750 = vmatpush1.bf16.msra.mxu0 %v5452
    %5751 = vmatprep.subr.bf16.mxu0 %v5457
    %5752 = vmatpush1.bf16.msra.mxu0 %v5456
    %5753 = vmatprep.subr.bf16.mxu0 %v5461
    %5754 = vmatpush1.bf16.msra.mxu0 %v5460
    %5755 = vmatprep.subr.bf16.mxu0 %v5465
    %5756 = vmatpush1.bf16.msra.mxu0 %v5464
    %5757 = vmatprep.subr.bf16.mxu0 %v5469
    %5758 = vmatpush1.bf16.msra.mxu0 %v5468
    %5759 = vmatprep.subr.bf16.mxu0 %v5473
    %5760 = vmatpush1.bf16.msra.mxu0 %v5472
    %5761 = vmatprep.subr.bf16.mxu0 %v5477
    %5762 = vmatpush1.bf16.msra.mxu0 %v5476
    %5763 = vmatprep.subr.bf16.mxu0 %v5481
    %5764 = vmatpush1.bf16.msra.mxu0 %v5480
    %5765 = vmatprep.subr.bf16.mxu0 %v5485
    %5766 = vmatpush1.bf16.msra.mxu0 %v5484
    %5767 = vmatprep.subr.bf16.mxu0 %v5489
    %5768 = vmatpush1.bf16.msra.mxu0 %v5488
    %5769 = vmatprep.subr.bf16.mxu0 %v5493
    %5770 = vmatpush1.bf16.msra.mxu0 %v5492
    %5771 = vmatprep.subr.bf16.mxu0 %v5497
    %5772 = vmatpush1.bf16.msra.mxu0 %v5496
    %5773 = vmatprep.mubr.bf16.mxu0 %v4810
    %5774 = vmatmul.mubr.bf16.gmra.mrb[0].mxu0 %v4809
    %v5775 = vpop.f32.mrb[0].mxu0
    %v5776 = vadd.f32 %v5663, %v5775
    %v5777 = vpop.f32.mrb[0].mxu0
    %v5778 = vadd.f32 %v5665, %v5777
    %v5779 = vpop.f32.mrb[0].mxu0
    %v5780 = vadd.f32 %v5667, %v5779
    %v5781 = vpop.f32.mrb[0].mxu0
    %v5782 = vadd.f32 %v5669, %v5781
    %5783 = vmatprep.mubr.bf16.mxu0 %v4814
    %5784 = vmatmul.mubr.bf16.gmra.mrb[0].mxu0 %v4813
    %v5785 = vpop.f32.mrb[0].mxu0
    %v5786 = vadd.f32 %v5673, %v5785
    %v5787 = vpop.f32.mrb[0].mxu0
    %v5788 = vadd.f32 %v5675, %v5787
    %v5789 = vpop.f32.mrb[0].mxu0
    %v5790 = vadd.f32 %v5677, %v5789
    %v5791 = vpop.f32.mrb[0].mxu0
    %v5792 = vadd.f32 %v5679, %v5791
    %5793 = vmatprep.mubr.bf16.mxu0 %v4818
    %5794 = vmatmul.mubr.bf16.gmra.mrb[0].mxu0 %v4817
    %v5795 = vpop.f32.mrb[0].mxu0
    %v5796 = vadd.f32 %v5683, %v5795
    %v5797 = vpop.f32.mrb[0].mxu0
    %v5798 = vadd.f32 %v5685, %v5797
    %v5799 = vpop.f32.mrb[0].mxu0
    %v5800 = vadd.f32 %v5687, %v5799
    %v5801 = vpop.f32.mrb[0].mxu0
    %v5802 = vadd.f32 %v5689, %v5801
    %5803 = vmatprep.mubr.bf16.mxu0 %v4822
    %5804 = vmatmul.mubr.bf16.gmra.mrb[0].mxu0 %v4821
    %v5805 = vpop.f32.mrb[0].mxu0
    %v5806 = vadd.f32 %v5693, %v5805
    %v5807 = vpop.f32.mrb[0].mxu0
    %v5808 = vadd.f32 %v5695, %v5807
    %v5809 = vpop.f32.mrb[0].mxu0
    %v5810 = vadd.f32 %v5697, %v5809
    %v5811 = vpop.f32.mrb[0].mxu0
    %v5812 = vadd.f32 %v5699, %v5811
    %5813 = vmatprep.mubr.bf16.mxu0 %v4826
    %5814 = vmatmul.mubr.bf16.gmra.mrb[0].mxu0 %v4825
    %v5815 = vpop.f32.mrb[0].mxu0
    %v5816 = vadd.f32 %v5703, %v5815
    %v5817 = vpop.f32.mrb[0].mxu0
    %v5818 = vadd.f32 %v5705, %v5817
    %v5819 = vpop.f32.mrb[0].mxu0
    %v5820 = vadd.f32 %v5707, %v5819
    %v5821 = vpop.f32.mrb[0].mxu0
    %v5822 = vadd.f32 %v5709, %v5821
    %5823 = vmatprep.mubr.bf16.mxu0 %v4830
    %5824 = vmatmul.mubr.bf16.gmra.mrb[0].mxu0 %v4829
    %v5825 = vpop.f32.mrb[0].mxu0
    %v5826 = vadd.f32 %v5713, %v5825
    %v5827 = vpop.f32.mrb[0].mxu0
    %v5828 = vadd.f32 %v5715, %v5827
    %v5829 = vpop.f32.mrb[0].mxu0
    %v5830 = vadd.f32 %v5717, %v5829
    %v5831 = vpop.f32.mrb[0].mxu0
    %v5832 = vadd.f32 %v5719, %v5831
    %5833 = vmatprep.mubr.bf16.mxu0 %v4834
    %5834 = vmatmul.mubr.bf16.gmra.mrb[0].mxu0 %v4833
    %v5835 = vpop.f32.mrb[0].mxu0
    %v5836 = vadd.f32 %v5723, %v5835
    %v5837 = vpop.f32.mrb[0].mxu0
    %v5838 = vadd.f32 %v5725, %v5837
    %v5839 = vpop.f32.mrb[0].mxu0
    %v5840 = vadd.f32 %v5727, %v5839
    %v5841 = vpop.f32.mrb[0].mxu0
    %v5842 = vadd.f32 %v5729, %v5841
    %5843 = vmatprep.mubr.bf16.mxu0 %v4838
    %5844 = vmatmul.mubr.bf16.gmra.mrb[0].mxu0 %v4837
    %v5845 = vpop.f32.mrb[0].mxu0
    %v5846 = vadd.f32 %v5733, %v5845
    %v5847 = vpop.f32.mrb[0].mxu0
    %v5848 = vadd.f32 %v5735, %v5847
    %v5849 = vpop.f32.mrb[0].mxu0
    %v5850 = vadd.f32 %v5737, %v5849
    %v5851 = vpop.f32.mrb[0].mxu0
    %v5852 = vadd.f32 %v5739, %v5851
    %5853 = vdwg.mxu0
    %5854 = vmatprep.subr.bf16.mxu0 %v5375
    %5855 = vmatpush1.bf16.msra.mxu0 %v5374
    %5856 = vmatprep.subr.bf16.mxu0 %v5379
    %5857 = vmatpush1.bf16.msra.mxu0 %v5378
    %5858 = vmatprep.subr.bf16.mxu0 %v5383
    %5859 = vmatpush1.bf16.msra.mxu0 %v5382
    %5860 = vmatprep.subr.bf16.mxu0 %v5387
    %5861 = vmatpush1.bf16.msra.mxu0 %v5386
    %5862 = vmatprep.subr.bf16.mxu0 %v5391
    %5863 = vmatpush1.bf16.msra.mxu0 %v5390
    %5864 = vmatprep.subr.bf16.mxu0 %v5395
    %5865 = vmatpush1.bf16.msra.mxu0 %v5394
    %5866 = vmatprep.subr.bf16.mxu0 %v5399
    %5867 = vmatpush1.bf16.msra.mxu0 %v5398
    %5868 = vmatprep.subr.bf16.mxu0 %v5403
    %5869 = vmatpush1.bf16.msra.mxu0 %v5402
    %5870 = vmatprep.subr.bf16.mxu0 %v5407
    %5871 = vmatpush1.bf16.msra.mxu0 %v5406
    %5872 = vmatprep.subr.bf16.mxu0 %v5411
    %5873 = vmatpush1.bf16.msra.mxu0 %v5410
    %5874 = vmatprep.subr.bf16.mxu0 %v5415
    %5875 = vmatpush1.bf16.msra.mxu0 %v5414
    %5876 = vmatprep.subr.bf16.mxu0 %v5419
    %5877 = vmatpush1.bf16.msra.mxu0 %v5418
    %5878 = vmatprep.subr.bf16.mxu0 %v5423
    %5879 = vmatpush1.bf16.msra.mxu0 %v5422
    %5880 = vmatprep.subr.bf16.mxu0 %v5427
    %5881 = vmatpush1.bf16.msra.mxu0 %v5426
    %5882 = vmatprep.subr.bf16.mxu0 %v5431
    %5883 = vmatpush1.bf16.msra.mxu0 %v5430
    %5884 = vmatprep.subr.bf16.mxu0 %v5435
    %5885 = vmatpush1.bf16.msra.mxu0 %v5434
    %5886 = vmatprep.mubr.bf16.mxu0 %v4808
    %5887 = vmatmul.mubr.bf16.gmra.mrb[0].mxu0 %v4807
    %v5888 = vpop.f32.mrb[0].mxu0
    %v5889 = vadd.f32 %v4979, %v5888
    %v5890 = vpop.f32.mrb[0].mxu0
    %v5891 = vadd.f32 %v4983, %v5890
    %v5892 = vpop.f32.mrb[0].mxu0
    %v5893 = vadd.f32 %v4979, %v5892
    %v5894 = vpop.f32.mrb[0].mxu0
    %v5895 = vadd.f32 %v4983, %v5894
    %5896 = vmatprep.mubr.bf16.mxu0 %v4812
    %5897 = vmatmul.mubr.bf16.gmra.mrb[0].mxu0 %v4811
    %v5898 = vpop.f32.mrb[0].mxu0
    %v5899 = vadd.f32 %v4979, %v5898
    %v5900 = vpop.f32.mrb[0].mxu0
    %v5901 = vadd.f32 %v4983, %v5900
    %v5902 = vpop.f32.mrb[0].mxu0
    %v5903 = vadd.f32 %v4979, %v5902
    %v5904 = vpop.f32.mrb[0].mxu0
    %v5905 = vadd.f32 %v4983, %v5904
    %5906 = vmatprep.mubr.bf16.mxu0 %v4816
    %5907 = vmatmul.mubr.bf16.gmra.mrb[0].mxu0 %v4815
    %v5908 = vpop.f32.mrb[0].mxu0
    %v5909 = vadd.f32 %v4979, %v5908
    %v5910 = vpop.f32.mrb[0].mxu0
    %v5911 = vadd.f32 %v4983, %v5910
    %v5912 = vpop.f32.mrb[0].mxu0
    %v5913 = vadd.f32 %v4979, %v5912
    %v5914 = vpop.f32.mrb[0].mxu0
    %v5915 = vadd.f32 %v4983, %v5914
    %5916 = vmatprep.mubr.bf16.mxu0 %v4820
    %5917 = vmatmul.mubr.bf16.gmra.mrb[0].mxu0 %v4819
    %v5918 = vpop.f32.mrb[0].mxu0
    %v5919 = vadd.f32 %v4979, %v5918
    %v5920 = vpop.f32.mrb[0].mxu0
    %v5921 = vadd.f32 %v4983, %v5920
    %v5922 = vpop.f32.mrb[0].mxu0
    %v5923 = vadd.f32 %v4979, %v5922
    %v5924 = vpop.f32.mrb[0].mxu0
    %v5925 = vadd.f32 %v4983, %v5924
    %5926 = vmatprep.mubr.bf16.mxu0 %v4824
    %5927 = vmatmul.mubr.bf16.gmra.mrb[0].mxu0 %v4823
    %v5928 = vpop.f32.mrb[0].mxu0
    %v5929 = vadd.f32 %v4979, %v5928
    %v5930 = vpop.f32.mrb[0].mxu0
    %v5931 = vadd.f32 %v4983, %v5930
    %v5932 = vpop.f32.mrb[0].mxu0
    %v5933 = vadd.f32 %v4979, %v5932
    %v5934 = vpop.f32.mrb[0].mxu0
    %v5935 = vadd.f32 %v4983, %v5934
    %5936 = vmatprep.mubr.bf16.mxu0 %v4828
    %5937 = vmatmul.mubr.bf16.gmra.mrb[0].mxu0 %v4827
    %v5938 = vpop.f32.mrb[0].mxu0
    %v5939 = vadd.f32 %v4979, %v5938
    %v5940 = vpop.f32.mrb[0].mxu0
    %v5941 = vadd.f32 %v4983, %v5940
    %v5942 = vpop.f32.mrb[0].mxu0
    %v5943 = vadd.f32 %v4979, %v5942
    %v5944 = vpop.f32.mrb[0].mxu0
    %v5945 = vadd.f32 %v4983, %v5944
    %5946 = vmatprep.mubr.bf16.mxu0 %v4832
    %5947 = vmatmul.mubr.bf16.gmra.mrb[0].mxu0 %v4831
    %v5948 = vpop.f32.mrb[0].mxu0
    %v5949 = vadd.f32 %v4979, %v5948
    %v5950 = vpop.f32.mrb[0].mxu0
    %v5951 = vadd.f32 %v4983, %v5950
    %v5952 = vpop.f32.mrb[0].mxu0
    %v5953 = vadd.f32 %v4979, %v5952
    %v5954 = vpop.f32.mrb[0].mxu0
    %v5955 = vadd.f32 %v4983, %v5954
    %5956 = vmatprep.mubr.bf16.mxu0 %v4836
    %5957 = vmatmul.mubr.bf16.gmra.mrb[0].mxu0 %v4835
    %v5958 = vpop.f32.mrb[0].mxu0
    %v5959 = vadd.f32 %v4979, %v5958
    %v5960 = vpop.f32.mrb[0].mxu0
    %v5961 = vadd.f32 %v4983, %v5960
    %v5962 = vpop.f32.mrb[0].mxu0
    %v5963 = vadd.f32 %v4979, %v5962
    %v5964 = vpop.f32.mrb[0].mxu0
    %v5965 = vadd.f32 %v4983, %v5964
    %5966 = vdwg.mxu0
    %5967 = vmatprep.subr.bf16.mxu0 %v5439
    %5968 = vmatpush1.bf16.msra.mxu0 %v5438
    %5969 = vmatprep.subr.bf16.mxu0 %v5443
    %5970 = vmatpush1.bf16.msra.mxu0 %v5442
    %5971 = vmatprep.subr.bf16.mxu0 %v5447
    %5972 = vmatpush1.bf16.msra.mxu0 %v5446
    %5973 = vmatprep.subr.bf16.mxu0 %v5451
    %5974 = vmatpush1.bf16.msra.mxu0 %v5450
    %5975 = vmatprep.subr.bf16.mxu0 %v5455
    %5976 = vmatpush1.bf16.msra.mxu0 %v5454
    %5977 = vmatprep.subr.bf16.mxu0 %v5459
    %5978 = vmatpush1.bf16.msra.mxu0 %v5458
    %5979 = vmatprep.subr.bf16.mxu0 %v5463
    %5980 = vmatpush1.bf16.msra.mxu0 %v5462
    %5981 = vmatprep.subr.bf16.mxu0 %v5467
    %5982 = vmatpush1.bf16.msra.mxu0 %v5466
    %5983 = vmatprep.subr.bf16.mxu0 %v5471
    %5984 = vmatpush1.bf16.msra.mxu0 %v5470
    %5985 = vmatprep.subr.bf16.mxu0 %v5475
    %5986 = vmatpush1.bf16.msra.mxu0 %v5474
    %5987 = vmatprep.subr.bf16.mxu0 %v5479
    %5988 = vmatpush1.bf16.msra.mxu0 %v5478
    %5989 = vmatprep.subr.bf16.mxu0 %v5483
    %5990 = vmatpush1.bf16.msra.mxu0 %v5482
    %5991 = vmatprep.subr.bf16.mxu0 %v5487
    %5992 = vmatpush1.bf16.msra.mxu0 %v5486
    %5993 = vmatprep.subr.bf16.mxu0 %v5491
    %5994 = vmatpush1.bf16.msra.mxu0 %v5490
    %5995 = vmatprep.subr.bf16.mxu0 %v5495
    %5996 = vmatpush1.bf16.msra.mxu0 %v5494
    %5997 = vmatprep.subr.bf16.mxu0 %v5499
    %5998 = vmatpush1.bf16.msra.mxu0 %v5498
    %5999 = vmatprep.mubr.bf16.mxu0 %v4810
    %6000 = vmatmul.mubr.bf16.gmra.mrb[0].mxu0 %v4809
    %v6001 = vpop.f32.mrb[0].mxu0
    %v6002 = vadd.f32 %v5889, %v6001
    %v6003 = vpop.f32.mrb[0].mxu0
    %v6004 = vadd.f32 %v5891, %v6003
    %v6005 = vpop.f32.mrb[0].mxu0
    %v6006 = vadd.f32 %v5893, %v6005
    %v6007 = vpop.f32.mrb[0].mxu0
    %v6008 = vadd.f32 %v5895, %v6007
    %6009 = vmatprep.mubr.bf16.mxu0 %v4814
    %6010 = vmatmul.mubr.bf16.gmra.mrb[0].mxu0 %v4813
    %v6011 = vpop.f32.mrb[0].mxu0
    %v6012 = vadd.f32 %v5899, %v6011
    %v6013 = vpop.f32.mrb[0].mxu0
    %v6014 = vadd.f32 %v5901, %v6013
    %v6015 = vpop.f32.mrb[0].mxu0
    %v6016 = vadd.f32 %v5903, %v6015
    %v6017 = vpop.f32.mrb[0].mxu0
    %v6018 = vadd.f32 %v5905, %v6017
    %6019 = vmatprep.mubr.bf16.mxu0 %v4818
    %6020 = vmatmul.mubr.bf16.gmra.mrb[0].mxu0 %v4817
    %v6021 = vpop.f32.mrb[0].mxu0
    %v6022 = vadd.f32 %v5909, %v6021
    %v6023 = vpop.f32.mrb[0].mxu0
    %v6024 = vadd.f32 %v5911, %v6023
    %v6025 = vpop.f32.mrb[0].mxu0
    %v6026 = vadd.f32 %v5913, %v6025
    %v6027 = vpop.f32.mrb[0].mxu0
    %v6028 = vadd.f32 %v5915, %v6027
    %6029 = vmatprep.mubr.bf16.mxu0 %v4822
    %6030 = vmatmul.mubr.bf16.gmra.mrb[0].mxu0 %v4821
    %v6031 = vpop.f32.mrb[0].mxu0
    %v6032 = vadd.f32 %v5919, %v6031
    %v6033 = vpop.f32.mrb[0].mxu0
    %v6034 = vadd.f32 %v5921, %v6033
    %v6035 = vpop.f32.mrb[0].mxu0
    %v6036 = vadd.f32 %v5923, %v6035
    %v6037 = vpop.f32.mrb[0].mxu0
    %v6038 = vadd.f32 %v5925, %v6037
    %6039 = vmatprep.mubr.bf16.mxu0 %v4826
    %6040 = vmatmul.mubr.bf16.gmra.mrb[0].mxu0 %v4825
    %v6041 = vpop.f32.mrb[0].mxu0
    %v6042 = vadd.f32 %v5929, %v6041
    %v6043 = vpop.f32.mrb[0].mxu0
    %v6044 = vadd.f32 %v5931, %v6043
    %v6045 = vpop.f32.mrb[0].mxu0
    %v6046 = vadd.f32 %v5933, %v6045
    %v6047 = vpop.f32.mrb[0].mxu0
    %v6048 = vadd.f32 %v5935, %v6047
    %6049 = vmatprep.mubr.bf16.mxu0 %v4830
    %6050 = vmatmul.mubr.bf16.gmra.mrb[0].mxu0 %v4829
    %v6051 = vpop.f32.mrb[0].mxu0
    %v6052 = vadd.f32 %v5939, %v6051
    %v6053 = vpop.f32.mrb[0].mxu0
    %v6054 = vadd.f32 %v5941, %v6053
    %v6055 = vpop.f32.mrb[0].mxu0
    %v6056 = vadd.f32 %v5943, %v6055
    %v6057 = vpop.f32.mrb[0].mxu0
    %v6058 = vadd.f32 %v5945, %v6057
    %6059 = vmatprep.mubr.bf16.mxu0 %v4834
    %6060 = vmatmul.mubr.bf16.gmra.mrb[0].mxu0 %v4833
    %v6061 = vpop.f32.mrb[0].mxu0
    %v6062 = vadd.f32 %v5949, %v6061
    %v6063 = vpop.f32.mrb[0].mxu0
    %v6064 = vadd.f32 %v5951, %v6063
    %v6065 = vpop.f32.mrb[0].mxu0
    %v6066 = vadd.f32 %v5953, %v6065
    %v6067 = vpop.f32.mrb[0].mxu0
    %v6068 = vadd.f32 %v5955, %v6067
    %6069 = vmatprep.mubr.bf16.mxu0 %v4838
    %6070 = vmatmul.mubr.bf16.gmra.mrb[0].mxu0 %v4837
    %v6071 = vpop.f32.mrb[0].mxu0
    %v6072 = vadd.f32 %v5959, %v6071
    %v6073 = vpop.f32.mrb[0].mxu0
    %v6074 = vadd.f32 %v5961, %v6073
    %v6075 = vpop.f32.mrb[0].mxu0
    %v6076 = vadd.f32 %v5963, %v6075
    %v6077 = vpop.f32.mrb[0].mxu0
    %v6078 = vadd.f32 %v5965, %v6077
    %6079 = vdwg.mxu0
    %v6080 = vmax.f32 %v5776, 0.0
    %v6081 = vmax.f32 %v5778, 0.0
    %v6082 = vmax.f32 %v6002, 0.0
    %v6083 = vmax.f32 %v6004, 0.0
    %v6084 = vmax.f32 %v5780, 0.0
    %v6085 = vmax.f32 %v5782, 0.0
    %v6086 = vmax.f32 %v6006, 0.0
    %v6087 = vmax.f32 %v6008, 0.0
    %v6088 = vmax.f32 %v5786, 0.0
    %v6089 = vmax.f32 %v5788, 0.0
    %v6090 = vmax.f32 %v6012, 0.0
    %v6091 = vmax.f32 %v6014, 0.0
    %v6092 = vmax.f32 %v5790, 0.0
    %v6093 = vmax.f32 %v5792, 0.0
    %v6094 = vmax.f32 %v6016, 0.0
    %v6095 = vmax.f32 %v6018, 0.0
    %v6096 = vmax.f32 %v5796, 0.0
    %v6097 = vmax.f32 %v5798, 0.0
    %v6098 = vmax.f32 %v6022, 0.0
    %v6099 = vmax.f32 %v6024, 0.0
    %v6100 = vmax.f32 %v5800, 0.0
    %v6101 = vmax.f32 %v5802, 0.0
    %v6102 = vmax.f32 %v6026, 0.0
    %v6103 = vmax.f32 %v6028, 0.0
    %v6104 = vmax.f32 %v5806, 0.0
    %v6105 = vmax.f32 %v5808, 0.0
    %v6106 = vmax.f32 %v6032, 0.0
    %v6107 = vmax.f32 %v6034, 0.0
    %v6108 = vmax.f32 %v5810, 0.0
    %v6109 = vmax.f32 %v5812, 0.0
    %v6110 = vmax.f32 %v6036, 0.0
    %v6111 = vmax.f32 %v6038, 0.0
    %v6112 = vmax.f32 %v5816, 0.0
    %v6113 = vmax.f32 %v5818, 0.0
    %v6114 = vmax.f32 %v6042, 0.0
    %v6115 = vmax.f32 %v6044, 0.0
    %v6116 = vmax.f32 %v5820, 0.0
    %v6117 = vmax.f32 %v5822, 0.0
    %v6118 = vmax.f32 %v6046, 0.0
    %v6119 = vmax.f32 %v6048, 0.0
    %v6120 = vmax.f32 %v5826, 0.0
    %v6121 = vmax.f32 %v5828, 0.0
    %v6122 = vmax.f32 %v6052, 0.0
    %v6123 = vmax.f32 %v6054, 0.0
    %v6124 = vmax.f32 %v5830, 0.0
    %v6125 = vmax.f32 %v5832, 0.0
    %v6126 = vmax.f32 %v6056, 0.0
    %v6127 = vmax.f32 %v6058, 0.0
    %v6128 = vmax.f32 %v5836, 0.0
    %v6129 = vmax.f32 %v5838, 0.0
    %v6130 = vmax.f32 %v6062, 0.0
    %v6131 = vmax.f32 %v6064, 0.0
    %v6132 = vmax.f32 %v5840, 0.0
    %v6133 = vmax.f32 %v5842, 0.0
    %v6134 = vmax.f32 %v6066, 0.0
    %v6135 = vmax.f32 %v6068, 0.0
    %v6136 = vmax.f32 %v5846, 0.0
    %v6137 = vmax.f32 %v5848, 0.0
    %v6138 = vmax.f32 %v6072, 0.0
    %v6139 = vmax.f32 %v6074, 0.0
    %v6140 = vmax.f32 %v5850, 0.0
    %v6141 = vmax.f32 %v5852, 0.0
    %v6142 = vmax.f32 %v6076, 0.0
    %v6143 = vmax.f32 %v6078, 0.0
    %v6144 = vpack.c.bf16 %v6084, %v6080
    %v6145 = vpack.c.bf16 %v6085, %v6081
    %v6146 = vpack.c.bf16 %v6086, %v6082
    %v6147 = vpack.c.bf16 %v6087, %v6083
    %v6148 = vpack.c.bf16 %v6092, %v6088
    %v6149 = vpack.c.bf16 %v6093, %v6089
    %v6150 = vpack.c.bf16 %v6094, %v6090
    %v6151 = vpack.c.bf16 %v6095, %v6091
    %v6152 = vpack.c.bf16 %v6100, %v6096
    %v6153 = vpack.c.bf16 %v6101, %v6097
    %v6154 = vpack.c.bf16 %v6102, %v6098
    %v6155 = vpack.c.bf16 %v6103, %v6099
    %v6156 = vpack.c.bf16 %v6108, %v6104
    %v6157 = vpack.c.bf16 %v6109, %v6105
    %v6158 = vpack.c.bf16 %v6110, %v6106
    %v6159 = vpack.c.bf16 %v6111, %v6107
    %v6160 = vpack.c.bf16 %v6116, %v6112
    %v6161 = vpack.c.bf16 %v6117, %v6113
    %v6162 = vpack.c.bf16 %v6118, %v6114
    %v6163 = vpack.c.bf16 %v6119, %v6115
    %v6164 = vpack.c.bf16 %v6124, %v6120
    %v6165 = vpack.c.bf16 %v6125, %v6121
    %v6166 = vpack.c.bf16 %v6126, %v6122
    %v6167 = vpack.c.bf16 %v6127, %v6123
    %v6168 = vpack.c.bf16 %v6132, %v6128
    %v6169 = vpack.c.bf16 %v6133, %v6129
    %v6170 = vpack.c.bf16 %v6134, %v6130
    %v6171 = vpack.c.bf16 %v6135, %v6131
    %v6172 = vpack.c.bf16 %v6140, %v6136
    %v6173 = vpack.c.bf16 %v6141, %v6137
    %v6174 = vpack.c.bf16 %v6142, %v6138
    %v6175 = vpack.c.bf16 %v6143, %v6139
    %v6176 = vld [vmem:[#allocation13] sm:$0xff]
    %v6177 = vld [vmem:[#allocation13 + $0x8] sm:$0xff]
    %v6178 = vld [vmem:[#allocation13 + $0x10] sm:$0xff]
    %v6179 = vld [vmem:[#allocation13 + $0x18] sm:$0xff]
    %v6180 = vld [vmem:[#allocation13 + $0x20] sm:$0xff]
    %v6181 = vld [vmem:[#allocation13 + $0x28] sm:$0xff]
    %v6182 = vld [vmem:[#allocation13 + $0x30] sm:$0xff]
    %v6183 = vld [vmem:[#allocation13 + $0x38] sm:$0xff]
    %v6184 = vld [vmem:[#allocation13 + $0x40] sm:$0xff]
    %v6185 = vld [vmem:[#allocation13 + $0x48] sm:$0xff]
    %v6186 = vld [vmem:[#allocation13 + $0x50] sm:$0xff]
    %v6187 = vld [vmem:[#allocation13 + $0x58] sm:$0xff]
    %v6188 = vld [vmem:[#allocation13 + $0x60] sm:$0xff]
    %v6189 = vld [vmem:[#allocation13 + $0x68] sm:$0xff]
    %v6190 = vld [vmem:[#allocation13 + $0x70] sm:$0xff]
    %v6191 = vld [vmem:[#allocation13 + $0x78] sm:$0xff]
    %v6192 = vld [vmem:[#allocation13 + $0x80] sm:$0xff]
    %v6193 = vld [vmem:[#allocation13 + $0x88] sm:$0xff]
    %v6194 = vld [vmem:[#allocation13 + $0x90] sm:$0xff]
    %v6195 = vld [vmem:[#allocation13 + $0x98] sm:$0xff]
    %v6196 = vld [vmem:[#allocation13 + $0xa0] sm:$0xff]
    %v6197 = vld [vmem:[#allocation13 + $0xa8] sm:$0xff]
    %v6198 = vld [vmem:[#allocation13 + $0xb0] sm:$0xff]
    %v6199 = vld [vmem:[#allocation13 + $0xb8] sm:$0xff]
    %v6200 = vld [vmem:[#allocation13 + $0xc0] sm:$0xff]
    %v6201 = vld [vmem:[#allocation13 + $0xc8] sm:$0xff]
    %v6202 = vld [vmem:[#allocation13 + $0xd0] sm:$0xff]
    %v6203 = vld [vmem:[#allocation13 + $0xd8] sm:$0xff]
    %v6204 = vld [vmem:[#allocation13 + $0xe0] sm:$0xff]
    %v6205 = vld [vmem:[#allocation13 + $0xe8] sm:$0xff]
    %v6206 = vld [vmem:[#allocation13 + $0xf0] sm:$0xff]
    %v6207 = vld [vmem:[#allocation13 + $0xf8] sm:$0xff]
    %v6208 = vld [vmem:[#allocation13 + $0x100] sm:$0xff]
    %v6209 = vld [vmem:[#allocation13 + $0x108] sm:$0xff]
    %v6210 = vld [vmem:[#allocation13 + $0x110] sm:$0xff]
    %v6211 = vld [vmem:[#allocation13 + $0x118] sm:$0xff]
    %v6212 = vld [vmem:[#allocation13 + $0x120] sm:$0xff]
    %v6213 = vld [vmem:[#allocation13 + $0x128] sm:$0xff]
    %v6214 = vld [vmem:[#allocation13 + $0x130] sm:$0xff]
    %v6215 = vld [vmem:[#allocation13 + $0x138] sm:$0xff]
    %v6216 = vld [vmem:[#allocation13 + $0x140] sm:$0xff]
    %v6217 = vld [vmem:[#allocation13 + $0x148] sm:$0xff]
    %v6218 = vld [vmem:[#allocation13 + $0x150] sm:$0xff]
    %v6219 = vld [vmem:[#allocation13 + $0x158] sm:$0xff]
    %v6220 = vld [vmem:[#allocation13 + $0x160] sm:$0xff]
    %v6221 = vld [vmem:[#allocation13 + $0x168] sm:$0xff]
    %v6222 = vld [vmem:[#allocation13 + $0x170] sm:$0xff]
    %v6223 = vld [vmem:[#allocation13 + $0x178] sm:$0xff]
    %v6224 = vld [vmem:[#allocation13 + $0x180] sm:$0xff]
    %v6225 = vld [vmem:[#allocation13 + $0x188] sm:$0xff]
    %v6226 = vld [vmem:[#allocation13 + $0x190] sm:$0xff]
    %v6227 = vld [vmem:[#allocation13 + $0x198] sm:$0xff]
    %v6228 = vld [vmem:[#allocation13 + $0x1a0] sm:$0xff]
    %v6229 = vld [vmem:[#allocation13 + $0x1a8] sm:$0xff]
    %v6230 = vld [vmem:[#allocation13 + $0x1b0] sm:$0xff]
    %v6231 = vld [vmem:[#allocation13 + $0x1b8] sm:$0xff]
    %v6232 = vld [vmem:[#allocation13 + $0x1c0] sm:$0xff]
    %v6233 = vld [vmem:[#allocation13 + $0x1c8] sm:$0xff]
    %v6234 = vld [vmem:[#allocation13 + $0x1d0] sm:$0xff]
    %v6235 = vld [vmem:[#allocation13 + $0x1d8] sm:$0xff]
    %v6236 = vld [vmem:[#allocation13 + $0x1e0] sm:$0xff]
    %v6237 = vld [vmem:[#allocation13 + $0x1e8] sm:$0xff]
    %v6238 = vld [vmem:[#allocation13 + $0x1f0] sm:$0xff]
    %v6239 = vld [vmem:[#allocation13 + $0x1f8] sm:$0xff]
    %v6240 = vld [vmem:[#allocation13 + $0x200] sm:$0xff]
    %v6241 = vld [vmem:[#allocation13 + $0x208] sm:$0xff]
    %v6242 = vld [vmem:[#allocation13 + $0x210] sm:$0xff]
    %v6243 = vld [vmem:[#allocation13 + $0x218] sm:$0xff]
    %v6244 = vld [vmem:[#allocation13 + $0x220] sm:$0xff]
    %v6245 = vld [vmem:[#allocation13 + $0x228] sm:$0xff]
    %v6246 = vld [vmem:[#allocation13 + $0x230] sm:$0xff]
    %v6247 = vld [vmem:[#allocation13 + $0x238] sm:$0xff]
    %v6248 = vld [vmem:[#allocation13 + $0x240] sm:$0xff]
    %v6249 = vld [vmem:[#allocation13 + $0x248] sm:$0xff]
    %v6250 = vld [vmem:[#allocation13 + $0x250] sm:$0xff]
    %v6251 = vld [vmem:[#allocation13 + $0x258] sm:$0xff]
    %v6252 = vld [vmem:[#allocation13 + $0x260] sm:$0xff]
    %v6253 = vld [vmem:[#allocation13 + $0x268] sm:$0xff]
    %v6254 = vld [vmem:[#allocation13 + $0x270] sm:$0xff]
    %v6255 = vld [vmem:[#allocation13 + $0x278] sm:$0xff]
    %v6256 = vld [vmem:[#allocation13 + $0x280] sm:$0xff]
    %v6257 = vld [vmem:[#allocation13 + $0x288] sm:$0xff]
    %v6258 = vld [vmem:[#allocation13 + $0x290] sm:$0xff]
    %v6259 = vld [vmem:[#allocation13 + $0x298] sm:$0xff]
    %v6260 = vld [vmem:[#allocation13 + $0x2a0] sm:$0xff]
    %v6261 = vld [vmem:[#allocation13 + $0x2a8] sm:$0xff]
    %v6262 = vld [vmem:[#allocation13 + $0x2b0] sm:$0xff]
    %v6263 = vld [vmem:[#allocation13 + $0x2b8] sm:$0xff]
    %v6264 = vld [vmem:[#allocation13 + $0x2c0] sm:$0xff]
    %v6265 = vld [vmem:[#allocation13 + $0x2c8] sm:$0xff]
    %v6266 = vld [vmem:[#allocation13 + $0x2d0] sm:$0xff]
    %v6267 = vld [vmem:[#allocation13 + $0x2d8] sm:$0xff]
    %v6268 = vld [vmem:[#allocation13 + $0x2e0] sm:$0xff]
    %v6269 = vld [vmem:[#allocation13 + $0x2e8] sm:$0xff]
    %v6270 = vld [vmem:[#allocation13 + $0x2f0] sm:$0xff]
    %v6271 = vld [vmem:[#allocation13 + $0x2f8] sm:$0xff]
    %v6272 = vld [vmem:[#allocation13 + $0x300] sm:$0xff]
    %v6273 = vld [vmem:[#allocation13 + $0x308] sm:$0xff]
    %v6274 = vld [vmem:[#allocation13 + $0x310] sm:$0xff]
    %v6275 = vld [vmem:[#allocation13 + $0x318] sm:$0xff]
    %v6276 = vld [vmem:[#allocation13 + $0x320] sm:$0xff]
    %v6277 = vld [vmem:[#allocation13 + $0x328] sm:$0xff]
    %v6278 = vld [vmem:[#allocation13 + $0x330] sm:$0xff]
    %v6279 = vld [vmem:[#allocation13 + $0x338] sm:$0xff]
    %v6280 = vld [vmem:[#allocation13 + $0x340] sm:$0xff]
    %v6281 = vld [vmem:[#allocation13 + $0x348] sm:$0xff]
    %v6282 = vld [vmem:[#allocation13 + $0x350] sm:$0xff]
    %v6283 = vld [vmem:[#allocation13 + $0x358] sm:$0xff]
    %v6284 = vld [vmem:[#allocation13 + $0x360] sm:$0xff]
    %v6285 = vld [vmem:[#allocation13 + $0x368] sm:$0xff]
    %v6286 = vld [vmem:[#allocation13 + $0x370] sm:$0xff]
    %v6287 = vld [vmem:[#allocation13 + $0x378] sm:$0xff]
    %v6288 = vld [vmem:[#allocation13 + $0x380] sm:$0xff]
    %v6289 = vld [vmem:[#allocation13 + $0x388] sm:$0xff]
    %v6290 = vld [vmem:[#allocation13 + $0x390] sm:$0xff]
    %v6291 = vld [vmem:[#allocation13 + $0x398] sm:$0xff]
    %v6292 = vld [vmem:[#allocation13 + $0x3a0] sm:$0xff]
    %v6293 = vld [vmem:[#allocation13 + $0x3a8] sm:$0xff]
    %v6294 = vld [vmem:[#allocation13 + $0x3b0] sm:$0xff]
    %v6295 = vld [vmem:[#allocation13 + $0x3b8] sm:$0xff]
    %v6296 = vld [vmem:[#allocation13 + $0x3c0] sm:$0xff]
    %v6297 = vld [vmem:[#allocation13 + $0x3c8] sm:$0xff]
    %v6298 = vld [vmem:[#allocation13 + $0x3d0] sm:$0xff]
    %v6299 = vld [vmem:[#allocation13 + $0x3d8] sm:$0xff]
    %v6300 = vld [vmem:[#allocation13 + $0x3e0] sm:$0xff]
    %v6301 = vld [vmem:[#allocation13 + $0x3e8] sm:$0xff]
    %v6302 = vld [vmem:[#allocation13 + $0x3f0] sm:$0xff]
    %v6303 = vld [vmem:[#allocation13 + $0x3f8] sm:$0xff]
    %v6305 = vlaneseq
    %v6306 = vshrl.u32 %v6305, 7
    %v6307 = vsub.s32 0, %v6306
    %v6308 = vrot.slane %v148, %v6307
    %v6309 = vlaneseq
    %v6310 = vshrl.u32 %v6309, 7
    %v6311 = vsub.s32 1, %v6310
    %v6312 = vrot.slane %v148, %v6311
    %v6313 = vlaneseq
    %v6314 = vshrl.u32 %v6313, 7
    %v6315 = vsub.s32 2, %v6314
    %v6316 = vrot.slane %v148, %v6315
    %v6317 = vlaneseq
    %v6318 = vshrl.u32 %v6317, 7
    %v6319 = vsub.s32 3, %v6318
    %v6320 = vrot.slane %v148, %v6319
    %v6453 = vunpack.c.l.b16 %v6176
    %v6454 = vunpack.c.h.b16 %v6176
    %v6455 = vunpack.c.l.b16 %v6177
    %v6456 = vunpack.c.h.b16 %v6177
    %v6457 = vunpack.c.l.b16 %v6178
    %v6458 = vunpack.c.h.b16 %v6178
    %v6459 = vunpack.c.l.b16 %v6179
    %v6460 = vunpack.c.h.b16 %v6179
    %v6461 = vunpack.c.l.b16 %v6180
    %v6462 = vunpack.c.h.b16 %v6180
    %v6463 = vunpack.c.l.b16 %v6181
    %v6464 = vunpack.c.h.b16 %v6181
    %v6465 = vunpack.c.l.b16 %v6182
    %v6466 = vunpack.c.h.b16 %v6182
    %v6467 = vunpack.c.l.b16 %v6183
    %v6468 = vunpack.c.h.b16 %v6183
    %v6469 = vunpack.c.l.b16 %v6184
    %v6470 = vunpack.c.h.b16 %v6184
    %v6471 = vunpack.c.l.b16 %v6185
    %v6472 = vunpack.c.h.b16 %v6185
    %v6473 = vunpack.c.l.b16 %v6186
    %v6474 = vunpack.c.h.b16 %v6186
    %v6475 = vunpack.c.l.b16 %v6187
    %v6476 = vunpack.c.h.b16 %v6187
    %v6477 = vunpack.c.l.b16 %v6188
    %v6478 = vunpack.c.h.b16 %v6188
    %v6479 = vunpack.c.l.b16 %v6189
    %v6480 = vunpack.c.h.b16 %v6189
    %v6481 = vunpack.c.l.b16 %v6190
    %v6482 = vunpack.c.h.b16 %v6190
    %v6483 = vunpack.c.l.b16 %v6191
    %v6484 = vunpack.c.h.b16 %v6191
    %v6485 = vunpack.c.l.b16 %v6192
    %v6486 = vunpack.c.h.b16 %v6192
    %v6487 = vunpack.c.l.b16 %v6193
    %v6488 = vunpack.c.h.b16 %v6193
    %v6489 = vunpack.c.l.b16 %v6194
    %v6490 = vunpack.c.h.b16 %v6194
    %v6491 = vunpack.c.l.b16 %v6195
    %v6492 = vunpack.c.h.b16 %v6195
    %v6493 = vunpack.c.l.b16 %v6196
    %v6494 = vunpack.c.h.b16 %v6196
    %v6495 = vunpack.c.l.b16 %v6197
    %v6496 = vunpack.c.h.b16 %v6197
    %v6497 = vunpack.c.l.b16 %v6198
    %v6498 = vunpack.c.h.b16 %v6198
    %v6499 = vunpack.c.l.b16 %v6199
    %v6500 = vunpack.c.h.b16 %v6199
    %v6501 = vunpack.c.l.b16 %v6200
    %v6502 = vunpack.c.h.b16 %v6200
    %v6503 = vunpack.c.l.b16 %v6201
    %v6504 = vunpack.c.h.b16 %v6201
    %v6505 = vunpack.c.l.b16 %v6202
    %v6506 = vunpack.c.h.b16 %v6202
    %v6507 = vunpack.c.l.b16 %v6203
    %v6508 = vunpack.c.h.b16 %v6203
    %v6509 = vunpack.c.l.b16 %v6204
    %v6510 = vunpack.c.h.b16 %v6204
    %v6511 = vunpack.c.l.b16 %v6205
    %v6512 = vunpack.c.h.b16 %v6205
    %v6513 = vunpack.c.l.b16 %v6206
    %v6514 = vunpack.c.h.b16 %v6206
    %v6515 = vunpack.c.l.b16 %v6207
    %v6516 = vunpack.c.h.b16 %v6207
    %v6517 = vunpack.c.l.b16 %v6208
    %v6518 = vunpack.c.h.b16 %v6208
    %v6519 = vunpack.c.l.b16 %v6209
    %v6520 = vunpack.c.h.b16 %v6209
    %v6521 = vunpack.c.l.b16 %v6210
    %v6522 = vunpack.c.h.b16 %v6210
    %v6523 = vunpack.c.l.b16 %v6211
    %v6524 = vunpack.c.h.b16 %v6211
    %v6525 = vunpack.c.l.b16 %v6212
    %v6526 = vunpack.c.h.b16 %v6212
    %v6527 = vunpack.c.l.b16 %v6213
    %v6528 = vunpack.c.h.b16 %v6213
    %v6529 = vunpack.c.l.b16 %v6214
    %v6530 = vunpack.c.h.b16 %v6214
    %v6531 = vunpack.c.l.b16 %v6215
    %v6532 = vunpack.c.h.b16 %v6215
    %v6533 = vunpack.c.l.b16 %v6216
    %v6534 = vunpack.c.h.b16 %v6216
    %v6535 = vunpack.c.l.b16 %v6217
    %v6536 = vunpack.c.h.b16 %v6217
    %v6537 = vunpack.c.l.b16 %v6218
    %v6538 = vunpack.c.h.b16 %v6218
    %v6539 = vunpack.c.l.b16 %v6219
    %v6540 = vunpack.c.h.b16 %v6219
    %v6541 = vunpack.c.l.b16 %v6220
    %v6542 = vunpack.c.h.b16 %v6220
    %v6543 = vunpack.c.l.b16 %v6221
    %v6544 = vunpack.c.h.b16 %v6221
    %v6545 = vunpack.c.l.b16 %v6222
    %v6546 = vunpack.c.h.b16 %v6222
    %v6547 = vunpack.c.l.b16 %v6223
    %v6548 = vunpack.c.h.b16 %v6223
    %v6549 = vunpack.c.l.b16 %v6224
    %v6550 = vunpack.c.h.b16 %v6224
    %v6551 = vunpack.c.l.b16 %v6225
    %v6552 = vunpack.c.h.b16 %v6225
    %v6553 = vunpack.c.l.b16 %v6226
    %v6554 = vunpack.c.h.b16 %v6226
    %v6555 = vunpack.c.l.b16 %v6227
    %v6556 = vunpack.c.h.b16 %v6227
    %v6557 = vunpack.c.l.b16 %v6228
    %v6558 = vunpack.c.h.b16 %v6228
    %v6559 = vunpack.c.l.b16 %v6229
    %v6560 = vunpack.c.h.b16 %v6229
    %v6561 = vunpack.c.l.b16 %v6230
    %v6562 = vunpack.c.h.b16 %v6230
    %v6563 = vunpack.c.l.b16 %v6231
    %v6564 = vunpack.c.h.b16 %v6231
    %v6565 = vunpack.c.l.b16 %v6232
    %v6566 = vunpack.c.h.b16 %v6232
    %v6567 = vunpack.c.l.b16 %v6233
    %v6568 = vunpack.c.h.b16 %v6233
    %v6569 = vunpack.c.l.b16 %v6234
    %v6570 = vunpack.c.h.b16 %v6234
    %v6571 = vunpack.c.l.b16 %v6235
    %v6572 = vunpack.c.h.b16 %v6235
    %v6573 = vunpack.c.l.b16 %v6236
    %v6574 = vunpack.c.h.b16 %v6236
    %v6575 = vunpack.c.l.b16 %v6237
    %v6576 = vunpack.c.h.b16 %v6237
    %v6577 = vunpack.c.l.b16 %v6238
    %v6578 = vunpack.c.h.b16 %v6238
    %v6579 = vunpack.c.l.b16 %v6239
    %v6580 = vunpack.c.h.b16 %v6239
    %v6581 = vunpack.c.l.b16 %v6240
    %v6582 = vunpack.c.h.b16 %v6240
    %v6583 = vunpack.c.l.b16 %v6241
    %v6584 = vunpack.c.h.b16 %v6241
    %v6585 = vunpack.c.l.b16 %v6242
    %v6586 = vunpack.c.h.b16 %v6242
    %v6587 = vunpack.c.l.b16 %v6243
    %v6588 = vunpack.c.h.b16 %v6243
    %v6589 = vunpack.c.l.b16 %v6244
    %v6590 = vunpack.c.h.b16 %v6244
    %v6591 = vunpack.c.l.b16 %v6245
    %v6592 = vunpack.c.h.b16 %v6245
    %v6593 = vunpack.c.l.b16 %v6246
    %v6594 = vunpack.c.h.b16 %v6246
    %v6595 = vunpack.c.l.b16 %v6247
    %v6596 = vunpack.c.h.b16 %v6247
    %v6597 = vunpack.c.l.b16 %v6248
    %v6598 = vunpack.c.h.b16 %v6248
    %v6599 = vunpack.c.l.b16 %v6249
    %v6600 = vunpack.c.h.b16 %v6249
    %v6601 = vunpack.c.l.b16 %v6250
    %v6602 = vunpack.c.h.b16 %v6250
    %v6603 = vunpack.c.l.b16 %v6251
    %v6604 = vunpack.c.h.b16 %v6251
    %v6605 = vunpack.c.l.b16 %v6252
    %v6606 = vunpack.c.h.b16 %v6252
    %v6607 = vunpack.c.l.b16 %v6253
    %v6608 = vunpack.c.h.b16 %v6253
    %v6609 = vunpack.c.l.b16 %v6254
    %v6610 = vunpack.c.h.b16 %v6254
    %v6611 = vunpack.c.l.b16 %v6255
    %v6612 = vunpack.c.h.b16 %v6255
    %v6613 = vunpack.c.l.b16 %v6256
    %v6614 = vunpack.c.h.b16 %v6256
    %v6615 = vunpack.c.l.b16 %v6257
    %v6616 = vunpack.c.h.b16 %v6257
    %v6617 = vunpack.c.l.b16 %v6258
    %v6618 = vunpack.c.h.b16 %v6258
    %v6619 = vunpack.c.l.b16 %v6259
    %v6620 = vunpack.c.h.b16 %v6259
    %v6621 = vunpack.c.l.b16 %v6260
    %v6622 = vunpack.c.h.b16 %v6260
    %v6623 = vunpack.c.l.b16 %v6261
    %v6624 = vunpack.c.h.b16 %v6261
    %v6625 = vunpack.c.l.b16 %v6262
    %v6626 = vunpack.c.h.b16 %v6262
    %v6627 = vunpack.c.l.b16 %v6263
    %v6628 = vunpack.c.h.b16 %v6263
    %v6629 = vunpack.c.l.b16 %v6264
    %v6630 = vunpack.c.h.b16 %v6264
    %v6631 = vunpack.c.l.b16 %v6265
    %v6632 = vunpack.c.h.b16 %v6265
    %v6633 = vunpack.c.l.b16 %v6266
    %v6634 = vunpack.c.h.b16 %v6266
    %v6635 = vunpack.c.l.b16 %v6267
    %v6636 = vunpack.c.h.b16 %v6267
    %v6637 = vunpack.c.l.b16 %v6268
    %v6638 = vunpack.c.h.b16 %v6268
    %v6639 = vunpack.c.l.b16 %v6269
    %v6640 = vunpack.c.h.b16 %v6269
    %v6641 = vunpack.c.l.b16 %v6270
    %v6642 = vunpack.c.h.b16 %v6270
    %v6643 = vunpack.c.l.b16 %v6271
    %v6644 = vunpack.c.h.b16 %v6271
    %v6645 = vunpack.c.l.b16 %v6272
    %v6646 = vunpack.c.h.b16 %v6272
    %v6647 = vunpack.c.l.b16 %v6273
    %v6648 = vunpack.c.h.b16 %v6273
    %v6649 = vunpack.c.l.b16 %v6274
    %v6650 = vunpack.c.h.b16 %v6274
    %v6651 = vunpack.c.l.b16 %v6275
    %v6652 = vunpack.c.h.b16 %v6275
    %v6653 = vunpack.c.l.b16 %v6276
    %v6654 = vunpack.c.h.b16 %v6276
    %v6655 = vunpack.c.l.b16 %v6277
    %v6656 = vunpack.c.h.b16 %v6277
    %v6657 = vunpack.c.l.b16 %v6278
    %v6658 = vunpack.c.h.b16 %v6278
    %v6659 = vunpack.c.l.b16 %v6279
    %v6660 = vunpack.c.h.b16 %v6279
    %v6661 = vunpack.c.l.b16 %v6280
    %v6662 = vunpack.c.h.b16 %v6280
    %v6663 = vunpack.c.l.b16 %v6281
    %v6664 = vunpack.c.h.b16 %v6281
    %v6665 = vunpack.c.l.b16 %v6282
    %v6666 = vunpack.c.h.b16 %v6282
    %v6667 = vunpack.c.l.b16 %v6283
    %v6668 = vunpack.c.h.b16 %v6283
    %v6669 = vunpack.c.l.b16 %v6284
    %v6670 = vunpack.c.h.b16 %v6284
    %v6671 = vunpack.c.l.b16 %v6285
    %v6672 = vunpack.c.h.b16 %v6285
    %v6673 = vunpack.c.l.b16 %v6286
    %v6674 = vunpack.c.h.b16 %v6286
    %v6675 = vunpack.c.l.b16 %v6287
    %v6676 = vunpack.c.h.b16 %v6287
    %v6677 = vunpack.c.l.b16 %v6288
    %v6678 = vunpack.c.h.b16 %v6288
    %v6679 = vunpack.c.l.b16 %v6289
    %v6680 = vunpack.c.h.b16 %v6289
    %v6681 = vunpack.c.l.b16 %v6290
    %v6682 = vunpack.c.h.b16 %v6290
    %v6683 = vunpack.c.l.b16 %v6291
    %v6684 = vunpack.c.h.b16 %v6291
    %v6685 = vunpack.c.l.b16 %v6292
    %v6686 = vunpack.c.h.b16 %v6292
    %v6687 = vunpack.c.l.b16 %v6293
    %v6688 = vunpack.c.h.b16 %v6293
    %v6689 = vunpack.c.l.b16 %v6294
    %v6690 = vunpack.c.h.b16 %v6294
    %v6691 = vunpack.c.l.b16 %v6295
    %v6692 = vunpack.c.h.b16 %v6295
    %v6693 = vunpack.c.l.b16 %v6296
    %v6694 = vunpack.c.h.b16 %v6296
    %v6695 = vunpack.c.l.b16 %v6297
    %v6696 = vunpack.c.h.b16 %v6297
    %v6697 = vunpack.c.l.b16 %v6298
    %v6698 = vunpack.c.h.b16 %v6298
    %v6699 = vunpack.c.l.b16 %v6299
    %v6700 = vunpack.c.h.b16 %v6299
    %v6701 = vunpack.c.l.b16 %v6300
    %v6702 = vunpack.c.h.b16 %v6300
    %v6703 = vunpack.c.l.b16 %v6301
    %v6704 = vunpack.c.h.b16 %v6301
    %v6705 = vunpack.c.l.b16 %v6302
    %v6706 = vunpack.c.h.b16 %v6302
    %v6707 = vunpack.c.l.b16 %v6303
    %v6708 = vunpack.c.h.b16 %v6303
    %v6709 = vpack.c.b16 %v6457, %v6453
    %v6710 = vpack.c.b16 %v6458, %v6454
    %v6711 = vpack.c.b16 %v6459, %v6455
    %v6712 = vpack.c.b16 %v6460, %v6456
    %v6713 = vpack.c.b16 %v6465, %v6461
    %v6714 = vpack.c.b16 %v6466, %v6462
    %v6715 = vpack.c.b16 %v6467, %v6463
    %v6716 = vpack.c.b16 %v6468, %v6464
    %v6717 = vpack.c.b16 %v6473, %v6469
    %v6718 = vpack.c.b16 %v6474, %v6470
    %v6719 = vpack.c.b16 %v6475, %v6471
    %v6720 = vpack.c.b16 %v6476, %v6472
    %v6721 = vpack.c.b16 %v6481, %v6477
    %v6722 = vpack.c.b16 %v6482, %v6478
    %v6723 = vpack.c.b16 %v6483, %v6479
    %v6724 = vpack.c.b16 %v6484, %v6480
    %v6725 = vpack.c.b16 %v6489, %v6485
    %v6726 = vpack.c.b16 %v6490, %v6486
    %v6727 = vpack.c.b16 %v6491, %v6487
    %v6728 = vpack.c.b16 %v6492, %v6488
    %v6729 = vpack.c.b16 %v6497, %v6493
    %v6730 = vpack.c.b16 %v6498, %v6494
    %v6731 = vpack.c.b16 %v6499, %v6495
    %v6732 = vpack.c.b16 %v6500, %v6496
    %v6733 = vpack.c.b16 %v6505, %v6501
    %v6734 = vpack.c.b16 %v6506, %v6502
    %v6735 = vpack.c.b16 %v6507, %v6503
    %v6736 = vpack.c.b16 %v6508, %v6504
    %v6737 = vpack.c.b16 %v6513, %v6509
    %v6738 = vpack.c.b16 %v6514, %v6510
    %v6739 = vpack.c.b16 %v6515, %v6511
    %v6740 = vpack.c.b16 %v6516, %v6512
    %v6741 = vpack.c.b16 %v6521, %v6517
    %v6742 = vpack.c.b16 %v6522, %v6518
    %v6743 = vpack.c.b16 %v6523, %v6519
    %v6744 = vpack.c.b16 %v6524, %v6520
    %v6745 = vpack.c.b16 %v6529, %v6525
    %v6746 = vpack.c.b16 %v6530, %v6526
    %v6747 = vpack.c.b16 %v6531, %v6527
    %v6748 = vpack.c.b16 %v6532, %v6528
    %v6749 = vpack.c.b16 %v6537, %v6533
    %v6750 = vpack.c.b16 %v6538, %v6534
    %v6751 = vpack.c.b16 %v6539, %v6535
    %v6752 = vpack.c.b16 %v6540, %v6536
    %v6753 = vpack.c.b16 %v6545, %v6541
    %v6754 = vpack.c.b16 %v6546, %v6542
    %v6755 = vpack.c.b16 %v6547, %v6543
    %v6756 = vpack.c.b16 %v6548, %v6544
    %v6757 = vpack.c.b16 %v6553, %v6549
    %v6758 = vpack.c.b16 %v6554, %v6550
    %v6759 = vpack.c.b16 %v6555, %v6551
    %v6760 = vpack.c.b16 %v6556, %v6552
    %v6761 = vpack.c.b16 %v6561, %v6557
    %v6762 = vpack.c.b16 %v6562, %v6558
    %v6763 = vpack.c.b16 %v6563, %v6559
    %v6764 = vpack.c.b16 %v6564, %v6560
    %v6765 = vpack.c.b16 %v6569, %v6565
    %v6766 = vpack.c.b16 %v6570, %v6566
    %v6767 = vpack.c.b16 %v6571, %v6567
    %v6768 = vpack.c.b16 %v6572, %v6568
    %v6769 = vpack.c.b16 %v6577, %v6573
    %v6770 = vpack.c.b16 %v6578, %v6574
    %v6771 = vpack.c.b16 %v6579, %v6575
    %v6772 = vpack.c.b16 %v6580, %v6576
    %v6773 = vpack.c.b16 %v6585, %v6581
    %v6774 = vpack.c.b16 %v6586, %v6582
    %v6775 = vpack.c.b16 %v6587, %v6583
    %v6776 = vpack.c.b16 %v6588, %v6584
    %v6777 = vpack.c.b16 %v6593, %v6589
    %v6778 = vpack.c.b16 %v6594, %v6590
    %v6779 = vpack.c.b16 %v6595, %v6591
    %v6780 = vpack.c.b16 %v6596, %v6592
    %v6781 = vpack.c.b16 %v6601, %v6597
    %v6782 = vpack.c.b16 %v6602, %v6598
    %v6783 = vpack.c.b16 %v6603, %v6599
    %v6784 = vpack.c.b16 %v6604, %v6600
    %v6785 = vpack.c.b16 %v6609, %v6605
    %v6786 = vpack.c.b16 %v6610, %v6606
    %v6787 = vpack.c.b16 %v6611, %v6607
    %v6788 = vpack.c.b16 %v6612, %v6608
    %v6789 = vpack.c.b16 %v6617, %v6613
    %v6790 = vpack.c.b16 %v6618, %v6614
    %v6791 = vpack.c.b16 %v6619, %v6615
    %v6792 = vpack.c.b16 %v6620, %v6616
    %v6793 = vpack.c.b16 %v6625, %v6621
    %v6794 = vpack.c.b16 %v6626, %v6622
    %v6795 = vpack.c.b16 %v6627, %v6623
    %v6796 = vpack.c.b16 %v6628, %v6624
    %v6797 = vpack.c.b16 %v6633, %v6629
    %v6798 = vpack.c.b16 %v6634, %v6630
    %v6799 = vpack.c.b16 %v6635, %v6631
    %v6800 = vpack.c.b16 %v6636, %v6632
    %v6801 = vpack.c.b16 %v6641, %v6637
    %v6802 = vpack.c.b16 %v6642, %v6638
    %v6803 = vpack.c.b16 %v6643, %v6639
    %v6804 = vpack.c.b16 %v6644, %v6640
    %v6805 = vpack.c.b16 %v6649, %v6645
    %v6806 = vpack.c.b16 %v6650, %v6646
    %v6807 = vpack.c.b16 %v6651, %v6647
    %v6808 = vpack.c.b16 %v6652, %v6648
    %v6809 = vpack.c.b16 %v6657, %v6653
    %v6810 = vpack.c.b16 %v6658, %v6654
    %v6811 = vpack.c.b16 %v6659, %v6655
    %v6812 = vpack.c.b16 %v6660, %v6656
    %v6813 = vpack.c.b16 %v6665, %v6661
    %v6814 = vpack.c.b16 %v6666, %v6662
    %v6815 = vpack.c.b16 %v6667, %v6663
    %v6816 = vpack.c.b16 %v6668, %v6664
    %v6817 = vpack.c.b16 %v6673, %v6669
    %v6818 = vpack.c.b16 %v6674, %v6670
    %v6819 = vpack.c.b16 %v6675, %v6671
    %v6820 = vpack.c.b16 %v6676, %v6672
    %v6821 = vpack.c.b16 %v6681, %v6677
    %v6822 = vpack.c.b16 %v6682, %v6678
    %v6823 = vpack.c.b16 %v6683, %v6679
    %v6824 = vpack.c.b16 %v6684, %v6680
    %v6825 = vpack.c.b16 %v6689, %v6685
    %v6826 = vpack.c.b16 %v6690, %v6686
    %v6827 = vpack.c.b16 %v6691, %v6687
    %v6828 = vpack.c.b16 %v6692, %v6688
    %v6829 = vpack.c.b16 %v6697, %v6693
    %v6830 = vpack.c.b16 %v6698, %v6694
    %v6831 = vpack.c.b16 %v6699, %v6695
    %v6832 = vpack.c.b16 %v6700, %v6696
    %v6833 = vpack.c.b16 %v6705, %v6701
    %v6834 = vpack.c.b16 %v6706, %v6702
    %v6835 = vpack.c.b16 %v6707, %v6703
    %v6836 = vpack.c.b16 %v6708, %v6704
    %6965 = vmatprep.subr.bf16.mxu0 %v6710
    %6966 = vmatpush1.bf16.msra.mxu0 %v6709
    %6967 = vmatprep.subr.bf16.mxu0 %v6714
    %6968 = vmatpush1.bf16.msra.mxu0 %v6713
    %6969 = vmatprep.subr.bf16.mxu0 %v6718
    %6970 = vmatpush1.bf16.msra.mxu0 %v6717
    %6971 = vmatprep.subr.bf16.mxu0 %v6722
    %6972 = vmatpush1.bf16.msra.mxu0 %v6721
    %6973 = vmatprep.subr.bf16.mxu0 %v6726
    %6974 = vmatpush1.bf16.msra.mxu0 %v6725
    %6975 = vmatprep.subr.bf16.mxu0 %v6730
    %6976 = vmatpush1.bf16.msra.mxu0 %v6729
    %6977 = vmatprep.subr.bf16.mxu0 %v6734
    %6978 = vmatpush1.bf16.msra.mxu0 %v6733
    %6979 = vmatprep.subr.bf16.mxu0 %v6738
    %6980 = vmatpush1.bf16.msra.mxu0 %v6737
    %6981 = vmatprep.subr.bf16.mxu0 %v6742
    %6982 = vmatpush1.bf16.msra.mxu0 %v6741
    %6983 = vmatprep.subr.bf16.mxu0 %v6746
    %6984 = vmatpush1.bf16.msra.mxu0 %v6745
    %6985 = vmatprep.subr.bf16.mxu0 %v6750
    %6986 = vmatpush1.bf16.msra.mxu0 %v6749
    %6987 = vmatprep.subr.bf16.mxu0 %v6754
    %6988 = vmatpush1.bf16.msra.mxu0 %v6753
    %6989 = vmatprep.subr.bf16.mxu0 %v6758
    %6990 = vmatpush1.bf16.msra.mxu0 %v6757
    %6991 = vmatprep.subr.bf16.mxu0 %v6762
    %6992 = vmatpush1.bf16.msra.mxu0 %v6761
    %6993 = vmatprep.subr.bf16.mxu0 %v6766
    %6994 = vmatpush1.bf16.msra.mxu0 %v6765
    %6995 = vmatprep.subr.bf16.mxu0 %v6770
    %6996 = vmatpush1.bf16.msra.mxu0 %v6769
    %6997 = vmatprep.mubr.bf16.mxu0 %v6145
    %6998 = vmatmul.mubr.bf16.gmra.mrb[0].mxu0 %v6144
    %v6999 = vpop.f32.mrb[0].mxu0
    %v7000 = vadd.f32 %v6308, %v6999
    %v7001 = vpop.f32.mrb[0].mxu0
    %v7002 = vadd.f32 %v6312, %v7001
    %v7003 = vpop.f32.mrb[0].mxu0
    %v7004 = vadd.f32 %v6308, %v7003
    %v7005 = vpop.f32.mrb[0].mxu0
    %v7006 = vadd.f32 %v6312, %v7005
    %7007 = vmatprep.mubr.bf16.mxu0 %v6149
    %7008 = vmatmul.mubr.bf16.gmra.mrb[0].mxu0 %v6148
    %v7009 = vpop.f32.mrb[0].mxu0
    %v7010 = vadd.f32 %v6308, %v7009
    %v7011 = vpop.f32.mrb[0].mxu0
    %v7012 = vadd.f32 %v6312, %v7011
    %v7013 = vpop.f32.mrb[0].mxu0
    %v7014 = vadd.f32 %v6308, %v7013
    %v7015 = vpop.f32.mrb[0].mxu0
    %v7016 = vadd.f32 %v6312, %v7015
    %7017 = vmatprep.mubr.bf16.mxu0 %v6153
    %7018 = vmatmul.mubr.bf16.gmra.mrb[0].mxu0 %v6152
    %v7019 = vpop.f32.mrb[0].mxu0
    %v7020 = vadd.f32 %v6308, %v7019
    %v7021 = vpop.f32.mrb[0].mxu0
    %v7022 = vadd.f32 %v6312, %v7021
    %v7023 = vpop.f32.mrb[0].mxu0
    %v7024 = vadd.f32 %v6308, %v7023
    %v7025 = vpop.f32.mrb[0].mxu0
    %v7026 = vadd.f32 %v6312, %v7025
    %7027 = vmatprep.mubr.bf16.mxu0 %v6157
    %7028 = vmatmul.mubr.bf16.gmra.mrb[0].mxu0 %v6156
    %v7029 = vpop.f32.mrb[0].mxu0
    %v7030 = vadd.f32 %v6308, %v7029
    %v7031 = vpop.f32.mrb[0].mxu0
    %v7032 = vadd.f32 %v6312, %v7031
    %v7033 = vpop.f32.mrb[0].mxu0
    %v7034 = vadd.f32 %v6308, %v7033
    %v7035 = vpop.f32.mrb[0].mxu0
    %v7036 = vadd.f32 %v6312, %v7035
    %7037 = vmatprep.mubr.bf16.mxu0 %v6161
    %7038 = vmatmul.mubr.bf16.gmra.mrb[0].mxu0 %v6160
    %v7039 = vpop.f32.mrb[0].mxu0
    %v7040 = vadd.f32 %v6308, %v7039
    %v7041 = vpop.f32.mrb[0].mxu0
    %v7042 = vadd.f32 %v6312, %v7041
    %v7043 = vpop.f32.mrb[0].mxu0
    %v7044 = vadd.f32 %v6308, %v7043
    %v7045 = vpop.f32.mrb[0].mxu0
    %v7046 = vadd.f32 %v6312, %v7045
    %7047 = vmatprep.mubr.bf16.mxu0 %v6165
    %7048 = vmatmul.mubr.bf16.gmra.mrb[0].mxu0 %v6164
    %v7049 = vpop.f32.mrb[0].mxu0
    %v7050 = vadd.f32 %v6308, %v7049
    %v7051 = vpop.f32.mrb[0].mxu0
    %v7052 = vadd.f32 %v6312, %v7051
    %v7053 = vpop.f32.mrb[0].mxu0
    %v7054 = vadd.f32 %v6308, %v7053
    %v7055 = vpop.f32.mrb[0].mxu0
    %v7056 = vadd.f32 %v6312, %v7055
    %7057 = vmatprep.mubr.bf16.mxu0 %v6169
    %7058 = vmatmul.mubr.bf16.gmra.mrb[0].mxu0 %v6168
    %v7059 = vpop.f32.mrb[0].mxu0
    %v7060 = vadd.f32 %v6308, %v7059
    %v7061 = vpop.f32.mrb[0].mxu0
    %v7062 = vadd.f32 %v6312, %v7061
    %v7063 = vpop.f32.mrb[0].mxu0
    %v7064 = vadd.f32 %v6308, %v7063
    %v7065 = vpop.f32.mrb[0].mxu0
    %v7066 = vadd.f32 %v6312, %v7065
    %7067 = vmatprep.mubr.bf16.mxu0 %v6173
    %7068 = vmatmul.mubr.bf16.gmra.mrb[0].mxu0 %v6172
    %v7069 = vpop.f32.mrb[0].mxu0
    %v7070 = vadd.f32 %v6308, %v7069
    %v7071 = vpop.f32.mrb[0].mxu0
    %v7072 = vadd.f32 %v6312, %v7071
    %v7073 = vpop.f32.mrb[0].mxu0
    %v7074 = vadd.f32 %v6308, %v7073
    %v7075 = vpop.f32.mrb[0].mxu0
    %v7076 = vadd.f32 %v6312, %v7075
    %7077 = vdwg.mxu0
    %7078 = vmatprep.subr.bf16.mxu0 %v6774
    %7079 = vmatpush1.bf16.msra.mxu0 %v6773
    %7080 = vmatprep.subr.bf16.mxu0 %v6778
    %7081 = vmatpush1.bf16.msra.mxu0 %v6777
    %7082 = vmatprep.subr.bf16.mxu0 %v6782
    %7083 = vmatpush1.bf16.msra.mxu0 %v6781
    %7084 = vmatprep.subr.bf16.mxu0 %v6786
    %7085 = vmatpush1.bf16.msra.mxu0 %v6785
    %7086 = vmatprep.subr.bf16.mxu0 %v6790
    %7087 = vmatpush1.bf16.msra.mxu0 %v6789
    %7088 = vmatprep.subr.bf16.mxu0 %v6794
    %7089 = vmatpush1.bf16.msra.mxu0 %v6793
    %7090 = vmatprep.subr.bf16.mxu0 %v6798
    %7091 = vmatpush1.bf16.msra.mxu0 %v6797
    %7092 = vmatprep.subr.bf16.mxu0 %v6802
    %7093 = vmatpush1.bf16.msra.mxu0 %v6801
    %7094 = vmatprep.subr.bf16.mxu0 %v6806
    %7095 = vmatpush1.bf16.msra.mxu0 %v6805
    %7096 = vmatprep.subr.bf16.mxu0 %v6810
    %7097 = vmatpush1.bf16.msra.mxu0 %v6809
    %7098 = vmatprep.subr.bf16.mxu0 %v6814
    %7099 = vmatpush1.bf16.msra.mxu0 %v6813
    %7100 = vmatprep.subr.bf16.mxu0 %v6818
    %7101 = vmatpush1.bf16.msra.mxu0 %v6817
    %7102 = vmatprep.subr.bf16.mxu0 %v6822
    %7103 = vmatpush1.bf16.msra.mxu0 %v6821
    %7104 = vmatprep.subr.bf16.mxu0 %v6826
    %7105 = vmatpush1.bf16.msra.mxu0 %v6825
    %7106 = vmatprep.subr.bf16.mxu0 %v6830
    %7107 = vmatpush1.bf16.msra.mxu0 %v6829
    %7108 = vmatprep.subr.bf16.mxu0 %v6834
    %7109 = vmatpush1.bf16.msra.mxu0 %v6833
    %7110 = vmatprep.mubr.bf16.mxu0 %v6147
    %7111 = vmatmul.mubr.bf16.gmra.mrb[0].mxu0 %v6146
    %v7112 = vpop.f32.mrb[0].mxu0
    %v7113 = vadd.f32 %v7000, %v7112
    %v7114 = vpop.f32.mrb[0].mxu0
    %v7115 = vadd.f32 %v7002, %v7114
    %v7116 = vpop.f32.mrb[0].mxu0
    %v7117 = vadd.f32 %v7004, %v7116
    %v7118 = vpop.f32.mrb[0].mxu0
    %v7119 = vadd.f32 %v7006, %v7118
    %7120 = vmatprep.mubr.bf16.mxu0 %v6151
    %7121 = vmatmul.mubr.bf16.gmra.mrb[0].mxu0 %v6150
    %v7122 = vpop.f32.mrb[0].mxu0
    %v7123 = vadd.f32 %v7010, %v7122
    %v7124 = vpop.f32.mrb[0].mxu0
    %v7125 = vadd.f32 %v7012, %v7124
    %v7126 = vpop.f32.mrb[0].mxu0
    %v7127 = vadd.f32 %v7014, %v7126
    %v7128 = vpop.f32.mrb[0].mxu0
    %v7129 = vadd.f32 %v7016, %v7128
    %7130 = vmatprep.mubr.bf16.mxu0 %v6155
    %7131 = vmatmul.mubr.bf16.gmra.mrb[0].mxu0 %v6154
    %v7132 = vpop.f32.mrb[0].mxu0
    %v7133 = vadd.f32 %v7020, %v7132
    %v7134 = vpop.f32.mrb[0].mxu0
    %v7135 = vadd.f32 %v7022, %v7134
    %v7136 = vpop.f32.mrb[0].mxu0
    %v7137 = vadd.f32 %v7024, %v7136
    %v7138 = vpop.f32.mrb[0].mxu0
    %v7139 = vadd.f32 %v7026, %v7138
    %7140 = vmatprep.mubr.bf16.mxu0 %v6159
    %7141 = vmatmul.mubr.bf16.gmra.mrb[0].mxu0 %v6158
    %v7142 = vpop.f32.mrb[0].mxu0
    %v7143 = vadd.f32 %v7030, %v7142
    %v7144 = vpop.f32.mrb[0].mxu0
    %v7145 = vadd.f32 %v7032, %v7144
    %v7146 = vpop.f32.mrb[0].mxu0
    %v7147 = vadd.f32 %v7034, %v7146
    %v7148 = vpop.f32.mrb[0].mxu0
    %v7149 = vadd.f32 %v7036, %v7148
    %7150 = vmatprep.mubr.bf16.mxu0 %v6163
    %7151 = vmatmul.mubr.bf16.gmra.mrb[0].mxu0 %v6162
    %v7152 = vpop.f32.mrb[0].mxu0
    %v7153 = vadd.f32 %v7040, %v7152
    %v7154 = vpop.f32.mrb[0].mxu0
    %v7155 = vadd.f32 %v7042, %v7154
    %v7156 = vpop.f32.mrb[0].mxu0
    %v7157 = vadd.f32 %v7044, %v7156
    %v7158 = vpop.f32.mrb[0].mxu0
    %v7159 = vadd.f32 %v7046, %v7158
    %7160 = vmatprep.mubr.bf16.mxu0 %v6167
    %7161 = vmatmul.mubr.bf16.gmra.mrb[0].mxu0 %v6166
    %v7162 = vpop.f32.mrb[0].mxu0
    %v7163 = vadd.f32 %v7050, %v7162
    %v7164 = vpop.f32.mrb[0].mxu0
    %v7165 = vadd.f32 %v7052, %v7164
    %v7166 = vpop.f32.mrb[0].mxu0
    %v7167 = vadd.f32 %v7054, %v7166
    %v7168 = vpop.f32.mrb[0].mxu0
    %v7169 = vadd.f32 %v7056, %v7168
    %7170 = vmatprep.mubr.bf16.mxu0 %v6171
    %7171 = vmatmul.mubr.bf16.gmra.mrb[0].mxu0 %v6170
    %v7172 = vpop.f32.mrb[0].mxu0
    %v7173 = vadd.f32 %v7060, %v7172
    %v7174 = vpop.f32.mrb[0].mxu0
    %v7175 = vadd.f32 %v7062, %v7174
    %v7176 = vpop.f32.mrb[0].mxu0
    %v7177 = vadd.f32 %v7064, %v7176
    %v7178 = vpop.f32.mrb[0].mxu0
    %v7179 = vadd.f32 %v7066, %v7178
    %7180 = vmatprep.mubr.bf16.mxu0 %v6175
    %7181 = vmatmul.mubr.bf16.gmra.mrb[0].mxu0 %v6174
    %v7182 = vpop.f32.mrb[0].mxu0
    %v7183 = vadd.f32 %v7070, %v7182
    %v7184 = vpop.f32.mrb[0].mxu0
    %v7185 = vadd.f32 %v7072, %v7184
    %v7186 = vpop.f32.mrb[0].mxu0
    %v7187 = vadd.f32 %v7074, %v7186
    %v7188 = vpop.f32.mrb[0].mxu0
    %v7189 = vadd.f32 %v7076, %v7188
    %7190 = vdwg.mxu0
    %7191 = vmatprep.subr.bf16.mxu0 %v6712
    %7192 = vmatpush1.bf16.msra.mxu0 %v6711
    %7193 = vmatprep.subr.bf16.mxu0 %v6716
    %7194 = vmatpush1.bf16.msra.mxu0 %v6715
    %7195 = vmatprep.subr.bf16.mxu0 %v6720
    %7196 = vmatpush1.bf16.msra.mxu0 %v6719
    %7197 = vmatprep.subr.bf16.mxu0 %v6724
    %7198 = vmatpush1.bf16.msra.mxu0 %v6723
    %7199 = vmatprep.subr.bf16.mxu0 %v6728
    %7200 = vmatpush1.bf16.msra.mxu0 %v6727
    %7201 = vmatprep.subr.bf16.mxu0 %v6732
    %7202 = vmatpush1.bf16.msra.mxu0 %v6731
    %7203 = vmatprep.subr.bf16.mxu0 %v6736
    %7204 = vmatpush1.bf16.msra.mxu0 %v6735
    %7205 = vmatprep.subr.bf16.mxu0 %v6740
    %7206 = vmatpush1.bf16.msra.mxu0 %v6739
    %7207 = vmatprep.subr.bf16.mxu0 %v6744
    %7208 = vmatpush1.bf16.msra.mxu0 %v6743
    %7209 = vmatprep.subr.bf16.mxu0 %v6748
    %7210 = vmatpush1.bf16.msra.mxu0 %v6747
    %7211 = vmatprep.subr.bf16.mxu0 %v6752
    %7212 = vmatpush1.bf16.msra.mxu0 %v6751
    %7213 = vmatprep.subr.bf16.mxu0 %v6756
    %7214 = vmatpush1.bf16.msra.mxu0 %v6755
    %7215 = vmatprep.subr.bf16.mxu0 %v6760
    %7216 = vmatpush1.bf16.msra.mxu0 %v6759
    %7217 = vmatprep.subr.bf16.mxu0 %v6764
    %7218 = vmatpush1.bf16.msra.mxu0 %v6763
    %7219 = vmatprep.subr.bf16.mxu0 %v6768
    %7220 = vmatpush1.bf16.msra.mxu0 %v6767
    %7221 = vmatprep.subr.bf16.mxu0 %v6772
    %7222 = vmatpush1.bf16.msra.mxu0 %v6771
    %7223 = vmatprep.mubr.bf16.mxu0 %v6145
    %7224 = vmatmul.mubr.bf16.gmra.mrb[0].mxu0 %v6144
    %v7225 = vpop.f32.mrb[0].mxu0
    %v7226 = vadd.f32 %v6316, %v7225
    %v7227 = vpop.f32.mrb[0].mxu0
    %v7228 = vadd.f32 %v6320, %v7227
    %v7229 = vpop.f32.mrb[0].mxu0
    %v7230 = vadd.f32 %v6316, %v7229
    %v7231 = vpop.f32.mrb[0].mxu0
    %v7232 = vadd.f32 %v6320, %v7231
    %7233 = vmatprep.mubr.bf16.mxu0 %v6149
    %7234 = vmatmul.mubr.bf16.gmra.mrb[0].mxu0 %v6148
    %v7235 = vpop.f32.mrb[0].mxu0
    %v7236 = vadd.f32 %v6316, %v7235
    %v7237 = vpop.f32.mrb[0].mxu0
    %v7238 = vadd.f32 %v6320, %v7237
    %v7239 = vpop.f32.mrb[0].mxu0
    %v7240 = vadd.f32 %v6316, %v7239
    %v7241 = vpop.f32.mrb[0].mxu0
    %v7242 = vadd.f32 %v6320, %v7241
    %7243 = vmatprep.mubr.bf16.mxu0 %v6153
    %7244 = vmatmul.mubr.bf16.gmra.mrb[0].mxu0 %v6152
    %v7245 = vpop.f32.mrb[0].mxu0
    %v7246 = vadd.f32 %v6316, %v7245
    %v7247 = vpop.f32.mrb[0].mxu0
    %v7248 = vadd.f32 %v6320, %v7247
    %v7249 = vpop.f32.mrb[0].mxu0
    %v7250 = vadd.f32 %v6316, %v7249
    %v7251 = vpop.f32.mrb[0].mxu0
    %v7252 = vadd.f32 %v6320, %v7251
    %7253 = vmatprep.mubr.bf16.mxu0 %v6157
    %7254 = vmatmul.mubr.bf16.gmra.mrb[0].mxu0 %v6156
    %v7255 = vpop.f32.mrb[0].mxu0
    %v7256 = vadd.f32 %v6316, %v7255
    %v7257 = vpop.f32.mrb[0].mxu0
    %v7258 = vadd.f32 %v6320, %v7257
    %v7259 = vpop.f32.mrb[0].mxu0
    %v7260 = vadd.f32 %v6316, %v7259
    %v7261 = vpop.f32.mrb[0].mxu0
    %v7262 = vadd.f32 %v6320, %v7261
    %7263 = vmatprep.mubr.bf16.mxu0 %v6161
    %7264 = vmatmul.mubr.bf16.gmra.mrb[0].mxu0 %v6160
    %v7265 = vpop.f32.mrb[0].mxu0
    %v7266 = vadd.f32 %v6316, %v7265
    %v7267 = vpop.f32.mrb[0].mxu0
    %v7268 = vadd.f32 %v6320, %v7267
    %v7269 = vpop.f32.mrb[0].mxu0
    %v7270 = vadd.f32 %v6316, %v7269
    %v7271 = vpop.f32.mrb[0].mxu0
    %v7272 = vadd.f32 %v6320, %v7271
    %7273 = vmatprep.mubr.bf16.mxu0 %v6165
    %7274 = vmatmul.mubr.bf16.gmra.mrb[0].mxu0 %v6164
    %v7275 = vpop.f32.mrb[0].mxu0
    %v7276 = vadd.f32 %v6316, %v7275
    %v7277 = vpop.f32.mrb[0].mxu0
    %v7278 = vadd.f32 %v6320, %v7277
    %v7279 = vpop.f32.mrb[0].mxu0
    %v7280 = vadd.f32 %v6316, %v7279
    %v7281 = vpop.f32.mrb[0].mxu0
    %v7282 = vadd.f32 %v6320, %v7281
    %7283 = vmatprep.mubr.bf16.mxu0 %v6169
    %7284 = vmatmul.mubr.bf16.gmra.mrb[0].mxu0 %v6168
    %v7285 = vpop.f32.mrb[0].mxu0
    %v7286 = vadd.f32 %v6316, %v7285
    %v7287 = vpop.f32.mrb[0].mxu0
    %v7288 = vadd.f32 %v6320, %v7287
    %v7289 = vpop.f32.mrb[0].mxu0
    %v7290 = vadd.f32 %v6316, %v7289
    %v7291 = vpop.f32.mrb[0].mxu0
    %v7292 = vadd.f32 %v6320, %v7291
    %7293 = vmatprep.mubr.bf16.mxu0 %v6173
    %7294 = vmatmul.mubr.bf16.gmra.mrb[0].mxu0 %v6172
    %v7295 = vpop.f32.mrb[0].mxu0
    %v7296 = vadd.f32 %v6316, %v7295
    %v7297 = vpop.f32.mrb[0].mxu0
    %v7298 = vadd.f32 %v6320, %v7297
    %v7299 = vpop.f32.mrb[0].mxu0
    %v7300 = vadd.f32 %v6316, %v7299
    %v7301 = vpop.f32.mrb[0].mxu0
    %v7302 = vadd.f32 %v6320, %v7301
    %7303 = vdwg.mxu0
    %7304 = vmatprep.subr.bf16.mxu0 %v6776
    %7305 = vmatpush1.bf16.msra.mxu0 %v6775
    %7306 = vmatprep.subr.bf16.mxu0 %v6780
    %7307 = vmatpush1.bf16.msra.mxu0 %v6779
    %7308 = vmatprep.subr.bf16.mxu0 %v6784
    %7309 = vmatpush1.bf16.msra.mxu0 %v6783
    %7310 = vmatprep.subr.bf16.mxu0 %v6788
    %7311 = vmatpush1.bf16.msra.mxu0 %v6787
    %7312 = vmatprep.subr.bf16.mxu0 %v6792
    %7313 = vmatpush1.bf16.msra.mxu0 %v6791
    %7314 = vmatprep.subr.bf16.mxu0 %v6796
    %7315 = vmatpush1.bf16.msra.mxu0 %v6795
    %7316 = vmatprep.subr.bf16.mxu0 %v6800
    %7317 = vmatpush1.bf16.msra.mxu0 %v6799
    %7318 = vmatprep.subr.bf16.mxu0 %v6804
    %7319 = vmatpush1.bf16.msra.mxu0 %v6803
    %7320 = vmatprep.subr.bf16.mxu0 %v6808
    %7321 = vmatpush1.bf16.msra.mxu0 %v6807
    %7322 = vmatprep.subr.bf16.mxu0 %v6812
    %7323 = vmatpush1.bf16.msra.mxu0 %v6811
    %7324 = vmatprep.subr.bf16.mxu0 %v6816
    %7325 = vmatpush1.bf16.msra.mxu0 %v6815
    %7326 = vmatprep.subr.bf16.mxu0 %v6820
    %7327 = vmatpush1.bf16.msra.mxu0 %v6819
    %7328 = vmatprep.subr.bf16.mxu0 %v6824
    %7329 = vmatpush1.bf16.msra.mxu0 %v6823
    %7330 = vmatprep.subr.bf16.mxu0 %v6828
    %7331 = vmatpush1.bf16.msra.mxu0 %v6827
    %7332 = vmatprep.subr.bf16.mxu0 %v6832
    %7333 = vmatpush1.bf16.msra.mxu0 %v6831
    %7334 = vmatprep.subr.bf16.mxu0 %v6836
    %7335 = vmatpush1.bf16.msra.mxu0 %v6835
    %7336 = vmatprep.mubr.bf16.mxu0 %v6147
    %7337 = vmatmul.mubr.bf16.gmra.mrb[0].mxu0 %v6146
    %v7338 = vpop.f32.mrb[0].mxu0
    %v7339 = vadd.f32 %v7226, %v7338
    %v7340 = vpop.f32.mrb[0].mxu0
    %v7341 = vadd.f32 %v7228, %v7340
    %v7342 = vpop.f32.mrb[0].mxu0
    %v7343 = vadd.f32 %v7230, %v7342
    %v7344 = vpop.f32.mrb[0].mxu0
    %v7345 = vadd.f32 %v7232, %v7344
    %7346 = vmatprep.mubr.bf16.mxu0 %v6151
    %7347 = vmatmul.mubr.bf16.gmra.mrb[0].mxu0 %v6150
    %v7348 = vpop.f32.mrb[0].mxu0
    %v7349 = vadd.f32 %v7236, %v7348
    %v7350 = vpop.f32.mrb[0].mxu0
    %v7351 = vadd.f32 %v7238, %v7350
    %v7352 = vpop.f32.mrb[0].mxu0
    %v7353 = vadd.f32 %v7240, %v7352
    %v7354 = vpop.f32.mrb[0].mxu0
    %v7355 = vadd.f32 %v7242, %v7354
    %7356 = vmatprep.mubr.bf16.mxu0 %v6155
    %7357 = vmatmul.mubr.bf16.gmra.mrb[0].mxu0 %v6154
    %v7358 = vpop.f32.mrb[0].mxu0
    %v7359 = vadd.f32 %v7246, %v7358
    %v7360 = vpop.f32.mrb[0].mxu0
    %v7361 = vadd.f32 %v7248, %v7360
    %v7362 = vpop.f32.mrb[0].mxu0
    %v7363 = vadd.f32 %v7250, %v7362
    %v7364 = vpop.f32.mrb[0].mxu0
    %v7365 = vadd.f32 %v7252, %v7364
    %7366 = vmatprep.mubr.bf16.mxu0 %v6159
    %7367 = vmatmul.mubr.bf16.gmra.mrb[0].mxu0 %v6158
    %v7368 = vpop.f32.mrb[0].mxu0
    %v7369 = vadd.f32 %v7256, %v7368
    %v7370 = vpop.f32.mrb[0].mxu0
    %v7371 = vadd.f32 %v7258, %v7370
    %v7372 = vpop.f32.mrb[0].mxu0
    %v7373 = vadd.f32 %v7260, %v7372
    %v7374 = vpop.f32.mrb[0].mxu0
    %v7375 = vadd.f32 %v7262, %v7374
    %7376 = vmatprep.mubr.bf16.mxu0 %v6163
    %7377 = vmatmul.mubr.bf16.gmra.mrb[0].mxu0 %v6162
    %v7378 = vpop.f32.mrb[0].mxu0
    %v7379 = vadd.f32 %v7266, %v7378
    %v7380 = vpop.f32.mrb[0].mxu0
    %v7381 = vadd.f32 %v7268, %v7380
    %v7382 = vpop.f32.mrb[0].mxu0
    %v7383 = vadd.f32 %v7270, %v7382
    %v7384 = vpop.f32.mrb[0].mxu0
    %v7385 = vadd.f32 %v7272, %v7384
    %7386 = vmatprep.mubr.bf16.mxu0 %v6167
    %7387 = vmatmul.mubr.bf16.gmra.mrb[0].mxu0 %v6166
    %v7388 = vpop.f32.mrb[0].mxu0
    %v7389 = vadd.f32 %v7276, %v7388
    %v7390 = vpop.f32.mrb[0].mxu0
    %v7391 = vadd.f32 %v7278, %v7390
    %v7392 = vpop.f32.mrb[0].mxu0
    %v7393 = vadd.f32 %v7280, %v7392
    %v7394 = vpop.f32.mrb[0].mxu0
    %v7395 = vadd.f32 %v7282, %v7394
    %7396 = vmatprep.mubr.bf16.mxu0 %v6171
    %7397 = vmatmul.mubr.bf16.gmra.mrb[0].mxu0 %v6170
    %v7398 = vpop.f32.mrb[0].mxu0
    %v7399 = vadd.f32 %v7286, %v7398
    %v7400 = vpop.f32.mrb[0].mxu0
    %v7401 = vadd.f32 %v7288, %v7400
    %v7402 = vpop.f32.mrb[0].mxu0
    %v7403 = vadd.f32 %v7290, %v7402
    %v7404 = vpop.f32.mrb[0].mxu0
    %v7405 = vadd.f32 %v7292, %v7404
    %7406 = vmatprep.mubr.bf16.mxu0 %v6175
    %7407 = vmatmul.mubr.bf16.gmra.mrb[0].mxu0 %v6174
    %v7408 = vpop.f32.mrb[0].mxu0
    %v7409 = vadd.f32 %v7296, %v7408
    %v7410 = vpop.f32.mrb[0].mxu0
    %v7411 = vadd.f32 %v7298, %v7410
    %v7412 = vpop.f32.mrb[0].mxu0
    %v7413 = vadd.f32 %v7300, %v7412
    %v7414 = vpop.f32.mrb[0].mxu0
    %v7415 = vadd.f32 %v7302, %v7414
    %7416 = vdwg.mxu0
    %v7417 = vmax.f32 %v7113, 0.0
    %v7418 = vmax.f32 %v7115, 0.0
    %v7419 = vmax.f32 %v7339, 0.0
    %v7420 = vmax.f32 %v7341, 0.0
    %v7421 = vmax.f32 %v7117, 0.0
    %v7422 = vmax.f32 %v7119, 0.0
    %v7423 = vmax.f32 %v7343, 0.0
    %v7424 = vmax.f32 %v7345, 0.0
    %v7425 = vmax.f32 %v7123, 0.0
    %v7426 = vmax.f32 %v7125, 0.0
    %v7427 = vmax.f32 %v7349, 0.0
    %v7428 = vmax.f32 %v7351, 0.0
    %v7429 = vmax.f32 %v7127, 0.0
    %v7430 = vmax.f32 %v7129, 0.0
    %v7431 = vmax.f32 %v7353, 0.0
    %v7432 = vmax.f32 %v7355, 0.0
    %v7433 = vmax.f32 %v7133, 0.0
    %v7434 = vmax.f32 %v7135, 0.0
    %v7435 = vmax.f32 %v7359, 0.0
    %v7436 = vmax.f32 %v7361, 0.0
    %v7437 = vmax.f32 %v7137, 0.0
    %v7438 = vmax.f32 %v7139, 0.0
    %v7439 = vmax.f32 %v7363, 0.0
    %v7440 = vmax.f32 %v7365, 0.0
    %v7441 = vmax.f32 %v7143, 0.0
    %v7442 = vmax.f32 %v7145, 0.0
    %v7443 = vmax.f32 %v7369, 0.0
    %v7444 = vmax.f32 %v7371, 0.0
    %v7445 = vmax.f32 %v7147, 0.0
    %v7446 = vmax.f32 %v7149, 0.0
    %v7447 = vmax.f32 %v7373, 0.0
    %v7448 = vmax.f32 %v7375, 0.0
    %v7449 = vmax.f32 %v7153, 0.0
    %v7450 = vmax.f32 %v7155, 0.0
    %v7451 = vmax.f32 %v7379, 0.0
    %v7452 = vmax.f32 %v7381, 0.0
    %v7453 = vmax.f32 %v7157, 0.0
    %v7454 = vmax.f32 %v7159, 0.0
    %v7455 = vmax.f32 %v7383, 0.0
    %v7456 = vmax.f32 %v7385, 0.0
    %v7457 = vmax.f32 %v7163, 0.0
    %v7458 = vmax.f32 %v7165, 0.0
    %v7459 = vmax.f32 %v7389, 0.0
    %v7460 = vmax.f32 %v7391, 0.0
    %v7461 = vmax.f32 %v7167, 0.0
    %v7462 = vmax.f32 %v7169, 0.0
    %v7463 = vmax.f32 %v7393, 0.0
    %v7464 = vmax.f32 %v7395, 0.0
    %v7465 = vmax.f32 %v7173, 0.0
    %v7466 = vmax.f32 %v7175, 0.0
    %v7467 = vmax.f32 %v7399, 0.0
    %v7468 = vmax.f32 %v7401, 0.0
    %v7469 = vmax.f32 %v7177, 0.0
    %v7470 = vmax.f32 %v7179, 0.0
    %v7471 = vmax.f32 %v7403, 0.0
    %v7472 = vmax.f32 %v7405, 0.0
    %v7473 = vmax.f32 %v7183, 0.0
    %v7474 = vmax.f32 %v7185, 0.0
    %v7475 = vmax.f32 %v7409, 0.0
    %v7476 = vmax.f32 %v7411, 0.0
    %v7477 = vmax.f32 %v7187, 0.0
    %v7478 = vmax.f32 %v7189, 0.0
    %v7479 = vmax.f32 %v7413, 0.0
    %v7480 = vmax.f32 %v7415, 0.0
    %v7481 = vpack.c.bf16 %v7421, %v7417
    %v7482 = vpack.c.bf16 %v7422, %v7418
    %v7483 = vpack.c.bf16 %v7423, %v7419
    %v7484 = vpack.c.bf16 %v7424, %v7420
    %v7485 = vpack.c.bf16 %v7429, %v7425
    %v7486 = vpack.c.bf16 %v7430, %v7426
    %v7487 = vpack.c.bf16 %v7431, %v7427
    %v7488 = vpack.c.bf16 %v7432, %v7428
    %v7489 = vpack.c.bf16 %v7437, %v7433
    %v7490 = vpack.c.bf16 %v7438, %v7434
    %v7491 = vpack.c.bf16 %v7439, %v7435
    %v7492 = vpack.c.bf16 %v7440, %v7436
    %v7493 = vpack.c.bf16 %v7445, %v7441
    %v7494 = vpack.c.bf16 %v7446, %v7442
    %v7495 = vpack.c.bf16 %v7447, %v7443
    %v7496 = vpack.c.bf16 %v7448, %v7444
    %v7497 = vpack.c.bf16 %v7453, %v7449
    %v7498 = vpack.c.bf16 %v7454, %v7450
    %v7499 = vpack.c.bf16 %v7455, %v7451
    %v7500 = vpack.c.bf16 %v7456, %v7452
    %v7501 = vpack.c.bf16 %v7461, %v7457
    %v7502 = vpack.c.bf16 %v7462, %v7458
    %v7503 = vpack.c.bf16 %v7463, %v7459
    %v7504 = vpack.c.bf16 %v7464, %v7460
    %v7505 = vpack.c.bf16 %v7469, %v7465
    %v7506 = vpack.c.bf16 %v7470, %v7466
    %v7507 = vpack.c.bf16 %v7471, %v7467
    %v7508 = vpack.c.bf16 %v7472, %v7468
    %v7509 = vpack.c.bf16 %v7477, %v7473
    %v7510 = vpack.c.bf16 %v7478, %v7474
    %v7511 = vpack.c.bf16 %v7479, %v7475
    %v7512 = vpack.c.bf16 %v7480, %v7476
    %v7513 = vld [vmem:[#allocation14] sm:$0xf]
    %v7514 = vld [vmem:[#allocation14 + $0x4] sm:$0xf]
    %v7515 = vld [vmem:[#allocation14 + $0x8] sm:$0xf]
    %v7516 = vld [vmem:[#allocation14 + $0xc] sm:$0xf]
    %v7517 = vld [vmem:[#allocation14 + $0x10] sm:$0xf]
    %v7518 = vld [vmem:[#allocation14 + $0x14] sm:$0xf]
    %v7519 = vld [vmem:[#allocation14 + $0x18] sm:$0xf]
    %v7520 = vld [vmem:[#allocation14 + $0x1c] sm:$0xf]
    %v7521 = vld [vmem:[#allocation14 + $0x20] sm:$0xf]
    %v7522 = vld [vmem:[#allocation14 + $0x24] sm:$0xf]
    %v7523 = vld [vmem:[#allocation14 + $0x28] sm:$0xf]
    %v7524 = vld [vmem:[#allocation14 + $0x2c] sm:$0xf]
    %v7525 = vld [vmem:[#allocation14 + $0x30] sm:$0xf]
    %v7526 = vld [vmem:[#allocation14 + $0x34] sm:$0xf]
    %v7527 = vld [vmem:[#allocation14 + $0x38] sm:$0xf]
    %v7528 = vld [vmem:[#allocation14 + $0x3c] sm:$0xf]
    %v7529 = vld [vmem:[#allocation14 + $0x40] sm:$0xf]
    %v7530 = vld [vmem:[#allocation14 + $0x44] sm:$0xf]
    %v7531 = vld [vmem:[#allocation14 + $0x48] sm:$0xf]
    %v7532 = vld [vmem:[#allocation14 + $0x4c] sm:$0xf]
    %v7533 = vld [vmem:[#allocation14 + $0x50] sm:$0xf]
    %v7534 = vld [vmem:[#allocation14 + $0x54] sm:$0xf]
    %v7535 = vld [vmem:[#allocation14 + $0x58] sm:$0xf]
    %v7536 = vld [vmem:[#allocation14 + $0x5c] sm:$0xf]
    %v7537 = vld [vmem:[#allocation14 + $0x60] sm:$0xf]
    %v7538 = vld [vmem:[#allocation14 + $0x64] sm:$0xf]
    %v7539 = vld [vmem:[#allocation14 + $0x68] sm:$0xf]
    %v7540 = vld [vmem:[#allocation14 + $0x6c] sm:$0xf]
    %v7541 = vld [vmem:[#allocation14 + $0x70] sm:$0xf]
    %v7542 = vld [vmem:[#allocation14 + $0x74] sm:$0xf]
    %v7543 = vld [vmem:[#allocation14 + $0x78] sm:$0xf]
    %v7544 = vld [vmem:[#allocation14 + $0x7c] sm:$0xf]
    %v7545 = vld [vmem:[#allocation14 + $0x80] sm:$0xf]
    %v7546 = vld [vmem:[#allocation14 + $0x84] sm:$0xf]
    %v7547 = vld [vmem:[#allocation14 + $0x88] sm:$0xf]
    %v7548 = vld [vmem:[#allocation14 + $0x8c] sm:$0xf]
    %v7549 = vld [vmem:[#allocation14 + $0x90] sm:$0xf]
    %v7550 = vld [vmem:[#allocation14 + $0x94] sm:$0xf]
    %v7551 = vld [vmem:[#allocation14 + $0x98] sm:$0xf]
    %v7552 = vld [vmem:[#allocation14 + $0x9c] sm:$0xf]
    %v7553 = vld [vmem:[#allocation14 + $0xa0] sm:$0xf]
    %v7554 = vld [vmem:[#allocation14 + $0xa4] sm:$0xf]
    %v7555 = vld [vmem:[#allocation14 + $0xa8] sm:$0xf]
    %v7556 = vld [vmem:[#allocation14 + $0xac] sm:$0xf]
    %v7557 = vld [vmem:[#allocation14 + $0xb0] sm:$0xf]
    %v7558 = vld [vmem:[#allocation14 + $0xb4] sm:$0xf]
    %v7559 = vld [vmem:[#allocation14 + $0xb8] sm:$0xf]
    %v7560 = vld [vmem:[#allocation14 + $0xbc] sm:$0xf]
    %v7561 = vld [vmem:[#allocation14 + $0xc0] sm:$0xf]
    %v7562 = vld [vmem:[#allocation14 + $0xc4] sm:$0xf]
    %v7563 = vld [vmem:[#allocation14 + $0xc8] sm:$0xf]
    %v7564 = vld [vmem:[#allocation14 + $0xcc] sm:$0xf]
    %v7565 = vld [vmem:[#allocation14 + $0xd0] sm:$0xf]
    %v7566 = vld [vmem:[#allocation14 + $0xd4] sm:$0xf]
    %v7567 = vld [vmem:[#allocation14 + $0xd8] sm:$0xf]
    %v7568 = vld [vmem:[#allocation14 + $0xdc] sm:$0xf]
    %v7569 = vld [vmem:[#allocation14 + $0xe0] sm:$0xf]
    %v7570 = vld [vmem:[#allocation14 + $0xe4] sm:$0xf]
    %v7571 = vld [vmem:[#allocation14 + $0xe8] sm:$0xf]
    %v7572 = vld [vmem:[#allocation14 + $0xec] sm:$0xf]
    %v7573 = vld [vmem:[#allocation14 + $0xf0] sm:$0xf]
    %v7574 = vld [vmem:[#allocation14 + $0xf4] sm:$0xf]
    %v7575 = vld [vmem:[#allocation14 + $0xf8] sm:$0xf]
    %v7576 = vld [vmem:[#allocation14 + $0xfc] sm:$0xf]
    %v7578 = vlaneseq
    %v7579 = vshrl.u32 %v7578, 7
    %v7580 = vsub.s32 0, %v7579
    %v7581 = vrot.slane %v149, %v7580
    %v7647 = vunpack.c.l.b16 %v7513
    %v7648 = vunpack.c.l.b16 %v7514
    %v7649 = vunpack.c.l.b16 %v7515
    %v7650 = vunpack.c.l.b16 %v7516
    %v7651 = vunpack.c.l.b16 %v7517
    %v7652 = vunpack.c.l.b16 %v7518
    %v7653 = vunpack.c.l.b16 %v7519
    %v7654 = vunpack.c.l.b16 %v7520
    %v7655 = vunpack.c.l.b16 %v7521
    %v7656 = vunpack.c.l.b16 %v7522
    %v7657 = vunpack.c.l.b16 %v7523
    %v7658 = vunpack.c.l.b16 %v7524
    %v7659 = vunpack.c.l.b16 %v7525
    %v7660 = vunpack.c.l.b16 %v7526
    %v7661 = vunpack.c.l.b16 %v7527
    %v7662 = vunpack.c.l.b16 %v7528
    %v7663 = vunpack.c.l.b16 %v7529
    %v7664 = vunpack.c.l.b16 %v7530
    %v7665 = vunpack.c.l.b16 %v7531
    %v7666 = vunpack.c.l.b16 %v7532
    %v7667 = vunpack.c.l.b16 %v7533
    %v7668 = vunpack.c.l.b16 %v7534
    %v7669 = vunpack.c.l.b16 %v7535
    %v7670 = vunpack.c.l.b16 %v7536
    %v7671 = vunpack.c.l.b16 %v7537
    %v7672 = vunpack.c.l.b16 %v7538
    %v7673 = vunpack.c.l.b16 %v7539
    %v7674 = vunpack.c.l.b16 %v7540
    %v7675 = vunpack.c.l.b16 %v7541
    %v7676 = vunpack.c.l.b16 %v7542
    %v7677 = vunpack.c.l.b16 %v7543
    %v7678 = vunpack.c.l.b16 %v7544
    %v7679 = vunpack.c.l.b16 %v7545
    %v7680 = vunpack.c.l.b16 %v7546
    %v7681 = vunpack.c.l.b16 %v7547
    %v7682 = vunpack.c.l.b16 %v7548
    %v7683 = vunpack.c.l.b16 %v7549
    %v7684 = vunpack.c.l.b16 %v7550
    %v7685 = vunpack.c.l.b16 %v7551
    %v7686 = vunpack.c.l.b16 %v7552
    %v7687 = vunpack.c.l.b16 %v7553
    %v7688 = vunpack.c.l.b16 %v7554
    %v7689 = vunpack.c.l.b16 %v7555
    %v7690 = vunpack.c.l.b16 %v7556
    %v7691 = vunpack.c.l.b16 %v7557
    %v7692 = vunpack.c.l.b16 %v7558
    %v7693 = vunpack.c.l.b16 %v7559
    %v7694 = vunpack.c.l.b16 %v7560
    %v7695 = vunpack.c.l.b16 %v7561
    %v7696 = vunpack.c.l.b16 %v7562
    %v7697 = vunpack.c.l.b16 %v7563
    %v7698 = vunpack.c.l.b16 %v7564
    %v7699 = vunpack.c.l.b16 %v7565
    %v7700 = vunpack.c.l.b16 %v7566
    %v7701 = vunpack.c.l.b16 %v7567
    %v7702 = vunpack.c.l.b16 %v7568
    %v7703 = vunpack.c.l.b16 %v7569
    %v7704 = vunpack.c.l.b16 %v7570
    %v7705 = vunpack.c.l.b16 %v7571
    %v7706 = vunpack.c.l.b16 %v7572
    %v7707 = vunpack.c.l.b16 %v7573
    %v7708 = vunpack.c.l.b16 %v7574
    %v7709 = vunpack.c.l.b16 %v7575
    %v7710 = vunpack.c.l.b16 %v7576
    %v7711 = vpack.c.b16 %v7648, %v7647
    %v7712 = vpack.c.b16 %v7650, %v7649
    %v7713 = vpack.c.b16 %v7652, %v7651
    %v7714 = vpack.c.b16 %v7654, %v7653
    %v7715 = vpack.c.b16 %v7656, %v7655
    %v7716 = vpack.c.b16 %v7658, %v7657
    %v7717 = vpack.c.b16 %v7660, %v7659
    %v7718 = vpack.c.b16 %v7662, %v7661
    %v7719 = vpack.c.b16 %v7664, %v7663
    %v7720 = vpack.c.b16 %v7666, %v7665
    %v7721 = vpack.c.b16 %v7668, %v7667
    %v7722 = vpack.c.b16 %v7670, %v7669
    %v7723 = vpack.c.b16 %v7672, %v7671
    %v7724 = vpack.c.b16 %v7674, %v7673
    %v7725 = vpack.c.b16 %v7676, %v7675
    %v7726 = vpack.c.b16 %v7678, %v7677
    %v7727 = vpack.c.b16 %v7680, %v7679
    %v7728 = vpack.c.b16 %v7682, %v7681
    %v7729 = vpack.c.b16 %v7684, %v7683
    %v7730 = vpack.c.b16 %v7686, %v7685
    %v7731 = vpack.c.b16 %v7688, %v7687
    %v7732 = vpack.c.b16 %v7690, %v7689
    %v7733 = vpack.c.b16 %v7692, %v7691
    %v7734 = vpack.c.b16 %v7694, %v7693
    %v7735 = vpack.c.b16 %v7696, %v7695
    %v7736 = vpack.c.b16 %v7698, %v7697
    %v7737 = vpack.c.b16 %v7700, %v7699
    %v7738 = vpack.c.b16 %v7702, %v7701
    %v7739 = vpack.c.b16 %v7704, %v7703
    %v7740 = vpack.c.b16 %v7706, %v7705
    %v7741 = vpack.c.b16 %v7708, %v7707
    %v7742 = vpack.c.b16 %v7710, %v7709
    %7775 = vmatprep.subr.bf16.mxu0 0
    %7776 = vmatpush1.bf16.msra.mxu0 %v7711
    %7777 = vmatprep.subr.bf16.mxu0 0
    %7778 = vmatpush1.bf16.msra.mxu0 %v7712
    %7779 = vmatprep.subr.bf16.mxu0 0
    %7780 = vmatpush1.bf16.msra.mxu0 %v7713
    %7781 = vmatprep.subr.bf16.mxu0 0
    %7782 = vmatpush1.bf16.msra.mxu0 %v7714
    %7783 = vmatprep.subr.bf16.mxu0 0
    %7784 = vmatpush1.bf16.msra.mxu0 %v7715
    %7785 = vmatprep.subr.bf16.mxu0 0
    %7786 = vmatpush1.bf16.msra.mxu0 %v7716
    %7787 = vmatprep.subr.bf16.mxu0 0
    %7788 = vmatpush1.bf16.msra.mxu0 %v7717
    %7789 = vmatprep.subr.bf16.mxu0 0
    %7790 = vmatpush1.bf16.msra.mxu0 %v7718
    %7791 = vmatprep.subr.bf16.mxu0 0
    %7792 = vmatpush1.bf16.msra.mxu0 %v7719
    %7793 = vmatprep.subr.bf16.mxu0 0
    %7794 = vmatpush1.bf16.msra.mxu0 %v7720
    %7795 = vmatprep.subr.bf16.mxu0 0
    %7796 = vmatpush1.bf16.msra.mxu0 %v7721
    %7797 = vmatprep.subr.bf16.mxu0 0
    %7798 = vmatpush1.bf16.msra.mxu0 %v7722
    %7799 = vmatprep.subr.bf16.mxu0 0
    %7800 = vmatpush1.bf16.msra.mxu0 %v7723
    %7801 = vmatprep.subr.bf16.mxu0 0
    %7802 = vmatpush1.bf16.msra.mxu0 %v7724
    %7803 = vmatprep.subr.bf16.mxu0 0
    %7804 = vmatpush1.bf16.msra.mxu0 %v7725
    %7805 = vmatprep.subr.bf16.mxu0 0
    %7806 = vmatpush1.bf16.msra.mxu0 %v7726
    %7807 = vmatprep.mubr.bf16.mxu0 %v7482
    %7808 = vmatmul.mubr.bf16.gmra.mrb[0].mxu0 %v7481
    %v7809 = vpop.f32.mrb[0].mxu0
    %v7810 = vadd.f32 %v7581, %v7809
    %v7811 = vpop.f32.mrb[0].mxu0
    %v7812 = vpop.f32.mrb[0].mxu0
    %v7813 = vadd.f32 %v7581, %v7812
    %v7814 = vpop.f32.mrb[0].mxu0
    %7815 = vmatprep.mubr.bf16.mxu0 %v7486
    %7816 = vmatmul.mubr.bf16.gmra.mrb[0].mxu0 %v7485
    %v7817 = vpop.f32.mrb[0].mxu0
    %v7818 = vadd.f32 %v7581, %v7817
    %v7819 = vpop.f32.mrb[0].mxu0
    %v7820 = vpop.f32.mrb[0].mxu0
    %v7821 = vadd.f32 %v7581, %v7820
    %v7822 = vpop.f32.mrb[0].mxu0
    %7823 = vmatprep.mubr.bf16.mxu0 %v7490
    %7824 = vmatmul.mubr.bf16.gmra.mrb[0].mxu0 %v7489
    %v7825 = vpop.f32.mrb[0].mxu0
    %v7826 = vadd.f32 %v7581, %v7825
    %v7827 = vpop.f32.mrb[0].mxu0
    %v7828 = vpop.f32.mrb[0].mxu0
    %v7829 = vadd.f32 %v7581, %v7828
    %v7830 = vpop.f32.mrb[0].mxu0
    %7831 = vmatprep.mubr.bf16.mxu0 %v7494
    %7832 = vmatmul.mubr.bf16.gmra.mrb[0].mxu0 %v7493
    %v7833 = vpop.f32.mrb[0].mxu0
    %v7834 = vadd.f32 %v7581, %v7833
    %v7835 = vpop.f32.mrb[0].mxu0
    %v7836 = vpop.f32.mrb[0].mxu0
    %v7837 = vadd.f32 %v7581, %v7836
    %v7838 = vpop.f32.mrb[0].mxu0
    %7839 = vmatprep.mubr.bf16.mxu0 %v7498
    %7840 = vmatmul.mubr.bf16.gmra.mrb[0].mxu0 %v7497
    %v7841 = vpop.f32.mrb[0].mxu0
    %v7842 = vadd.f32 %v7581, %v7841
    %v7843 = vpop.f32.mrb[0].mxu0
    %v7844 = vpop.f32.mrb[0].mxu0
    %v7845 = vadd.f32 %v7581, %v7844
    %v7846 = vpop.f32.mrb[0].mxu0
    %7847 = vmatprep.mubr.bf16.mxu0 %v7502
    %7848 = vmatmul.mubr.bf16.gmra.mrb[0].mxu0 %v7501
    %v7849 = vpop.f32.mrb[0].mxu0
    %v7850 = vadd.f32 %v7581, %v7849
    %v7851 = vpop.f32.mrb[0].mxu0
    %v7852 = vpop.f32.mrb[0].mxu0
    %v7853 = vadd.f32 %v7581, %v7852
    %v7854 = vpop.f32.mrb[0].mxu0
    %7855 = vmatprep.mubr.bf16.mxu0 %v7506
    %7856 = vmatmul.mubr.bf16.gmra.mrb[0].mxu0 %v7505
    %v7857 = vpop.f32.mrb[0].mxu0
    %v7858 = vadd.f32 %v7581, %v7857
    %v7859 = vpop.f32.mrb[0].mxu0
    %v7860 = vpop.f32.mrb[0].mxu0
    %v7861 = vadd.f32 %v7581, %v7860
    %v7862 = vpop.f32.mrb[0].mxu0
    %7863 = vmatprep.mubr.bf16.mxu0 %v7510
    %7864 = vmatmul.mubr.bf16.gmra.mrb[0].mxu0 %v7509
    %v7865 = vpop.f32.mrb[0].mxu0
    %v7866 = vadd.f32 %v7581, %v7865
    %v7867 = vpop.f32.mrb[0].mxu0
    %v7868 = vpop.f32.mrb[0].mxu0
    %v7869 = vadd.f32 %v7581, %v7868
    %v7870 = vpop.f32.mrb[0].mxu0
    %7871 = vdwg.mxu0
    %7872 = vmatprep.subr.bf16.mxu0 0
    %7873 = vmatpush1.bf16.msra.mxu0 %v7727
    %7874 = vmatprep.subr.bf16.mxu0 0
    %7875 = vmatpush1.bf16.msra.mxu0 %v7728
    %7876 = vmatprep.subr.bf16.mxu0 0
    %7877 = vmatpush1.bf16.msra.mxu0 %v7729
    %7878 = vmatprep.subr.bf16.mxu0 0
    %7879 = vmatpush1.bf16.msra.mxu0 %v7730
    %7880 = vmatprep.subr.bf16.mxu0 0
    %7881 = vmatpush1.bf16.msra.mxu0 %v7731
    %7882 = vmatprep.subr.bf16.mxu0 0
    %7883 = vmatpush1.bf16.msra.mxu0 %v7732
    %7884 = vmatprep.subr.bf16.mxu0 0
    %7885 = vmatpush1.bf16.msra.mxu0 %v7733
    %7886 = vmatprep.subr.bf16.mxu0 0
    %7887 = vmatpush1.bf16.msra.mxu0 %v7734
    %7888 = vmatprep.subr.bf16.mxu0 0
    %7889 = vmatpush1.bf16.msra.mxu0 %v7735
    %7890 = vmatprep.subr.bf16.mxu0 0
    %7891 = vmatpush1.bf16.msra.mxu0 %v7736
    %7892 = vmatprep.subr.bf16.mxu0 0
    %7893 = vmatpush1.bf16.msra.mxu0 %v7737
    %7894 = vmatprep.subr.bf16.mxu0 0
    %7895 = vmatpush1.bf16.msra.mxu0 %v7738
    %7896 = vmatprep.subr.bf16.mxu0 0
    %7897 = vmatpush1.bf16.msra.mxu0 %v7739
    %7898 = vmatprep.subr.bf16.mxu0 0
    %7899 = vmatpush1.bf16.msra.mxu0 %v7740
    %7900 = vmatprep.subr.bf16.mxu0 0
    %7901 = vmatpush1.bf16.msra.mxu0 %v7741
    %7902 = vmatprep.subr.bf16.mxu0 0
    %7903 = vmatpush1.bf16.msra.mxu0 %v7742
    %7904 = vmatprep.mubr.bf16.mxu0 %v7484
    %7905 = vmatmul.mubr.bf16.gmra.mrb[0].mxu0 %v7483
    %v7906 = vpop.f32.mrb[0].mxu0
    %v7907 = vadd.f32 %v7810, %v7906
    %v7908 = vpop.f32.mrb[0].mxu0
    %v7909 = vpop.f32.mrb[0].mxu0
    %v7910 = vadd.f32 %v7813, %v7909
    %v7911 = vpop.f32.mrb[0].mxu0
    %7912 = vmatprep.mubr.bf16.mxu0 %v7488
    %7913 = vmatmul.mubr.bf16.gmra.mrb[0].mxu0 %v7487
    %v7914 = vpop.f32.mrb[0].mxu0
    %v7915 = vadd.f32 %v7818, %v7914
    %v7916 = vpop.f32.mrb[0].mxu0
    %v7917 = vpop.f32.mrb[0].mxu0
    %v7918 = vadd.f32 %v7821, %v7917
    %v7919 = vpop.f32.mrb[0].mxu0
    %7920 = vmatprep.mubr.bf16.mxu0 %v7492
    %7921 = vmatmul.mubr.bf16.gmra.mrb[0].mxu0 %v7491
    %v7922 = vpop.f32.mrb[0].mxu0
    %v7923 = vadd.f32 %v7826, %v7922
    %v7924 = vpop.f32.mrb[0].mxu0
    %v7925 = vpop.f32.mrb[0].mxu0
    %v7926 = vadd.f32 %v7829, %v7925
    %v7927 = vpop.f32.mrb[0].mxu0
    %7928 = vmatprep.mubr.bf16.mxu0 %v7496
    %7929 = vmatmul.mubr.bf16.gmra.mrb[0].mxu0 %v7495
    %v7930 = vpop.f32.mrb[0].mxu0
    %v7931 = vadd.f32 %v7834, %v7930
    %v7932 = vpop.f32.mrb[0].mxu0
    %v7933 = vpop.f32.mrb[0].mxu0
    %v7934 = vadd.f32 %v7837, %v7933
    %v7935 = vpop.f32.mrb[0].mxu0
    %7936 = vmatprep.mubr.bf16.mxu0 %v7500
    %7937 = vmatmul.mubr.bf16.gmra.mrb[0].mxu0 %v7499
    %v7938 = vpop.f32.mrb[0].mxu0
    %v7939 = vadd.f32 %v7842, %v7938
    %v7940 = vpop.f32.mrb[0].mxu0
    %v7941 = vpop.f32.mrb[0].mxu0
    %v7942 = vadd.f32 %v7845, %v7941
    %v7943 = vpop.f32.mrb[0].mxu0
    %7944 = vmatprep.mubr.bf16.mxu0 %v7504
    %7945 = vmatmul.mubr.bf16.gmra.mrb[0].mxu0 %v7503
    %v7946 = vpop.f32.mrb[0].mxu0
    %v7947 = vadd.f32 %v7850, %v7946
    %v7948 = vpop.f32.mrb[0].mxu0
    %v7949 = vpop.f32.mrb[0].mxu0
    %v7950 = vadd.f32 %v7853, %v7949
    %v7951 = vpop.f32.mrb[0].mxu0
    %7952 = vmatprep.mubr.bf16.mxu0 %v7508
    %7953 = vmatmul.mubr.bf16.gmra.mrb[0].mxu0 %v7507
    %v7954 = vpop.f32.mrb[0].mxu0
    %v7955 = vadd.f32 %v7858, %v7954
    %v7956 = vpop.f32.mrb[0].mxu0
    %v7957 = vpop.f32.mrb[0].mxu0
    %v7958 = vadd.f32 %v7861, %v7957
    %v7959 = vpop.f32.mrb[0].mxu0
    %7960 = vmatprep.mubr.bf16.mxu0 %v7512
    %7961 = vmatmul.mubr.bf16.gmra.mrb[0].mxu0 %v7511
    %v7962 = vpop.f32.mrb[0].mxu0
    %v7963 = vadd.f32 %v7866, %v7962
    %v7964 = vpop.f32.mrb[0].mxu0
    %v7965 = vpop.f32.mrb[0].mxu0
    %v7966 = vadd.f32 %v7869, %v7965
    %v7967 = vpop.f32.mrb[0].mxu0
    %7968 = vdwg.mxu0
    %v7969 = vadd.f32 %v1781, %v7907
    %v7970 = vadd.f32 %v1785, %v7910
    %v7971 = vadd.f32 %v1791, %v7915
    %v7972 = vadd.f32 %v1795, %v7918
    %v7973 = vadd.f32 %v1801, %v7923
    %v7974 = vadd.f32 %v1805, %v7926
    %v7975 = vadd.f32 %v1811, %v7931
    %v7976 = vadd.f32 %v1815, %v7934
    %v7977 = vadd.f32 %v1821, %v7939
    %v7978 = vadd.f32 %v1825, %v7942
    %v7979 = vadd.f32 %v1831, %v7947
    %v7980 = vadd.f32 %v1835, %v7950
    %v7981 = vadd.f32 %v1841, %v7955
    %v7982 = vadd.f32 %v1845, %v7958
    %v7983 = vadd.f32 %v1851, %v7963
    %v7984 = vadd.f32 %v1855, %v7966
    %7985 = vst [vmem:[#allocation16] sm:$0xff] %v7969
    %7986 = vst [vmem:[#allocation16 + $0x8] sm:$0xff] %v7970
    %7987 = vst [vmem:[#allocation16 + $0x10] sm:$0xff] %v7971
    %7988 = vst [vmem:[#allocation16 + $0x18] sm:$0xff] %v7972
    %7989 = vst [vmem:[#allocation16 + $0x20] sm:$0xff] %v7973
    %7990 = vst [vmem:[#allocation16 + $0x28] sm:$0xff] %v7974
    %7991 = vst [vmem:[#allocation16 + $0x30] sm:$0xff] %v7975
    %7992 = vst [vmem:[#allocation16 + $0x38] sm:$0xff] %v7976
    %7993 = vst [vmem:[#allocation16 + $0x40] sm:$0xff] %v7977
    %7994 = vst [vmem:[#allocation16 + $0x48] sm:$0xff] %v7978
    %7995 = vst [vmem:[#allocation16 + $0x50] sm:$0xff] %v7979
    %7996 = vst [vmem:[#allocation16 + $0x58] sm:$0xff] %v7980
    %7997 = vst [vmem:[#allocation16 + $0x60] sm:$0xff] %v7981
    %7998 = vst [vmem:[#allocation16 + $0x68] sm:$0xff] %v7982
    %7999 = vst [vmem:[#allocation16 + $0x70] sm:$0xff] %v7983
    %8000 = vst [vmem:[#allocation16 + $0x78] sm:$0xff] %v7984
    // Predicated region
    $region70: #{tpu_custom_call.1} parent=1 // pred_check
      _
    $region71: #{tpu_custom_call.1} parent=1 // pred_check_branch
      %8002 = sbr.rel (0) target = $region73
    $region72: #{tpu_custom_call.1} parent=1 // pred_region
      %s8004 = ssub.s32 2048, 2048
      %8005 = vsyncadd [#allocation4], %s8004
      %s8006 = sshll.u32 [#allocation16], 4
      %s8007 = int_to_ptr.vmem [resolvable:$true] %s8006
      %8012 = dma.vmem_to_hbm [thread:$0]  %s8007, 2048, %s9, [#allocation4], 128, 128, 8
    $region73: #{tpu_custom_call.1} parent=1 // pred_fallthru
      _
    // Predicated region
    $region74: #{tpu_custom_call.1} parent=1 // pred_check
      _
    $region75: #{tpu_custom_call.1} parent=1 // pred_check_branch
      %8014 = sbr.rel (0) target = $region77
    $region76: #{tpu_custom_call.1} parent=1 // pred_region
      %8015 = dma.done [#allocation4], 2048
    $region77: #{tpu_custom_call.1} parent=1 // pred_fallthru
      _
    %8016 = vsyncpa [#allocation3], 1
    %8017 = vsyncpa [#allocation6], 1
    %8018 = vsyncpa [#allocation9], 1
    %8019 = vsyncpa [#allocation12], 1
    %8020 = vsyncpa [#allocation15], 1
    %8021 = vsyncpa [#allocation4], 1

</llo_original>
